<compile_context>
chip_gen: v7x
topology: tpu7x:2x2x1
jax: 0.10.0
libtpu: 0.0.40
codegen_flags: <defaults>
</compile_context>

<pallas_src>
import math

import jax
import jax.numpy as jnp
from jax.experimental import pallas as pl
from jax.experimental.pallas import tpu as pltpu


# ---------------------------------------------------------------------------
# in-kernel helpers
# ---------------------------------------------------------------------------

def _shift_rows(x, oy):
    """shifted[y] = x[y + oy] (zero outside). Axis 0 is untiled -> cheap slice."""
    if oy == 0:
        return x
    pad = jnp.zeros((abs(oy),) + x.shape[1:], x.dtype)
    if oy > 0:
        return jnp.concatenate([x[oy:], pad], axis=0)
    return jnp.concatenate([pad, x[:oy]], axis=0)


def _shift_cols(x, ox):
    """shifted[:, w] = x[:, w + ox] (zero outside). Sublane shift (XLU)."""
    if ox == 0:
        return x
    pad = jnp.zeros((x.shape[0], abs(ox)) + x.shape[2:], x.dtype)
    if ox > 0:
        return jnp.concatenate([x[:, ox:], pad], axis=1)
    return jnp.concatenate([pad, x[:, :ox]], axis=1)


def _gelu_tanh(x):
    # tanh-form GELU: tanh runs on the EUP (its own bundle slot) instead of a
    # long erf polynomial on the VALU.  |delta| vs exact-erf GELU < ~3.5e-4.
    c = math.sqrt(2.0 / math.pi)
    return 0.5 * x * (1.0 + jnp.tanh(c * (x + 0.044715 * x * x * x)))


# ---------------------------------------------------------------------------
# kernel
# ---------------------------------------------------------------------------

def convnext_block_kernel(
    x_ref,      # (1, H, W, C)     input tile (one batch element), f32
    w_dw_ref,   # (49, C)          depthwise 7x7 weights, tap-major (ky*7+kx), f32
    b_dw_ref,   # (1, C)
    g_ref,      # (1, C)           LayerNorm gamma
    beta_ref,   # (1, C)           LayerNorm beta
    w1_ref,     # (9*C, F)         conv1 3x3 weights, im2col-flattened, bf16
    b1_ref,     # (1, F)
    w2r_ref,    # (9*F + C, Co)    [conv2 3x3 ; residual 1x1] weights, bf16
    b2r_ref,    # (1, Co)          b2 + br
    o_ref,      # (1, H, W, Co)    output tile
):
    H, W = o_ref.shape[1], o_ref.shape[2]
    C = x_ref.shape[3]
    F = b1_ref.shape[1]
    Co = o_ref.shape[3]
    eps = 1e-5

    x = x_ref[0].astype(jnp.float32)                       # (H, W, C)

    # ---------- depthwise 7x7 conv, padding 3, groups = C (VPU) ----------
    w_dw = w_dw_ref[...]                                   # hoisted (49, C)
    b_dw = b_dw_ref[...]                                   # (1, C)
    # 7 column (sublane) shifts once; the 7 row shifts per column are cheap.
    x_cols = [_shift_cols(x, ox) for ox in range(-3, 4)]
    h = jnp.zeros((H, W, C), jnp.float32)
    for ky in range(7):
        for kx in range(7):
            k = ky * 7 + kx
            s = _shift_rows(x_cols[kx], ky - 3)            # (H, W, C)
            h = h + s * w_dw[k:k + 1]                      # (1, C) broadcast
    h = h + b_dw

    # ---------- LayerNorm over channels (torch dim=1, unbiased=False) ----
    mean = jnp.mean(h, axis=-1, keepdims=True)
    diff = h - mean
    var = jnp.mean(diff * diff, axis=-1, keepdims=True)
    h = diff * jax.lax.rsqrt(var + eps) * g_ref[...] + beta_ref[...]

    # ---------- conv1 3x3 (C -> F): im2col + single bf16 MXU matmul ------
    h_cols = [_shift_cols(h, ox) for ox in (-1, 0, 1)]
    taps1 = [_shift_rows(h_cols[kx], ky - 1)
             for ky in range(3) for kx in range(3)]        # tap order ky*3+kx
    im1 = jnp.concatenate(taps1, axis=-1).reshape(H * W, 9 * C)
    a1 = jnp.dot(im1.astype(jnp.bfloat16), w1_ref[...],
                 preferred_element_type=jnp.float32) + b1_ref[...]
    h1 = _gelu_tanh(a1).reshape(H, W, F)

    # ---- conv2 3x3 (F -> Co) fused with residual 1x1 (C -> Co): one matmul
    h1_cols = [_shift_cols(h1, ox) for ox in (-1, 0, 1)]
    taps2 = [_shift_rows(h1_cols[kx], ky - 1)
             for ky in range(3) for kx in range(3)]
    im2 = jnp.concatenate(taps2 + [x], axis=-1).reshape(H * W, 9 * F + C)
    out = jnp.dot(im2.astype(jnp.bfloat16), w2r_ref[...],
                  preferred_element_type=jnp.float32) + b2r_ref[...]

    o_ref[0] = out.reshape(H, W, Co).astype(o_ref.dtype)


# ---------------------------------------------------------------------------
# wrapper
# ---------------------------------------------------------------------------

def convnext_block(x_nchw, params):
    """x_nchw: (B, C, H, W) float32 (PyTorch layout). Returns (B, Co, H, W)."""
    w_dw, b_dw, g, beta, w1, b1, w2, b2, wr, br = params
    B, C, H, W = x_nchw.shape
    F = w1.shape[2]
    Co = w2.shape[2]

    x = jnp.transpose(x_nchw, (0, 2, 3, 1))                # NCHW -> NHWC

    # im2col-flattened, bf16 MXU weights (accumulation stays f32 in-kernel).
    w1_f = w1.reshape(9 * C, F).astype(jnp.bfloat16)
    # conv2 + residual fused along the contraction axis.
    w2r_f = jnp.concatenate([w2.reshape(9 * F, Co), wr],
                            axis=0).astype(jnp.bfloat16)   # (9*F + C, Co)
    b2r = b2 + br                                          # (1, Co)

    out_nhwc = pl.pallas_call(
        convnext_block_kernel,
        out_shape=jax.ShapeDtypeStruct((B, H, W, Co), x.dtype),
        grid_spec=pltpu.PrefetchScalarGridSpec(
            num_scalar_prefetch=0,
            grid=(B,),
            in_specs=[
                pl.BlockSpec((1, H, W, C), lambda b: (b, 0, 0, 0)),
                pl.BlockSpec((49, C), lambda b: (0, 0)),
                pl.BlockSpec((1, C), lambda b: (0, 0)),
                pl.BlockSpec((1, C), lambda b: (0, 0)),
                pl.BlockSpec((1, C), lambda b: (0, 0)),
                pl.BlockSpec((9 * C, F), lambda b: (0, 0)),
                pl.BlockSpec((1, F), lambda b: (0, 0)),
                pl.BlockSpec((9 * F + C, Co), lambda b: (0, 0)),
                pl.BlockSpec((1, Co), lambda b: (0, 0)),
            ],
            out_specs=pl.BlockSpec((1, H, W, Co), lambda b: (b, 0, 0, 0)),
        ),
        # batch axis is independent -> parallel (sharded across 2 TCs on v7x)
        compiler_params=pltpu.CompilerParams(
            dimension_semantics=("parallel",)),
    )(x, w_dw, b_dw, g, beta, w1_f, b1, w2r_f, b2r)

    return jnp.transpose(out_nhwc, (0, 3, 1, 2))           # NHWC -> NCHW


# ---------------------------------------------------------------------------
# parameters / pure-JAX reference (torch semantics, f32, exact-erf GELU)
# ---------------------------------------------------------------------------

def init_params(key, dim, dim_out, mult=3):
    """Deterministic synthetic parameters (shapes match the nn.Module)."""
    hidden = dim_out * mult
    ks = jax.random.split(key, 8)
    # torch ds_conv.weight (dim,1,7,7)  -> (7,7,dim) tap-major -> (49, dim)
    w_dw = (0.1 * jax.random.normal(ks[0], (7, 7, dim), jnp.float32)
            ).reshape(49, dim)
    b_dw = 0.1 * jax.random.normal(ks[1], (1, dim), jnp.float32)
    g = jnp.ones((1, dim), jnp.float32)        # LayerNorm.g init (ones)
    beta = jnp.zeros((1, dim), jnp.float32)    # LayerNorm.b init (zeros)
    # torch conv1.weight (hidden,dim,3,3) -> (3,3,dim,hidden) -> (9,dim,hidden)
    w1 = (0.1 * jax.random.normal(ks[2], (3, 3, dim, hidden), jnp.float32)
          ).reshape(9, dim, hidden)
    b1 = 0.1 * jax.random.normal(ks[3], (1, hidden), jnp.float32)
    w2 = (0.1 * jax.random.normal(ks[4], (3, 3, hidden, dim_out), jnp.float32)
          ).reshape(9, hidden, dim_out)
    b2 = 0.1 * jax.random.normal(ks[5], (1, dim_out), jnp.float32)
    wr = 0.1 * jax.random.normal(ks[6], (dim, dim_out), jnp.float32)
    br = 0.1 * jax.random.normal(ks[7], (1, dim_out), jnp.float32)
    return (w_dw, b_dw, g, beta, w1, b1, w2, b2, wr, br)


def reference(x_nchw, params):
    """Pure-JAX reference of the same forward pass (f32, exact-erf GELU)."""
    w_dw, b_dw, g, beta, w1, b1, w2, b2, wr, br = params
    x = jnp.transpose(x_nchw, (0, 2, 3, 1))
    C = x.shape[-1]
    F = w1.shape[-1]
    Co = w2.shape[-1]
    dn = ("NHWC", "HWIO", "NHWC")
    h = jax.lax.conv_general_dilated(
        x, w_dw.reshape(7, 7, 1, C), (1, 1), [(3, 3), (3, 3)],
        dimension_numbers=dn, feature_group_count=C) + b_dw.reshape(1, 1, 1, C)
    mean = jnp.mean(h, axis=-1, keepdims=True)
    var = jnp.mean((h - mean) ** 2, axis=-1, keepdims=True)
    h = (h - mean) / jnp.sqrt(var + 1e-5) * g.reshape(1, 1, 1, C) \
        + beta.reshape(1, 1, 1, C)
    h = jax.lax.conv_general_dilated(
        h, w1.reshape(3, 3, C, F), (1, 1), [(1, 1), (1, 1)],
        dimension_numbers=dn) + b1.reshape(1, 1, 1, F)
    h = 0.5 * h * (1.0 + jax.lax.erf(h / jnp.sqrt(2.0)))
    h = jax.lax.conv_general_dilated(
        h, w2.reshape(3, 3, F, Co), (1, 1), [(1, 1), (1, 1)],
        dimension_numbers=dn) + b2.reshape(1, 1, 1, Co)
    res = jnp.einsum("bhwc,co->bhwo", x, wr) + br.reshape(1, 1, 1, Co)
    return jnp.transpose(h + res, (0, 3, 1, 2))


if __name__ == "__main__":
    dim, dim_out, mult = 4, 8, 3
    B, H, W = 2, 16, 16

    key = jax.random.PRNGKey(0)
    kx, kp = jax.random.split(key)
    x = jax.random.normal(kx, (B, dim, H, W), jnp.float32)   # NCHW like PyTorch
    params = init_params(kp, dim, dim_out, mult)

    out = convnext_block(x, params)
    jax.block_until_ready(out)
    assert out.shape == (B, dim_out, H, W)

    ref = reference(x, params)
    # Tolerance accounts for bf16 MXU operands (f32 accumulation) and the
    # tanh-form GELU vs. the f32 exact-erf reference.
    assert jnp.allclose(out, ref, atol=2e-2, rtol=2e-2), \
        float(jnp.max(jnp.abs(out - ref)))

    print("KERNEL_OK")
</pallas_src>

<mosaic_0001>
module attributes {stable_mosaic.version = 11 : i64} {
  func.func @convnext_block_kernel(%arg0: i32, %arg1: memref<1x16x16x4xf32, #tpu.memory_space<vmem>>, %arg2: memref<49x4xf32, #tpu.memory_space<vmem>>, %arg3: memref<1x4xf32, #tpu.memory_space<vmem>>, %arg4: memref<1x4xf32, #tpu.memory_space<vmem>>, %arg5: memref<1x4xf32, #tpu.memory_space<vmem>>, %arg6: memref<36x24xbf16, #tpu.memory_space<vmem>>, %arg7: memref<1x24xf32, #tpu.memory_space<vmem>>, %arg8: memref<220x8xbf16, #tpu.memory_space<vmem>>, %arg9: memref<1x8xf32, #tpu.memory_space<vmem>>, %arg10: memref<1x16x16x8xf32, #tpu.memory_space<vmem>>) attributes {dimension_semantics = [#tpu.dimension_semantics<parallel>], iteration_bounds = array<i64: 2>, scalar_prefetch = 0 : i64, scratch_operands = 0 : i64, tpu.core_type = #tpu.core_type<tc>, window_params = [{transform_indices = @transform_0, window_bounds = array<i64: 1, 16, 16, 4>}, {pipeline_mode = #tpu.pipeline_mode<synchronous>, transform_indices = @transform_1, window_bounds = array<i64: 49, 4>}, {pipeline_mode = #tpu.pipeline_mode<synchronous>, transform_indices = @transform_2, window_bounds = array<i64: 1, 4>}, {pipeline_mode = #tpu.pipeline_mode<synchronous>, transform_indices = @transform_3, window_bounds = array<i64: 1, 4>}, {pipeline_mode = #tpu.pipeline_mode<synchronous>, transform_indices = @transform_4, window_bounds = array<i64: 1, 4>}, {pipeline_mode = #tpu.pipeline_mode<synchronous>, transform_indices = @transform_5, window_bounds = array<i64: 36, 24>}, {pipeline_mode = #tpu.pipeline_mode<synchronous>, transform_indices = @transform_6, window_bounds = array<i64: 1, 24>}, {pipeline_mode = #tpu.pipeline_mode<synchronous>, transform_indices = @transform_7, window_bounds = array<i64: 220, 8>}, {pipeline_mode = #tpu.pipeline_mode<synchronous>, transform_indices = @transform_8, window_bounds = array<i64: 1, 8>}, {transform_indices = @transform_9, window_bounds = array<i64: 1, 16, 16, 8>}]} {
    %c0 = arith.constant 0 : index
    %c0_0 = arith.constant 0 : index
    %c0_1 = arith.constant 0 : index
    %c0_2 = arith.constant 0 : index
    %0 = vector.load %arg1[%c0, %c0_0, %c0_1, %c0_2] : memref<1x16x16x4xf32, #tpu.memory_space<vmem>>, vector<1x16x16x4xf32>
    %1 = vector.shape_cast %0 : vector<1x16x16x4xf32> to vector<16x16x4xf32>
    %c0_3 = arith.constant 0 : index
    %c0_4 = arith.constant 0 : index
    %2 = vector.load %arg2[%c0_3, %c0_4] : memref<49x4xf32, #tpu.memory_space<vmem>>, vector<49x4xf32>
    %c0_5 = arith.constant 0 : index
    %c0_6 = arith.constant 0 : index
    %3 = vector.load %arg3[%c0_5, %c0_6] : memref<1x4xf32, #tpu.memory_space<vmem>>, vector<1x4xf32>
    %cst = arith.constant 0.000000e+00 : f32
    %4 = vector.broadcast %cst : f32 to vector<16x3x4xf32>
    %5 = vector.extract_strided_slice %1 {offsets = [0, 0, 0], sizes = [16, 13, 4], strides = [1, 1, 1]} : vector<16x16x4xf32> to vector<16x13x4xf32>
    %6 = tpu.concatenate %4, %5 in 1 : vector<16x3x4xf32>, vector<16x13x4xf32> -> vector<16x16x4xf32>
    %cst_7 = arith.constant 0.000000e+00 : f32
    %7 = vector.broadcast %cst_7 : f32 to vector<16x2x4xf32>
    %8 = vector.extract_strided_slice %1 {offsets = [0, 0, 0], sizes = [16, 14, 4], strides = [1, 1, 1]} : vector<16x16x4xf32> to vector<16x14x4xf32>
    %9 = tpu.concatenate %7, %8 in 1 : vector<16x2x4xf32>, vector<16x14x4xf32> -> vector<16x16x4xf32>
    %cst_8 = arith.constant 0.000000e+00 : f32
    %10 = vector.broadcast %cst_8 : f32 to vector<16x1x4xf32>
    %11 = vector.extract_strided_slice %1 {offsets = [0, 0, 0], sizes = [16, 15, 4], strides = [1, 1, 1]} : vector<16x16x4xf32> to vector<16x15x4xf32>
    %12 = tpu.concatenate %10, %11 in 1 : vector<16x1x4xf32>, vector<16x15x4xf32> -> vector<16x16x4xf32>
    %cst_9 = arith.constant 0.000000e+00 : f32
    %13 = vector.broadcast %cst_9 : f32 to vector<16x1x4xf32>
    %14 = vector.extract_strided_slice %1 {offsets = [0, 1, 0], sizes = [16, 15, 4], strides = [1, 1, 1]} : vector<16x16x4xf32> to vector<16x15x4xf32>
    %15 = tpu.concatenate %14, %13 in 1 : vector<16x15x4xf32>, vector<16x1x4xf32> -> vector<16x16x4xf32>
    %cst_10 = arith.constant 0.000000e+00 : f32
    %16 = vector.broadcast %cst_10 : f32 to vector<16x2x4xf32>
    %17 = vector.extract_strided_slice %1 {offsets = [0, 2, 0], sizes = [16, 14, 4], strides = [1, 1, 1]} : vector<16x16x4xf32> to vector<16x14x4xf32>
    %18 = tpu.concatenate %17, %16 in 1 : vector<16x14x4xf32>, vector<16x2x4xf32> -> vector<16x16x4xf32>
    %cst_11 = arith.constant 0.000000e+00 : f32
    %19 = vector.broadcast %cst_11 : f32 to vector<16x3x4xf32>
    %20 = vector.extract_strided_slice %1 {offsets = [0, 3, 0], sizes = [16, 13, 4], strides = [1, 1, 1]} : vector<16x16x4xf32> to vector<16x13x4xf32>
    %21 = tpu.concatenate %20, %19 in 1 : vector<16x13x4xf32>, vector<16x3x4xf32> -> vector<16x16x4xf32>
    %cst_12 = arith.constant 0.000000e+00 : f32
    %22 = vector.broadcast %cst_12 : f32 to vector<16x16x4xf32>
    %cst_13 = arith.constant 0.000000e+00 : f32
    %23 = vector.broadcast %cst_13 : f32 to vector<3x16x4xf32>
    %24 = vector.extract_strided_slice %6 {offsets = [0, 0, 0], sizes = [13, 16, 4], strides = [1, 1, 1]} : vector<16x16x4xf32> to vector<13x16x4xf32>
    %25 = tpu.concatenate %23, %24 in 0 : vector<3x16x4xf32>, vector<13x16x4xf32> -> vector<16x16x4xf32>
    %26 = vector.extract_strided_slice %2 {offsets = [0, 0], sizes = [1, 4], strides = [1, 1]} : vector<49x4xf32> to vector<1x4xf32>
    %27 = vector.shape_cast %26 : vector<1x4xf32> to vector<1x1x4xf32>
    %28 = vector.broadcast %27 : vector<1x1x4xf32> to vector<16x16x4xf32>
    %29 = arith.mulf %25, %28 : vector<16x16x4xf32>
    %30 = arith.addf %22, %29 : vector<16x16x4xf32>
    %cst_14 = arith.constant 0.000000e+00 : f32
    %31 = vector.broadcast %cst_14 : f32 to vector<3x16x4xf32>
    %32 = vector.extract_strided_slice %9 {offsets = [0, 0, 0], sizes = [13, 16, 4], strides = [1, 1, 1]} : vector<16x16x4xf32> to vector<13x16x4xf32>
    %33 = tpu.concatenate %31, %32 in 0 : vector<3x16x4xf32>, vector<13x16x4xf32> -> vector<16x16x4xf32>
    %34 = vector.extract_strided_slice %2 {offsets = [1, 0], sizes = [1, 4], strides = [1, 1]} : vector<49x4xf32> to vector<1x4xf32>
    %35 = vector.shape_cast %34 : vector<1x4xf32> to vector<1x1x4xf32>
    %36 = vector.broadcast %35 : vector<1x1x4xf32> to vector<16x16x4xf32>
    %37 = arith.mulf %33, %36 : vector<16x16x4xf32>
    %38 = arith.addf %30, %37 : vector<16x16x4xf32>
    %cst_15 = arith.constant 0.000000e+00 : f32
    %39 = vector.broadcast %cst_15 : f32 to vector<3x16x4xf32>
    %40 = vector.extract_strided_slice %12 {offsets = [0, 0, 0], sizes = [13, 16, 4], strides = [1, 1, 1]} : vector<16x16x4xf32> to vector<13x16x4xf32>
    %41 = tpu.concatenate %39, %40 in 0 : vector<3x16x4xf32>, vector<13x16x4xf32> -> vector<16x16x4xf32>
    %42 = vector.extract_strided_slice %2 {offsets = [2, 0], sizes = [1, 4], strides = [1, 1]} : vector<49x4xf32> to vector<1x4xf32>
    %43 = vector.shape_cast %42 : vector<1x4xf32> to vector<1x1x4xf32>
    %44 = vector.broadcast %43 : vector<1x1x4xf32> to vector<16x16x4xf32>
    %45 = arith.mulf %41, %44 : vector<16x16x4xf32>
    %46 = arith.addf %38, %45 : vector<16x16x4xf32>
    %cst_16 = arith.constant 0.000000e+00 : f32
    %47 = vector.broadcast %cst_16 : f32 to vector<3x16x4xf32>
    %48 = vector.extract_strided_slice %1 {offsets = [0, 0, 0], sizes = [13, 16, 4], strides = [1, 1, 1]} : vector<16x16x4xf32> to vector<13x16x4xf32>
    %49 = tpu.concatenate %47, %48 in 0 : vector<3x16x4xf32>, vector<13x16x4xf32> -> vector<16x16x4xf32>
    %50 = vector.extract_strided_slice %2 {offsets = [3, 0], sizes = [1, 4], strides = [1, 1]} : vector<49x4xf32> to vector<1x4xf32>
    %51 = vector.shape_cast %50 : vector<1x4xf32> to vector<1x1x4xf32>
    %52 = vector.broadcast %51 : vector<1x1x4xf32> to vector<16x16x4xf32>
    %53 = arith.mulf %49, %52 : vector<16x16x4xf32>
    %54 = arith.addf %46, %53 : vector<16x16x4xf32>
    %cst_17 = arith.constant 0.000000e+00 : f32
    %55 = vector.broadcast %cst_17 : f32 to vector<3x16x4xf32>
    %56 = vector.extract_strided_slice %15 {offsets = [0, 0, 0], sizes = [13, 16, 4], strides = [1, 1, 1]} : vector<16x16x4xf32> to vector<13x16x4xf32>
    %57 = tpu.concatenate %55, %56 in 0 : vector<3x16x4xf32>, vector<13x16x4xf32> -> vector<16x16x4xf32>
    %58 = vector.extract_strided_slice %2 {offsets = [4, 0], sizes = [1, 4], strides = [1, 1]} : vector<49x4xf32> to vector<1x4xf32>
    %59 = vector.shape_cast %58 : vector<1x4xf32> to vector<1x1x4xf32>
    %60 = vector.broadcast %59 : vector<1x1x4xf32> to vector<16x16x4xf32>
    %61 = arith.mulf %57, %60 : vector<16x16x4xf32>
    %62 = arith.addf %54, %61 : vector<16x16x4xf32>
    %cst_18 = arith.constant 0.000000e+00 : f32
    %63 = vector.broadcast %cst_18 : f32 to vector<3x16x4xf32>
    %64 = vector.extract_strided_slice %18 {offsets = [0, 0, 0], sizes = [13, 16, 4], strides = [1, 1, 1]} : vector<16x16x4xf32> to vector<13x16x4xf32>
    %65 = tpu.concatenate %63, %64 in 0 : vector<3x16x4xf32>, vector<13x16x4xf32> -> vector<16x16x4xf32>
    %66 = vector.extract_strided_slice %2 {offsets = [5, 0], sizes = [1, 4], strides = [1, 1]} : vector<49x4xf32> to vector<1x4xf32>
    %67 = vector.shape_cast %66 : vector<1x4xf32> to vector<1x1x4xf32>
    %68 = vector.broadcast %67 : vector<1x1x4xf32> to vector<16x16x4xf32>
    %69 = arith.mulf %65, %68 : vector<16x16x4xf32>
    %70 = arith.addf %62, %69 : vector<16x16x4xf32>
    %cst_19 = arith.constant 0.000000e+00 : f32
    %71 = vector.broadcast %cst_19 : f32 to vector<3x16x4xf32>
    %72 = vector.extract_strided_slice %21 {offsets = [0, 0, 0], sizes = [13, 16, 4], strides = [1, 1, 1]} : vector<16x16x4xf32> to vector<13x16x4xf32>
    %73 = tpu.concatenate %71, %72 in 0 : vector<3x16x4xf32>, vector<13x16x4xf32> -> vector<16x16x4xf32>
    %74 = vector.extract_strided_slice %2 {offsets = [6, 0], sizes = [1, 4], strides = [1, 1]} : vector<49x4xf32> to vector<1x4xf32>
    %75 = vector.shape_cast %74 : vector<1x4xf32> to vector<1x1x4xf32>
    %76 = vector.broadcast %75 : vector<1x1x4xf32> to vector<16x16x4xf32>
    %77 = arith.mulf %73, %76 : vector<16x16x4xf32>
    %78 = arith.addf %70, %77 : vector<16x16x4xf32>
    %cst_20 = arith.constant 0.000000e+00 : f32
    %79 = vector.broadcast %cst_20 : f32 to vector<2x16x4xf32>
    %80 = vector.extract_strided_slice %6 {offsets = [0, 0, 0], sizes = [14, 16, 4], strides = [1, 1, 1]} : vector<16x16x4xf32> to vector<14x16x4xf32>
    %81 = tpu.concatenate %79, %80 in 0 : vector<2x16x4xf32>, vector<14x16x4xf32> -> vector<16x16x4xf32>
    %82 = vector.extract_strided_slice %2 {offsets = [7, 0], sizes = [1, 4], strides = [1, 1]} : vector<49x4xf32> to vector<1x4xf32>
    %83 = vector.shape_cast %82 : vector<1x4xf32> to vector<1x1x4xf32>
    %84 = vector.broadcast %83 : vector<1x1x4xf32> to vector<16x16x4xf32>
    %85 = arith.mulf %81, %84 : vector<16x16x4xf32>
    %86 = arith.addf %78, %85 : vector<16x16x4xf32>
    %cst_21 = arith.constant 0.000000e+00 : f32
    %87 = vector.broadcast %cst_21 : f32 to vector<2x16x4xf32>
    %88 = vector.extract_strided_slice %9 {offsets = [0, 0, 0], sizes = [14, 16, 4], strides = [1, 1, 1]} : vector<16x16x4xf32> to vector<14x16x4xf32>
    %89 = tpu.concatenate %87, %88 in 0 : vector<2x16x4xf32>, vector<14x16x4xf32> -> vector<16x16x4xf32>
    %90 = vector.extract_strided_slice %2 {offsets = [8, 0], sizes = [1, 4], strides = [1, 1]} : vector<49x4xf32> to vector<1x4xf32>
    %91 = vector.shape_cast %90 : vector<1x4xf32> to vector<1x1x4xf32>
    %92 = vector.broadcast %91 : vector<1x1x4xf32> to vector<16x16x4xf32>
    %93 = arith.mulf %89, %92 : vector<16x16x4xf32>
    %94 = arith.addf %86, %93 : vector<16x16x4xf32>
    %cst_22 = arith.constant 0.000000e+00 : f32
    %95 = vector.broadcast %cst_22 : f32 to vector<2x16x4xf32>
    %96 = vector.extract_strided_slice %12 {offsets = [0, 0, 0], sizes = [14, 16, 4], strides = [1, 1, 1]} : vector<16x16x4xf32> to vector<14x16x4xf32>
    %97 = tpu.concatenate %95, %96 in 0 : vector<2x16x4xf32>, vector<14x16x4xf32> -> vector<16x16x4xf32>
    %98 = vector.extract_strided_slice %2 {offsets = [9, 0], sizes = [1, 4], strides = [1, 1]} : vector<49x4xf32> to vector<1x4xf32>
    %99 = vector.shape_cast %98 : vector<1x4xf32> to vector<1x1x4xf32>
    %100 = vector.broadcast %99 : vector<1x1x4xf32> to vector<16x16x4xf32>
    %101 = arith.mulf %97, %100 : vector<16x16x4xf32>
    %102 = arith.addf %94, %101 : vector<16x16x4xf32>
    %cst_23 = arith.constant 0.000000e+00 : f32
    %103 = vector.broadcast %cst_23 : f32 to vector<2x16x4xf32>
    %104 = vector.extract_strided_slice %1 {offsets = [0, 0, 0], sizes = [14, 16, 4], strides = [1, 1, 1]} : vector<16x16x4xf32> to vector<14x16x4xf32>
    %105 = tpu.concatenate %103, %104 in 0 : vector<2x16x4xf32>, vector<14x16x4xf32> -> vector<16x16x4xf32>
    %106 = vector.extract_strided_slice %2 {offsets = [10, 0], sizes = [1, 4], strides = [1, 1]} : vector<49x4xf32> to vector<1x4xf32>
    %107 = vector.shape_cast %106 : vector<1x4xf32> to vector<1x1x4xf32>
    %108 = vector.broadcast %107 : vector<1x1x4xf32> to vector<16x16x4xf32>
    %109 = arith.mulf %105, %108 : vector<16x16x4xf32>
    %110 = arith.addf %102, %109 : vector<16x16x4xf32>
    %cst_24 = arith.constant 0.000000e+00 : f32
    %111 = vector.broadcast %cst_24 : f32 to vector<2x16x4xf32>
    %112 = vector.extract_strided_slice %15 {offsets = [0, 0, 0], sizes = [14, 16, 4], strides = [1, 1, 1]} : vector<16x16x4xf32> to vector<14x16x4xf32>
    %113 = tpu.concatenate %111, %112 in 0 : vector<2x16x4xf32>, vector<14x16x4xf32> -> vector<16x16x4xf32>
    %114 = vector.extract_strided_slice %2 {offsets = [11, 0], sizes = [1, 4], strides = [1, 1]} : vector<49x4xf32> to vector<1x4xf32>
    %115 = vector.shape_cast %114 : vector<1x4xf32> to vector<1x1x4xf32>
    %116 = vector.broadcast %115 : vector<1x1x4xf32> to vector<16x16x4xf32>
    %117 = arith.mulf %113, %116 : vector<16x16x4xf32>
    %118 = arith.addf %110, %117 : vector<16x16x4xf32>
    %cst_25 = arith.constant 0.000000e+00 : f32
    %119 = vector.broadcast %cst_25 : f32 to vector<2x16x4xf32>
    %120 = vector.extract_strided_slice %18 {offsets = [0, 0, 0], sizes = [14, 16, 4], strides = [1, 1, 1]} : vector<16x16x4xf32> to vector<14x16x4xf32>
    %121 = tpu.concatenate %119, %120 in 0 : vector<2x16x4xf32>, vector<14x16x4xf32> -> vector<16x16x4xf32>
    %122 = vector.extract_strided_slice %2 {offsets = [12, 0], sizes = [1, 4], strides = [1, 1]} : vector<49x4xf32> to vector<1x4xf32>
    %123 = vector.shape_cast %122 : vector<1x4xf32> to vector<1x1x4xf32>
    %124 = vector.broadcast %123 : vector<1x1x4xf32> to vector<16x16x4xf32>
    %125 = arith.mulf %121, %124 : vector<16x16x4xf32>
    %126 = arith.addf %118, %125 : vector<16x16x4xf32>
    %cst_26 = arith.constant 0.000000e+00 : f32
    %127 = vector.broadcast %cst_26 : f32 to vector<2x16x4xf32>
    %128 = vector.extract_strided_slice %21 {offsets = [0, 0, 0], sizes = [14, 16, 4], strides = [1, 1, 1]} : vector<16x16x4xf32> to vector<14x16x4xf32>
    %129 = tpu.concatenate %127, %128 in 0 : vector<2x16x4xf32>, vector<14x16x4xf32> -> vector<16x16x4xf32>
    %130 = vector.extract_strided_slice %2 {offsets = [13, 0], sizes = [1, 4], strides = [1, 1]} : vector<49x4xf32> to vector<1x4xf32>
    %131 = vector.shape_cast %130 : vector<1x4xf32> to vector<1x1x4xf32>
    %132 = vector.broadcast %131 : vector<1x1x4xf32> to vector<16x16x4xf32>
    %133 = arith.mulf %129, %132 : vector<16x16x4xf32>
    %134 = arith.addf %126, %133 : vector<16x16x4xf32>
    %cst_27 = arith.constant 0.000000e+00 : f32
    %135 = vector.broadcast %cst_27 : f32 to vector<1x16x4xf32>
    %136 = vector.extract_strided_slice %6 {offsets = [0, 0, 0], sizes = [15, 16, 4], strides = [1, 1, 1]} : vector<16x16x4xf32> to vector<15x16x4xf32>
    %137 = tpu.concatenate %135, %136 in 0 : vector<1x16x4xf32>, vector<15x16x4xf32> -> vector<16x16x4xf32>
    %138 = vector.extract_strided_slice %2 {offsets = [14, 0], sizes = [1, 4], strides = [1, 1]} : vector<49x4xf32> to vector<1x4xf32>
    %139 = vector.shape_cast %138 : vector<1x4xf32> to vector<1x1x4xf32>
    %140 = vector.broadcast %139 : vector<1x1x4xf32> to vector<16x16x4xf32>
    %141 = arith.mulf %137, %140 : vector<16x16x4xf32>
    %142 = arith.addf %134, %141 : vector<16x16x4xf32>
    %cst_28 = arith.constant 0.000000e+00 : f32
    %143 = vector.broadcast %cst_28 : f32 to vector<1x16x4xf32>
    %144 = vector.extract_strided_slice %9 {offsets = [0, 0, 0], sizes = [15, 16, 4], strides = [1, 1, 1]} : vector<16x16x4xf32> to vector<15x16x4xf32>
    %145 = tpu.concatenate %143, %144 in 0 : vector<1x16x4xf32>, vector<15x16x4xf32> -> vector<16x16x4xf32>
    %146 = vector.extract_strided_slice %2 {offsets = [15, 0], sizes = [1, 4], strides = [1, 1]} : vector<49x4xf32> to vector<1x4xf32>
    %147 = vector.shape_cast %146 : vector<1x4xf32> to vector<1x1x4xf32>
    %148 = vector.broadcast %147 : vector<1x1x4xf32> to vector<16x16x4xf32>
    %149 = arith.mulf %145, %148 : vector<16x16x4xf32>
    %150 = arith.addf %142, %149 : vector<16x16x4xf32>
    %cst_29 = arith.constant 0.000000e+00 : f32
    %151 = vector.broadcast %cst_29 : f32 to vector<1x16x4xf32>
    %152 = vector.extract_strided_slice %12 {offsets = [0, 0, 0], sizes = [15, 16, 4], strides = [1, 1, 1]} : vector<16x16x4xf32> to vector<15x16x4xf32>
    %153 = tpu.concatenate %151, %152 in 0 : vector<1x16x4xf32>, vector<15x16x4xf32> -> vector<16x16x4xf32>
    %154 = vector.extract_strided_slice %2 {offsets = [16, 0], sizes = [1, 4], strides = [1, 1]} : vector<49x4xf32> to vector<1x4xf32>
    %155 = vector.shape_cast %154 : vector<1x4xf32> to vector<1x1x4xf32>
    %156 = vector.broadcast %155 : vector<1x1x4xf32> to vector<16x16x4xf32>
    %157 = arith.mulf %153, %156 : vector<16x16x4xf32>
    %158 = arith.addf %150, %157 : vector<16x16x4xf32>
    %cst_30 = arith.constant 0.000000e+00 : f32
    %159 = vector.broadcast %cst_30 : f32 to vector<1x16x4xf32>
    %160 = vector.extract_strided_slice %1 {offsets = [0, 0, 0], sizes = [15, 16, 4], strides = [1, 1, 1]} : vector<16x16x4xf32> to vector<15x16x4xf32>
    %161 = tpu.concatenate %159, %160 in 0 : vector<1x16x4xf32>, vector<15x16x4xf32> -> vector<16x16x4xf32>
    %162 = vector.extract_strided_slice %2 {offsets = [17, 0], sizes = [1, 4], strides = [1, 1]} : vector<49x4xf32> to vector<1x4xf32>
    %163 = vector.shape_cast %162 : vector<1x4xf32> to vector<1x1x4xf32>
    %164 = vector.broadcast %163 : vector<1x1x4xf32> to vector<16x16x4xf32>
    %165 = arith.mulf %161, %164 : vector<16x16x4xf32>
    %166 = arith.addf %158, %165 : vector<16x16x4xf32>
    %cst_31 = arith.constant 0.000000e+00 : f32
    %167 = vector.broadcast %cst_31 : f32 to vector<1x16x4xf32>
    %168 = vector.extract_strided_slice %15 {offsets = [0, 0, 0], sizes = [15, 16, 4], strides = [1, 1, 1]} : vector<16x16x4xf32> to vector<15x16x4xf32>
    %169 = tpu.concatenate %167, %168 in 0 : vector<1x16x4xf32>, vector<15x16x4xf32> -> vector<16x16x4xf32>
    %170 = vector.extract_strided_slice %2 {offsets = [18, 0], sizes = [1, 4], strides = [1, 1]} : vector<49x4xf32> to vector<1x4xf32>
    %171 = vector.shape_cast %170 : vector<1x4xf32> to vector<1x1x4xf32>
    %172 = vector.broadcast %171 : vector<1x1x4xf32> to vector<16x16x4xf32>
    %173 = arith.mulf %169, %172 : vector<16x16x4xf32>
    %174 = arith.addf %166, %173 : vector<16x16x4xf32>
    %cst_32 = arith.constant 0.000000e+00 : f32
    %175 = vector.broadcast %cst_32 : f32 to vector<1x16x4xf32>
    %176 = vector.extract_strided_slice %18 {offsets = [0, 0, 0], sizes = [15, 16, 4], strides = [1, 1, 1]} : vector<16x16x4xf32> to vector<15x16x4xf32>
    %177 = tpu.concatenate %175, %176 in 0 : vector<1x16x4xf32>, vector<15x16x4xf32> -> vector<16x16x4xf32>
    %178 = vector.extract_strided_slice %2 {offsets = [19, 0], sizes = [1, 4], strides = [1, 1]} : vector<49x4xf32> to vector<1x4xf32>
    %179 = vector.shape_cast %178 : vector<1x4xf32> to vector<1x1x4xf32>
    %180 = vector.broadcast %179 : vector<1x1x4xf32> to vector<16x16x4xf32>
    %181 = arith.mulf %177, %180 : vector<16x16x4xf32>
    %182 = arith.addf %174, %181 : vector<16x16x4xf32>
    %cst_33 = arith.constant 0.000000e+00 : f32
    %183 = vector.broadcast %cst_33 : f32 to vector<1x16x4xf32>
    %184 = vector.extract_strided_slice %21 {offsets = [0, 0, 0], sizes = [15, 16, 4], strides = [1, 1, 1]} : vector<16x16x4xf32> to vector<15x16x4xf32>
    %185 = tpu.concatenate %183, %184 in 0 : vector<1x16x4xf32>, vector<15x16x4xf32> -> vector<16x16x4xf32>
    %186 = vector.extract_strided_slice %2 {offsets = [20, 0], sizes = [1, 4], strides = [1, 1]} : vector<49x4xf32> to vector<1x4xf32>
    %187 = vector.shape_cast %186 : vector<1x4xf32> to vector<1x1x4xf32>
    %188 = vector.broadcast %187 : vector<1x1x4xf32> to vector<16x16x4xf32>
    %189 = arith.mulf %185, %188 : vector<16x16x4xf32>
    %190 = arith.addf %182, %189 : vector<16x16x4xf32>
    %191 = vector.extract_strided_slice %2 {offsets = [21, 0], sizes = [1, 4], strides = [1, 1]} : vector<49x4xf32> to vector<1x4xf32>
    %192 = vector.shape_cast %191 : vector<1x4xf32> to vector<1x1x4xf32>
    %193 = vector.broadcast %192 : vector<1x1x4xf32> to vector<16x16x4xf32>
    %194 = arith.mulf %6, %193 : vector<16x16x4xf32>
    %195 = arith.addf %190, %194 : vector<16x16x4xf32>
    %196 = vector.extract_strided_slice %2 {offsets = [22, 0], sizes = [1, 4], strides = [1, 1]} : vector<49x4xf32> to vector<1x4xf32>
    %197 = vector.shape_cast %196 : vector<1x4xf32> to vector<1x1x4xf32>
    %198 = vector.broadcast %197 : vector<1x1x4xf32> to vector<16x16x4xf32>
    %199 = arith.mulf %9, %198 : vector<16x16x4xf32>
    %200 = arith.addf %195, %199 : vector<16x16x4xf32>
    %201 = vector.extract_strided_slice %2 {offsets = [23, 0], sizes = [1, 4], strides = [1, 1]} : vector<49x4xf32> to vector<1x4xf32>
    %202 = vector.shape_cast %201 : vector<1x4xf32> to vector<1x1x4xf32>
    %203 = vector.broadcast %202 : vector<1x1x4xf32> to vector<16x16x4xf32>
    %204 = arith.mulf %12, %203 : vector<16x16x4xf32>
    %205 = arith.addf %200, %204 : vector<16x16x4xf32>
    %206 = vector.extract_strided_slice %2 {offsets = [24, 0], sizes = [1, 4], strides = [1, 1]} : vector<49x4xf32> to vector<1x4xf32>
    %207 = vector.shape_cast %206 : vector<1x4xf32> to vector<1x1x4xf32>
    %208 = vector.broadcast %207 : vector<1x1x4xf32> to vector<16x16x4xf32>
    %209 = arith.mulf %1, %208 : vector<16x16x4xf32>
    %210 = arith.addf %205, %209 : vector<16x16x4xf32>
    %211 = vector.extract_strided_slice %2 {offsets = [25, 0], sizes = [1, 4], strides = [1, 1]} : vector<49x4xf32> to vector<1x4xf32>
    %212 = vector.shape_cast %211 : vector<1x4xf32> to vector<1x1x4xf32>
    %213 = vector.broadcast %212 : vector<1x1x4xf32> to vector<16x16x4xf32>
    %214 = arith.mulf %15, %213 : vector<16x16x4xf32>
    %215 = arith.addf %210, %214 : vector<16x16x4xf32>
    %216 = vector.extract_strided_slice %2 {offsets = [26, 0], sizes = [1, 4], strides = [1, 1]} : vector<49x4xf32> to vector<1x4xf32>
    %217 = vector.shape_cast %216 : vector<1x4xf32> to vector<1x1x4xf32>
    %218 = vector.broadcast %217 : vector<1x1x4xf32> to vector<16x16x4xf32>
    %219 = arith.mulf %18, %218 : vector<16x16x4xf32>
    %220 = arith.addf %215, %219 : vector<16x16x4xf32>
    %221 = vector.extract_strided_slice %2 {offsets = [27, 0], sizes = [1, 4], strides = [1, 1]} : vector<49x4xf32> to vector<1x4xf32>
    %222 = vector.shape_cast %221 : vector<1x4xf32> to vector<1x1x4xf32>
    %223 = vector.broadcast %222 : vector<1x1x4xf32> to vector<16x16x4xf32>
    %224 = arith.mulf %21, %223 : vector<16x16x4xf32>
    %225 = arith.addf %220, %224 : vector<16x16x4xf32>
    %cst_34 = arith.constant 0.000000e+00 : f32
    %226 = vector.broadcast %cst_34 : f32 to vector<1x16x4xf32>
    %227 = vector.extract_strided_slice %6 {offsets = [1, 0, 0], sizes = [15, 16, 4], strides = [1, 1, 1]} : vector<16x16x4xf32> to vector<15x16x4xf32>
    %228 = tpu.concatenate %227, %226 in 0 : vector<15x16x4xf32>, vector<1x16x4xf32> -> vector<16x16x4xf32>
    %229 = vector.extract_strided_slice %2 {offsets = [28, 0], sizes = [1, 4], strides = [1, 1]} : vector<49x4xf32> to vector<1x4xf32>
    %230 = vector.shape_cast %229 : vector<1x4xf32> to vector<1x1x4xf32>
    %231 = vector.broadcast %230 : vector<1x1x4xf32> to vector<16x16x4xf32>
    %232 = arith.mulf %228, %231 : vector<16x16x4xf32>
    %233 = arith.addf %225, %232 : vector<16x16x4xf32>
    %cst_35 = arith.constant 0.000000e+00 : f32
    %234 = vector.broadcast %cst_35 : f32 to vector<1x16x4xf32>
    %235 = vector.extract_strided_slice %9 {offsets = [1, 0, 0], sizes = [15, 16, 4], strides = [1, 1, 1]} : vector<16x16x4xf32> to vector<15x16x4xf32>
    %236 = tpu.concatenate %235, %234 in 0 : vector<15x16x4xf32>, vector<1x16x4xf32> -> vector<16x16x4xf32>
    %237 = vector.extract_strided_slice %2 {offsets = [29, 0], sizes = [1, 4], strides = [1, 1]} : vector<49x4xf32> to vector<1x4xf32>
    %238 = vector.shape_cast %237 : vector<1x4xf32> to vector<1x1x4xf32>
    %239 = vector.broadcast %238 : vector<1x1x4xf32> to vector<16x16x4xf32>
    %240 = arith.mulf %236, %239 : vector<16x16x4xf32>
    %241 = arith.addf %233, %240 : vector<16x16x4xf32>
    %cst_36 = arith.constant 0.000000e+00 : f32
    %242 = vector.broadcast %cst_36 : f32 to vector<1x16x4xf32>
    %243 = vector.extract_strided_slice %12 {offsets = [1, 0, 0], sizes = [15, 16, 4], strides = [1, 1, 1]} : vector<16x16x4xf32> to vector<15x16x4xf32>
    %244 = tpu.concatenate %243, %242 in 0 : vector<15x16x4xf32>, vector<1x16x4xf32> -> vector<16x16x4xf32>
    %245 = vector.extract_strided_slice %2 {offsets = [30, 0], sizes = [1, 4], strides = [1, 1]} : vector<49x4xf32> to vector<1x4xf32>
    %246 = vector.shape_cast %245 : vector<1x4xf32> to vector<1x1x4xf32>
    %247 = vector.broadcast %246 : vector<1x1x4xf32> to vector<16x16x4xf32>
    %248 = arith.mulf %244, %247 : vector<16x16x4xf32>
    %249 = arith.addf %241, %248 : vector<16x16x4xf32>
    %cst_37 = arith.constant 0.000000e+00 : f32
    %250 = vector.broadcast %cst_37 : f32 to vector<1x16x4xf32>
    %251 = vector.extract_strided_slice %1 {offsets = [1, 0, 0], sizes = [15, 16, 4], strides = [1, 1, 1]} : vector<16x16x4xf32> to vector<15x16x4xf32>
    %252 = tpu.concatenate %251, %250 in 0 : vector<15x16x4xf32>, vector<1x16x4xf32> -> vector<16x16x4xf32>
    %253 = vector.extract_strided_slice %2 {offsets = [31, 0], sizes = [1, 4], strides = [1, 1]} : vector<49x4xf32> to vector<1x4xf32>
    %254 = vector.shape_cast %253 : vector<1x4xf32> to vector<1x1x4xf32>
    %255 = vector.broadcast %254 : vector<1x1x4xf32> to vector<16x16x4xf32>
    %256 = arith.mulf %252, %255 : vector<16x16x4xf32>
    %257 = arith.addf %249, %256 : vector<16x16x4xf32>
    %cst_38 = arith.constant 0.000000e+00 : f32
    %258 = vector.broadcast %cst_38 : f32 to vector<1x16x4xf32>
    %259 = vector.extract_strided_slice %15 {offsets = [1, 0, 0], sizes = [15, 16, 4], strides = [1, 1, 1]} : vector<16x16x4xf32> to vector<15x16x4xf32>
    %260 = tpu.concatenate %259, %258 in 0 : vector<15x16x4xf32>, vector<1x16x4xf32> -> vector<16x16x4xf32>
    %261 = vector.extract_strided_slice %2 {offsets = [32, 0], sizes = [1, 4], strides = [1, 1]} : vector<49x4xf32> to vector<1x4xf32>
    %262 = vector.shape_cast %261 : vector<1x4xf32> to vector<1x1x4xf32>
    %263 = vector.broadcast %262 : vector<1x1x4xf32> to vector<16x16x4xf32>
    %264 = arith.mulf %260, %263 : vector<16x16x4xf32>
    %265 = arith.addf %257, %264 : vector<16x16x4xf32>
    %cst_39 = arith.constant 0.000000e+00 : f32
    %266 = vector.broadcast %cst_39 : f32 to vector<1x16x4xf32>
    %267 = vector.extract_strided_slice %18 {offsets = [1, 0, 0], sizes = [15, 16, 4], strides = [1, 1, 1]} : vector<16x16x4xf32> to vector<15x16x4xf32>
    %268 = tpu.concatenate %267, %266 in 0 : vector<15x16x4xf32>, vector<1x16x4xf32> -> vector<16x16x4xf32>
    %269 = vector.extract_strided_slice %2 {offsets = [33, 0], sizes = [1, 4], strides = [1, 1]} : vector<49x4xf32> to vector<1x4xf32>
    %270 = vector.shape_cast %269 : vector<1x4xf32> to vector<1x1x4xf32>
    %271 = vector.broadcast %270 : vector<1x1x4xf32> to vector<16x16x4xf32>
    %272 = arith.mulf %268, %271 : vector<16x16x4xf32>
    %273 = arith.addf %265, %272 : vector<16x16x4xf32>
    %cst_40 = arith.constant 0.000000e+00 : f32
    %274 = vector.broadcast %cst_40 : f32 to vector<1x16x4xf32>
    %275 = vector.extract_strided_slice %21 {offsets = [1, 0, 0], sizes = [15, 16, 4], strides = [1, 1, 1]} : vector<16x16x4xf32> to vector<15x16x4xf32>
    %276 = tpu.concatenate %275, %274 in 0 : vector<15x16x4xf32>, vector<1x16x4xf32> -> vector<16x16x4xf32>
    %277 = vector.extract_strided_slice %2 {offsets = [34, 0], sizes = [1, 4], strides = [1, 1]} : vector<49x4xf32> to vector<1x4xf32>
    %278 = vector.shape_cast %277 : vector<1x4xf32> to vector<1x1x4xf32>
    %279 = vector.broadcast %278 : vector<1x1x4xf32> to vector<16x16x4xf32>
    %280 = arith.mulf %276, %279 : vector<16x16x4xf32>
    %281 = arith.addf %273, %280 : vector<16x16x4xf32>
    %cst_41 = arith.constant 0.000000e+00 : f32
    %282 = vector.broadcast %cst_41 : f32 to vector<2x16x4xf32>
    %283 = vector.extract_strided_slice %6 {offsets = [2, 0, 0], sizes = [14, 16, 4], strides = [1, 1, 1]} : vector<16x16x4xf32> to vector<14x16x4xf32>
    %284 = tpu.concatenate %283, %282 in 0 : vector<14x16x4xf32>, vector<2x16x4xf32> -> vector<16x16x4xf32>
    %285 = vector.extract_strided_slice %2 {offsets = [35, 0], sizes = [1, 4], strides = [1, 1]} : vector<49x4xf32> to vector<1x4xf32>
    %286 = vector.shape_cast %285 : vector<1x4xf32> to vector<1x1x4xf32>
    %287 = vector.broadcast %286 : vector<1x1x4xf32> to vector<16x16x4xf32>
    %288 = arith.mulf %284, %287 : vector<16x16x4xf32>
    %289 = arith.addf %281, %288 : vector<16x16x4xf32>
    %cst_42 = arith.constant 0.000000e+00 : f32
    %290 = vector.broadcast %cst_42 : f32 to vector<2x16x4xf32>
    %291 = vector.extract_strided_slice %9 {offsets = [2, 0, 0], sizes = [14, 16, 4], strides = [1, 1, 1]} : vector<16x16x4xf32> to vector<14x16x4xf32>
    %292 = tpu.concatenate %291, %290 in 0 : vector<14x16x4xf32>, vector<2x16x4xf32> -> vector<16x16x4xf32>
    %293 = vector.extract_strided_slice %2 {offsets = [36, 0], sizes = [1, 4], strides = [1, 1]} : vector<49x4xf32> to vector<1x4xf32>
    %294 = vector.shape_cast %293 : vector<1x4xf32> to vector<1x1x4xf32>
    %295 = vector.broadcast %294 : vector<1x1x4xf32> to vector<16x16x4xf32>
    %296 = arith.mulf %292, %295 : vector<16x16x4xf32>
    %297 = arith.addf %289, %296 : vector<16x16x4xf32>
    %cst_43 = arith.constant 0.000000e+00 : f32
    %298 = vector.broadcast %cst_43 : f32 to vector<2x16x4xf32>
    %299 = vector.extract_strided_slice %12 {offsets = [2, 0, 0], sizes = [14, 16, 4], strides = [1, 1, 1]} : vector<16x16x4xf32> to vector<14x16x4xf32>
    %300 = tpu.concatenate %299, %298 in 0 : vector<14x16x4xf32>, vector<2x16x4xf32> -> vector<16x16x4xf32>
    %301 = vector.extract_strided_slice %2 {offsets = [37, 0], sizes = [1, 4], strides = [1, 1]} : vector<49x4xf32> to vector<1x4xf32>
    %302 = vector.shape_cast %301 : vector<1x4xf32> to vector<1x1x4xf32>
    %303 = vector.broadcast %302 : vector<1x1x4xf32> to vector<16x16x4xf32>
    %304 = arith.mulf %300, %303 : vector<16x16x4xf32>
    %305 = arith.addf %297, %304 : vector<16x16x4xf32>
    %cst_44 = arith.constant 0.000000e+00 : f32
    %306 = vector.broadcast %cst_44 : f32 to vector<2x16x4xf32>
    %307 = vector.extract_strided_slice %1 {offsets = [2, 0, 0], sizes = [14, 16, 4], strides = [1, 1, 1]} : vector<16x16x4xf32> to vector<14x16x4xf32>
    %308 = tpu.concatenate %307, %306 in 0 : vector<14x16x4xf32>, vector<2x16x4xf32> -> vector<16x16x4xf32>
    %309 = vector.extract_strided_slice %2 {offsets = [38, 0], sizes = [1, 4], strides = [1, 1]} : vector<49x4xf32> to vector<1x4xf32>
    %310 = vector.shape_cast %309 : vector<1x4xf32> to vector<1x1x4xf32>
    %311 = vector.broadcast %310 : vector<1x1x4xf32> to vector<16x16x4xf32>
    %312 = arith.mulf %308, %311 : vector<16x16x4xf32>
    %313 = arith.addf %305, %312 : vector<16x16x4xf32>
    %cst_45 = arith.constant 0.000000e+00 : f32
    %314 = vector.broadcast %cst_45 : f32 to vector<2x16x4xf32>
    %315 = vector.extract_strided_slice %15 {offsets = [2, 0, 0], sizes = [14, 16, 4], strides = [1, 1, 1]} : vector<16x16x4xf32> to vector<14x16x4xf32>
    %316 = tpu.concatenate %315, %314 in 0 : vector<14x16x4xf32>, vector<2x16x4xf32> -> vector<16x16x4xf32>
    %317 = vector.extract_strided_slice %2 {offsets = [39, 0], sizes = [1, 4], strides = [1, 1]} : vector<49x4xf32> to vector<1x4xf32>
    %318 = vector.shape_cast %317 : vector<1x4xf32> to vector<1x1x4xf32>
    %319 = vector.broadcast %318 : vector<1x1x4xf32> to vector<16x16x4xf32>
    %320 = arith.mulf %316, %319 : vector<16x16x4xf32>
    %321 = arith.addf %313, %320 : vector<16x16x4xf32>
    %cst_46 = arith.constant 0.000000e+00 : f32
    %322 = vector.broadcast %cst_46 : f32 to vector<2x16x4xf32>
    %323 = vector.extract_strided_slice %18 {offsets = [2, 0, 0], sizes = [14, 16, 4], strides = [1, 1, 1]} : vector<16x16x4xf32> to vector<14x16x4xf32>
    %324 = tpu.concatenate %323, %322 in 0 : vector<14x16x4xf32>, vector<2x16x4xf32> -> vector<16x16x4xf32>
    %325 = vector.extract_strided_slice %2 {offsets = [40, 0], sizes = [1, 4], strides = [1, 1]} : vector<49x4xf32> to vector<1x4xf32>
    %326 = vector.shape_cast %325 : vector<1x4xf32> to vector<1x1x4xf32>
    %327 = vector.broadcast %326 : vector<1x1x4xf32> to vector<16x16x4xf32>
    %328 = arith.mulf %324, %327 : vector<16x16x4xf32>
    %329 = arith.addf %321, %328 : vector<16x16x4xf32>
    %cst_47 = arith.constant 0.000000e+00 : f32
    %330 = vector.broadcast %cst_47 : f32 to vector<2x16x4xf32>
    %331 = vector.extract_strided_slice %21 {offsets = [2, 0, 0], sizes = [14, 16, 4], strides = [1, 1, 1]} : vector<16x16x4xf32> to vector<14x16x4xf32>
    %332 = tpu.concatenate %331, %330 in 0 : vector<14x16x4xf32>, vector<2x16x4xf32> -> vector<16x16x4xf32>
    %333 = vector.extract_strided_slice %2 {offsets = [41, 0], sizes = [1, 4], strides = [1, 1]} : vector<49x4xf32> to vector<1x4xf32>
    %334 = vector.shape_cast %333 : vector<1x4xf32> to vector<1x1x4xf32>
    %335 = vector.broadcast %334 : vector<1x1x4xf32> to vector<16x16x4xf32>
    %336 = arith.mulf %332, %335 : vector<16x16x4xf32>
    %337 = arith.addf %329, %336 : vector<16x16x4xf32>
    %cst_48 = arith.constant 0.000000e+00 : f32
    %338 = vector.broadcast %cst_48 : f32 to vector<3x16x4xf32>
    %339 = vector.extract_strided_slice %6 {offsets = [3, 0, 0], sizes = [13, 16, 4], strides = [1, 1, 1]} : vector<16x16x4xf32> to vector<13x16x4xf32>
    %340 = tpu.concatenate %339, %338 in 0 : vector<13x16x4xf32>, vector<3x16x4xf32> -> vector<16x16x4xf32>
    %341 = vector.extract_strided_slice %2 {offsets = [42, 0], sizes = [1, 4], strides = [1, 1]} : vector<49x4xf32> to vector<1x4xf32>
    %342 = vector.shape_cast %341 : vector<1x4xf32> to vector<1x1x4xf32>
    %343 = vector.broadcast %342 : vector<1x1x4xf32> to vector<16x16x4xf32>
    %344 = arith.mulf %340, %343 : vector<16x16x4xf32>
    %345 = arith.addf %337, %344 : vector<16x16x4xf32>
    %cst_49 = arith.constant 0.000000e+00 : f32
    %346 = vector.broadcast %cst_49 : f32 to vector<3x16x4xf32>
    %347 = vector.extract_strided_slice %9 {offsets = [3, 0, 0], sizes = [13, 16, 4], strides = [1, 1, 1]} : vector<16x16x4xf32> to vector<13x16x4xf32>
    %348 = tpu.concatenate %347, %346 in 0 : vector<13x16x4xf32>, vector<3x16x4xf32> -> vector<16x16x4xf32>
    %349 = vector.extract_strided_slice %2 {offsets = [43, 0], sizes = [1, 4], strides = [1, 1]} : vector<49x4xf32> to vector<1x4xf32>
    %350 = vector.shape_cast %349 : vector<1x4xf32> to vector<1x1x4xf32>
    %351 = vector.broadcast %350 : vector<1x1x4xf32> to vector<16x16x4xf32>
    %352 = arith.mulf %348, %351 : vector<16x16x4xf32>
    %353 = arith.addf %345, %352 : vector<16x16x4xf32>
    %cst_50 = arith.constant 0.000000e+00 : f32
    %354 = vector.broadcast %cst_50 : f32 to vector<3x16x4xf32>
    %355 = vector.extract_strided_slice %12 {offsets = [3, 0, 0], sizes = [13, 16, 4], strides = [1, 1, 1]} : vector<16x16x4xf32> to vector<13x16x4xf32>
    %356 = tpu.concatenate %355, %354 in 0 : vector<13x16x4xf32>, vector<3x16x4xf32> -> vector<16x16x4xf32>
    %357 = vector.extract_strided_slice %2 {offsets = [44, 0], sizes = [1, 4], strides = [1, 1]} : vector<49x4xf32> to vector<1x4xf32>
    %358 = vector.shape_cast %357 : vector<1x4xf32> to vector<1x1x4xf32>
    %359 = vector.broadcast %358 : vector<1x1x4xf32> to vector<16x16x4xf32>
    %360 = arith.mulf %356, %359 : vector<16x16x4xf32>
    %361 = arith.addf %353, %360 : vector<16x16x4xf32>
    %cst_51 = arith.constant 0.000000e+00 : f32
    %362 = vector.broadcast %cst_51 : f32 to vector<3x16x4xf32>
    %363 = vector.extract_strided_slice %1 {offsets = [3, 0, 0], sizes = [13, 16, 4], strides = [1, 1, 1]} : vector<16x16x4xf32> to vector<13x16x4xf32>
    %364 = tpu.concatenate %363, %362 in 0 : vector<13x16x4xf32>, vector<3x16x4xf32> -> vector<16x16x4xf32>
    %365 = vector.extract_strided_slice %2 {offsets = [45, 0], sizes = [1, 4], strides = [1, 1]} : vector<49x4xf32> to vector<1x4xf32>
    %366 = vector.shape_cast %365 : vector<1x4xf32> to vector<1x1x4xf32>
    %367 = vector.broadcast %366 : vector<1x1x4xf32> to vector<16x16x4xf32>
    %368 = arith.mulf %364, %367 : vector<16x16x4xf32>
    %369 = arith.addf %361, %368 : vector<16x16x4xf32>
    %cst_52 = arith.constant 0.000000e+00 : f32
    %370 = vector.broadcast %cst_52 : f32 to vector<3x16x4xf32>
    %371 = vector.extract_strided_slice %15 {offsets = [3, 0, 0], sizes = [13, 16, 4], strides = [1, 1, 1]} : vector<16x16x4xf32> to vector<13x16x4xf32>
    %372 = tpu.concatenate %371, %370 in 0 : vector<13x16x4xf32>, vector<3x16x4xf32> -> vector<16x16x4xf32>
    %373 = vector.extract_strided_slice %2 {offsets = [46, 0], sizes = [1, 4], strides = [1, 1]} : vector<49x4xf32> to vector<1x4xf32>
    %374 = vector.shape_cast %373 : vector<1x4xf32> to vector<1x1x4xf32>
    %375 = vector.broadcast %374 : vector<1x1x4xf32> to vector<16x16x4xf32>
    %376 = arith.mulf %372, %375 : vector<16x16x4xf32>
    %377 = arith.addf %369, %376 : vector<16x16x4xf32>
    %cst_53 = arith.constant 0.000000e+00 : f32
    %378 = vector.broadcast %cst_53 : f32 to vector<3x16x4xf32>
    %379 = vector.extract_strided_slice %18 {offsets = [3, 0, 0], sizes = [13, 16, 4], strides = [1, 1, 1]} : vector<16x16x4xf32> to vector<13x16x4xf32>
    %380 = tpu.concatenate %379, %378 in 0 : vector<13x16x4xf32>, vector<3x16x4xf32> -> vector<16x16x4xf32>
    %381 = vector.extract_strided_slice %2 {offsets = [47, 0], sizes = [1, 4], strides = [1, 1]} : vector<49x4xf32> to vector<1x4xf32>
    %382 = vector.shape_cast %381 : vector<1x4xf32> to vector<1x1x4xf32>
    %383 = vector.broadcast %382 : vector<1x1x4xf32> to vector<16x16x4xf32>
    %384 = arith.mulf %380, %383 : vector<16x16x4xf32>
    %385 = arith.addf %377, %384 : vector<16x16x4xf32>
    %cst_54 = arith.constant 0.000000e+00 : f32
    %386 = vector.broadcast %cst_54 : f32 to vector<3x16x4xf32>
    %387 = vector.extract_strided_slice %21 {offsets = [3, 0, 0], sizes = [13, 16, 4], strides = [1, 1, 1]} : vector<16x16x4xf32> to vector<13x16x4xf32>
    %388 = tpu.concatenate %387, %386 in 0 : vector<13x16x4xf32>, vector<3x16x4xf32> -> vector<16x16x4xf32>
    %389 = vector.extract_strided_slice %2 {offsets = [48, 0], sizes = [1, 4], strides = [1, 1]} : vector<49x4xf32> to vector<1x4xf32>
    %390 = vector.shape_cast %389 : vector<1x4xf32> to vector<1x1x4xf32>
    %391 = vector.broadcast %390 : vector<1x1x4xf32> to vector<16x16x4xf32>
    %392 = arith.mulf %388, %391 : vector<16x16x4xf32>
    %393 = arith.addf %385, %392 : vector<16x16x4xf32>
    %394 = vector.shape_cast %3 : vector<1x4xf32> to vector<1x1x4xf32>
    %395 = vector.broadcast %394 : vector<1x1x4xf32> to vector<16x16x4xf32>
    %396 = arith.addf %393, %395 : vector<16x16x4xf32>
    %cst_55 = arith.constant dense<0.000000e+00> : vector<16x16xf32>
    %397 = vector.multi_reduction <add>, %396, %cst_55 [2] : vector<16x16x4xf32> to vector<16x16xf32>
    %398 = vector.shape_cast %397 : vector<16x16xf32> to vector<16x16x1xf32>
    %cst_56 = arith.constant 4.000000e+00 : f32
    %399 = vector.broadcast %cst_56 : f32 to vector<16x16x1xf32>
    %400 = arith.divf %398, %399 : vector<16x16x1xf32>
    %401 = vector.broadcast %400 : vector<16x16x1xf32> to vector<16x16x4xf32>
    %402 = arith.subf %396, %401 : vector<16x16x4xf32>
    %403 = arith.mulf %402, %402 : vector<16x16x4xf32>
    %cst_57 = arith.constant dense<0.000000e+00> : vector<16x16xf32>
    %404 = vector.multi_reduction <add>, %403, %cst_57 [2] : vector<16x16x4xf32> to vector<16x16xf32>
    %405 = vector.shape_cast %404 : vector<16x16xf32> to vector<16x16x1xf32>
    %cst_58 = arith.constant 4.000000e+00 : f32
    %406 = vector.broadcast %cst_58 : f32 to vector<16x16x1xf32>
    %407 = arith.divf %405, %406 : vector<16x16x1xf32>
    %cst_59 = arith.constant 9.99999974E-6 : f32
    %408 = vector.broadcast %cst_59 : f32 to vector<16x16x1xf32>
    %409 = arith.addf %407, %408 : vector<16x16x1xf32>
    %410 = math.rsqrt %409 : vector<16x16x1xf32>
    %411 = vector.broadcast %410 : vector<16x16x1xf32> to vector<16x16x4xf32>
    %412 = arith.mulf %402, %411 : vector<16x16x4xf32>
    %c0_60 = arith.constant 0 : index
    %c0_61 = arith.constant 0 : index
    %413 = vector.load %arg4[%c0_60, %c0_61] : memref<1x4xf32, #tpu.memory_space<vmem>>, vector<1x4xf32>
    %414 = vector.shape_cast %413 : vector<1x4xf32> to vector<1x1x4xf32>
    %415 = vector.broadcast %414 : vector<1x1x4xf32> to vector<16x16x4xf32>
    %416 = arith.mulf %412, %415 : vector<16x16x4xf32>
    %c0_62 = arith.constant 0 : index
    %c0_63 = arith.constant 0 : index
    %417 = vector.load %arg5[%c0_62, %c0_63] : memref<1x4xf32, #tpu.memory_space<vmem>>, vector<1x4xf32>
    %418 = vector.shape_cast %417 : vector<1x4xf32> to vector<1x1x4xf32>
    %419 = vector.broadcast %418 : vector<1x1x4xf32> to vector<16x16x4xf32>
    %420 = arith.addf %416, %419 : vector<16x16x4xf32>
    %cst_64 = arith.constant 0.000000e+00 : f32
    %421 = vector.broadcast %cst_64 : f32 to vector<16x1x4xf32>
    %422 = vector.extract_strided_slice %420 {offsets = [0, 0, 0], sizes = [16, 15, 4], strides = [1, 1, 1]} : vector<16x16x4xf32> to vector<16x15x4xf32>
    %423 = tpu.concatenate %421, %422 in 1 : vector<16x1x4xf32>, vector<16x15x4xf32> -> vector<16x16x4xf32>
    %cst_65 = arith.constant 0.000000e+00 : f32
    %424 = vector.broadcast %cst_65 : f32 to vector<16x1x4xf32>
    %425 = vector.extract_strided_slice %420 {offsets = [0, 1, 0], sizes = [16, 15, 4], strides = [1, 1, 1]} : vector<16x16x4xf32> to vector<16x15x4xf32>
    %426 = tpu.concatenate %425, %424 in 1 : vector<16x15x4xf32>, vector<16x1x4xf32> -> vector<16x16x4xf32>
    %cst_66 = arith.constant 0.000000e+00 : f32
    %427 = vector.broadcast %cst_66 : f32 to vector<1x16x4xf32>
    %428 = vector.extract_strided_slice %423 {offsets = [0, 0, 0], sizes = [15, 16, 4], strides = [1, 1, 1]} : vector<16x16x4xf32> to vector<15x16x4xf32>
    %429 = tpu.concatenate %427, %428 in 0 : vector<1x16x4xf32>, vector<15x16x4xf32> -> vector<16x16x4xf32>
    %cst_67 = arith.constant 0.000000e+00 : f32
    %430 = vector.broadcast %cst_67 : f32 to vector<1x16x4xf32>
    %431 = vector.extract_strided_slice %420 {offsets = [0, 0, 0], sizes = [15, 16, 4], strides = [1, 1, 1]} : vector<16x16x4xf32> to vector<15x16x4xf32>
    %432 = tpu.concatenate %430, %431 in 0 : vector<1x16x4xf32>, vector<15x16x4xf32> -> vector<16x16x4xf32>
    %cst_68 = arith.constant 0.000000e+00 : f32
    %433 = vector.broadcast %cst_68 : f32 to vector<1x16x4xf32>
    %434 = vector.extract_strided_slice %426 {offsets = [0, 0, 0], sizes = [15, 16, 4], strides = [1, 1, 1]} : vector<16x16x4xf32> to vector<15x16x4xf32>
    %435 = tpu.concatenate %433, %434 in 0 : vector<1x16x4xf32>, vector<15x16x4xf32> -> vector<16x16x4xf32>
    %cst_69 = arith.constant 0.000000e+00 : f32
    %436 = vector.broadcast %cst_69 : f32 to vector<1x16x4xf32>
    %437 = vector.extract_strided_slice %423 {offsets = [1, 0, 0], sizes = [15, 16, 4], strides = [1, 1, 1]} : vector<16x16x4xf32> to vector<15x16x4xf32>
    %438 = tpu.concatenate %437, %436 in 0 : vector<15x16x4xf32>, vector<1x16x4xf32> -> vector<16x16x4xf32>
    %cst_70 = arith.constant 0.000000e+00 : f32
    %439 = vector.broadcast %cst_70 : f32 to vector<1x16x4xf32>
    %440 = vector.extract_strided_slice %420 {offsets = [1, 0, 0], sizes = [15, 16, 4], strides = [1, 1, 1]} : vector<16x16x4xf32> to vector<15x16x4xf32>
    %441 = tpu.concatenate %440, %439 in 0 : vector<15x16x4xf32>, vector<1x16x4xf32> -> vector<16x16x4xf32>
    %cst_71 = arith.constant 0.000000e+00 : f32
    %442 = vector.broadcast %cst_71 : f32 to vector<1x16x4xf32>
    %443 = vector.extract_strided_slice %426 {offsets = [1, 0, 0], sizes = [15, 16, 4], strides = [1, 1, 1]} : vector<16x16x4xf32> to vector<15x16x4xf32>
    %444 = tpu.concatenate %443, %442 in 0 : vector<15x16x4xf32>, vector<1x16x4xf32> -> vector<16x16x4xf32>
    %445 = tpu.concatenate %429, %432, %435, %423, %420, %426, %438, %441, %444 in 2 : vector<16x16x4xf32>, vector<16x16x4xf32>, vector<16x16x4xf32>, vector<16x16x4xf32>, vector<16x16x4xf32>, vector<16x16x4xf32>, vector<16x16x4xf32>, vector<16x16x4xf32>, vector<16x16x4xf32> -> vector<16x16x36xf32>
    %446 = vector.shape_cast %445 : vector<16x16x36xf32> to vector<256x36xf32>
    %447 = arith.truncf %446 : vector<256x36xf32> to vector<256x36xbf16>
    %c0_72 = arith.constant 0 : index
    %c0_73 = arith.constant 0 : index
    %448 = vector.load %arg6[%c0_72, %c0_73] : memref<36x24xbf16, #tpu.memory_space<vmem>>, vector<36x24xbf16>
    %cst_74 = arith.constant dense<0.000000e+00> : vector<256x24xf32>
    %449 = tpu.matmul %447, %448, %cst_74 {dimension_numbers = #tpu.dot_dimension_numbers<[1], [0], [0], [1], [0, 0, 1, 1], [], []>} : vector<256x36xbf16>, vector<36x24xbf16>, vector<256x24xf32> -> vector<256x24xf32>
    %c0_75 = arith.constant 0 : index
    %c0_76 = arith.constant 0 : index
    %450 = vector.load %arg7[%c0_75, %c0_76] : memref<1x24xf32, #tpu.memory_space<vmem>>, vector<1x24xf32>
    %451 = vector.broadcast %450 : vector<1x24xf32> to vector<256x24xf32>
    %452 = arith.addf %449, %451 : vector<256x24xf32>
    %cst_77 = arith.constant 5.000000e-01 : f32
    %453 = vector.broadcast %cst_77 : f32 to vector<256x24xf32>
    %454 = arith.mulf %453, %452 : vector<256x24xf32>
    %cst_78 = arith.constant 4.471500e-02 : f32
    %455 = vector.broadcast %cst_78 : f32 to vector<256x24xf32>
    %456 = arith.mulf %455, %452 : vector<256x24xf32>
    %457 = arith.mulf %456, %452 : vector<256x24xf32>
    %458 = arith.mulf %457, %452 : vector<256x24xf32>
    %459 = arith.addf %452, %458 : vector<256x24xf32>
    %cst_79 = arith.constant 0.797884583 : f32
    %460 = vector.broadcast %cst_79 : f32 to vector<256x24xf32>
    %461 = arith.mulf %460, %459 : vector<256x24xf32>
    %462 = math.tanh %461 : vector<256x24xf32>
    %cst_80 = arith.constant 1.000000e+00 : f32
    %463 = vector.broadcast %cst_80 : f32 to vector<256x24xf32>
    %464 = arith.addf %463, %462 : vector<256x24xf32>
    %465 = arith.mulf %454, %464 : vector<256x24xf32>
    %466 = vector.shape_cast %465 : vector<256x24xf32> to vector<16x16x24xf32>
    %cst_81 = arith.constant 0.000000e+00 : f32
    %467 = vector.broadcast %cst_81 : f32 to vector<16x1x24xf32>
    %468 = vector.extract_strided_slice %466 {offsets = [0, 0, 0], sizes = [16, 15, 24], strides = [1, 1, 1]} : vector<16x16x24xf32> to vector<16x15x24xf32>
    %469 = tpu.concatenate %467, %468 in 1 : vector<16x1x24xf32>, vector<16x15x24xf32> -> vector<16x16x24xf32>
    %cst_82 = arith.constant 0.000000e+00 : f32
    %470 = vector.broadcast %cst_82 : f32 to vector<16x1x24xf32>
    %471 = vector.extract_strided_slice %466 {offsets = [0, 1, 0], sizes = [16, 15, 24], strides = [1, 1, 1]} : vector<16x16x24xf32> to vector<16x15x24xf32>
    %472 = tpu.concatenate %471, %470 in 1 : vector<16x15x24xf32>, vector<16x1x24xf32> -> vector<16x16x24xf32>
    %cst_83 = arith.constant 0.000000e+00 : f32
    %473 = vector.broadcast %cst_83 : f32 to vector<1x16x24xf32>
    %474 = vector.extract_strided_slice %469 {offsets = [0, 0, 0], sizes = [15, 16, 24], strides = [1, 1, 1]} : vector<16x16x24xf32> to vector<15x16x24xf32>
    %475 = tpu.concatenate %473, %474 in 0 : vector<1x16x24xf32>, vector<15x16x24xf32> -> vector<16x16x24xf32>
    %cst_84 = arith.constant 0.000000e+00 : f32
    %476 = vector.broadcast %cst_84 : f32 to vector<1x16x24xf32>
    %477 = vector.extract_strided_slice %466 {offsets = [0, 0, 0], sizes = [15, 16, 24], strides = [1, 1, 1]} : vector<16x16x24xf32> to vector<15x16x24xf32>
    %478 = tpu.concatenate %476, %477 in 0 : vector<1x16x24xf32>, vector<15x16x24xf32> -> vector<16x16x24xf32>
    %cst_85 = arith.constant 0.000000e+00 : f32
    %479 = vector.broadcast %cst_85 : f32 to vector<1x16x24xf32>
    %480 = vector.extract_strided_slice %472 {offsets = [0, 0, 0], sizes = [15, 16, 24], strides = [1, 1, 1]} : vector<16x16x24xf32> to vector<15x16x24xf32>
    %481 = tpu.concatenate %479, %480 in 0 : vector<1x16x24xf32>, vector<15x16x24xf32> -> vector<16x16x24xf32>
    %cst_86 = arith.constant 0.000000e+00 : f32
    %482 = vector.broadcast %cst_86 : f32 to vector<1x16x24xf32>
    %483 = vector.extract_strided_slice %469 {offsets = [1, 0, 0], sizes = [15, 16, 24], strides = [1, 1, 1]} : vector<16x16x24xf32> to vector<15x16x24xf32>
    %484 = tpu.concatenate %483, %482 in 0 : vector<15x16x24xf32>, vector<1x16x24xf32> -> vector<16x16x24xf32>
    %cst_87 = arith.constant 0.000000e+00 : f32
    %485 = vector.broadcast %cst_87 : f32 to vector<1x16x24xf32>
    %486 = vector.extract_strided_slice %466 {offsets = [1, 0, 0], sizes = [15, 16, 24], strides = [1, 1, 1]} : vector<16x16x24xf32> to vector<15x16x24xf32>
    %487 = tpu.concatenate %486, %485 in 0 : vector<15x16x24xf32>, vector<1x16x24xf32> -> vector<16x16x24xf32>
    %cst_88 = arith.constant 0.000000e+00 : f32
    %488 = vector.broadcast %cst_88 : f32 to vector<1x16x24xf32>
    %489 = vector.extract_strided_slice %472 {offsets = [1, 0, 0], sizes = [15, 16, 24], strides = [1, 1, 1]} : vector<16x16x24xf32> to vector<15x16x24xf32>
    %490 = tpu.concatenate %489, %488 in 0 : vector<15x16x24xf32>, vector<1x16x24xf32> -> vector<16x16x24xf32>
    %491 = tpu.concatenate %475, %478, %481, %469, %466, %472, %484, %487, %490, %1 in 2 : vector<16x16x24xf32>, vector<16x16x24xf32>, vector<16x16x24xf32>, vector<16x16x24xf32>, vector<16x16x24xf32>, vector<16x16x24xf32>, vector<16x16x24xf32>, vector<16x16x24xf32>, vector<16x16x24xf32>, vector<16x16x4xf32> -> vector<16x16x220xf32>
    %492 = vector.shape_cast %491 : vector<16x16x220xf32> to vector<256x220xf32>
    %493 = arith.truncf %492 : vector<256x220xf32> to vector<256x220xbf16>
    %c0_89 = arith.constant 0 : index
    %c0_90 = arith.constant 0 : index
    %494 = vector.load %arg8[%c0_89, %c0_90] : memref<220x8xbf16, #tpu.memory_space<vmem>>, vector<220x8xbf16>
    %cst_91 = arith.constant dense<0.000000e+00> : vector<256x8xf32>
    %495 = tpu.matmul %493, %494, %cst_91 {dimension_numbers = #tpu.dot_dimension_numbers<[1], [0], [0], [1], [0, 0, 1, 1], [], []>} : vector<256x220xbf16>, vector<220x8xbf16>, vector<256x8xf32> -> vector<256x8xf32>
    %c0_92 = arith.constant 0 : index
    %c0_93 = arith.constant 0 : index
    %496 = vector.load %arg9[%c0_92, %c0_93] : memref<1x8xf32, #tpu.memory_space<vmem>>, vector<1x8xf32>
    %497 = vector.broadcast %496 : vector<1x8xf32> to vector<256x8xf32>
    %498 = arith.addf %495, %497 : vector<256x8xf32>
    %499 = vector.shape_cast %498 : vector<256x8xf32> to vector<16x16x8xf32>
    %c0_94 = arith.constant 0 : index
    %c0_95 = arith.constant 0 : index
    %c0_96 = arith.constant 0 : index
    %c0_97 = arith.constant 0 : index
    %500 = vector.load %arg10[%c0_94, %c0_95, %c0_96, %c0_97] : memref<1x16x16x8xf32, #tpu.memory_space<vmem>>, vector<1x16x16x8xf32>
    %501 = vector.shape_cast %500 : vector<1x16x16x8xf32> to vector<16x16x8xf32>
    %502 = vector.shape_cast %499 : vector<16x16x8xf32> to vector<1x16x16x8xf32>
    tpu.vector_store %arg10[%c0_94, %c0_95, %c0_96, %c0_97], %502 {strides = array<i32>} : memref<1x16x16x8xf32, #tpu.memory_space<vmem>>, vector<1x16x16x8xf32>,
    return
  }
  func.func @transform_0(%arg0: i32) -> (i32, i32, i32, i32) {
    %c0_i32 = arith.constant 0 : i32
    %c0_i32_0 = arith.constant 0 : i32
    %c0_i32_1 = arith.constant 0 : i32
    %c0_i32_2 = arith.constant 0 : i32
    return %arg0, %c0_i32, %c0_i32_0, %c0_i32_1 : i32, i32, i32, i32
  }
  func.func @transform_1(%arg0: i32) -> (i32, i32) {
    %c0_i32 = arith.constant 0 : i32
    %c0_i32_0 = arith.constant 0 : i32
    %c0_i32_1 = arith.constant 0 : i32
    return %c0_i32, %c0_i32_0 : i32, i32
  }
  func.func @transform_2(%arg0: i32) -> (i32, i32) {
    %c0_i32 = arith.constant 0 : i32
    %c0_i32_0 = arith.constant 0 : i32
    %c0_i32_1 = arith.constant 0 : i32
    return %c0_i32, %c0_i32_0 : i32, i32
  }
  func.func @transform_3(%arg0: i32) -> (i32, i32) {
    %c0_i32 = arith.constant 0 : i32
    %c0_i32_0 = arith.constant 0 : i32
    %c0_i32_1 = arith.constant 0 : i32
    return %c0_i32, %c0_i32_0 : i32, i32
  }
  func.func @transform_4(%arg0: i32) -> (i32, i32) {
    %c0_i32 = arith.constant 0 : i32
    %c0_i32_0 = arith.constant 0 : i32
    %c0_i32_1 = arith.constant 0 : i32
    return %c0_i32, %c0_i32_0 : i32, i32
  }
  func.func @transform_5(%arg0: i32) -> (i32, i32) {
    %c0_i32 = arith.constant 0 : i32
    %c0_i32_0 = arith.constant 0 : i32
    %c0_i32_1 = arith.constant 0 : i32
    return %c0_i32, %c0_i32_0 : i32, i32
  }
  func.func @transform_6(%arg0: i32) -> (i32, i32) {
    %c0_i32 = arith.constant 0 : i32
    %c0_i32_0 = arith.constant 0 : i32
    %c0_i32_1 = arith.constant 0 : i32
    return %c0_i32, %c0_i32_0 : i32, i32
  }
  func.func @transform_7(%arg0: i32) -> (i32, i32) {
    %c0_i32 = arith.constant 0 : i32
    %c0_i32_0 = arith.constant 0 : i32
    %c0_i32_1 = arith.constant 0 : i32
    return %c0_i32, %c0_i32_0 : i32, i32
  }
  func.func @transform_8(%arg0: i32) -> (i32, i32) {
    %c0_i32 = arith.constant 0 : i32
    %c0_i32_0 = arith.constant 0 : i32
    %c0_i32_1 = arith.constant 0 : i32
    return %c0_i32, %c0_i32_0 : i32, i32
  }
  func.func @transform_9(%arg0: i32) -> (i32, i32, i32, i32) {
    %c0_i32 = arith.constant 0 : i32
    %c0_i32_0 = arith.constant 0 : i32
    %c0_i32_1 = arith.constant 0 : i32
    %c0_i32_2 = arith.constant 0 : i32
    return %arg0, %c0_i32, %c0_i32_0, %c0_i32_1 : i32, i32, i32, i32
  }
}

</mosaic_0001>

<llo_original>
// kernel: tpu_custom_call.1
$region0: #{tpu_custom_call.1}
  #allocation0 [shape = 'u32[]', space=smem, size = 0x4, offset = 0x4, fixed_abs, tag = 'smem constant byte address 0x4 - core index']
  #allocation1 [shape = 'u32[144,128]{1,0:T(1,128)}', space=vmem, size = 0x12000, scoped, tag = 'internal scratch']
  %s0 = inlined_call_operand.vmem [shape: f32[2,16,16,4], index: 0, kind: input, shape index: {}]
  %s1 = inlined_call_operand.vmem [shape: f32[49,4], index: 1, kind: input, shape index: {}]
  %s2 = inlined_call_operand.vmem [shape: f32[1,4], index: 2, kind: input, shape index: {}]
  %s3 = inlined_call_operand.vmem [shape: f32[1,4], index: 3, kind: input, shape index: {}]
  %s4 = inlined_call_operand.vmem [shape: f32[1,4], index: 4, kind: input, shape index: {}]
  %s5 = inlined_call_operand.vmem [shape: bf16[36,24], index: 5, kind: input, shape index: {}]
  %s6 = inlined_call_operand.vmem [shape: f32[1,24], index: 6, kind: input, shape index: {}]
  %s7 = inlined_call_operand.vmem [shape: bf16[220,8], index: 7, kind: input, shape index: {}]
  %s8 = inlined_call_operand.vmem [shape: f32[1,8], index: 8, kind: input, shape index: {}]
  %s9 = inlined_call_operand.vmem [shape: f32[2,16,16,8], index: 9, kind: output, shape index: {}]
  %s10 = sld [smem:[#allocation0]]
  $region69: #{tpu_custom_call.1} parent=0
    _
  %s12 = ssub.s32 1, %s10
  %s13 = scalar_select 0, %s12, %s10
  loop: start=0, step=1, limit=4
  $region2: #{tpu_custom_call.1} parent=0 // loop_pre_header
    _
  $region3: #{tpu_custom_call.1} parent=0 // loop_header
    %s15 = sphi 0, %s19
    %p16 = scmp.ge.s32.totalorder %s15, 4
    %s25 = sphi 0, %s27
    %s28 = sphi 0, %s25
    %s29 = sphi 0, %s28
    %s45 = sphi 0, %s29
    %s49 = sphi 0, %s49
    %s51 = sphi 0, %s49
    %s52 = sphi 0, %s51
    %s66 = sphi 0, %s52
    %s70 = sphi 0, %s70
    %s72 = sphi 0, %s70
    %s73 = sphi 0, %s72
    %s87 = sphi 0, %s73
    %s91 = sphi 0, %s91
    %s93 = sphi 0, %s91
    %s94 = sphi 0, %s93
    %s108 = sphi 0, %s94
    %s112 = sphi 0, %s112
    %s114 = sphi 0, %s112
    %s115 = sphi 0, %s114
    %s129 = sphi 0, %s115
    %s133 = sphi 0, %s133
    %s135 = sphi 0, %s133
    %s136 = sphi 0, %s135
    %s150 = sphi 0, %s136
    %s154 = sphi 0, %s154
    %s156 = sphi 0, %s154
    %s157 = sphi 0, %s156
    %s171 = sphi 0, %s157
    %s175 = sphi 0, %s175
    %s177 = sphi 0, %s175
    %s178 = sphi 0, %s177
    %s192 = sphi 0, %s178
    %s196 = sphi 0, %s196
    %s198 = sphi 0, %s196
    %s199 = sphi 0, %s198
    %s213 = sphi 0, %s199
    %s219 = sphi 0, %s221
    %s222 = sphi 0, %s219
    %s223 = sphi 0, %s222
    %s239 = sphi 0, %s223
  $region4: #{tpu_custom_call.1} parent=0 // loop_header_branch
    %18 = sbr.rel (%p16) target = $region8
  $region5: #{tpu_custom_call.1} parent=0 // loop_body
    %s20 = ssub.s32 %s15, 1
    %s21 = ssub.s32 %s15, 2
    %s22 = sadd.s32 %s15, 1
    %s23 = ssub.s32 %s15, %s22
    %p24 = scmp.eq.s32.totalorder %s23, 0
    %s26 = sadd.s32 %s25, 1
    %s27 = scalar_select %p24, %s25, %s26
    %p30 = pneg %p24
    %p31 = scmp.eq.s32.totalorder %s15, 1
    %p32 = por %p30, %p31
    %p33 = scmp.ne.s32.totalorder %s25, %s28
    %p34 = scmp.eq.s32.totalorder %s15, 0
    %p35 = por %p33, %p34
    %p36 = scmp.ne.s32.totalorder %s25, %s28
    %p37 = scmp.eq.s32.totalorder %s20, 1
    %p38 = por %p36, %p37
    %p39 = scmp.ne.s32.totalorder %s28, %s29
    %p40 = scmp.eq.s32.totalorder %s20, 0
    %p41 = por %p39, %p40
    %p42 = scmp.ne.s32.totalorder %s28, %s29
    %p43 = scmp.eq.s32.totalorder %s21, 1
    %p44 = por %p42, %p43
    %p46 = scmp.ne.s32.totalorder %s29, %s45
    %p47 = scmp.eq.s32.totalorder %s21, 0
    %p48 = por %p46, %p47
    %s50 = sadd.s32 %s49, 1
    %p53 = scmp.eq.s32.totalorder %s15, 1
    %p54 = scmp.ne.s32.totalorder %s49, %s51
    %p55 = scmp.eq.s32.totalorder %s15, 0
    %p56 = por %p54, %p55
    %p57 = scmp.ne.s32.totalorder %s49, %s51
    %p58 = scmp.eq.s32.totalorder %s20, 1
    %p59 = por %p57, %p58
    %p60 = scmp.ne.s32.totalorder %s51, %s52
    %p61 = scmp.eq.s32.totalorder %s20, 0
    %p62 = por %p60, %p61
    %p63 = scmp.ne.s32.totalorder %s51, %s52
    %p64 = scmp.eq.s32.totalorder %s21, 1
    %p65 = por %p63, %p64
    %p67 = scmp.ne.s32.totalorder %s52, %s66
    %p68 = scmp.eq.s32.totalorder %s21, 0
    %p69 = por %p67, %p68
    %s71 = sadd.s32 %s70, 1
    %p74 = scmp.eq.s32.totalorder %s15, 1
    %p75 = scmp.ne.s32.totalorder %s70, %s72
    %p76 = scmp.eq.s32.totalorder %s15, 0
    %p77 = por %p75, %p76
    %p78 = scmp.ne.s32.totalorder %s70, %s72
    %p79 = scmp.eq.s32.totalorder %s20, 1
    %p80 = por %p78, %p79
    %p81 = scmp.ne.s32.totalorder %s72, %s73
    %p82 = scmp.eq.s32.totalorder %s20, 0
    %p83 = por %p81, %p82
    %p84 = scmp.ne.s32.totalorder %s72, %s73
    %p85 = scmp.eq.s32.totalorder %s21, 1
    %p86 = por %p84, %p85
    %p88 = scmp.ne.s32.totalorder %s73, %s87
    %p89 = scmp.eq.s32.totalorder %s21, 0
    %p90 = por %p88, %p89
    %s92 = sadd.s32 %s91, 1
    %p95 = scmp.eq.s32.totalorder %s15, 1
    %p96 = scmp.ne.s32.totalorder %s91, %s93
    %p97 = scmp.eq.s32.totalorder %s15, 0
    %p98 = por %p96, %p97
    %p99 = scmp.ne.s32.totalorder %s91, %s93
    %p100 = scmp.eq.s32.totalorder %s20, 1
    %p101 = por %p99, %p100
    %p102 = scmp.ne.s32.totalorder %s93, %s94
    %p103 = scmp.eq.s32.totalorder %s20, 0
    %p104 = por %p102, %p103
    %p105 = scmp.ne.s32.totalorder %s93, %s94
    %p106 = scmp.eq.s32.totalorder %s21, 1
    %p107 = por %p105, %p106
    %p109 = scmp.ne.s32.totalorder %s94, %s108
    %p110 = scmp.eq.s32.totalorder %s21, 0
    %p111 = por %p109, %p110
    %s113 = sadd.s32 %s112, 1
    %p116 = scmp.eq.s32.totalorder %s15, 1
    %p117 = scmp.ne.s32.totalorder %s112, %s114
    %p118 = scmp.eq.s32.totalorder %s15, 0
    %p119 = por %p117, %p118
    %p120 = scmp.ne.s32.totalorder %s112, %s114
    %p121 = scmp.eq.s32.totalorder %s20, 1
    %p122 = por %p120, %p121
    %p123 = scmp.ne.s32.totalorder %s114, %s115
    %p124 = scmp.eq.s32.totalorder %s20, 0
    %p125 = por %p123, %p124
    %p126 = scmp.ne.s32.totalorder %s114, %s115
    %p127 = scmp.eq.s32.totalorder %s21, 1
    %p128 = por %p126, %p127
    %p130 = scmp.ne.s32.totalorder %s115, %s129
    %p131 = scmp.eq.s32.totalorder %s21, 0
    %p132 = por %p130, %p131
    %s134 = sadd.s32 %s133, 1
    %p137 = scmp.eq.s32.totalorder %s15, 1
    %p138 = scmp.ne.s32.totalorder %s133, %s135
    %p139 = scmp.eq.s32.totalorder %s15, 0
    %p140 = por %p138, %p139
    %p141 = scmp.ne.s32.totalorder %s133, %s135
    %p142 = scmp.eq.s32.totalorder %s20, 1
    %p143 = por %p141, %p142
    %p144 = scmp.ne.s32.totalorder %s135, %s136
    %p145 = scmp.eq.s32.totalorder %s20, 0
    %p146 = por %p144, %p145
    %p147 = scmp.ne.s32.totalorder %s135, %s136
    %p148 = scmp.eq.s32.totalorder %s21, 1
    %p149 = por %p147, %p148
    %p151 = scmp.ne.s32.totalorder %s136, %s150
    %p152 = scmp.eq.s32.totalorder %s21, 0
    %p153 = por %p151, %p152
    %s155 = sadd.s32 %s154, 1
    %p158 = scmp.eq.s32.totalorder %s15, 1
    %p159 = scmp.ne.s32.totalorder %s154, %s156
    %p160 = scmp.eq.s32.totalorder %s15, 0
    %p161 = por %p159, %p160
    %p162 = scmp.ne.s32.totalorder %s154, %s156
    %p163 = scmp.eq.s32.totalorder %s20, 1
    %p164 = por %p162, %p163
    %p165 = scmp.ne.s32.totalorder %s156, %s157
    %p166 = scmp.eq.s32.totalorder %s20, 0
    %p167 = por %p165, %p166
    %p168 = scmp.ne.s32.totalorder %s156, %s157
    %p169 = scmp.eq.s32.totalorder %s21, 1
    %p170 = por %p168, %p169
    %p172 = scmp.ne.s32.totalorder %s157, %s171
    %p173 = scmp.eq.s32.totalorder %s21, 0
    %p174 = por %p172, %p173
    %s176 = sadd.s32 %s175, 1
    %p179 = scmp.eq.s32.totalorder %s15, 1
    %p180 = scmp.ne.s32.totalorder %s175, %s177
    %p181 = scmp.eq.s32.totalorder %s15, 0
    %p182 = por %p180, %p181
    %p183 = scmp.ne.s32.totalorder %s175, %s177
    %p184 = scmp.eq.s32.totalorder %s20, 1
    %p185 = por %p183, %p184
    %p186 = scmp.ne.s32.totalorder %s177, %s178
    %p187 = scmp.eq.s32.totalorder %s20, 0
    %p188 = por %p186, %p187
    %p189 = scmp.ne.s32.totalorder %s177, %s178
    %p190 = scmp.eq.s32.totalorder %s21, 1
    %p191 = por %p189, %p190
    %p193 = scmp.ne.s32.totalorder %s178, %s192
    %p194 = scmp.eq.s32.totalorder %s21, 0
    %p195 = por %p193, %p194
    %s197 = sadd.s32 %s196, 1
    %p200 = scmp.eq.s32.totalorder %s15, 1
    %p201 = scmp.ne.s32.totalorder %s196, %s198
    %p202 = scmp.eq.s32.totalorder %s15, 0
    %p203 = por %p201, %p202
    %p204 = scmp.ne.s32.totalorder %s196, %s198
    %p205 = scmp.eq.s32.totalorder %s20, 1
    %p206 = por %p204, %p205
    %p207 = scmp.ne.s32.totalorder %s198, %s199
    %p208 = scmp.eq.s32.totalorder %s20, 0
    %p209 = por %p207, %p208
    %p210 = scmp.ne.s32.totalorder %s198, %s199
    %p211 = scmp.eq.s32.totalorder %s21, 1
    %p212 = por %p210, %p211
    %p214 = scmp.ne.s32.totalorder %s199, %s213
    %p215 = scmp.eq.s32.totalorder %s21, 0
    %p216 = por %p214, %p215
    %s217 = ssub.s32 %s15, %s22
    %p218 = scmp.eq.s32.totalorder %s217, 0
    %s220 = sadd.s32 %s219, 1
    %s221 = scalar_select %p218, %s219, %s220
    %p224 = pneg %p218
    %p225 = scmp.eq.s32.totalorder %s15, 1
    %p226 = por %p224, %p225
    %p227 = scmp.ne.s32.totalorder %s219, %s222
    %p228 = scmp.eq.s32.totalorder %s15, 0
    %p229 = por %p227, %p228
    %p230 = scmp.ne.s32.totalorder %s219, %s222
    %p231 = scmp.eq.s32.totalorder %s20, 1
    %p232 = por %p230, %p231
    %p233 = scmp.ne.s32.totalorder %s222, %s223
    %p234 = scmp.eq.s32.totalorder %s20, 0
    %p235 = por %p233, %p234
    %p236 = scmp.ne.s32.totalorder %s222, %s223
    %p237 = scmp.eq.s32.totalorder %s21, 1
    %p238 = por %p236, %p237
    %p240 = scmp.ne.s32.totalorder %s223, %s239
    %p241 = scmp.eq.s32.totalorder %s21, 0
    %p242 = por %p240, %p241
    %p243 = scmp.le.s32.totalorder 1, %s15
    %p244 = scmp.lt.s32.totalorder %s15, 3
    %p245 = pnand %p243, %p244
    %p246 = pneg %p245
    // Predicated region
    $region9: #{tpu_custom_call.1} parent=5 // pred_check
      _
    $region10: #{tpu_custom_call.1} parent=5 // pred_check_branch
      %248 = sbr.rel (%p245) target = $region12
    $region11: #{tpu_custom_call.1} parent=5 // pred_region
      %s249 = ssub.s32 %s15, 1
      // Predicated region
      $region13: #{tpu_custom_call.1} parent=11 // pred_check
        %p250 = pneg %p62
      $region14: #{tpu_custom_call.1} parent=11 // pred_check_branch
        %252 = sbr.rel (%p250) target = $region16
      $region15: #{tpu_custom_call.1} parent=11 // pred_region
        _
      $region16: #{tpu_custom_call.1} parent=11 // pred_fallthru
        _
      // Predicated region
      $region17: #{tpu_custom_call.1} parent=11 // pred_check
        %p253 = pneg %p83
      $region18: #{tpu_custom_call.1} parent=11 // pred_check_branch
        %255 = sbr.rel (%p253) target = $region20
      $region19: #{tpu_custom_call.1} parent=11 // pred_region
        _
      $region20: #{tpu_custom_call.1} parent=11 // pred_fallthru
        _
      // Predicated region
      $region21: #{tpu_custom_call.1} parent=11 // pred_check
        %p256 = pneg %p104
      $region22: #{tpu_custom_call.1} parent=11 // pred_check_branch
        %258 = sbr.rel (%p256) target = $region24
      $region23: #{tpu_custom_call.1} parent=11 // pred_region
        _
      $region24: #{tpu_custom_call.1} parent=11 // pred_fallthru
        _
      // Predicated region
      $region25: #{tpu_custom_call.1} parent=11 // pred_check
        %p259 = pneg %p125
      $region26: #{tpu_custom_call.1} parent=11 // pred_check_branch
        %261 = sbr.rel (%p259) target = $region28
      $region27: #{tpu_custom_call.1} parent=11 // pred_region
        _
      $region28: #{tpu_custom_call.1} parent=11 // pred_fallthru
        _
      // Predicated region
      $region29: #{tpu_custom_call.1} parent=11 // pred_check
        %p262 = pneg %p146
      $region30: #{tpu_custom_call.1} parent=11 // pred_check_branch
        %264 = sbr.rel (%p262) target = $region32
      $region31: #{tpu_custom_call.1} parent=11 // pred_region
        _
      $region32: #{tpu_custom_call.1} parent=11 // pred_fallthru
        _
      // Predicated region
      $region33: #{tpu_custom_call.1} parent=11 // pred_check
        %p265 = pneg %p167
      $region34: #{tpu_custom_call.1} parent=11 // pred_check_branch
        %267 = sbr.rel (%p265) target = $region36
      $region35: #{tpu_custom_call.1} parent=11 // pred_region
        _
      $region36: #{tpu_custom_call.1} parent=11 // pred_fallthru
        _
      // Predicated region
      $region37: #{tpu_custom_call.1} parent=11 // pred_check
        %p268 = pneg %p188
      $region38: #{tpu_custom_call.1} parent=11 // pred_check_branch
        %270 = sbr.rel (%p268) target = $region40
      $region39: #{tpu_custom_call.1} parent=11 // pred_region
        _
      $region40: #{tpu_custom_call.1} parent=11 // pred_fallthru
        _
      // Predicated region
      $region41: #{tpu_custom_call.1} parent=11 // pred_check
        %p271 = pneg %p209
      $region42: #{tpu_custom_call.1} parent=11 // pred_check_branch
        %273 = sbr.rel (%p271) target = $region44
      $region43: #{tpu_custom_call.1} parent=11 // pred_region
        _
      $region44: #{tpu_custom_call.1} parent=11 // pred_fallthru
        _
    $region12: #{tpu_custom_call.1} parent=5 // pred_fallthru
      _
    %p274 = scmp.lt.s32.totalorder %s15, 2
    // Predicated region
    $region45: #{tpu_custom_call.1} parent=5 // pred_check
      %p275 = pneg %p274
    $region46: #{tpu_custom_call.1} parent=5 // pred_check_branch
      %277 = sbr.rel (%p275) target = $region48
    $region47: #{tpu_custom_call.1} parent=5 // pred_region
      // Predicated region
      $region49: #{tpu_custom_call.1} parent=47 // pred_check
        %p278 = pneg %p35
      $region50: #{tpu_custom_call.1} parent=47 // pred_check_branch
        %280 = sbr.rel (%p278) target = $region52
      $region51: #{tpu_custom_call.1} parent=47 // pred_region
        %p281 = scmp.lt.s32.totalorder %s15, 1
        %s282 = scalar_select %p281, %s15, 1
        %s283 = smul.addr %s282, 32
        %s284 = smul.addr %s283, 8
        %s285 = scalar_lea.vmem %s0, %s284
      $region52: #{tpu_custom_call.1} parent=47 // pred_fallthru
        _
    $region48: #{tpu_custom_call.1} parent=5 // pred_fallthru
      _
    %p286 = scmp.le.s32.totalorder 1, %s15
    %p287 = scmp.lt.s32.totalorder %s15, 3
    %p288 = pnand %p286, %p287
    %p289 = pneg %p288
    // Predicated region
    $region53: #{tpu_custom_call.1} parent=5 // pred_check
      _
    $region54: #{tpu_custom_call.1} parent=5 // pred_check_branch
      %291 = sbr.rel (%p288) target = $region56
    $region55: #{tpu_custom_call.1} parent=5 // pred_region
      %s292 = ssub.s32 %s15, 1
      %p293 = scmp.lt.s32.totalorder %s20, 1
      %s294 = scalar_select %p293, %s20, 1
      %s295 = smul.addr %s294, 32
      %s296 = smul.addr %s295, 8
      %s297 = scalar_lea.vmem %s0, %s296
      %p298 = pneg %p41
      %p299 = pneg %p38
      %p300 = pneg %p62
      %p301 = pneg %p59
      %p302 = pneg %p83
      %p303 = pneg %p80
      %p304 = pneg %p104
      %p305 = pneg %p101
      %p306 = pneg %p125
      %p307 = pneg %p122
      %p308 = pneg %p146
      %p309 = pneg %p143
      %p310 = pneg %p167
      %p311 = pneg %p164
      %p312 = pneg %p188
      %p313 = pneg %p185
      %p314 = pneg %p209
      %p315 = pneg %p206
      %p316 = pneg %p235
      %p317 = pneg %p232
      %p318 = scmp.lt.s32.totalorder %s20, 1
      %s319 = scalar_select %p318, %s20, 1
      %s320 = smul.addr %s319, 32
      %s321 = smul.addr %s320, 8
      %s322 = scalar_lea.vmem %s9, %s321
      %p323 = scmp.lt.s32.totalorder %s20, 1
      %s324 = scalar_select %p323, %s20, 1
      %s325 = smul.addr %s324, 32
      %s326 = smul.addr %s325, 8
      %s327 = scalar_lea.vmem %s0, %s326
      %p328 = scmp.lt.s32.totalorder %s20, 1
      %s329 = scalar_select %p328, %s20, 1
      %s330 = smul.addr %s329, 32
      %s331 = smul.addr %s330, 8
      %s332 = scalar_lea.vmem %s9, %s331
      %v334 = vld [vmem:[%s327] sm:$0xff]
      %v335 = vld [vmem:[%s327 + $0x8] sm:$0xff]
      %v336 = vld [vmem:[%s327 + $0x10] sm:$0xff]
      %v337 = vld [vmem:[%s327 + $0x18] sm:$0xff]
      %v338 = vld [vmem:[%s327 + $0x20] sm:$0xff]
      %v339 = vld [vmem:[%s327 + $0x28] sm:$0xff]
      %v340 = vld [vmem:[%s327 + $0x30] sm:$0xff]
      %v341 = vld [vmem:[%s327 + $0x38] sm:$0xff]
      %v342 = vld [vmem:[%s327 + $0x40] sm:$0xff]
      %v343 = vld [vmem:[%s327 + $0x48] sm:$0xff]
      %v344 = vld [vmem:[%s327 + $0x50] sm:$0xff]
      %v345 = vld [vmem:[%s327 + $0x58] sm:$0xff]
      %v346 = vld [vmem:[%s327 + $0x60] sm:$0xff]
      %v347 = vld [vmem:[%s327 + $0x68] sm:$0xff]
      %v348 = vld [vmem:[%s327 + $0x70] sm:$0xff]
      %v349 = vld [vmem:[%s327 + $0x78] sm:$0xff]
      %v350 = vld [vmem:[%s327 + $0x80] sm:$0xff]
      %v351 = vld [vmem:[%s327 + $0x88] sm:$0xff]
      %v352 = vld [vmem:[%s327 + $0x90] sm:$0xff]
      %v353 = vld [vmem:[%s327 + $0x98] sm:$0xff]
      %v354 = vld [vmem:[%s327 + $0xa0] sm:$0xff]
      %v355 = vld [vmem:[%s327 + $0xa8] sm:$0xff]
      %v356 = vld [vmem:[%s327 + $0xb0] sm:$0xff]
      %v357 = vld [vmem:[%s327 + $0xb8] sm:$0xff]
      %v358 = vld [vmem:[%s327 + $0xc0] sm:$0xff]
      %v359 = vld [vmem:[%s327 + $0xc8] sm:$0xff]
      %v360 = vld [vmem:[%s327 + $0xd0] sm:$0xff]
      %v361 = vld [vmem:[%s327 + $0xd8] sm:$0xff]
      %v362 = vld [vmem:[%s327 + $0xe0] sm:$0xff]
      %v363 = vld [vmem:[%s327 + $0xe8] sm:$0xff]
      %v364 = vld [vmem:[%s327 + $0xf0] sm:$0xff]
      %v365 = vld [vmem:[%s327 + $0xf8] sm:$0xff]
      %v366 = vld [vmem:[%s1] sm:$0xff]
      %v367 = vld [vmem:[%s1 + $0x8] sm:$0xff]
      %v368 = vld [vmem:[%s1 + $0x10] sm:$0xff]
      %v369 = vld [vmem:[%s1 + $0x18] sm:$0xff]
      %v370 = vld [vmem:[%s1 + $0x20] sm:$0xff]
      %v371 = vld [vmem:[%s1 + $0x28] sm:$0xff]
      %v372 = vld [vmem:[%s1 + $0x30] sm:$0x1]
      %v373 = vld [vmem:[%s2] sm:$0x1]
      %vm406 = vcmask 1042432
      %v407 = vrot.slane %v334, 5
      %v408 = vrot.slane %v335, 5
      %v409 = vsel %vm406, %v407, %v408
      %v410 = vrot.slane %v336, 5
      %v411 = vrot.slane %v337, 5
      %v412 = vsel %vm406, %v410, %v411
      %v413 = vrot.slane %v338, 5
      %v414 = vrot.slane %v339, 5
      %v415 = vsel %vm406, %v413, %v414
      %v416 = vrot.slane %v340, 5
      %v417 = vrot.slane %v341, 5
      %v418 = vsel %vm406, %v416, %v417
      %v419 = vrot.slane %v342, 5
      %v420 = vrot.slane %v343, 5
      %v421 = vsel %vm406, %v419, %v420
      %v422 = vrot.slane %v344, 5
      %v423 = vrot.slane %v345, 5
      %v424 = vsel %vm406, %v422, %v423
      %v425 = vrot.slane %v346, 5
      %v426 = vrot.slane %v347, 5
      %v427 = vsel %vm406, %v425, %v426
      %v428 = vrot.slane %v348, 5
      %v429 = vrot.slane %v349, 5
      %v430 = vsel %vm406, %v428, %v429
      %v431 = vrot.slane %v350, 5
      %v432 = vrot.slane %v351, 5
      %v433 = vsel %vm406, %v431, %v432
      %v434 = vrot.slane %v352, 5
      %v435 = vrot.slane %v353, 5
      %v436 = vsel %vm406, %v434, %v435
      %v437 = vrot.slane %v354, 5
      %v438 = vrot.slane %v355, 5
      %v439 = vsel %vm406, %v437, %v438
      %v440 = vrot.slane %v356, 5
      %v441 = vrot.slane %v357, 5
      %v442 = vsel %vm406, %v440, %v441
      %v443 = vrot.slane %v358, 5
      %v444 = vrot.slane %v359, 5
      %v445 = vsel %vm406, %v443, %v444
      %v446 = vrot.slane %v360, 5
      %v447 = vrot.slane %v361, 5
      %v448 = vsel %vm406, %v446, %v447
      %v449 = vrot.slane %v362, 5
      %v450 = vrot.slane %v363, 5
      %v451 = vsel %vm406, %v449, %v450
      %v452 = vrot.slane %v364, 5
      %v453 = vrot.slane %v365, 5
      %v454 = vsel %vm406, %v452, %v453
      %v487 = vsel %vm406, 0.0, %v407
      %v488 = vsel %vm406, 0.0, %v410
      %v489 = vsel %vm406, 0.0, %v413
      %v490 = vsel %vm406, 0.0, %v416
      %v491 = vsel %vm406, 0.0, %v419
      %v492 = vsel %vm406, 0.0, %v422
      %v493 = vsel %vm406, 0.0, %v425
      %v494 = vsel %vm406, 0.0, %v428
      %v495 = vsel %vm406, 0.0, %v431
      %v496 = vsel %vm406, 0.0, %v434
      %v497 = vsel %vm406, 0.0, %v437
      %v498 = vsel %vm406, 0.0, %v440
      %v499 = vsel %vm406, 0.0, %v443
      %v500 = vsel %vm406, 0.0, %v446
      %v501 = vsel %vm406, 0.0, %v449
      %v502 = vsel %vm406, 0.0, %v452
      %vm503 = vcmask 1041408
      %v504 = vrot.slane %v334, 6
      %v505 = vrot.slane %v335, 6
      %v506 = vsel %vm503, %v504, %v505
      %v507 = vrot.slane %v336, 6
      %v508 = vrot.slane %v337, 6
      %v509 = vsel %vm503, %v507, %v508
      %v510 = vrot.slane %v338, 6
      %v511 = vrot.slane %v339, 6
      %v512 = vsel %vm503, %v510, %v511
      %v513 = vrot.slane %v340, 6
      %v514 = vrot.slane %v341, 6
      %v515 = vsel %vm503, %v513, %v514
      %v516 = vrot.slane %v342, 6
      %v517 = vrot.slane %v343, 6
      %v518 = vsel %vm503, %v516, %v517
      %v519 = vrot.slane %v344, 6
      %v520 = vrot.slane %v345, 6
      %v521 = vsel %vm503, %v519, %v520
      %v522 = vrot.slane %v346, 6
      %v523 = vrot.slane %v347, 6
      %v524 = vsel %vm503, %v522, %v523
      %v525 = vrot.slane %v348, 6
      %v526 = vrot.slane %v349, 6
      %v527 = vsel %vm503, %v525, %v526
      %v528 = vrot.slane %v350, 6
      %v529 = vrot.slane %v351, 6
      %v530 = vsel %vm503, %v528, %v529
      %v531 = vrot.slane %v352, 6
      %v532 = vrot.slane %v353, 6
      %v533 = vsel %vm503, %v531, %v532
      %v534 = vrot.slane %v354, 6
      %v535 = vrot.slane %v355, 6
      %v536 = vsel %vm503, %v534, %v535
      %v537 = vrot.slane %v356, 6
      %v538 = vrot.slane %v357, 6
      %v539 = vsel %vm503, %v537, %v538
      %v540 = vrot.slane %v358, 6
      %v541 = vrot.slane %v359, 6
      %v542 = vsel %vm503, %v540, %v541
      %v543 = vrot.slane %v360, 6
      %v544 = vrot.slane %v361, 6
      %v545 = vsel %vm503, %v543, %v544
      %v546 = vrot.slane %v362, 6
      %v547 = vrot.slane %v363, 6
      %v548 = vsel %vm503, %v546, %v547
      %v549 = vrot.slane %v364, 6
      %v550 = vrot.slane %v365, 6
      %v551 = vsel %vm503, %v549, %v550
      %v584 = vsel %vm503, 0.0, %v504
      %v585 = vsel %vm503, 0.0, %v507
      %v586 = vsel %vm503, 0.0, %v510
      %v587 = vsel %vm503, 0.0, %v513
      %v588 = vsel %vm503, 0.0, %v516
      %v589 = vsel %vm503, 0.0, %v519
      %v590 = vsel %vm503, 0.0, %v522
      %v591 = vsel %vm503, 0.0, %v525
      %v592 = vsel %vm503, 0.0, %v528
      %v593 = vsel %vm503, 0.0, %v531
      %v594 = vsel %vm503, 0.0, %v534
      %v595 = vsel %vm503, 0.0, %v537
      %v596 = vsel %vm503, 0.0, %v540
      %v597 = vsel %vm503, 0.0, %v543
      %v598 = vsel %vm503, 0.0, %v546
      %v599 = vsel %vm503, 0.0, %v549
      %vm600 = vcmask 1040384
      %v601 = vrot.slane %v334, 7
      %v602 = vrot.slane %v335, 7
      %v603 = vsel %vm600, %v601, %v602
      %v604 = vrot.slane %v336, 7
      %v605 = vrot.slane %v337, 7
      %v606 = vsel %vm600, %v604, %v605
      %v607 = vrot.slane %v338, 7
      %v608 = vrot.slane %v339, 7
      %v609 = vsel %vm600, %v607, %v608
      %v610 = vrot.slane %v340, 7
      %v611 = vrot.slane %v341, 7
      %v612 = vsel %vm600, %v610, %v611
      %v613 = vrot.slane %v342, 7
      %v614 = vrot.slane %v343, 7
      %v615 = vsel %vm600, %v613, %v614
      %v616 = vrot.slane %v344, 7
      %v617 = vrot.slane %v345, 7
      %v618 = vsel %vm600, %v616, %v617
      %v619 = vrot.slane %v346, 7
      %v620 = vrot.slane %v347, 7
      %v621 = vsel %vm600, %v619, %v620
      %v622 = vrot.slane %v348, 7
      %v623 = vrot.slane %v349, 7
      %v624 = vsel %vm600, %v622, %v623
      %v625 = vrot.slane %v350, 7
      %v626 = vrot.slane %v351, 7
      %v627 = vsel %vm600, %v625, %v626
      %v628 = vrot.slane %v352, 7
      %v629 = vrot.slane %v353, 7
      %v630 = vsel %vm600, %v628, %v629
      %v631 = vrot.slane %v354, 7
      %v632 = vrot.slane %v355, 7
      %v633 = vsel %vm600, %v631, %v632
      %v634 = vrot.slane %v356, 7
      %v635 = vrot.slane %v357, 7
      %v636 = vsel %vm600, %v634, %v635
      %v637 = vrot.slane %v358, 7
      %v638 = vrot.slane %v359, 7
      %v639 = vsel %vm600, %v637, %v638
      %v640 = vrot.slane %v360, 7
      %v641 = vrot.slane %v361, 7
      %v642 = vsel %vm600, %v640, %v641
      %v643 = vrot.slane %v362, 7
      %v644 = vrot.slane %v363, 7
      %v645 = vsel %vm600, %v643, %v644
      %v646 = vrot.slane %v364, 7
      %v647 = vrot.slane %v365, 7
      %v648 = vsel %vm600, %v646, %v647
      %v681 = vsel %vm600, 0.0, %v601
      %v682 = vsel %vm600, 0.0, %v604
      %v683 = vsel %vm600, 0.0, %v607
      %v684 = vsel %vm600, 0.0, %v610
      %v685 = vsel %vm600, 0.0, %v613
      %v686 = vsel %vm600, 0.0, %v616
      %v687 = vsel %vm600, 0.0, %v619
      %v688 = vsel %vm600, 0.0, %v622
      %v689 = vsel %vm600, 0.0, %v625
      %v690 = vsel %vm600, 0.0, %v628
      %v691 = vsel %vm600, 0.0, %v631
      %v692 = vsel %vm600, 0.0, %v634
      %v693 = vsel %vm600, 0.0, %v637
      %v694 = vsel %vm600, 0.0, %v640
      %v695 = vsel %vm600, 0.0, %v643
      %v696 = vsel %vm600, 0.0, %v646
      %vm697 = vcmask 1046528
      %v698 = vrot.slane %v334, 1
      %v699 = vrot.slane %v335, 1
      %v700 = vsel %vm697, %v698, %v699
      %v701 = vrot.slane %v336, 1
      %v702 = vrot.slane %v337, 1
      %v703 = vsel %vm697, %v701, %v702
      %v704 = vrot.slane %v338, 1
      %v705 = vrot.slane %v339, 1
      %v706 = vsel %vm697, %v704, %v705
      %v707 = vrot.slane %v340, 1
      %v708 = vrot.slane %v341, 1
      %v709 = vsel %vm697, %v707, %v708
      %v710 = vrot.slane %v342, 1
      %v711 = vrot.slane %v343, 1
      %v712 = vsel %vm697, %v710, %v711
      %v713 = vrot.slane %v344, 1
      %v714 = vrot.slane %v345, 1
      %v715 = vsel %vm697, %v713, %v714
      %v716 = vrot.slane %v346, 1
      %v717 = vrot.slane %v347, 1
      %v718 = vsel %vm697, %v716, %v717
      %v719 = vrot.slane %v348, 1
      %v720 = vrot.slane %v349, 1
      %v721 = vsel %vm697, %v719, %v720
      %v722 = vrot.slane %v350, 1
      %v723 = vrot.slane %v351, 1
      %v724 = vsel %vm697, %v722, %v723
      %v725 = vrot.slane %v352, 1
      %v726 = vrot.slane %v353, 1
      %v727 = vsel %vm697, %v725, %v726
      %v728 = vrot.slane %v354, 1
      %v729 = vrot.slane %v355, 1
      %v730 = vsel %vm697, %v728, %v729
      %v731 = vrot.slane %v356, 1
      %v732 = vrot.slane %v357, 1
      %v733 = vsel %vm697, %v731, %v732
      %v734 = vrot.slane %v358, 1
      %v735 = vrot.slane %v359, 1
      %v736 = vsel %vm697, %v734, %v735
      %v737 = vrot.slane %v360, 1
      %v738 = vrot.slane %v361, 1
      %v739 = vsel %vm697, %v737, %v738
      %v740 = vrot.slane %v362, 1
      %v741 = vrot.slane %v363, 1
      %v742 = vsel %vm697, %v740, %v741
      %v743 = vrot.slane %v364, 1
      %v744 = vrot.slane %v365, 1
      %v745 = vsel %vm697, %v743, %v744
      %v778 = vsel %vm697, %v699, 0.0
      %v779 = vsel %vm697, %v702, 0.0
      %v780 = vsel %vm697, %v705, 0.0
      %v781 = vsel %vm697, %v708, 0.0
      %v782 = vsel %vm697, %v711, 0.0
      %v783 = vsel %vm697, %v714, 0.0
      %v784 = vsel %vm697, %v717, 0.0
      %v785 = vsel %vm697, %v720, 0.0
      %v786 = vsel %vm697, %v723, 0.0
      %v787 = vsel %vm697, %v726, 0.0
      %v788 = vsel %vm697, %v729, 0.0
      %v789 = vsel %vm697, %v732, 0.0
      %v790 = vsel %vm697, %v735, 0.0
      %v791 = vsel %vm697, %v738, 0.0
      %v792 = vsel %vm697, %v741, 0.0
      %v793 = vsel %vm697, %v744, 0.0
      %vm794 = vcmask 1045504
      %v795 = vrot.slane %v334, 2
      %v796 = vrot.slane %v335, 2
      %v797 = vsel %vm794, %v795, %v796
      %v798 = vrot.slane %v336, 2
      %v799 = vrot.slane %v337, 2
      %v800 = vsel %vm794, %v798, %v799
      %v801 = vrot.slane %v338, 2
      %v802 = vrot.slane %v339, 2
      %v803 = vsel %vm794, %v801, %v802
      %v804 = vrot.slane %v340, 2
      %v805 = vrot.slane %v341, 2
      %v806 = vsel %vm794, %v804, %v805
      %v807 = vrot.slane %v342, 2
      %v808 = vrot.slane %v343, 2
      %v809 = vsel %vm794, %v807, %v808
      %v810 = vrot.slane %v344, 2
      %v811 = vrot.slane %v345, 2
      %v812 = vsel %vm794, %v810, %v811
      %v813 = vrot.slane %v346, 2
      %v814 = vrot.slane %v347, 2
      %v815 = vsel %vm794, %v813, %v814
      %v816 = vrot.slane %v348, 2
      %v817 = vrot.slane %v349, 2
      %v818 = vsel %vm794, %v816, %v817
      %v819 = vrot.slane %v350, 2
      %v820 = vrot.slane %v351, 2
      %v821 = vsel %vm794, %v819, %v820
      %v822 = vrot.slane %v352, 2
      %v823 = vrot.slane %v353, 2
      %v824 = vsel %vm794, %v822, %v823
      %v825 = vrot.slane %v354, 2
      %v826 = vrot.slane %v355, 2
      %v827 = vsel %vm794, %v825, %v826
      %v828 = vrot.slane %v356, 2
      %v829 = vrot.slane %v357, 2
      %v830 = vsel %vm794, %v828, %v829
      %v831 = vrot.slane %v358, 2
      %v832 = vrot.slane %v359, 2
      %v833 = vsel %vm794, %v831, %v832
      %v834 = vrot.slane %v360, 2
      %v835 = vrot.slane %v361, 2
      %v836 = vsel %vm794, %v834, %v835
      %v837 = vrot.slane %v362, 2
      %v838 = vrot.slane %v363, 2
      %v839 = vsel %vm794, %v837, %v838
      %v840 = vrot.slane %v364, 2
      %v841 = vrot.slane %v365, 2
      %v842 = vsel %vm794, %v840, %v841
      %v875 = vsel %vm794, %v796, 0.0
      %v876 = vsel %vm794, %v799, 0.0
      %v877 = vsel %vm794, %v802, 0.0
      %v878 = vsel %vm794, %v805, 0.0
      %v879 = vsel %vm794, %v808, 0.0
      %v880 = vsel %vm794, %v811, 0.0
      %v881 = vsel %vm794, %v814, 0.0
      %v882 = vsel %vm794, %v817, 0.0
      %v883 = vsel %vm794, %v820, 0.0
      %v884 = vsel %vm794, %v823, 0.0
      %v885 = vsel %vm794, %v826, 0.0
      %v886 = vsel %vm794, %v829, 0.0
      %v887 = vsel %vm794, %v832, 0.0
      %v888 = vsel %vm794, %v835, 0.0
      %v889 = vsel %vm794, %v838, 0.0
      %v890 = vsel %vm794, %v841, 0.0
      %vm891 = vcmask 1044480
      %v892 = vrot.slane %v334, 3
      %v893 = vrot.slane %v335, 3
      %v894 = vsel %vm891, %v892, %v893
      %v895 = vrot.slane %v336, 3
      %v896 = vrot.slane %v337, 3
      %v897 = vsel %vm891, %v895, %v896
      %v898 = vrot.slane %v338, 3
      %v899 = vrot.slane %v339, 3
      %v900 = vsel %vm891, %v898, %v899
      %v901 = vrot.slane %v340, 3
      %v902 = vrot.slane %v341, 3
      %v903 = vsel %vm891, %v901, %v902
      %v904 = vrot.slane %v342, 3
      %v905 = vrot.slane %v343, 3
      %v906 = vsel %vm891, %v904, %v905
      %v907 = vrot.slane %v344, 3
      %v908 = vrot.slane %v345, 3
      %v909 = vsel %vm891, %v907, %v908
      %v910 = vrot.slane %v346, 3
      %v911 = vrot.slane %v347, 3
      %v912 = vsel %vm891, %v910, %v911
      %v913 = vrot.slane %v348, 3
      %v914 = vrot.slane %v349, 3
      %v915 = vsel %vm891, %v913, %v914
      %v916 = vrot.slane %v350, 3
      %v917 = vrot.slane %v351, 3
      %v918 = vsel %vm891, %v916, %v917
      %v919 = vrot.slane %v352, 3
      %v920 = vrot.slane %v353, 3
      %v921 = vsel %vm891, %v919, %v920
      %v922 = vrot.slane %v354, 3
      %v923 = vrot.slane %v355, 3
      %v924 = vsel %vm891, %v922, %v923
      %v925 = vrot.slane %v356, 3
      %v926 = vrot.slane %v357, 3
      %v927 = vsel %vm891, %v925, %v926
      %v928 = vrot.slane %v358, 3
      %v929 = vrot.slane %v359, 3
      %v930 = vsel %vm891, %v928, %v929
      %v931 = vrot.slane %v360, 3
      %v932 = vrot.slane %v361, 3
      %v933 = vsel %vm891, %v931, %v932
      %v934 = vrot.slane %v362, 3
      %v935 = vrot.slane %v363, 3
      %v936 = vsel %vm891, %v934, %v935
      %v937 = vrot.slane %v364, 3
      %v938 = vrot.slane %v365, 3
      %v939 = vsel %vm891, %v937, %v938
      %v972 = vsel %vm891, %v893, 0.0
      %v973 = vsel %vm891, %v896, 0.0
      %v974 = vsel %vm891, %v899, 0.0
      %v975 = vsel %vm891, %v902, 0.0
      %v976 = vsel %vm891, %v905, 0.0
      %v977 = vsel %vm891, %v908, 0.0
      %v978 = vsel %vm891, %v911, 0.0
      %v979 = vsel %vm891, %v914, 0.0
      %v980 = vsel %vm891, %v917, 0.0
      %v981 = vsel %vm891, %v920, 0.0
      %v982 = vsel %vm891, %v923, 0.0
      %v983 = vsel %vm891, %v926, 0.0
      %v984 = vsel %vm891, %v929, 0.0
      %v985 = vsel %vm891, %v932, 0.0
      %v986 = vsel %vm891, %v935, 0.0
      %v987 = vsel %vm891, %v938, 0.0
      %v988 = vlaneseq
      %v989 = vshrl.u32 %v988, 7
      %v990 = vsub.s32 0, %v989
      %v991 = vrot.slane %v366, %v990
      %v992 = vmul.f32 %v991, 0.0
      %v993 = vmul.f32 %v487, %v991
      %v994 = vmul.f32 %v409, %v991
      %v995 = vmul.f32 %v488, %v991
      %v996 = vmul.f32 %v412, %v991
      %v997 = vmul.f32 %v489, %v991
      %v998 = vmul.f32 %v415, %v991
      %v999 = vmul.f32 %v490, %v991
      %v1000 = vmul.f32 %v418, %v991
      %v1001 = vmul.f32 %v491, %v991
      %v1002 = vmul.f32 %v421, %v991
      %v1003 = vmul.f32 %v492, %v991
      %v1004 = vmul.f32 %v424, %v991
      %v1005 = vmul.f32 %v493, %v991
      %v1006 = vmul.f32 %v427, %v991
      %v1007 = vmul.f32 %v494, %v991
      %v1008 = vmul.f32 %v430, %v991
      %v1009 = vmul.f32 %v495, %v991
      %v1010 = vmul.f32 %v433, %v991
      %v1011 = vmul.f32 %v496, %v991
      %v1012 = vmul.f32 %v436, %v991
      %v1013 = vmul.f32 %v497, %v991
      %v1014 = vmul.f32 %v439, %v991
      %v1015 = vmul.f32 %v498, %v991
      %v1016 = vmul.f32 %v442, %v991
      %v1017 = vmul.f32 %v499, %v991
      %v1018 = vmul.f32 %v445, %v991
      %v1019 = vadd.f32 %v992, 0.0
      %v1020 = vadd.f32 %v993, 0.0
      %v1021 = vadd.f32 %v994, 0.0
      %v1022 = vadd.f32 %v995, 0.0
      %v1023 = vadd.f32 %v996, 0.0
      %v1024 = vadd.f32 %v997, 0.0
      %v1025 = vadd.f32 %v998, 0.0
      %v1026 = vadd.f32 %v999, 0.0
      %v1027 = vadd.f32 %v1000, 0.0
      %v1028 = vadd.f32 %v1001, 0.0
      %v1029 = vadd.f32 %v1002, 0.0
      %v1030 = vadd.f32 %v1003, 0.0
      %v1031 = vadd.f32 %v1004, 0.0
      %v1032 = vadd.f32 %v1005, 0.0
      %v1033 = vadd.f32 %v1006, 0.0
      %v1034 = vadd.f32 %v1007, 0.0
      %v1035 = vadd.f32 %v1008, 0.0
      %v1036 = vadd.f32 %v1009, 0.0
      %v1037 = vadd.f32 %v1010, 0.0
      %v1038 = vadd.f32 %v1011, 0.0
      %v1039 = vadd.f32 %v1012, 0.0
      %v1040 = vadd.f32 %v1013, 0.0
      %v1041 = vadd.f32 %v1014, 0.0
      %v1042 = vadd.f32 %v1015, 0.0
      %v1043 = vadd.f32 %v1016, 0.0
      %v1044 = vadd.f32 %v1017, 0.0
      %v1045 = vadd.f32 %v1018, 0.0
      %v1046 = vlaneseq
      %v1047 = vshrl.u32 %v1046, 7
      %v1048 = vsub.s32 1, %v1047
      %v1049 = vrot.slane %v366, %v1048
      %v1050 = vmul.f32 %v1049, 0.0
      %v1051 = vmul.f32 %v584, %v1049
      %v1052 = vmul.f32 %v506, %v1049
      %v1053 = vmul.f32 %v585, %v1049
      %v1054 = vmul.f32 %v509, %v1049
      %v1055 = vmul.f32 %v586, %v1049
      %v1056 = vmul.f32 %v512, %v1049
      %v1057 = vmul.f32 %v587, %v1049
      %v1058 = vmul.f32 %v515, %v1049
      %v1059 = vmul.f32 %v588, %v1049
      %v1060 = vmul.f32 %v518, %v1049
      %v1061 = vmul.f32 %v589, %v1049
      %v1062 = vmul.f32 %v521, %v1049
      %v1063 = vmul.f32 %v590, %v1049
      %v1064 = vmul.f32 %v524, %v1049
      %v1065 = vmul.f32 %v591, %v1049
      %v1066 = vmul.f32 %v527, %v1049
      %v1067 = vmul.f32 %v592, %v1049
      %v1068 = vmul.f32 %v530, %v1049
      %v1069 = vmul.f32 %v593, %v1049
      %v1070 = vmul.f32 %v533, %v1049
      %v1071 = vmul.f32 %v594, %v1049
      %v1072 = vmul.f32 %v536, %v1049
      %v1073 = vmul.f32 %v595, %v1049
      %v1074 = vmul.f32 %v539, %v1049
      %v1075 = vmul.f32 %v596, %v1049
      %v1076 = vmul.f32 %v542, %v1049
      %v1077 = vadd.f32 %v1019, %v1050
      %v1078 = vadd.f32 %v1020, %v1051
      %v1079 = vadd.f32 %v1021, %v1052
      %v1080 = vadd.f32 %v1022, %v1053
      %v1081 = vadd.f32 %v1023, %v1054
      %v1082 = vadd.f32 %v1024, %v1055
      %v1083 = vadd.f32 %v1025, %v1056
      %v1084 = vadd.f32 %v1026, %v1057
      %v1085 = vadd.f32 %v1027, %v1058
      %v1086 = vadd.f32 %v1028, %v1059
      %v1087 = vadd.f32 %v1029, %v1060
      %v1088 = vadd.f32 %v1030, %v1061
      %v1089 = vadd.f32 %v1031, %v1062
      %v1090 = vadd.f32 %v1032, %v1063
      %v1091 = vadd.f32 %v1033, %v1064
      %v1092 = vadd.f32 %v1034, %v1065
      %v1093 = vadd.f32 %v1035, %v1066
      %v1094 = vadd.f32 %v1036, %v1067
      %v1095 = vadd.f32 %v1037, %v1068
      %v1096 = vadd.f32 %v1038, %v1069
      %v1097 = vadd.f32 %v1039, %v1070
      %v1098 = vadd.f32 %v1040, %v1071
      %v1099 = vadd.f32 %v1041, %v1072
      %v1100 = vadd.f32 %v1042, %v1073
      %v1101 = vadd.f32 %v1043, %v1074
      %v1102 = vadd.f32 %v1044, %v1075
      %v1103 = vadd.f32 %v1045, %v1076
      %v1104 = vlaneseq
      %v1105 = vshrl.u32 %v1104, 7
      %v1106 = vsub.s32 2, %v1105
      %v1107 = vrot.slane %v366, %v1106
      %v1108 = vmul.f32 %v1107, 0.0
      %v1109 = vmul.f32 %v681, %v1107
      %v1110 = vmul.f32 %v603, %v1107
      %v1111 = vmul.f32 %v682, %v1107
      %v1112 = vmul.f32 %v606, %v1107
      %v1113 = vmul.f32 %v683, %v1107
      %v1114 = vmul.f32 %v609, %v1107
      %v1115 = vmul.f32 %v684, %v1107
      %v1116 = vmul.f32 %v612, %v1107
      %v1117 = vmul.f32 %v685, %v1107
      %v1118 = vmul.f32 %v615, %v1107
      %v1119 = vmul.f32 %v686, %v1107
      %v1120 = vmul.f32 %v618, %v1107
      %v1121 = vmul.f32 %v687, %v1107
      %v1122 = vmul.f32 %v621, %v1107
      %v1123 = vmul.f32 %v688, %v1107
      %v1124 = vmul.f32 %v624, %v1107
      %v1125 = vmul.f32 %v689, %v1107
      %v1126 = vmul.f32 %v627, %v1107
      %v1127 = vmul.f32 %v690, %v1107
      %v1128 = vmul.f32 %v630, %v1107
      %v1129 = vmul.f32 %v691, %v1107
      %v1130 = vmul.f32 %v633, %v1107
      %v1131 = vmul.f32 %v692, %v1107
      %v1132 = vmul.f32 %v636, %v1107
      %v1133 = vmul.f32 %v693, %v1107
      %v1134 = vmul.f32 %v639, %v1107
      %v1135 = vadd.f32 %v1077, %v1108
      %v1136 = vadd.f32 %v1078, %v1109
      %v1137 = vadd.f32 %v1079, %v1110
      %v1138 = vadd.f32 %v1080, %v1111
      %v1139 = vadd.f32 %v1081, %v1112
      %v1140 = vadd.f32 %v1082, %v1113
      %v1141 = vadd.f32 %v1083, %v1114
      %v1142 = vadd.f32 %v1084, %v1115
      %v1143 = vadd.f32 %v1085, %v1116
      %v1144 = vadd.f32 %v1086, %v1117
      %v1145 = vadd.f32 %v1087, %v1118
      %v1146 = vadd.f32 %v1088, %v1119
      %v1147 = vadd.f32 %v1089, %v1120
      %v1148 = vadd.f32 %v1090, %v1121
      %v1149 = vadd.f32 %v1091, %v1122
      %v1150 = vadd.f32 %v1092, %v1123
      %v1151 = vadd.f32 %v1093, %v1124
      %v1152 = vadd.f32 %v1094, %v1125
      %v1153 = vadd.f32 %v1095, %v1126
      %v1154 = vadd.f32 %v1096, %v1127
      %v1155 = vadd.f32 %v1097, %v1128
      %v1156 = vadd.f32 %v1098, %v1129
      %v1157 = vadd.f32 %v1099, %v1130
      %v1158 = vadd.f32 %v1100, %v1131
      %v1159 = vadd.f32 %v1101, %v1132
      %v1160 = vadd.f32 %v1102, %v1133
      %v1161 = vadd.f32 %v1103, %v1134
      %v1162 = vlaneseq
      %v1163 = vshrl.u32 %v1162, 7
      %v1164 = vsub.s32 3, %v1163
      %v1165 = vrot.slane %v366, %v1164
      %v1166 = vmul.f32 %v1165, 0.0
      %v1167 = vmul.f32 %v334, %v1165
      %v1168 = vmul.f32 %v335, %v1165
      %v1169 = vmul.f32 %v336, %v1165
      %v1170 = vmul.f32 %v337, %v1165
      %v1171 = vmul.f32 %v338, %v1165
      %v1172 = vmul.f32 %v339, %v1165
      %v1173 = vmul.f32 %v340, %v1165
      %v1174 = vmul.f32 %v341, %v1165
      %v1175 = vmul.f32 %v342, %v1165
      %v1176 = vmul.f32 %v343, %v1165
      %v1177 = vmul.f32 %v344, %v1165
      %v1178 = vmul.f32 %v345, %v1165
      %v1179 = vmul.f32 %v346, %v1165
      %v1180 = vmul.f32 %v347, %v1165
      %v1181 = vmul.f32 %v348, %v1165
      %v1182 = vmul.f32 %v349, %v1165
      %v1183 = vmul.f32 %v350, %v1165
      %v1184 = vmul.f32 %v351, %v1165
      %v1185 = vmul.f32 %v352, %v1165
      %v1186 = vmul.f32 %v353, %v1165
      %v1187 = vmul.f32 %v354, %v1165
      %v1188 = vmul.f32 %v355, %v1165
      %v1189 = vmul.f32 %v356, %v1165
      %v1190 = vmul.f32 %v357, %v1165
      %v1191 = vmul.f32 %v358, %v1165
      %v1192 = vmul.f32 %v359, %v1165
      %v1193 = vadd.f32 %v1135, %v1166
      %v1194 = vadd.f32 %v1136, %v1167
      %v1195 = vadd.f32 %v1137, %v1168
      %v1196 = vadd.f32 %v1138, %v1169
      %v1197 = vadd.f32 %v1139, %v1170
      %v1198 = vadd.f32 %v1140, %v1171
      %v1199 = vadd.f32 %v1141, %v1172
      %v1200 = vadd.f32 %v1142, %v1173
      %v1201 = vadd.f32 %v1143, %v1174
      %v1202 = vadd.f32 %v1144, %v1175
      %v1203 = vadd.f32 %v1145, %v1176
      %v1204 = vadd.f32 %v1146, %v1177
      %v1205 = vadd.f32 %v1147, %v1178
      %v1206 = vadd.f32 %v1148, %v1179
      %v1207 = vadd.f32 %v1149, %v1180
      %v1208 = vadd.f32 %v1150, %v1181
      %v1209 = vadd.f32 %v1151, %v1182
      %v1210 = vadd.f32 %v1152, %v1183
      %v1211 = vadd.f32 %v1153, %v1184
      %v1212 = vadd.f32 %v1154, %v1185
      %v1213 = vadd.f32 %v1155, %v1186
      %v1214 = vadd.f32 %v1156, %v1187
      %v1215 = vadd.f32 %v1157, %v1188
      %v1216 = vadd.f32 %v1158, %v1189
      %v1217 = vadd.f32 %v1159, %v1190
      %v1218 = vadd.f32 %v1160, %v1191
      %v1219 = vadd.f32 %v1161, %v1192
      %v1220 = vlaneseq
      %v1221 = vshrl.u32 %v1220, 7
      %v1222 = vsub.s32 4, %v1221
      %v1223 = vrot.slane %v366, %v1222
      %v1224 = vmul.f32 %v1223, 0.0
      %v1225 = vmul.f32 %v700, %v1223
      %v1226 = vmul.f32 %v778, %v1223
      %v1227 = vmul.f32 %v703, %v1223
      %v1228 = vmul.f32 %v779, %v1223
      %v1229 = vmul.f32 %v706, %v1223
      %v1230 = vmul.f32 %v780, %v1223
      %v1231 = vmul.f32 %v709, %v1223
      %v1232 = vmul.f32 %v781, %v1223
      %v1233 = vmul.f32 %v712, %v1223
      %v1234 = vmul.f32 %v782, %v1223
      %v1235 = vmul.f32 %v715, %v1223
      %v1236 = vmul.f32 %v783, %v1223
      %v1237 = vmul.f32 %v718, %v1223
      %v1238 = vmul.f32 %v784, %v1223
      %v1239 = vmul.f32 %v721, %v1223
      %v1240 = vmul.f32 %v785, %v1223
      %v1241 = vmul.f32 %v724, %v1223
      %v1242 = vmul.f32 %v786, %v1223
      %v1243 = vmul.f32 %v727, %v1223
      %v1244 = vmul.f32 %v787, %v1223
      %v1245 = vmul.f32 %v730, %v1223
      %v1246 = vmul.f32 %v788, %v1223
      %v1247 = vmul.f32 %v733, %v1223
      %v1248 = vmul.f32 %v789, %v1223
      %v1249 = vmul.f32 %v736, %v1223
      %v1250 = vmul.f32 %v790, %v1223
      %v1251 = vadd.f32 %v1193, %v1224
      %v1252 = vadd.f32 %v1194, %v1225
      %v1253 = vadd.f32 %v1195, %v1226
      %v1254 = vadd.f32 %v1196, %v1227
      %v1255 = vadd.f32 %v1197, %v1228
      %v1256 = vadd.f32 %v1198, %v1229
      %v1257 = vadd.f32 %v1199, %v1230
      %v1258 = vadd.f32 %v1200, %v1231
      %v1259 = vadd.f32 %v1201, %v1232
      %v1260 = vadd.f32 %v1202, %v1233
      %v1261 = vadd.f32 %v1203, %v1234
      %v1262 = vadd.f32 %v1204, %v1235
      %v1263 = vadd.f32 %v1205, %v1236
      %v1264 = vadd.f32 %v1206, %v1237
      %v1265 = vadd.f32 %v1207, %v1238
      %v1266 = vadd.f32 %v1208, %v1239
      %v1267 = vadd.f32 %v1209, %v1240
      %v1268 = vadd.f32 %v1210, %v1241
      %v1269 = vadd.f32 %v1211, %v1242
      %v1270 = vadd.f32 %v1212, %v1243
      %v1271 = vadd.f32 %v1213, %v1244
      %v1272 = vadd.f32 %v1214, %v1245
      %v1273 = vadd.f32 %v1215, %v1246
      %v1274 = vadd.f32 %v1216, %v1247
      %v1275 = vadd.f32 %v1217, %v1248
      %v1276 = vadd.f32 %v1218, %v1249
      %v1277 = vadd.f32 %v1219, %v1250
      %v1278 = vlaneseq
      %v1279 = vshrl.u32 %v1278, 7
      %v1280 = vsub.s32 5, %v1279
      %v1281 = vrot.slane %v366, %v1280
      %v1282 = vmul.f32 %v1281, 0.0
      %v1283 = vmul.f32 %v797, %v1281
      %v1284 = vmul.f32 %v875, %v1281
      %v1285 = vmul.f32 %v800, %v1281
      %v1286 = vmul.f32 %v876, %v1281
      %v1287 = vmul.f32 %v803, %v1281
      %v1288 = vmul.f32 %v877, %v1281
      %v1289 = vmul.f32 %v806, %v1281
      %v1290 = vmul.f32 %v878, %v1281
      %v1291 = vmul.f32 %v809, %v1281
      %v1292 = vmul.f32 %v879, %v1281
      %v1293 = vmul.f32 %v812, %v1281
      %v1294 = vmul.f32 %v880, %v1281
      %v1295 = vmul.f32 %v815, %v1281
      %v1296 = vmul.f32 %v881, %v1281
      %v1297 = vmul.f32 %v818, %v1281
      %v1298 = vmul.f32 %v882, %v1281
      %v1299 = vmul.f32 %v821, %v1281
      %v1300 = vmul.f32 %v883, %v1281
      %v1301 = vmul.f32 %v824, %v1281
      %v1302 = vmul.f32 %v884, %v1281
      %v1303 = vmul.f32 %v827, %v1281
      %v1304 = vmul.f32 %v885, %v1281
      %v1305 = vmul.f32 %v830, %v1281
      %v1306 = vmul.f32 %v886, %v1281
      %v1307 = vmul.f32 %v833, %v1281
      %v1308 = vmul.f32 %v887, %v1281
      %v1309 = vadd.f32 %v1251, %v1282
      %v1310 = vadd.f32 %v1252, %v1283
      %v1311 = vadd.f32 %v1253, %v1284
      %v1312 = vadd.f32 %v1254, %v1285
      %v1313 = vadd.f32 %v1255, %v1286
      %v1314 = vadd.f32 %v1256, %v1287
      %v1315 = vadd.f32 %v1257, %v1288
      %v1316 = vadd.f32 %v1258, %v1289
      %v1317 = vadd.f32 %v1259, %v1290
      %v1318 = vadd.f32 %v1260, %v1291
      %v1319 = vadd.f32 %v1261, %v1292
      %v1320 = vadd.f32 %v1262, %v1293
      %v1321 = vadd.f32 %v1263, %v1294
      %v1322 = vadd.f32 %v1264, %v1295
      %v1323 = vadd.f32 %v1265, %v1296
      %v1324 = vadd.f32 %v1266, %v1297
      %v1325 = vadd.f32 %v1267, %v1298
      %v1326 = vadd.f32 %v1268, %v1299
      %v1327 = vadd.f32 %v1269, %v1300
      %v1328 = vadd.f32 %v1270, %v1301
      %v1329 = vadd.f32 %v1271, %v1302
      %v1330 = vadd.f32 %v1272, %v1303
      %v1331 = vadd.f32 %v1273, %v1304
      %v1332 = vadd.f32 %v1274, %v1305
      %v1333 = vadd.f32 %v1275, %v1306
      %v1334 = vadd.f32 %v1276, %v1307
      %v1335 = vadd.f32 %v1277, %v1308
      %v1336 = vlaneseq
      %v1337 = vshrl.u32 %v1336, 7
      %v1338 = vsub.s32 6, %v1337
      %v1339 = vrot.slane %v366, %v1338
      %v1340 = vmul.f32 %v1339, 0.0
      %v1341 = vmul.f32 %v894, %v1339
      %v1342 = vmul.f32 %v972, %v1339
      %v1343 = vmul.f32 %v897, %v1339
      %v1344 = vmul.f32 %v973, %v1339
      %v1345 = vmul.f32 %v900, %v1339
      %v1346 = vmul.f32 %v974, %v1339
      %v1347 = vmul.f32 %v903, %v1339
      %v1348 = vmul.f32 %v975, %v1339
      %v1349 = vmul.f32 %v906, %v1339
      %v1350 = vmul.f32 %v976, %v1339
      %v1351 = vmul.f32 %v909, %v1339
      %v1352 = vmul.f32 %v977, %v1339
      %v1353 = vmul.f32 %v912, %v1339
      %v1354 = vmul.f32 %v978, %v1339
      %v1355 = vmul.f32 %v915, %v1339
      %v1356 = vmul.f32 %v979, %v1339
      %v1357 = vmul.f32 %v918, %v1339
      %v1358 = vmul.f32 %v980, %v1339
      %v1359 = vmul.f32 %v921, %v1339
      %v1360 = vmul.f32 %v981, %v1339
      %v1361 = vmul.f32 %v924, %v1339
      %v1362 = vmul.f32 %v982, %v1339
      %v1363 = vmul.f32 %v927, %v1339
      %v1364 = vmul.f32 %v983, %v1339
      %v1365 = vmul.f32 %v930, %v1339
      %v1366 = vmul.f32 %v984, %v1339
      %v1367 = vadd.f32 %v1309, %v1340
      %v1368 = vadd.f32 %v1310, %v1341
      %v1369 = vadd.f32 %v1311, %v1342
      %v1370 = vadd.f32 %v1312, %v1343
      %v1371 = vadd.f32 %v1313, %v1344
      %v1372 = vadd.f32 %v1314, %v1345
      %v1373 = vadd.f32 %v1315, %v1346
      %v1374 = vadd.f32 %v1316, %v1347
      %v1375 = vadd.f32 %v1317, %v1348
      %v1376 = vadd.f32 %v1318, %v1349
      %v1377 = vadd.f32 %v1319, %v1350
      %v1378 = vadd.f32 %v1320, %v1351
      %v1379 = vadd.f32 %v1321, %v1352
      %v1380 = vadd.f32 %v1322, %v1353
      %v1381 = vadd.f32 %v1323, %v1354
      %v1382 = vadd.f32 %v1324, %v1355
      %v1383 = vadd.f32 %v1325, %v1356
      %v1384 = vadd.f32 %v1326, %v1357
      %v1385 = vadd.f32 %v1327, %v1358
      %v1386 = vadd.f32 %v1328, %v1359
      %v1387 = vadd.f32 %v1329, %v1360
      %v1388 = vadd.f32 %v1330, %v1361
      %v1389 = vadd.f32 %v1331, %v1362
      %v1390 = vadd.f32 %v1332, %v1363
      %v1391 = vadd.f32 %v1333, %v1364
      %v1392 = vadd.f32 %v1334, %v1365
      %v1393 = vadd.f32 %v1335, %v1366
      %v1394 = vlaneseq
      %v1395 = vshrl.u32 %v1394, 7
      %v1396 = vsub.s32 7, %v1395
      %v1397 = vrot.slane %v366, %v1396
      %v1398 = vmul.f32 %v1397, 0.0
      %v1399 = vmul.f32 %v487, %v1397
      %v1400 = vmul.f32 %v409, %v1397
      %v1401 = vmul.f32 %v488, %v1397
      %v1402 = vmul.f32 %v412, %v1397
      %v1403 = vmul.f32 %v489, %v1397
      %v1404 = vmul.f32 %v415, %v1397
      %v1405 = vmul.f32 %v490, %v1397
      %v1406 = vmul.f32 %v418, %v1397
      %v1407 = vmul.f32 %v491, %v1397
      %v1408 = vmul.f32 %v421, %v1397
      %v1409 = vmul.f32 %v492, %v1397
      %v1410 = vmul.f32 %v424, %v1397
      %v1411 = vmul.f32 %v493, %v1397
      %v1412 = vmul.f32 %v427, %v1397
      %v1413 = vmul.f32 %v494, %v1397
      %v1414 = vmul.f32 %v430, %v1397
      %v1415 = vmul.f32 %v495, %v1397
      %v1416 = vmul.f32 %v433, %v1397
      %v1417 = vmul.f32 %v496, %v1397
      %v1418 = vmul.f32 %v436, %v1397
      %v1419 = vmul.f32 %v497, %v1397
      %v1420 = vmul.f32 %v439, %v1397
      %v1421 = vmul.f32 %v498, %v1397
      %v1422 = vmul.f32 %v442, %v1397
      %v1423 = vmul.f32 %v499, %v1397
      %v1424 = vmul.f32 %v445, %v1397
      %v1425 = vmul.f32 %v500, %v1397
      %v1426 = vmul.f32 %v448, %v1397
      %v1427 = vadd.f32 %v1367, %v1398
      %v1428 = vadd.f32 %v1367, %v1399
      %v1429 = vadd.f32 %v1367, %v1400
      %v1430 = vadd.f32 %v1368, %v1401
      %v1431 = vadd.f32 %v1369, %v1402
      %v1432 = vadd.f32 %v1370, %v1403
      %v1433 = vadd.f32 %v1371, %v1404
      %v1434 = vadd.f32 %v1372, %v1405
      %v1435 = vadd.f32 %v1373, %v1406
      %v1436 = vadd.f32 %v1374, %v1407
      %v1437 = vadd.f32 %v1375, %v1408
      %v1438 = vadd.f32 %v1376, %v1409
      %v1439 = vadd.f32 %v1377, %v1410
      %v1440 = vadd.f32 %v1378, %v1411
      %v1441 = vadd.f32 %v1379, %v1412
      %v1442 = vadd.f32 %v1380, %v1413
      %v1443 = vadd.f32 %v1381, %v1414
      %v1444 = vadd.f32 %v1382, %v1415
      %v1445 = vadd.f32 %v1383, %v1416
      %v1446 = vadd.f32 %v1384, %v1417
      %v1447 = vadd.f32 %v1385, %v1418
      %v1448 = vadd.f32 %v1386, %v1419
      %v1449 = vadd.f32 %v1387, %v1420
      %v1450 = vadd.f32 %v1388, %v1421
      %v1451 = vadd.f32 %v1389, %v1422
      %v1452 = vadd.f32 %v1390, %v1423
      %v1453 = vadd.f32 %v1391, %v1424
      %v1454 = vadd.f32 %v1392, %v1425
      %v1455 = vadd.f32 %v1393, %v1426
      %v1456 = vlaneseq
      %v1457 = vshrl.u32 %v1456, 7
      %v1458 = vsub.s32 0, %v1457
      %v1459 = vrot.slane %v367, %v1458
      %v1460 = vmul.f32 %v1459, 0.0
      %v1461 = vmul.f32 %v584, %v1459
      %v1462 = vmul.f32 %v506, %v1459
      %v1463 = vmul.f32 %v585, %v1459
      %v1464 = vmul.f32 %v509, %v1459
      %v1465 = vmul.f32 %v586, %v1459
      %v1466 = vmul.f32 %v512, %v1459
      %v1467 = vmul.f32 %v587, %v1459
      %v1468 = vmul.f32 %v515, %v1459
      %v1469 = vmul.f32 %v588, %v1459
      %v1470 = vmul.f32 %v518, %v1459
      %v1471 = vmul.f32 %v589, %v1459
      %v1472 = vmul.f32 %v521, %v1459
      %v1473 = vmul.f32 %v590, %v1459
      %v1474 = vmul.f32 %v524, %v1459
      %v1475 = vmul.f32 %v591, %v1459
      %v1476 = vmul.f32 %v527, %v1459
      %v1477 = vmul.f32 %v592, %v1459
      %v1478 = vmul.f32 %v530, %v1459
      %v1479 = vmul.f32 %v593, %v1459
      %v1480 = vmul.f32 %v533, %v1459
      %v1481 = vmul.f32 %v594, %v1459
      %v1482 = vmul.f32 %v536, %v1459
      %v1483 = vmul.f32 %v595, %v1459
      %v1484 = vmul.f32 %v539, %v1459
      %v1485 = vmul.f32 %v596, %v1459
      %v1486 = vmul.f32 %v542, %v1459
      %v1487 = vmul.f32 %v597, %v1459
      %v1488 = vmul.f32 %v545, %v1459
      %v1489 = vadd.f32 %v1427, %v1460
      %v1490 = vadd.f32 %v1428, %v1461
      %v1491 = vadd.f32 %v1429, %v1462
      %v1492 = vadd.f32 %v1430, %v1463
      %v1493 = vadd.f32 %v1431, %v1464
      %v1494 = vadd.f32 %v1432, %v1465
      %v1495 = vadd.f32 %v1433, %v1466
      %v1496 = vadd.f32 %v1434, %v1467
      %v1497 = vadd.f32 %v1435, %v1468
      %v1498 = vadd.f32 %v1436, %v1469
      %v1499 = vadd.f32 %v1437, %v1470
      %v1500 = vadd.f32 %v1438, %v1471
      %v1501 = vadd.f32 %v1439, %v1472
      %v1502 = vadd.f32 %v1440, %v1473
      %v1503 = vadd.f32 %v1441, %v1474
      %v1504 = vadd.f32 %v1442, %v1475
      %v1505 = vadd.f32 %v1443, %v1476
      %v1506 = vadd.f32 %v1444, %v1477
      %v1507 = vadd.f32 %v1445, %v1478
      %v1508 = vadd.f32 %v1446, %v1479
      %v1509 = vadd.f32 %v1447, %v1480
      %v1510 = vadd.f32 %v1448, %v1481
      %v1511 = vadd.f32 %v1449, %v1482
      %v1512 = vadd.f32 %v1450, %v1483
      %v1513 = vadd.f32 %v1451, %v1484
      %v1514 = vadd.f32 %v1452, %v1485
      %v1515 = vadd.f32 %v1453, %v1486
      %v1516 = vadd.f32 %v1454, %v1487
      %v1517 = vadd.f32 %v1455, %v1488
      %v1518 = vlaneseq
      %v1519 = vshrl.u32 %v1518, 7
      %v1520 = vsub.s32 1, %v1519
      %v1521 = vrot.slane %v367, %v1520
      %v1522 = vmul.f32 %v1521, 0.0
      %v1523 = vmul.f32 %v681, %v1521
      %v1524 = vmul.f32 %v603, %v1521
      %v1525 = vmul.f32 %v682, %v1521
      %v1526 = vmul.f32 %v606, %v1521
      %v1527 = vmul.f32 %v683, %v1521
      %v1528 = vmul.f32 %v609, %v1521
      %v1529 = vmul.f32 %v684, %v1521
      %v1530 = vmul.f32 %v612, %v1521
      %v1531 = vmul.f32 %v685, %v1521
      %v1532 = vmul.f32 %v615, %v1521
      %v1533 = vmul.f32 %v686, %v1521
      %v1534 = vmul.f32 %v618, %v1521
      %v1535 = vmul.f32 %v687, %v1521
      %v1536 = vmul.f32 %v621, %v1521
      %v1537 = vmul.f32 %v688, %v1521
      %v1538 = vmul.f32 %v624, %v1521
      %v1539 = vmul.f32 %v689, %v1521
      %v1540 = vmul.f32 %v627, %v1521
      %v1541 = vmul.f32 %v690, %v1521
      %v1542 = vmul.f32 %v630, %v1521
      %v1543 = vmul.f32 %v691, %v1521
      %v1544 = vmul.f32 %v633, %v1521
      %v1545 = vmul.f32 %v692, %v1521
      %v1546 = vmul.f32 %v636, %v1521
      %v1547 = vmul.f32 %v693, %v1521
      %v1548 = vmul.f32 %v639, %v1521
      %v1549 = vmul.f32 %v694, %v1521
      %v1550 = vmul.f32 %v642, %v1521
      %v1551 = vadd.f32 %v1489, %v1522
      %v1552 = vadd.f32 %v1490, %v1523
      %v1553 = vadd.f32 %v1491, %v1524
      %v1554 = vadd.f32 %v1492, %v1525
      %v1555 = vadd.f32 %v1493, %v1526
      %v1556 = vadd.f32 %v1494, %v1527
      %v1557 = vadd.f32 %v1495, %v1528
      %v1558 = vadd.f32 %v1496, %v1529
      %v1559 = vadd.f32 %v1497, %v1530
      %v1560 = vadd.f32 %v1498, %v1531
      %v1561 = vadd.f32 %v1499, %v1532
      %v1562 = vadd.f32 %v1500, %v1533
      %v1563 = vadd.f32 %v1501, %v1534
      %v1564 = vadd.f32 %v1502, %v1535
      %v1565 = vadd.f32 %v1503, %v1536
      %v1566 = vadd.f32 %v1504, %v1537
      %v1567 = vadd.f32 %v1505, %v1538
      %v1568 = vadd.f32 %v1506, %v1539
      %v1569 = vadd.f32 %v1507, %v1540
      %v1570 = vadd.f32 %v1508, %v1541
      %v1571 = vadd.f32 %v1509, %v1542
      %v1572 = vadd.f32 %v1510, %v1543
      %v1573 = vadd.f32 %v1511, %v1544
      %v1574 = vadd.f32 %v1512, %v1545
      %v1575 = vadd.f32 %v1513, %v1546
      %v1576 = vadd.f32 %v1514, %v1547
      %v1577 = vadd.f32 %v1515, %v1548
      %v1578 = vadd.f32 %v1516, %v1549
      %v1579 = vadd.f32 %v1517, %v1550
      %v1580 = vlaneseq
      %v1581 = vshrl.u32 %v1580, 7
      %v1582 = vsub.s32 2, %v1581
      %v1583 = vrot.slane %v367, %v1582
      %v1584 = vmul.f32 %v1583, 0.0
      %v1585 = vmul.f32 %v334, %v1583
      %v1586 = vmul.f32 %v335, %v1583
      %v1587 = vmul.f32 %v336, %v1583
      %v1588 = vmul.f32 %v337, %v1583
      %v1589 = vmul.f32 %v338, %v1583
      %v1590 = vmul.f32 %v339, %v1583
      %v1591 = vmul.f32 %v340, %v1583
      %v1592 = vmul.f32 %v341, %v1583
      %v1593 = vmul.f32 %v342, %v1583
      %v1594 = vmul.f32 %v343, %v1583
      %v1595 = vmul.f32 %v344, %v1583
      %v1596 = vmul.f32 %v345, %v1583
      %v1597 = vmul.f32 %v346, %v1583
      %v1598 = vmul.f32 %v347, %v1583
      %v1599 = vmul.f32 %v348, %v1583
      %v1600 = vmul.f32 %v349, %v1583
      %v1601 = vmul.f32 %v350, %v1583
      %v1602 = vmul.f32 %v351, %v1583
      %v1603 = vmul.f32 %v352, %v1583
      %v1604 = vmul.f32 %v353, %v1583
      %v1605 = vmul.f32 %v354, %v1583
      %v1606 = vmul.f32 %v355, %v1583
      %v1607 = vmul.f32 %v356, %v1583
      %v1608 = vmul.f32 %v357, %v1583
      %v1609 = vmul.f32 %v358, %v1583
      %v1610 = vmul.f32 %v359, %v1583
      %v1611 = vmul.f32 %v360, %v1583
      %v1612 = vmul.f32 %v361, %v1583
      %v1613 = vadd.f32 %v1551, %v1584
      %v1614 = vadd.f32 %v1552, %v1585
      %v1615 = vadd.f32 %v1553, %v1586
      %v1616 = vadd.f32 %v1554, %v1587
      %v1617 = vadd.f32 %v1555, %v1588
      %v1618 = vadd.f32 %v1556, %v1589
      %v1619 = vadd.f32 %v1557, %v1590
      %v1620 = vadd.f32 %v1558, %v1591
      %v1621 = vadd.f32 %v1559, %v1592
      %v1622 = vadd.f32 %v1560, %v1593
      %v1623 = vadd.f32 %v1561, %v1594
      %v1624 = vadd.f32 %v1562, %v1595
      %v1625 = vadd.f32 %v1563, %v1596
      %v1626 = vadd.f32 %v1564, %v1597
      %v1627 = vadd.f32 %v1565, %v1598
      %v1628 = vadd.f32 %v1566, %v1599
      %v1629 = vadd.f32 %v1567, %v1600
      %v1630 = vadd.f32 %v1568, %v1601
      %v1631 = vadd.f32 %v1569, %v1602
      %v1632 = vadd.f32 %v1570, %v1603
      %v1633 = vadd.f32 %v1571, %v1604
      %v1634 = vadd.f32 %v1572, %v1605
      %v1635 = vadd.f32 %v1573, %v1606
      %v1636 = vadd.f32 %v1574, %v1607
      %v1637 = vadd.f32 %v1575, %v1608
      %v1638 = vadd.f32 %v1576, %v1609
      %v1639 = vadd.f32 %v1577, %v1610
      %v1640 = vadd.f32 %v1578, %v1611
      %v1641 = vadd.f32 %v1579, %v1612
      %v1642 = vlaneseq
      %v1643 = vshrl.u32 %v1642, 7
      %v1644 = vsub.s32 3, %v1643
      %v1645 = vrot.slane %v367, %v1644
      %v1646 = vmul.f32 %v1645, 0.0
      %v1647 = vmul.f32 %v700, %v1645
      %v1648 = vmul.f32 %v778, %v1645
      %v1649 = vmul.f32 %v703, %v1645
      %v1650 = vmul.f32 %v779, %v1645
      %v1651 = vmul.f32 %v706, %v1645
      %v1652 = vmul.f32 %v780, %v1645
      %v1653 = vmul.f32 %v709, %v1645
      %v1654 = vmul.f32 %v781, %v1645
      %v1655 = vmul.f32 %v712, %v1645
      %v1656 = vmul.f32 %v782, %v1645
      %v1657 = vmul.f32 %v715, %v1645
      %v1658 = vmul.f32 %v783, %v1645
      %v1659 = vmul.f32 %v718, %v1645
      %v1660 = vmul.f32 %v784, %v1645
      %v1661 = vmul.f32 %v721, %v1645
      %v1662 = vmul.f32 %v785, %v1645
      %v1663 = vmul.f32 %v724, %v1645
      %v1664 = vmul.f32 %v786, %v1645
      %v1665 = vmul.f32 %v727, %v1645
      %v1666 = vmul.f32 %v787, %v1645
      %v1667 = vmul.f32 %v730, %v1645
      %v1668 = vmul.f32 %v788, %v1645
      %v1669 = vmul.f32 %v733, %v1645
      %v1670 = vmul.f32 %v789, %v1645
      %v1671 = vmul.f32 %v736, %v1645
      %v1672 = vmul.f32 %v790, %v1645
      %v1673 = vmul.f32 %v739, %v1645
      %v1674 = vmul.f32 %v791, %v1645
      %v1675 = vadd.f32 %v1613, %v1646
      %v1676 = vadd.f32 %v1614, %v1647
      %v1677 = vadd.f32 %v1615, %v1648
      %v1678 = vadd.f32 %v1616, %v1649
      %v1679 = vadd.f32 %v1617, %v1650
      %v1680 = vadd.f32 %v1618, %v1651
      %v1681 = vadd.f32 %v1619, %v1652
      %v1682 = vadd.f32 %v1620, %v1653
      %v1683 = vadd.f32 %v1621, %v1654
      %v1684 = vadd.f32 %v1622, %v1655
      %v1685 = vadd.f32 %v1623, %v1656
      %v1686 = vadd.f32 %v1624, %v1657
      %v1687 = vadd.f32 %v1625, %v1658
      %v1688 = vadd.f32 %v1626, %v1659
      %v1689 = vadd.f32 %v1627, %v1660
      %v1690 = vadd.f32 %v1628, %v1661
      %v1691 = vadd.f32 %v1629, %v1662
      %v1692 = vadd.f32 %v1630, %v1663
      %v1693 = vadd.f32 %v1631, %v1664
      %v1694 = vadd.f32 %v1632, %v1665
      %v1695 = vadd.f32 %v1633, %v1666
      %v1696 = vadd.f32 %v1634, %v1667
      %v1697 = vadd.f32 %v1635, %v1668
      %v1698 = vadd.f32 %v1636, %v1669
      %v1699 = vadd.f32 %v1637, %v1670
      %v1700 = vadd.f32 %v1638, %v1671
      %v1701 = vadd.f32 %v1639, %v1672
      %v1702 = vadd.f32 %v1640, %v1673
      %v1703 = vadd.f32 %v1641, %v1674
      %v1704 = vlaneseq
      %v1705 = vshrl.u32 %v1704, 7
      %v1706 = vsub.s32 4, %v1705
      %v1707 = vrot.slane %v367, %v1706
      %v1708 = vmul.f32 %v1707, 0.0
      %v1709 = vmul.f32 %v797, %v1707
      %v1710 = vmul.f32 %v875, %v1707
      %v1711 = vmul.f32 %v800, %v1707
      %v1712 = vmul.f32 %v876, %v1707
      %v1713 = vmul.f32 %v803, %v1707
      %v1714 = vmul.f32 %v877, %v1707
      %v1715 = vmul.f32 %v806, %v1707
      %v1716 = vmul.f32 %v878, %v1707
      %v1717 = vmul.f32 %v809, %v1707
      %v1718 = vmul.f32 %v879, %v1707
      %v1719 = vmul.f32 %v812, %v1707
      %v1720 = vmul.f32 %v880, %v1707
      %v1721 = vmul.f32 %v815, %v1707
      %v1722 = vmul.f32 %v881, %v1707
      %v1723 = vmul.f32 %v818, %v1707
      %v1724 = vmul.f32 %v882, %v1707
      %v1725 = vmul.f32 %v821, %v1707
      %v1726 = vmul.f32 %v883, %v1707
      %v1727 = vmul.f32 %v824, %v1707
      %v1728 = vmul.f32 %v884, %v1707
      %v1729 = vmul.f32 %v827, %v1707
      %v1730 = vmul.f32 %v885, %v1707
      %v1731 = vmul.f32 %v830, %v1707
      %v1732 = vmul.f32 %v886, %v1707
      %v1733 = vmul.f32 %v833, %v1707
      %v1734 = vmul.f32 %v887, %v1707
      %v1735 = vmul.f32 %v836, %v1707
      %v1736 = vmul.f32 %v888, %v1707
      %v1737 = vadd.f32 %v1675, %v1708
      %v1738 = vadd.f32 %v1676, %v1709
      %v1739 = vadd.f32 %v1677, %v1710
      %v1740 = vadd.f32 %v1678, %v1711
      %v1741 = vadd.f32 %v1679, %v1712
      %v1742 = vadd.f32 %v1680, %v1713
      %v1743 = vadd.f32 %v1681, %v1714
      %v1744 = vadd.f32 %v1682, %v1715
      %v1745 = vadd.f32 %v1683, %v1716
      %v1746 = vadd.f32 %v1684, %v1717
      %v1747 = vadd.f32 %v1685, %v1718
      %v1748 = vadd.f32 %v1686, %v1719
      %v1749 = vadd.f32 %v1687, %v1720
      %v1750 = vadd.f32 %v1688, %v1721
      %v1751 = vadd.f32 %v1689, %v1722
      %v1752 = vadd.f32 %v1690, %v1723
      %v1753 = vadd.f32 %v1691, %v1724
      %v1754 = vadd.f32 %v1692, %v1725
      %v1755 = vadd.f32 %v1693, %v1726
      %v1756 = vadd.f32 %v1694, %v1727
      %v1757 = vadd.f32 %v1695, %v1728
      %v1758 = vadd.f32 %v1696, %v1729
      %v1759 = vadd.f32 %v1697, %v1730
      %v1760 = vadd.f32 %v1698, %v1731
      %v1761 = vadd.f32 %v1699, %v1732
      %v1762 = vadd.f32 %v1700, %v1733
      %v1763 = vadd.f32 %v1701, %v1734
      %v1764 = vadd.f32 %v1702, %v1735
      %v1765 = vadd.f32 %v1703, %v1736
      %v1766 = vlaneseq
      %v1767 = vshrl.u32 %v1766, 7
      %v1768 = vsub.s32 5, %v1767
      %v1769 = vrot.slane %v367, %v1768
      %v1770 = vmul.f32 %v1769, 0.0
      %v1771 = vmul.f32 %v894, %v1769
      %v1772 = vmul.f32 %v972, %v1769
      %v1773 = vmul.f32 %v897, %v1769
      %v1774 = vmul.f32 %v973, %v1769
      %v1775 = vmul.f32 %v900, %v1769
      %v1776 = vmul.f32 %v974, %v1769
      %v1777 = vmul.f32 %v903, %v1769
      %v1778 = vmul.f32 %v975, %v1769
      %v1779 = vmul.f32 %v906, %v1769
      %v1780 = vmul.f32 %v976, %v1769
      %v1781 = vmul.f32 %v909, %v1769
      %v1782 = vmul.f32 %v977, %v1769
      %v1783 = vmul.f32 %v912, %v1769
      %v1784 = vmul.f32 %v978, %v1769
      %v1785 = vmul.f32 %v915, %v1769
      %v1786 = vmul.f32 %v979, %v1769
      %v1787 = vmul.f32 %v918, %v1769
      %v1788 = vmul.f32 %v980, %v1769
      %v1789 = vmul.f32 %v921, %v1769
      %v1790 = vmul.f32 %v981, %v1769
      %v1791 = vmul.f32 %v924, %v1769
      %v1792 = vmul.f32 %v982, %v1769
      %v1793 = vmul.f32 %v927, %v1769
      %v1794 = vmul.f32 %v983, %v1769
      %v1795 = vmul.f32 %v930, %v1769
      %v1796 = vmul.f32 %v984, %v1769
      %v1797 = vmul.f32 %v933, %v1769
      %v1798 = vmul.f32 %v985, %v1769
      %v1799 = vadd.f32 %v1737, %v1770
      %v1800 = vadd.f32 %v1738, %v1771
      %v1801 = vadd.f32 %v1739, %v1772
      %v1802 = vadd.f32 %v1740, %v1773
      %v1803 = vadd.f32 %v1741, %v1774
      %v1804 = vadd.f32 %v1742, %v1775
      %v1805 = vadd.f32 %v1743, %v1776
      %v1806 = vadd.f32 %v1744, %v1777
      %v1807 = vadd.f32 %v1745, %v1778
      %v1808 = vadd.f32 %v1746, %v1779
      %v1809 = vadd.f32 %v1747, %v1780
      %v1810 = vadd.f32 %v1748, %v1781
      %v1811 = vadd.f32 %v1749, %v1782
      %v1812 = vadd.f32 %v1750, %v1783
      %v1813 = vadd.f32 %v1751, %v1784
      %v1814 = vadd.f32 %v1752, %v1785
      %v1815 = vadd.f32 %v1753, %v1786
      %v1816 = vadd.f32 %v1754, %v1787
      %v1817 = vadd.f32 %v1755, %v1788
      %v1818 = vadd.f32 %v1756, %v1789
      %v1819 = vadd.f32 %v1757, %v1790
      %v1820 = vadd.f32 %v1758, %v1791
      %v1821 = vadd.f32 %v1759, %v1792
      %v1822 = vadd.f32 %v1760, %v1793
      %v1823 = vadd.f32 %v1761, %v1794
      %v1824 = vadd.f32 %v1762, %v1795
      %v1825 = vadd.f32 %v1763, %v1796
      %v1826 = vadd.f32 %v1764, %v1797
      %v1827 = vadd.f32 %v1765, %v1798
      %v1828 = vlaneseq
      %v1829 = vshrl.u32 %v1828, 7
      %v1830 = vsub.s32 6, %v1829
      %v1831 = vrot.slane %v367, %v1830
      %v1832 = vmul.f32 %v1831, 0.0
      %v1833 = vmul.f32 %v487, %v1831
      %v1834 = vmul.f32 %v409, %v1831
      %v1835 = vmul.f32 %v488, %v1831
      %v1836 = vmul.f32 %v412, %v1831
      %v1837 = vmul.f32 %v489, %v1831
      %v1838 = vmul.f32 %v415, %v1831
      %v1839 = vmul.f32 %v490, %v1831
      %v1840 = vmul.f32 %v418, %v1831
      %v1841 = vmul.f32 %v491, %v1831
      %v1842 = vmul.f32 %v421, %v1831
      %v1843 = vmul.f32 %v492, %v1831
      %v1844 = vmul.f32 %v424, %v1831
      %v1845 = vmul.f32 %v493, %v1831
      %v1846 = vmul.f32 %v427, %v1831
      %v1847 = vmul.f32 %v494, %v1831
      %v1848 = vmul.f32 %v430, %v1831
      %v1849 = vmul.f32 %v495, %v1831
      %v1850 = vmul.f32 %v433, %v1831
      %v1851 = vmul.f32 %v496, %v1831
      %v1852 = vmul.f32 %v436, %v1831
      %v1853 = vmul.f32 %v497, %v1831
      %v1854 = vmul.f32 %v439, %v1831
      %v1855 = vmul.f32 %v498, %v1831
      %v1856 = vmul.f32 %v442, %v1831
      %v1857 = vmul.f32 %v499, %v1831
      %v1858 = vmul.f32 %v445, %v1831
      %v1859 = vmul.f32 %v500, %v1831
      %v1860 = vmul.f32 %v448, %v1831
      %v1861 = vmul.f32 %v501, %v1831
      %v1862 = vmul.f32 %v451, %v1831
      %v1863 = vadd.f32 %v1799, %v1832
      %v1864 = vadd.f32 %v1799, %v1833
      %v1865 = vadd.f32 %v1799, %v1834
      %v1866 = vadd.f32 %v1800, %v1835
      %v1867 = vadd.f32 %v1801, %v1836
      %v1868 = vadd.f32 %v1802, %v1837
      %v1869 = vadd.f32 %v1803, %v1838
      %v1870 = vadd.f32 %v1804, %v1839
      %v1871 = vadd.f32 %v1805, %v1840
      %v1872 = vadd.f32 %v1806, %v1841
      %v1873 = vadd.f32 %v1807, %v1842
      %v1874 = vadd.f32 %v1808, %v1843
      %v1875 = vadd.f32 %v1809, %v1844
      %v1876 = vadd.f32 %v1810, %v1845
      %v1877 = vadd.f32 %v1811, %v1846
      %v1878 = vadd.f32 %v1812, %v1847
      %v1879 = vadd.f32 %v1813, %v1848
      %v1880 = vadd.f32 %v1814, %v1849
      %v1881 = vadd.f32 %v1815, %v1850
      %v1882 = vadd.f32 %v1816, %v1851
      %v1883 = vadd.f32 %v1817, %v1852
      %v1884 = vadd.f32 %v1818, %v1853
      %v1885 = vadd.f32 %v1819, %v1854
      %v1886 = vadd.f32 %v1820, %v1855
      %v1887 = vadd.f32 %v1821, %v1856
      %v1888 = vadd.f32 %v1822, %v1857
      %v1889 = vadd.f32 %v1823, %v1858
      %v1890 = vadd.f32 %v1824, %v1859
      %v1891 = vadd.f32 %v1825, %v1860
      %v1892 = vadd.f32 %v1826, %v1861
      %v1893 = vadd.f32 %v1827, %v1862
      %v1894 = vlaneseq
      %v1895 = vshrl.u32 %v1894, 7
      %v1896 = vsub.s32 7, %v1895
      %v1897 = vrot.slane %v367, %v1896
      %v1898 = vmul.f32 %v1897, 0.0
      %v1899 = vmul.f32 %v584, %v1897
      %v1900 = vmul.f32 %v506, %v1897
      %v1901 = vmul.f32 %v585, %v1897
      %v1902 = vmul.f32 %v509, %v1897
      %v1903 = vmul.f32 %v586, %v1897
      %v1904 = vmul.f32 %v512, %v1897
      %v1905 = vmul.f32 %v587, %v1897
      %v1906 = vmul.f32 %v515, %v1897
      %v1907 = vmul.f32 %v588, %v1897
      %v1908 = vmul.f32 %v518, %v1897
      %v1909 = vmul.f32 %v589, %v1897
      %v1910 = vmul.f32 %v521, %v1897
      %v1911 = vmul.f32 %v590, %v1897
      %v1912 = vmul.f32 %v524, %v1897
      %v1913 = vmul.f32 %v591, %v1897
      %v1914 = vmul.f32 %v527, %v1897
      %v1915 = vmul.f32 %v592, %v1897
      %v1916 = vmul.f32 %v530, %v1897
      %v1917 = vmul.f32 %v593, %v1897
      %v1918 = vmul.f32 %v533, %v1897
      %v1919 = vmul.f32 %v594, %v1897
      %v1920 = vmul.f32 %v536, %v1897
      %v1921 = vmul.f32 %v595, %v1897
      %v1922 = vmul.f32 %v539, %v1897
      %v1923 = vmul.f32 %v596, %v1897
      %v1924 = vmul.f32 %v542, %v1897
      %v1925 = vmul.f32 %v597, %v1897
      %v1926 = vmul.f32 %v545, %v1897
      %v1927 = vmul.f32 %v598, %v1897
      %v1928 = vmul.f32 %v548, %v1897
      %v1929 = vadd.f32 %v1863, %v1898
      %v1930 = vadd.f32 %v1864, %v1899
      %v1931 = vadd.f32 %v1865, %v1900
      %v1932 = vadd.f32 %v1866, %v1901
      %v1933 = vadd.f32 %v1867, %v1902
      %v1934 = vadd.f32 %v1868, %v1903
      %v1935 = vadd.f32 %v1869, %v1904
      %v1936 = vadd.f32 %v1870, %v1905
      %v1937 = vadd.f32 %v1871, %v1906
      %v1938 = vadd.f32 %v1872, %v1907
      %v1939 = vadd.f32 %v1873, %v1908
      %v1940 = vadd.f32 %v1874, %v1909
      %v1941 = vadd.f32 %v1875, %v1910
      %v1942 = vadd.f32 %v1876, %v1911
      %v1943 = vadd.f32 %v1877, %v1912
      %v1944 = vadd.f32 %v1878, %v1913
      %v1945 = vadd.f32 %v1879, %v1914
      %v1946 = vadd.f32 %v1880, %v1915
      %v1947 = vadd.f32 %v1881, %v1916
      %v1948 = vadd.f32 %v1882, %v1917
      %v1949 = vadd.f32 %v1883, %v1918
      %v1950 = vadd.f32 %v1884, %v1919
      %v1951 = vadd.f32 %v1885, %v1920
      %v1952 = vadd.f32 %v1886, %v1921
      %v1953 = vadd.f32 %v1887, %v1922
      %v1954 = vadd.f32 %v1888, %v1923
      %v1955 = vadd.f32 %v1889, %v1924
      %v1956 = vadd.f32 %v1890, %v1925
      %v1957 = vadd.f32 %v1891, %v1926
      %v1958 = vadd.f32 %v1892, %v1927
      %v1959 = vadd.f32 %v1893, %v1928
      %v1960 = vlaneseq
      %v1961 = vshrl.u32 %v1960, 7
      %v1962 = vsub.s32 0, %v1961
      %v1963 = vrot.slane %v368, %v1962
      %v1964 = vmul.f32 %v1963, 0.0
      %v1965 = vmul.f32 %v681, %v1963
      %v1966 = vmul.f32 %v603, %v1963
      %v1967 = vmul.f32 %v682, %v1963
      %v1968 = vmul.f32 %v606, %v1963
      %v1969 = vmul.f32 %v683, %v1963
      %v1970 = vmul.f32 %v609, %v1963
      %v1971 = vmul.f32 %v684, %v1963
      %v1972 = vmul.f32 %v612, %v1963
      %v1973 = vmul.f32 %v685, %v1963
      %v1974 = vmul.f32 %v615, %v1963
      %v1975 = vmul.f32 %v686, %v1963
      %v1976 = vmul.f32 %v618, %v1963
      %v1977 = vmul.f32 %v687, %v1963
      %v1978 = vmul.f32 %v621, %v1963
      %v1979 = vmul.f32 %v688, %v1963
      %v1980 = vmul.f32 %v624, %v1963
      %v1981 = vmul.f32 %v689, %v1963
      %v1982 = vmul.f32 %v627, %v1963
      %v1983 = vmul.f32 %v690, %v1963
      %v1984 = vmul.f32 %v630, %v1963
      %v1985 = vmul.f32 %v691, %v1963
      %v1986 = vmul.f32 %v633, %v1963
      %v1987 = vmul.f32 %v692, %v1963
      %v1988 = vmul.f32 %v636, %v1963
      %v1989 = vmul.f32 %v693, %v1963
      %v1990 = vmul.f32 %v639, %v1963
      %v1991 = vmul.f32 %v694, %v1963
      %v1992 = vmul.f32 %v642, %v1963
      %v1993 = vmul.f32 %v695, %v1963
      %v1994 = vmul.f32 %v645, %v1963
      %v1995 = vadd.f32 %v1929, %v1964
      %v1996 = vadd.f32 %v1930, %v1965
      %v1997 = vadd.f32 %v1931, %v1966
      %v1998 = vadd.f32 %v1932, %v1967
      %v1999 = vadd.f32 %v1933, %v1968
      %v2000 = vadd.f32 %v1934, %v1969
      %v2001 = vadd.f32 %v1935, %v1970
      %v2002 = vadd.f32 %v1936, %v1971
      %v2003 = vadd.f32 %v1937, %v1972
      %v2004 = vadd.f32 %v1938, %v1973
      %v2005 = vadd.f32 %v1939, %v1974
      %v2006 = vadd.f32 %v1940, %v1975
      %v2007 = vadd.f32 %v1941, %v1976
      %v2008 = vadd.f32 %v1942, %v1977
      %v2009 = vadd.f32 %v1943, %v1978
      %v2010 = vadd.f32 %v1944, %v1979
      %v2011 = vadd.f32 %v1945, %v1980
      %v2012 = vadd.f32 %v1946, %v1981
      %v2013 = vadd.f32 %v1947, %v1982
      %v2014 = vadd.f32 %v1948, %v1983
      %v2015 = vadd.f32 %v1949, %v1984
      %v2016 = vadd.f32 %v1950, %v1985
      %v2017 = vadd.f32 %v1951, %v1986
      %v2018 = vadd.f32 %v1952, %v1987
      %v2019 = vadd.f32 %v1953, %v1988
      %v2020 = vadd.f32 %v1954, %v1989
      %v2021 = vadd.f32 %v1955, %v1990
      %v2022 = vadd.f32 %v1956, %v1991
      %v2023 = vadd.f32 %v1957, %v1992
      %v2024 = vadd.f32 %v1958, %v1993
      %v2025 = vadd.f32 %v1959, %v1994
      %v2026 = vlaneseq
      %v2027 = vshrl.u32 %v2026, 7
      %v2028 = vsub.s32 1, %v2027
      %v2029 = vrot.slane %v368, %v2028
      %v2030 = vmul.f32 %v2029, 0.0
      %v2031 = vmul.f32 %v334, %v2029
      %v2032 = vmul.f32 %v335, %v2029
      %v2033 = vmul.f32 %v336, %v2029
      %v2034 = vmul.f32 %v337, %v2029
      %v2035 = vmul.f32 %v338, %v2029
      %v2036 = vmul.f32 %v339, %v2029
      %v2037 = vmul.f32 %v340, %v2029
      %v2038 = vmul.f32 %v341, %v2029
      %v2039 = vmul.f32 %v342, %v2029
      %v2040 = vmul.f32 %v343, %v2029
      %v2041 = vmul.f32 %v344, %v2029
      %v2042 = vmul.f32 %v345, %v2029
      %v2043 = vmul.f32 %v346, %v2029
      %v2044 = vmul.f32 %v347, %v2029
      %v2045 = vmul.f32 %v348, %v2029
      %v2046 = vmul.f32 %v349, %v2029
      %v2047 = vmul.f32 %v350, %v2029
      %v2048 = vmul.f32 %v351, %v2029
      %v2049 = vmul.f32 %v352, %v2029
      %v2050 = vmul.f32 %v353, %v2029
      %v2051 = vmul.f32 %v354, %v2029
      %v2052 = vmul.f32 %v355, %v2029
      %v2053 = vmul.f32 %v356, %v2029
      %v2054 = vmul.f32 %v357, %v2029
      %v2055 = vmul.f32 %v358, %v2029
      %v2056 = vmul.f32 %v359, %v2029
      %v2057 = vmul.f32 %v360, %v2029
      %v2058 = vmul.f32 %v361, %v2029
      %v2059 = vmul.f32 %v362, %v2029
      %v2060 = vmul.f32 %v363, %v2029
      %v2061 = vadd.f32 %v1995, %v2030
      %v2062 = vadd.f32 %v1996, %v2031
      %v2063 = vadd.f32 %v1997, %v2032
      %v2064 = vadd.f32 %v1998, %v2033
      %v2065 = vadd.f32 %v1999, %v2034
      %v2066 = vadd.f32 %v2000, %v2035
      %v2067 = vadd.f32 %v2001, %v2036
      %v2068 = vadd.f32 %v2002, %v2037
      %v2069 = vadd.f32 %v2003, %v2038
      %v2070 = vadd.f32 %v2004, %v2039
      %v2071 = vadd.f32 %v2005, %v2040
      %v2072 = vadd.f32 %v2006, %v2041
      %v2073 = vadd.f32 %v2007, %v2042
      %v2074 = vadd.f32 %v2008, %v2043
      %v2075 = vadd.f32 %v2009, %v2044
      %v2076 = vadd.f32 %v2010, %v2045
      %v2077 = vadd.f32 %v2011, %v2046
      %v2078 = vadd.f32 %v2012, %v2047
      %v2079 = vadd.f32 %v2013, %v2048
      %v2080 = vadd.f32 %v2014, %v2049
      %v2081 = vadd.f32 %v2015, %v2050
      %v2082 = vadd.f32 %v2016, %v2051
      %v2083 = vadd.f32 %v2017, %v2052
      %v2084 = vadd.f32 %v2018, %v2053
      %v2085 = vadd.f32 %v2019, %v2054
      %v2086 = vadd.f32 %v2020, %v2055
      %v2087 = vadd.f32 %v2021, %v2056
      %v2088 = vadd.f32 %v2022, %v2057
      %v2089 = vadd.f32 %v2023, %v2058
      %v2090 = vadd.f32 %v2024, %v2059
      %v2091 = vadd.f32 %v2025, %v2060
      %v2092 = vlaneseq
      %v2093 = vshrl.u32 %v2092, 7
      %v2094 = vsub.s32 2, %v2093
      %v2095 = vrot.slane %v368, %v2094
      %v2096 = vmul.f32 %v2095, 0.0
      %v2097 = vmul.f32 %v700, %v2095
      %v2098 = vmul.f32 %v778, %v2095
      %v2099 = vmul.f32 %v703, %v2095
      %v2100 = vmul.f32 %v779, %v2095
      %v2101 = vmul.f32 %v706, %v2095
      %v2102 = vmul.f32 %v780, %v2095
      %v2103 = vmul.f32 %v709, %v2095
      %v2104 = vmul.f32 %v781, %v2095
      %v2105 = vmul.f32 %v712, %v2095
      %v2106 = vmul.f32 %v782, %v2095
      %v2107 = vmul.f32 %v715, %v2095
      %v2108 = vmul.f32 %v783, %v2095
      %v2109 = vmul.f32 %v718, %v2095
      %v2110 = vmul.f32 %v784, %v2095
      %v2111 = vmul.f32 %v721, %v2095
      %v2112 = vmul.f32 %v785, %v2095
      %v2113 = vmul.f32 %v724, %v2095
      %v2114 = vmul.f32 %v786, %v2095
      %v2115 = vmul.f32 %v727, %v2095
      %v2116 = vmul.f32 %v787, %v2095
      %v2117 = vmul.f32 %v730, %v2095
      %v2118 = vmul.f32 %v788, %v2095
      %v2119 = vmul.f32 %v733, %v2095
      %v2120 = vmul.f32 %v789, %v2095
      %v2121 = vmul.f32 %v736, %v2095
      %v2122 = vmul.f32 %v790, %v2095
      %v2123 = vmul.f32 %v739, %v2095
      %v2124 = vmul.f32 %v791, %v2095
      %v2125 = vmul.f32 %v742, %v2095
      %v2126 = vmul.f32 %v792, %v2095
      %v2127 = vadd.f32 %v2061, %v2096
      %v2128 = vadd.f32 %v2062, %v2097
      %v2129 = vadd.f32 %v2063, %v2098
      %v2130 = vadd.f32 %v2064, %v2099
      %v2131 = vadd.f32 %v2065, %v2100
      %v2132 = vadd.f32 %v2066, %v2101
      %v2133 = vadd.f32 %v2067, %v2102
      %v2134 = vadd.f32 %v2068, %v2103
      %v2135 = vadd.f32 %v2069, %v2104
      %v2136 = vadd.f32 %v2070, %v2105
      %v2137 = vadd.f32 %v2071, %v2106
      %v2138 = vadd.f32 %v2072, %v2107
      %v2139 = vadd.f32 %v2073, %v2108
      %v2140 = vadd.f32 %v2074, %v2109
      %v2141 = vadd.f32 %v2075, %v2110
      %v2142 = vadd.f32 %v2076, %v2111
      %v2143 = vadd.f32 %v2077, %v2112
      %v2144 = vadd.f32 %v2078, %v2113
      %v2145 = vadd.f32 %v2079, %v2114
      %v2146 = vadd.f32 %v2080, %v2115
      %v2147 = vadd.f32 %v2081, %v2116
      %v2148 = vadd.f32 %v2082, %v2117
      %v2149 = vadd.f32 %v2083, %v2118
      %v2150 = vadd.f32 %v2084, %v2119
      %v2151 = vadd.f32 %v2085, %v2120
      %v2152 = vadd.f32 %v2086, %v2121
      %v2153 = vadd.f32 %v2087, %v2122
      %v2154 = vadd.f32 %v2088, %v2123
      %v2155 = vadd.f32 %v2089, %v2124
      %v2156 = vadd.f32 %v2090, %v2125
      %v2157 = vadd.f32 %v2091, %v2126
      %v2158 = vlaneseq
      %v2159 = vshrl.u32 %v2158, 7
      %v2160 = vsub.s32 3, %v2159
      %v2161 = vrot.slane %v368, %v2160
      %v2162 = vmul.f32 %v2161, 0.0
      %v2163 = vmul.f32 %v797, %v2161
      %v2164 = vmul.f32 %v875, %v2161
      %v2165 = vmul.f32 %v800, %v2161
      %v2166 = vmul.f32 %v876, %v2161
      %v2167 = vmul.f32 %v803, %v2161
      %v2168 = vmul.f32 %v877, %v2161
      %v2169 = vmul.f32 %v806, %v2161
      %v2170 = vmul.f32 %v878, %v2161
      %v2171 = vmul.f32 %v809, %v2161
      %v2172 = vmul.f32 %v879, %v2161
      %v2173 = vmul.f32 %v812, %v2161
      %v2174 = vmul.f32 %v880, %v2161
      %v2175 = vmul.f32 %v815, %v2161
      %v2176 = vmul.f32 %v881, %v2161
      %v2177 = vmul.f32 %v818, %v2161
      %v2178 = vmul.f32 %v882, %v2161
      %v2179 = vmul.f32 %v821, %v2161
      %v2180 = vmul.f32 %v883, %v2161
      %v2181 = vmul.f32 %v824, %v2161
      %v2182 = vmul.f32 %v884, %v2161
      %v2183 = vmul.f32 %v827, %v2161
      %v2184 = vmul.f32 %v885, %v2161
      %v2185 = vmul.f32 %v830, %v2161
      %v2186 = vmul.f32 %v886, %v2161
      %v2187 = vmul.f32 %v833, %v2161
      %v2188 = vmul.f32 %v887, %v2161
      %v2189 = vmul.f32 %v836, %v2161
      %v2190 = vmul.f32 %v888, %v2161
      %v2191 = vmul.f32 %v839, %v2161
      %v2192 = vmul.f32 %v889, %v2161
      %v2193 = vadd.f32 %v2127, %v2162
      %v2194 = vadd.f32 %v2128, %v2163
      %v2195 = vadd.f32 %v2129, %v2164
      %v2196 = vadd.f32 %v2130, %v2165
      %v2197 = vadd.f32 %v2131, %v2166
      %v2198 = vadd.f32 %v2132, %v2167
      %v2199 = vadd.f32 %v2133, %v2168
      %v2200 = vadd.f32 %v2134, %v2169
      %v2201 = vadd.f32 %v2135, %v2170
      %v2202 = vadd.f32 %v2136, %v2171
      %v2203 = vadd.f32 %v2137, %v2172
      %v2204 = vadd.f32 %v2138, %v2173
      %v2205 = vadd.f32 %v2139, %v2174
      %v2206 = vadd.f32 %v2140, %v2175
      %v2207 = vadd.f32 %v2141, %v2176
      %v2208 = vadd.f32 %v2142, %v2177
      %v2209 = vadd.f32 %v2143, %v2178
      %v2210 = vadd.f32 %v2144, %v2179
      %v2211 = vadd.f32 %v2145, %v2180
      %v2212 = vadd.f32 %v2146, %v2181
      %v2213 = vadd.f32 %v2147, %v2182
      %v2214 = vadd.f32 %v2148, %v2183
      %v2215 = vadd.f32 %v2149, %v2184
      %v2216 = vadd.f32 %v2150, %v2185
      %v2217 = vadd.f32 %v2151, %v2186
      %v2218 = vadd.f32 %v2152, %v2187
      %v2219 = vadd.f32 %v2153, %v2188
      %v2220 = vadd.f32 %v2154, %v2189
      %v2221 = vadd.f32 %v2155, %v2190
      %v2222 = vadd.f32 %v2156, %v2191
      %v2223 = vadd.f32 %v2157, %v2192
      %v2224 = vlaneseq
      %v2225 = vshrl.u32 %v2224, 7
      %v2226 = vsub.s32 4, %v2225
      %v2227 = vrot.slane %v368, %v2226
      %v2228 = vmul.f32 %v2227, 0.0
      %v2229 = vmul.f32 %v894, %v2227
      %v2230 = vmul.f32 %v972, %v2227
      %v2231 = vmul.f32 %v897, %v2227
      %v2232 = vmul.f32 %v973, %v2227
      %v2233 = vmul.f32 %v900, %v2227
      %v2234 = vmul.f32 %v974, %v2227
      %v2235 = vmul.f32 %v903, %v2227
      %v2236 = vmul.f32 %v975, %v2227
      %v2237 = vmul.f32 %v906, %v2227
      %v2238 = vmul.f32 %v976, %v2227
      %v2239 = vmul.f32 %v909, %v2227
      %v2240 = vmul.f32 %v977, %v2227
      %v2241 = vmul.f32 %v912, %v2227
      %v2242 = vmul.f32 %v978, %v2227
      %v2243 = vmul.f32 %v915, %v2227
      %v2244 = vmul.f32 %v979, %v2227
      %v2245 = vmul.f32 %v918, %v2227
      %v2246 = vmul.f32 %v980, %v2227
      %v2247 = vmul.f32 %v921, %v2227
      %v2248 = vmul.f32 %v981, %v2227
      %v2249 = vmul.f32 %v924, %v2227
      %v2250 = vmul.f32 %v982, %v2227
      %v2251 = vmul.f32 %v927, %v2227
      %v2252 = vmul.f32 %v983, %v2227
      %v2253 = vmul.f32 %v930, %v2227
      %v2254 = vmul.f32 %v984, %v2227
      %v2255 = vmul.f32 %v933, %v2227
      %v2256 = vmul.f32 %v985, %v2227
      %v2257 = vmul.f32 %v936, %v2227
      %v2258 = vmul.f32 %v986, %v2227
      %v2259 = vadd.f32 %v2193, %v2228
      %v2260 = vadd.f32 %v2194, %v2229
      %v2261 = vadd.f32 %v2195, %v2230
      %v2262 = vadd.f32 %v2196, %v2231
      %v2263 = vadd.f32 %v2197, %v2232
      %v2264 = vadd.f32 %v2198, %v2233
      %v2265 = vadd.f32 %v2199, %v2234
      %v2266 = vadd.f32 %v2200, %v2235
      %v2267 = vadd.f32 %v2201, %v2236
      %v2268 = vadd.f32 %v2202, %v2237
      %v2269 = vadd.f32 %v2203, %v2238
      %v2270 = vadd.f32 %v2204, %v2239
      %v2271 = vadd.f32 %v2205, %v2240
      %v2272 = vadd.f32 %v2206, %v2241
      %v2273 = vadd.f32 %v2207, %v2242
      %v2274 = vadd.f32 %v2208, %v2243
      %v2275 = vadd.f32 %v2209, %v2244
      %v2276 = vadd.f32 %v2210, %v2245
      %v2277 = vadd.f32 %v2211, %v2246
      %v2278 = vadd.f32 %v2212, %v2247
      %v2279 = vadd.f32 %v2213, %v2248
      %v2280 = vadd.f32 %v2214, %v2249
      %v2281 = vadd.f32 %v2215, %v2250
      %v2282 = vadd.f32 %v2216, %v2251
      %v2283 = vadd.f32 %v2217, %v2252
      %v2284 = vadd.f32 %v2218, %v2253
      %v2285 = vadd.f32 %v2219, %v2254
      %v2286 = vadd.f32 %v2220, %v2255
      %v2287 = vadd.f32 %v2221, %v2256
      %v2288 = vadd.f32 %v2222, %v2257
      %v2289 = vadd.f32 %v2223, %v2258
      %v2290 = vlaneseq
      %v2291 = vshrl.u32 %v2290, 7
      %v2292 = vsub.s32 5, %v2291
      %v2293 = vrot.slane %v368, %v2292
      %v2294 = vmul.f32 %v487, %v2293
      %v2295 = vmul.f32 %v409, %v2293
      %v2296 = vmul.f32 %v488, %v2293
      %v2297 = vmul.f32 %v412, %v2293
      %v2298 = vmul.f32 %v489, %v2293
      %v2299 = vmul.f32 %v415, %v2293
      %v2300 = vmul.f32 %v490, %v2293
      %v2301 = vmul.f32 %v418, %v2293
      %v2302 = vmul.f32 %v491, %v2293
      %v2303 = vmul.f32 %v421, %v2293
      %v2304 = vmul.f32 %v492, %v2293
      %v2305 = vmul.f32 %v424, %v2293
      %v2306 = vmul.f32 %v493, %v2293
      %v2307 = vmul.f32 %v427, %v2293
      %v2308 = vmul.f32 %v494, %v2293
      %v2309 = vmul.f32 %v430, %v2293
      %v2310 = vmul.f32 %v495, %v2293
      %v2311 = vmul.f32 %v433, %v2293
      %v2312 = vmul.f32 %v496, %v2293
      %v2313 = vmul.f32 %v436, %v2293
      %v2314 = vmul.f32 %v497, %v2293
      %v2315 = vmul.f32 %v439, %v2293
      %v2316 = vmul.f32 %v498, %v2293
      %v2317 = vmul.f32 %v442, %v2293
      %v2318 = vmul.f32 %v499, %v2293
      %v2319 = vmul.f32 %v445, %v2293
      %v2320 = vmul.f32 %v500, %v2293
      %v2321 = vmul.f32 %v448, %v2293
      %v2322 = vmul.f32 %v501, %v2293
      %v2323 = vmul.f32 %v451, %v2293
      %v2324 = vmul.f32 %v502, %v2293
      %v2325 = vmul.f32 %v454, %v2293
      %v2326 = vadd.f32 %v2259, %v2294
      %v2327 = vadd.f32 %v2259, %v2295
      %v2328 = vadd.f32 %v2260, %v2296
      %v2329 = vadd.f32 %v2261, %v2297
      %v2330 = vadd.f32 %v2262, %v2298
      %v2331 = vadd.f32 %v2263, %v2299
      %v2332 = vadd.f32 %v2264, %v2300
      %v2333 = vadd.f32 %v2265, %v2301
      %v2334 = vadd.f32 %v2266, %v2302
      %v2335 = vadd.f32 %v2267, %v2303
      %v2336 = vadd.f32 %v2268, %v2304
      %v2337 = vadd.f32 %v2269, %v2305
      %v2338 = vadd.f32 %v2270, %v2306
      %v2339 = vadd.f32 %v2271, %v2307
      %v2340 = vadd.f32 %v2272, %v2308
      %v2341 = vadd.f32 %v2273, %v2309
      %v2342 = vadd.f32 %v2274, %v2310
      %v2343 = vadd.f32 %v2275, %v2311
      %v2344 = vadd.f32 %v2276, %v2312
      %v2345 = vadd.f32 %v2277, %v2313
      %v2346 = vadd.f32 %v2278, %v2314
      %v2347 = vadd.f32 %v2279, %v2315
      %v2348 = vadd.f32 %v2280, %v2316
      %v2349 = vadd.f32 %v2281, %v2317
      %v2350 = vadd.f32 %v2282, %v2318
      %v2351 = vadd.f32 %v2283, %v2319
      %v2352 = vadd.f32 %v2284, %v2320
      %v2353 = vadd.f32 %v2285, %v2321
      %v2354 = vadd.f32 %v2286, %v2322
      %v2355 = vadd.f32 %v2287, %v2323
      %v2356 = vadd.f32 %v2288, %v2324
      %v2357 = vadd.f32 %v2289, %v2325
      %v2358 = vlaneseq
      %v2359 = vshrl.u32 %v2358, 7
      %v2360 = vsub.s32 6, %v2359
      %v2361 = vrot.slane %v368, %v2360
      %v2362 = vmul.f32 %v584, %v2361
      %v2363 = vmul.f32 %v506, %v2361
      %v2364 = vmul.f32 %v585, %v2361
      %v2365 = vmul.f32 %v509, %v2361
      %v2366 = vmul.f32 %v586, %v2361
      %v2367 = vmul.f32 %v512, %v2361
      %v2368 = vmul.f32 %v587, %v2361
      %v2369 = vmul.f32 %v515, %v2361
      %v2370 = vmul.f32 %v588, %v2361
      %v2371 = vmul.f32 %v518, %v2361
      %v2372 = vmul.f32 %v589, %v2361
      %v2373 = vmul.f32 %v521, %v2361
      %v2374 = vmul.f32 %v590, %v2361
      %v2375 = vmul.f32 %v524, %v2361
      %v2376 = vmul.f32 %v591, %v2361
      %v2377 = vmul.f32 %v527, %v2361
      %v2378 = vmul.f32 %v592, %v2361
      %v2379 = vmul.f32 %v530, %v2361
      %v2380 = vmul.f32 %v593, %v2361
      %v2381 = vmul.f32 %v533, %v2361
      %v2382 = vmul.f32 %v594, %v2361
      %v2383 = vmul.f32 %v536, %v2361
      %v2384 = vmul.f32 %v595, %v2361
      %v2385 = vmul.f32 %v539, %v2361
      %v2386 = vmul.f32 %v596, %v2361
      %v2387 = vmul.f32 %v542, %v2361
      %v2388 = vmul.f32 %v597, %v2361
      %v2389 = vmul.f32 %v545, %v2361
      %v2390 = vmul.f32 %v598, %v2361
      %v2391 = vmul.f32 %v548, %v2361
      %v2392 = vmul.f32 %v599, %v2361
      %v2393 = vmul.f32 %v551, %v2361
      %v2394 = vadd.f32 %v2326, %v2362
      %v2395 = vadd.f32 %v2327, %v2363
      %v2396 = vadd.f32 %v2328, %v2364
      %v2397 = vadd.f32 %v2329, %v2365
      %v2398 = vadd.f32 %v2330, %v2366
      %v2399 = vadd.f32 %v2331, %v2367
      %v2400 = vadd.f32 %v2332, %v2368
      %v2401 = vadd.f32 %v2333, %v2369
      %v2402 = vadd.f32 %v2334, %v2370
      %v2403 = vadd.f32 %v2335, %v2371
      %v2404 = vadd.f32 %v2336, %v2372
      %v2405 = vadd.f32 %v2337, %v2373
      %v2406 = vadd.f32 %v2338, %v2374
      %v2407 = vadd.f32 %v2339, %v2375
      %v2408 = vadd.f32 %v2340, %v2376
      %v2409 = vadd.f32 %v2341, %v2377
      %v2410 = vadd.f32 %v2342, %v2378
      %v2411 = vadd.f32 %v2343, %v2379
      %v2412 = vadd.f32 %v2344, %v2380
      %v2413 = vadd.f32 %v2345, %v2381
      %v2414 = vadd.f32 %v2346, %v2382
      %v2415 = vadd.f32 %v2347, %v2383
      %v2416 = vadd.f32 %v2348, %v2384
      %v2417 = vadd.f32 %v2349, %v2385
      %v2418 = vadd.f32 %v2350, %v2386
      %v2419 = vadd.f32 %v2351, %v2387
      %v2420 = vadd.f32 %v2352, %v2388
      %v2421 = vadd.f32 %v2353, %v2389
      %v2422 = vadd.f32 %v2354, %v2390
      %v2423 = vadd.f32 %v2355, %v2391
      %v2424 = vadd.f32 %v2356, %v2392
      %v2425 = vadd.f32 %v2357, %v2393
      %v2426 = vlaneseq
      %v2427 = vshrl.u32 %v2426, 7
      %v2428 = vsub.s32 7, %v2427
      %v2429 = vrot.slane %v368, %v2428
      %v2430 = vmul.f32 %v681, %v2429
      %v2431 = vmul.f32 %v603, %v2429
      %v2432 = vmul.f32 %v682, %v2429
      %v2433 = vmul.f32 %v606, %v2429
      %v2434 = vmul.f32 %v683, %v2429
      %v2435 = vmul.f32 %v609, %v2429
      %v2436 = vmul.f32 %v684, %v2429
      %v2437 = vmul.f32 %v612, %v2429
      %v2438 = vmul.f32 %v685, %v2429
      %v2439 = vmul.f32 %v615, %v2429
      %v2440 = vmul.f32 %v686, %v2429
      %v2441 = vmul.f32 %v618, %v2429
      %v2442 = vmul.f32 %v687, %v2429
      %v2443 = vmul.f32 %v621, %v2429
      %v2444 = vmul.f32 %v688, %v2429
      %v2445 = vmul.f32 %v624, %v2429
      %v2446 = vmul.f32 %v689, %v2429
      %v2447 = vmul.f32 %v627, %v2429
      %v2448 = vmul.f32 %v690, %v2429
      %v2449 = vmul.f32 %v630, %v2429
      %v2450 = vmul.f32 %v691, %v2429
      %v2451 = vmul.f32 %v633, %v2429
      %v2452 = vmul.f32 %v692, %v2429
      %v2453 = vmul.f32 %v636, %v2429
      %v2454 = vmul.f32 %v693, %v2429
      %v2455 = vmul.f32 %v639, %v2429
      %v2456 = vmul.f32 %v694, %v2429
      %v2457 = vmul.f32 %v642, %v2429
      %v2458 = vmul.f32 %v695, %v2429
      %v2459 = vmul.f32 %v645, %v2429
      %v2460 = vmul.f32 %v696, %v2429
      %v2461 = vmul.f32 %v648, %v2429
      %v2462 = vadd.f32 %v2394, %v2430
      %v2463 = vadd.f32 %v2395, %v2431
      %v2464 = vadd.f32 %v2396, %v2432
      %v2465 = vadd.f32 %v2397, %v2433
      %v2466 = vadd.f32 %v2398, %v2434
      %v2467 = vadd.f32 %v2399, %v2435
      %v2468 = vadd.f32 %v2400, %v2436
      %v2469 = vadd.f32 %v2401, %v2437
      %v2470 = vadd.f32 %v2402, %v2438
      %v2471 = vadd.f32 %v2403, %v2439
      %v2472 = vadd.f32 %v2404, %v2440
      %v2473 = vadd.f32 %v2405, %v2441
      %v2474 = vadd.f32 %v2406, %v2442
      %v2475 = vadd.f32 %v2407, %v2443
      %v2476 = vadd.f32 %v2408, %v2444
      %v2477 = vadd.f32 %v2409, %v2445
      %v2478 = vadd.f32 %v2410, %v2446
      %v2479 = vadd.f32 %v2411, %v2447
      %v2480 = vadd.f32 %v2412, %v2448
      %v2481 = vadd.f32 %v2413, %v2449
      %v2482 = vadd.f32 %v2414, %v2450
      %v2483 = vadd.f32 %v2415, %v2451
      %v2484 = vadd.f32 %v2416, %v2452
      %v2485 = vadd.f32 %v2417, %v2453
      %v2486 = vadd.f32 %v2418, %v2454
      %v2487 = vadd.f32 %v2419, %v2455
      %v2488 = vadd.f32 %v2420, %v2456
      %v2489 = vadd.f32 %v2421, %v2457
      %v2490 = vadd.f32 %v2422, %v2458
      %v2491 = vadd.f32 %v2423, %v2459
      %v2492 = vadd.f32 %v2424, %v2460
      %v2493 = vadd.f32 %v2425, %v2461
      %v2494 = vlaneseq
      %v2495 = vshrl.u32 %v2494, 7
      %v2496 = vsub.s32 0, %v2495
      %v2497 = vrot.slane %v369, %v2496
      %v2498 = vmul.f32 %v334, %v2497
      %v2499 = vmul.f32 %v335, %v2497
      %v2500 = vmul.f32 %v336, %v2497
      %v2501 = vmul.f32 %v337, %v2497
      %v2502 = vmul.f32 %v338, %v2497
      %v2503 = vmul.f32 %v339, %v2497
      %v2504 = vmul.f32 %v340, %v2497
      %v2505 = vmul.f32 %v341, %v2497
      %v2506 = vmul.f32 %v342, %v2497
      %v2507 = vmul.f32 %v343, %v2497
      %v2508 = vmul.f32 %v344, %v2497
      %v2509 = vmul.f32 %v345, %v2497
      %v2510 = vmul.f32 %v346, %v2497
      %v2511 = vmul.f32 %v347, %v2497
      %v2512 = vmul.f32 %v348, %v2497
      %v2513 = vmul.f32 %v349, %v2497
      %v2514 = vmul.f32 %v350, %v2497
      %v2515 = vmul.f32 %v351, %v2497
      %v2516 = vmul.f32 %v352, %v2497
      %v2517 = vmul.f32 %v353, %v2497
      %v2518 = vmul.f32 %v354, %v2497
      %v2519 = vmul.f32 %v355, %v2497
      %v2520 = vmul.f32 %v356, %v2497
      %v2521 = vmul.f32 %v357, %v2497
      %v2522 = vmul.f32 %v358, %v2497
      %v2523 = vmul.f32 %v359, %v2497
      %v2524 = vmul.f32 %v360, %v2497
      %v2525 = vmul.f32 %v361, %v2497
      %v2526 = vmul.f32 %v362, %v2497
      %v2527 = vmul.f32 %v363, %v2497
      %v2528 = vmul.f32 %v364, %v2497
      %v2529 = vmul.f32 %v365, %v2497
      %v2530 = vadd.f32 %v2462, %v2498
      %v2531 = vadd.f32 %v2463, %v2499
      %v2532 = vadd.f32 %v2464, %v2500
      %v2533 = vadd.f32 %v2465, %v2501
      %v2534 = vadd.f32 %v2466, %v2502
      %v2535 = vadd.f32 %v2467, %v2503
      %v2536 = vadd.f32 %v2468, %v2504
      %v2537 = vadd.f32 %v2469, %v2505
      %v2538 = vadd.f32 %v2470, %v2506
      %v2539 = vadd.f32 %v2471, %v2507
      %v2540 = vadd.f32 %v2472, %v2508
      %v2541 = vadd.f32 %v2473, %v2509
      %v2542 = vadd.f32 %v2474, %v2510
      %v2543 = vadd.f32 %v2475, %v2511
      %v2544 = vadd.f32 %v2476, %v2512
      %v2545 = vadd.f32 %v2477, %v2513
      %v2546 = vadd.f32 %v2478, %v2514
      %v2547 = vadd.f32 %v2479, %v2515
      %v2548 = vadd.f32 %v2480, %v2516
      %v2549 = vadd.f32 %v2481, %v2517
      %v2550 = vadd.f32 %v2482, %v2518
      %v2551 = vadd.f32 %v2483, %v2519
      %v2552 = vadd.f32 %v2484, %v2520
      %v2553 = vadd.f32 %v2485, %v2521
      %v2554 = vadd.f32 %v2486, %v2522
      %v2555 = vadd.f32 %v2487, %v2523
      %v2556 = vadd.f32 %v2488, %v2524
      %v2557 = vadd.f32 %v2489, %v2525
      %v2558 = vadd.f32 %v2490, %v2526
      %v2559 = vadd.f32 %v2491, %v2527
      %v2560 = vadd.f32 %v2492, %v2528
      %v2561 = vadd.f32 %v2493, %v2529
      %v2562 = vlaneseq
      %v2563 = vshrl.u32 %v2562, 7
      %v2564 = vsub.s32 1, %v2563
      %v2565 = vrot.slane %v369, %v2564
      %v2566 = vmul.f32 %v700, %v2565
      %v2567 = vmul.f32 %v778, %v2565
      %v2568 = vmul.f32 %v703, %v2565
      %v2569 = vmul.f32 %v779, %v2565
      %v2570 = vmul.f32 %v706, %v2565
      %v2571 = vmul.f32 %v780, %v2565
      %v2572 = vmul.f32 %v709, %v2565
      %v2573 = vmul.f32 %v781, %v2565
      %v2574 = vmul.f32 %v712, %v2565
      %v2575 = vmul.f32 %v782, %v2565
      %v2576 = vmul.f32 %v715, %v2565
      %v2577 = vmul.f32 %v783, %v2565
      %v2578 = vmul.f32 %v718, %v2565
      %v2579 = vmul.f32 %v784, %v2565
      %v2580 = vmul.f32 %v721, %v2565
      %v2581 = vmul.f32 %v785, %v2565
      %v2582 = vmul.f32 %v724, %v2565
      %v2583 = vmul.f32 %v786, %v2565
      %v2584 = vmul.f32 %v727, %v2565
      %v2585 = vmul.f32 %v787, %v2565
      %v2586 = vmul.f32 %v730, %v2565
      %v2587 = vmul.f32 %v788, %v2565
      %v2588 = vmul.f32 %v733, %v2565
      %v2589 = vmul.f32 %v789, %v2565
      %v2590 = vmul.f32 %v736, %v2565
      %v2591 = vmul.f32 %v790, %v2565
      %v2592 = vmul.f32 %v739, %v2565
      %v2593 = vmul.f32 %v791, %v2565
      %v2594 = vmul.f32 %v742, %v2565
      %v2595 = vmul.f32 %v792, %v2565
      %v2596 = vmul.f32 %v745, %v2565
      %v2597 = vmul.f32 %v793, %v2565
      %v2598 = vadd.f32 %v2530, %v2566
      %v2599 = vadd.f32 %v2531, %v2567
      %v2600 = vadd.f32 %v2532, %v2568
      %v2601 = vadd.f32 %v2533, %v2569
      %v2602 = vadd.f32 %v2534, %v2570
      %v2603 = vadd.f32 %v2535, %v2571
      %v2604 = vadd.f32 %v2536, %v2572
      %v2605 = vadd.f32 %v2537, %v2573
      %v2606 = vadd.f32 %v2538, %v2574
      %v2607 = vadd.f32 %v2539, %v2575
      %v2608 = vadd.f32 %v2540, %v2576
      %v2609 = vadd.f32 %v2541, %v2577
      %v2610 = vadd.f32 %v2542, %v2578
      %v2611 = vadd.f32 %v2543, %v2579
      %v2612 = vadd.f32 %v2544, %v2580
      %v2613 = vadd.f32 %v2545, %v2581
      %v2614 = vadd.f32 %v2546, %v2582
      %v2615 = vadd.f32 %v2547, %v2583
      %v2616 = vadd.f32 %v2548, %v2584
      %v2617 = vadd.f32 %v2549, %v2585
      %v2618 = vadd.f32 %v2550, %v2586
      %v2619 = vadd.f32 %v2551, %v2587
      %v2620 = vadd.f32 %v2552, %v2588
      %v2621 = vadd.f32 %v2553, %v2589
      %v2622 = vadd.f32 %v2554, %v2590
      %v2623 = vadd.f32 %v2555, %v2591
      %v2624 = vadd.f32 %v2556, %v2592
      %v2625 = vadd.f32 %v2557, %v2593
      %v2626 = vadd.f32 %v2558, %v2594
      %v2627 = vadd.f32 %v2559, %v2595
      %v2628 = vadd.f32 %v2560, %v2596
      %v2629 = vadd.f32 %v2561, %v2597
      %v2630 = vlaneseq
      %v2631 = vshrl.u32 %v2630, 7
      %v2632 = vsub.s32 2, %v2631
      %v2633 = vrot.slane %v369, %v2632
      %v2634 = vmul.f32 %v797, %v2633
      %v2635 = vmul.f32 %v875, %v2633
      %v2636 = vmul.f32 %v800, %v2633
      %v2637 = vmul.f32 %v876, %v2633
      %v2638 = vmul.f32 %v803, %v2633
      %v2639 = vmul.f32 %v877, %v2633
      %v2640 = vmul.f32 %v806, %v2633
      %v2641 = vmul.f32 %v878, %v2633
      %v2642 = vmul.f32 %v809, %v2633
      %v2643 = vmul.f32 %v879, %v2633
      %v2644 = vmul.f32 %v812, %v2633
      %v2645 = vmul.f32 %v880, %v2633
      %v2646 = vmul.f32 %v815, %v2633
      %v2647 = vmul.f32 %v881, %v2633
      %v2648 = vmul.f32 %v818, %v2633
      %v2649 = vmul.f32 %v882, %v2633
      %v2650 = vmul.f32 %v821, %v2633
      %v2651 = vmul.f32 %v883, %v2633
      %v2652 = vmul.f32 %v824, %v2633
      %v2653 = vmul.f32 %v884, %v2633
      %v2654 = vmul.f32 %v827, %v2633
      %v2655 = vmul.f32 %v885, %v2633
      %v2656 = vmul.f32 %v830, %v2633
      %v2657 = vmul.f32 %v886, %v2633
      %v2658 = vmul.f32 %v833, %v2633
      %v2659 = vmul.f32 %v887, %v2633
      %v2660 = vmul.f32 %v836, %v2633
      %v2661 = vmul.f32 %v888, %v2633
      %v2662 = vmul.f32 %v839, %v2633
      %v2663 = vmul.f32 %v889, %v2633
      %v2664 = vmul.f32 %v842, %v2633
      %v2665 = vmul.f32 %v890, %v2633
      %v2666 = vadd.f32 %v2598, %v2634
      %v2667 = vadd.f32 %v2599, %v2635
      %v2668 = vadd.f32 %v2600, %v2636
      %v2669 = vadd.f32 %v2601, %v2637
      %v2670 = vadd.f32 %v2602, %v2638
      %v2671 = vadd.f32 %v2603, %v2639
      %v2672 = vadd.f32 %v2604, %v2640
      %v2673 = vadd.f32 %v2605, %v2641
      %v2674 = vadd.f32 %v2606, %v2642
      %v2675 = vadd.f32 %v2607, %v2643
      %v2676 = vadd.f32 %v2608, %v2644
      %v2677 = vadd.f32 %v2609, %v2645
      %v2678 = vadd.f32 %v2610, %v2646
      %v2679 = vadd.f32 %v2611, %v2647
      %v2680 = vadd.f32 %v2612, %v2648
      %v2681 = vadd.f32 %v2613, %v2649
      %v2682 = vadd.f32 %v2614, %v2650
      %v2683 = vadd.f32 %v2615, %v2651
      %v2684 = vadd.f32 %v2616, %v2652
      %v2685 = vadd.f32 %v2617, %v2653
      %v2686 = vadd.f32 %v2618, %v2654
      %v2687 = vadd.f32 %v2619, %v2655
      %v2688 = vadd.f32 %v2620, %v2656
      %v2689 = vadd.f32 %v2621, %v2657
      %v2690 = vadd.f32 %v2622, %v2658
      %v2691 = vadd.f32 %v2623, %v2659
      %v2692 = vadd.f32 %v2624, %v2660
      %v2693 = vadd.f32 %v2625, %v2661
      %v2694 = vadd.f32 %v2626, %v2662
      %v2695 = vadd.f32 %v2627, %v2663
      %v2696 = vadd.f32 %v2628, %v2664
      %v2697 = vadd.f32 %v2629, %v2665
      %v2698 = vlaneseq
      %v2699 = vshrl.u32 %v2698, 7
      %v2700 = vsub.s32 3, %v2699
      %v2701 = vrot.slane %v369, %v2700
      %v2702 = vmul.f32 %v894, %v2701
      %v2703 = vmul.f32 %v972, %v2701
      %v2704 = vmul.f32 %v897, %v2701
      %v2705 = vmul.f32 %v973, %v2701
      %v2706 = vmul.f32 %v900, %v2701
      %v2707 = vmul.f32 %v974, %v2701
      %v2708 = vmul.f32 %v903, %v2701
      %v2709 = vmul.f32 %v975, %v2701
      %v2710 = vmul.f32 %v906, %v2701
      %v2711 = vmul.f32 %v976, %v2701
      %v2712 = vmul.f32 %v909, %v2701
      %v2713 = vmul.f32 %v977, %v2701
      %v2714 = vmul.f32 %v912, %v2701
      %v2715 = vmul.f32 %v978, %v2701
      %v2716 = vmul.f32 %v915, %v2701
      %v2717 = vmul.f32 %v979, %v2701
      %v2718 = vmul.f32 %v918, %v2701
      %v2719 = vmul.f32 %v980, %v2701
      %v2720 = vmul.f32 %v921, %v2701
      %v2721 = vmul.f32 %v981, %v2701
      %v2722 = vmul.f32 %v924, %v2701
      %v2723 = vmul.f32 %v982, %v2701
      %v2724 = vmul.f32 %v927, %v2701
      %v2725 = vmul.f32 %v983, %v2701
      %v2726 = vmul.f32 %v930, %v2701
      %v2727 = vmul.f32 %v984, %v2701
      %v2728 = vmul.f32 %v933, %v2701
      %v2729 = vmul.f32 %v985, %v2701
      %v2730 = vmul.f32 %v936, %v2701
      %v2731 = vmul.f32 %v986, %v2701
      %v2732 = vmul.f32 %v939, %v2701
      %v2733 = vmul.f32 %v987, %v2701
      %v2734 = vadd.f32 %v2666, %v2702
      %v2735 = vadd.f32 %v2667, %v2703
      %v2736 = vadd.f32 %v2668, %v2704
      %v2737 = vadd.f32 %v2669, %v2705
      %v2738 = vadd.f32 %v2670, %v2706
      %v2739 = vadd.f32 %v2671, %v2707
      %v2740 = vadd.f32 %v2672, %v2708
      %v2741 = vadd.f32 %v2673, %v2709
      %v2742 = vadd.f32 %v2674, %v2710
      %v2743 = vadd.f32 %v2675, %v2711
      %v2744 = vadd.f32 %v2676, %v2712
      %v2745 = vadd.f32 %v2677, %v2713
      %v2746 = vadd.f32 %v2678, %v2714
      %v2747 = vadd.f32 %v2679, %v2715
      %v2748 = vadd.f32 %v2680, %v2716
      %v2749 = vadd.f32 %v2681, %v2717
      %v2750 = vadd.f32 %v2682, %v2718
      %v2751 = vadd.f32 %v2683, %v2719
      %v2752 = vadd.f32 %v2684, %v2720
      %v2753 = vadd.f32 %v2685, %v2721
      %v2754 = vadd.f32 %v2686, %v2722
      %v2755 = vadd.f32 %v2687, %v2723
      %v2756 = vadd.f32 %v2688, %v2724
      %v2757 = vadd.f32 %v2689, %v2725
      %v2758 = vadd.f32 %v2690, %v2726
      %v2759 = vadd.f32 %v2691, %v2727
      %v2760 = vadd.f32 %v2692, %v2728
      %v2761 = vadd.f32 %v2693, %v2729
      %v2762 = vadd.f32 %v2694, %v2730
      %v2763 = vadd.f32 %v2695, %v2731
      %v2764 = vadd.f32 %v2696, %v2732
      %v2765 = vadd.f32 %v2697, %v2733
      %v2766 = vlaneseq
      %v2767 = vshrl.u32 %v2766, 7
      %v2768 = vsub.s32 4, %v2767
      %v2769 = vrot.slane %v369, %v2768
      %v2770 = vmul.f32 %v488, %v2769
      %v2771 = vmul.f32 %v412, %v2769
      %v2772 = vmul.f32 %v489, %v2769
      %v2773 = vmul.f32 %v415, %v2769
      %v2774 = vmul.f32 %v490, %v2769
      %v2775 = vmul.f32 %v418, %v2769
      %v2776 = vmul.f32 %v491, %v2769
      %v2777 = vmul.f32 %v421, %v2769
      %v2778 = vmul.f32 %v492, %v2769
      %v2779 = vmul.f32 %v424, %v2769
      %v2780 = vmul.f32 %v493, %v2769
      %v2781 = vmul.f32 %v427, %v2769
      %v2782 = vmul.f32 %v494, %v2769
      %v2783 = vmul.f32 %v430, %v2769
      %v2784 = vmul.f32 %v495, %v2769
      %v2785 = vmul.f32 %v433, %v2769
      %v2786 = vmul.f32 %v496, %v2769
      %v2787 = vmul.f32 %v436, %v2769
      %v2788 = vmul.f32 %v497, %v2769
      %v2789 = vmul.f32 %v439, %v2769
      %v2790 = vmul.f32 %v498, %v2769
      %v2791 = vmul.f32 %v442, %v2769
      %v2792 = vmul.f32 %v499, %v2769
      %v2793 = vmul.f32 %v445, %v2769
      %v2794 = vmul.f32 %v500, %v2769
      %v2795 = vmul.f32 %v448, %v2769
      %v2796 = vmul.f32 %v501, %v2769
      %v2797 = vmul.f32 %v451, %v2769
      %v2798 = vmul.f32 %v502, %v2769
      %v2799 = vmul.f32 %v454, %v2769
      %v2800 = vmul.f32 %v2769, 0.0
      %v2801 = vadd.f32 %v2734, %v2770
      %v2802 = vadd.f32 %v2735, %v2771
      %v2803 = vadd.f32 %v2736, %v2772
      %v2804 = vadd.f32 %v2737, %v2773
      %v2805 = vadd.f32 %v2738, %v2774
      %v2806 = vadd.f32 %v2739, %v2775
      %v2807 = vadd.f32 %v2740, %v2776
      %v2808 = vadd.f32 %v2741, %v2777
      %v2809 = vadd.f32 %v2742, %v2778
      %v2810 = vadd.f32 %v2743, %v2779
      %v2811 = vadd.f32 %v2744, %v2780
      %v2812 = vadd.f32 %v2745, %v2781
      %v2813 = vadd.f32 %v2746, %v2782
      %v2814 = vadd.f32 %v2747, %v2783
      %v2815 = vadd.f32 %v2748, %v2784
      %v2816 = vadd.f32 %v2749, %v2785
      %v2817 = vadd.f32 %v2750, %v2786
      %v2818 = vadd.f32 %v2751, %v2787
      %v2819 = vadd.f32 %v2752, %v2788
      %v2820 = vadd.f32 %v2753, %v2789
      %v2821 = vadd.f32 %v2754, %v2790
      %v2822 = vadd.f32 %v2755, %v2791
      %v2823 = vadd.f32 %v2756, %v2792
      %v2824 = vadd.f32 %v2757, %v2793
      %v2825 = vadd.f32 %v2758, %v2794
      %v2826 = vadd.f32 %v2759, %v2795
      %v2827 = vadd.f32 %v2760, %v2796
      %v2828 = vadd.f32 %v2761, %v2797
      %v2829 = vadd.f32 %v2762, %v2798
      %v2830 = vadd.f32 %v2763, %v2799
      %v2831 = vadd.f32 %v2764, %v2800
      %v2832 = vadd.f32 %v2765, %v2800
      %v2833 = vlaneseq
      %v2834 = vshrl.u32 %v2833, 7
      %v2835 = vsub.s32 5, %v2834
      %v2836 = vrot.slane %v369, %v2835
      %v2837 = vmul.f32 %v585, %v2836
      %v2838 = vmul.f32 %v509, %v2836
      %v2839 = vmul.f32 %v586, %v2836
      %v2840 = vmul.f32 %v512, %v2836
      %v2841 = vmul.f32 %v587, %v2836
      %v2842 = vmul.f32 %v515, %v2836
      %v2843 = vmul.f32 %v588, %v2836
      %v2844 = vmul.f32 %v518, %v2836
      %v2845 = vmul.f32 %v589, %v2836
      %v2846 = vmul.f32 %v521, %v2836
      %v2847 = vmul.f32 %v590, %v2836
      %v2848 = vmul.f32 %v524, %v2836
      %v2849 = vmul.f32 %v591, %v2836
      %v2850 = vmul.f32 %v527, %v2836
      %v2851 = vmul.f32 %v592, %v2836
      %v2852 = vmul.f32 %v530, %v2836
      %v2853 = vmul.f32 %v593, %v2836
      %v2854 = vmul.f32 %v533, %v2836
      %v2855 = vmul.f32 %v594, %v2836
      %v2856 = vmul.f32 %v536, %v2836
      %v2857 = vmul.f32 %v595, %v2836
      %v2858 = vmul.f32 %v539, %v2836
      %v2859 = vmul.f32 %v596, %v2836
      %v2860 = vmul.f32 %v542, %v2836
      %v2861 = vmul.f32 %v597, %v2836
      %v2862 = vmul.f32 %v545, %v2836
      %v2863 = vmul.f32 %v598, %v2836
      %v2864 = vmul.f32 %v548, %v2836
      %v2865 = vmul.f32 %v599, %v2836
      %v2866 = vmul.f32 %v551, %v2836
      %v2867 = vmul.f32 %v2836, 0.0
      %v2868 = vadd.f32 %v2801, %v2837
      %v2869 = vadd.f32 %v2802, %v2838
      %v2870 = vadd.f32 %v2803, %v2839
      %v2871 = vadd.f32 %v2804, %v2840
      %v2872 = vadd.f32 %v2805, %v2841
      %v2873 = vadd.f32 %v2806, %v2842
      %v2874 = vadd.f32 %v2807, %v2843
      %v2875 = vadd.f32 %v2808, %v2844
      %v2876 = vadd.f32 %v2809, %v2845
      %v2877 = vadd.f32 %v2810, %v2846
      %v2878 = vadd.f32 %v2811, %v2847
      %v2879 = vadd.f32 %v2812, %v2848
      %v2880 = vadd.f32 %v2813, %v2849
      %v2881 = vadd.f32 %v2814, %v2850
      %v2882 = vadd.f32 %v2815, %v2851
      %v2883 = vadd.f32 %v2816, %v2852
      %v2884 = vadd.f32 %v2817, %v2853
      %v2885 = vadd.f32 %v2818, %v2854
      %v2886 = vadd.f32 %v2819, %v2855
      %v2887 = vadd.f32 %v2820, %v2856
      %v2888 = vadd.f32 %v2821, %v2857
      %v2889 = vadd.f32 %v2822, %v2858
      %v2890 = vadd.f32 %v2823, %v2859
      %v2891 = vadd.f32 %v2824, %v2860
      %v2892 = vadd.f32 %v2825, %v2861
      %v2893 = vadd.f32 %v2826, %v2862
      %v2894 = vadd.f32 %v2827, %v2863
      %v2895 = vadd.f32 %v2828, %v2864
      %v2896 = vadd.f32 %v2829, %v2865
      %v2897 = vadd.f32 %v2830, %v2866
      %v2898 = vadd.f32 %v2831, %v2867
      %v2899 = vadd.f32 %v2832, %v2867
      %v2900 = vlaneseq
      %v2901 = vshrl.u32 %v2900, 7
      %v2902 = vsub.s32 6, %v2901
      %v2903 = vrot.slane %v369, %v2902
      %v2904 = vmul.f32 %v682, %v2903
      %v2905 = vmul.f32 %v606, %v2903
      %v2906 = vmul.f32 %v683, %v2903
      %v2907 = vmul.f32 %v609, %v2903
      %v2908 = vmul.f32 %v684, %v2903
      %v2909 = vmul.f32 %v612, %v2903
      %v2910 = vmul.f32 %v685, %v2903
      %v2911 = vmul.f32 %v615, %v2903
      %v2912 = vmul.f32 %v686, %v2903
      %v2913 = vmul.f32 %v618, %v2903
      %v2914 = vmul.f32 %v687, %v2903
      %v2915 = vmul.f32 %v621, %v2903
      %v2916 = vmul.f32 %v688, %v2903
      %v2917 = vmul.f32 %v624, %v2903
      %v2918 = vmul.f32 %v689, %v2903
      %v2919 = vmul.f32 %v627, %v2903
      %v2920 = vmul.f32 %v690, %v2903
      %v2921 = vmul.f32 %v630, %v2903
      %v2922 = vmul.f32 %v691, %v2903
      %v2923 = vmul.f32 %v633, %v2903
      %v2924 = vmul.f32 %v692, %v2903
      %v2925 = vmul.f32 %v636, %v2903
      %v2926 = vmul.f32 %v693, %v2903
      %v2927 = vmul.f32 %v639, %v2903
      %v2928 = vmul.f32 %v694, %v2903
      %v2929 = vmul.f32 %v642, %v2903
      %v2930 = vmul.f32 %v695, %v2903
      %v2931 = vmul.f32 %v645, %v2903
      %v2932 = vmul.f32 %v696, %v2903
      %v2933 = vmul.f32 %v648, %v2903
      %v2934 = vmul.f32 %v2903, 0.0
      %v2935 = vadd.f32 %v2868, %v2904
      %v2936 = vadd.f32 %v2869, %v2905
      %v2937 = vadd.f32 %v2870, %v2906
      %v2938 = vadd.f32 %v2871, %v2907
      %v2939 = vadd.f32 %v2872, %v2908
      %v2940 = vadd.f32 %v2873, %v2909
      %v2941 = vadd.f32 %v2874, %v2910
      %v2942 = vadd.f32 %v2875, %v2911
      %v2943 = vadd.f32 %v2876, %v2912
      %v2944 = vadd.f32 %v2877, %v2913
      %v2945 = vadd.f32 %v2878, %v2914
      %v2946 = vadd.f32 %v2879, %v2915
      %v2947 = vadd.f32 %v2880, %v2916
      %v2948 = vadd.f32 %v2881, %v2917
      %v2949 = vadd.f32 %v2882, %v2918
      %v2950 = vadd.f32 %v2883, %v2919
      %v2951 = vadd.f32 %v2884, %v2920
      %v2952 = vadd.f32 %v2885, %v2921
      %v2953 = vadd.f32 %v2886, %v2922
      %v2954 = vadd.f32 %v2887, %v2923
      %v2955 = vadd.f32 %v2888, %v2924
      %v2956 = vadd.f32 %v2889, %v2925
      %v2957 = vadd.f32 %v2890, %v2926
      %v2958 = vadd.f32 %v2891, %v2927
      %v2959 = vadd.f32 %v2892, %v2928
      %v2960 = vadd.f32 %v2893, %v2929
      %v2961 = vadd.f32 %v2894, %v2930
      %v2962 = vadd.f32 %v2895, %v2931
      %v2963 = vadd.f32 %v2896, %v2932
      %v2964 = vadd.f32 %v2897, %v2933
      %v2965 = vadd.f32 %v2898, %v2934
      %v2966 = vadd.f32 %v2899, %v2934
      %v2967 = vlaneseq
      %v2968 = vshrl.u32 %v2967, 7
      %v2969 = vsub.s32 7, %v2968
      %v2970 = vrot.slane %v369, %v2969
      %v2971 = vmul.f32 %v336, %v2970
      %v2972 = vmul.f32 %v337, %v2970
      %v2973 = vmul.f32 %v338, %v2970
      %v2974 = vmul.f32 %v339, %v2970
      %v2975 = vmul.f32 %v340, %v2970
      %v2976 = vmul.f32 %v341, %v2970
      %v2977 = vmul.f32 %v342, %v2970
      %v2978 = vmul.f32 %v343, %v2970
      %v2979 = vmul.f32 %v344, %v2970
      %v2980 = vmul.f32 %v345, %v2970
      %v2981 = vmul.f32 %v346, %v2970
      %v2982 = vmul.f32 %v347, %v2970
      %v2983 = vmul.f32 %v348, %v2970
      %v2984 = vmul.f32 %v349, %v2970
      %v2985 = vmul.f32 %v350, %v2970
      %v2986 = vmul.f32 %v351, %v2970
      %v2987 = vmul.f32 %v352, %v2970
      %v2988 = vmul.f32 %v353, %v2970
      %v2989 = vmul.f32 %v354, %v2970
      %v2990 = vmul.f32 %v355, %v2970
      %v2991 = vmul.f32 %v356, %v2970
      %v2992 = vmul.f32 %v357, %v2970
      %v2993 = vmul.f32 %v358, %v2970
      %v2994 = vmul.f32 %v359, %v2970
      %v2995 = vmul.f32 %v360, %v2970
      %v2996 = vmul.f32 %v361, %v2970
      %v2997 = vmul.f32 %v362, %v2970
      %v2998 = vmul.f32 %v363, %v2970
      %v2999 = vmul.f32 %v364, %v2970
      %v3000 = vmul.f32 %v365, %v2970
      %v3001 = vmul.f32 %v2970, 0.0
      %v3002 = vadd.f32 %v2935, %v2971
      %v3003 = vadd.f32 %v2936, %v2972
      %v3004 = vadd.f32 %v2937, %v2973
      %v3005 = vadd.f32 %v2938, %v2974
      %v3006 = vadd.f32 %v2939, %v2975
      %v3007 = vadd.f32 %v2940, %v2976
      %v3008 = vadd.f32 %v2941, %v2977
      %v3009 = vadd.f32 %v2942, %v2978
      %v3010 = vadd.f32 %v2943, %v2979
      %v3011 = vadd.f32 %v2944, %v2980
      %v3012 = vadd.f32 %v2945, %v2981
      %v3013 = vadd.f32 %v2946, %v2982
      %v3014 = vadd.f32 %v2947, %v2983
      %v3015 = vadd.f32 %v2948, %v2984
      %v3016 = vadd.f32 %v2949, %v2985
      %v3017 = vadd.f32 %v2950, %v2986
      %v3018 = vadd.f32 %v2951, %v2987
      %v3019 = vadd.f32 %v2952, %v2988
      %v3020 = vadd.f32 %v2953, %v2989
      %v3021 = vadd.f32 %v2954, %v2990
      %v3022 = vadd.f32 %v2955, %v2991
      %v3023 = vadd.f32 %v2956, %v2992
      %v3024 = vadd.f32 %v2957, %v2993
      %v3025 = vadd.f32 %v2958, %v2994
      %v3026 = vadd.f32 %v2959, %v2995
      %v3027 = vadd.f32 %v2960, %v2996
      %v3028 = vadd.f32 %v2961, %v2997
      %v3029 = vadd.f32 %v2962, %v2998
      %v3030 = vadd.f32 %v2963, %v2999
      %v3031 = vadd.f32 %v2964, %v3000
      %v3032 = vadd.f32 %v2965, %v3001
      %v3033 = vadd.f32 %v2966, %v3001
      %v3034 = vlaneseq
      %v3035 = vshrl.u32 %v3034, 7
      %v3036 = vsub.s32 0, %v3035
      %v3037 = vrot.slane %v370, %v3036
      %v3038 = vmul.f32 %v703, %v3037
      %v3039 = vmul.f32 %v779, %v3037
      %v3040 = vmul.f32 %v706, %v3037
      %v3041 = vmul.f32 %v780, %v3037
      %v3042 = vmul.f32 %v709, %v3037
      %v3043 = vmul.f32 %v781, %v3037
      %v3044 = vmul.f32 %v712, %v3037
      %v3045 = vmul.f32 %v782, %v3037
      %v3046 = vmul.f32 %v715, %v3037
      %v3047 = vmul.f32 %v783, %v3037
      %v3048 = vmul.f32 %v718, %v3037
      %v3049 = vmul.f32 %v784, %v3037
      %v3050 = vmul.f32 %v721, %v3037
      %v3051 = vmul.f32 %v785, %v3037
      %v3052 = vmul.f32 %v724, %v3037
      %v3053 = vmul.f32 %v786, %v3037
      %v3054 = vmul.f32 %v727, %v3037
      %v3055 = vmul.f32 %v787, %v3037
      %v3056 = vmul.f32 %v730, %v3037
      %v3057 = vmul.f32 %v788, %v3037
      %v3058 = vmul.f32 %v733, %v3037
      %v3059 = vmul.f32 %v789, %v3037
      %v3060 = vmul.f32 %v736, %v3037
      %v3061 = vmul.f32 %v790, %v3037
      %v3062 = vmul.f32 %v739, %v3037
      %v3063 = vmul.f32 %v791, %v3037
      %v3064 = vmul.f32 %v742, %v3037
      %v3065 = vmul.f32 %v792, %v3037
      %v3066 = vmul.f32 %v745, %v3037
      %v3067 = vmul.f32 %v793, %v3037
      %v3068 = vmul.f32 %v3037, 0.0
      %v3069 = vadd.f32 %v3002, %v3038
      %v3070 = vadd.f32 %v3003, %v3039
      %v3071 = vadd.f32 %v3004, %v3040
      %v3072 = vadd.f32 %v3005, %v3041
      %v3073 = vadd.f32 %v3006, %v3042
      %v3074 = vadd.f32 %v3007, %v3043
      %v3075 = vadd.f32 %v3008, %v3044
      %v3076 = vadd.f32 %v3009, %v3045
      %v3077 = vadd.f32 %v3010, %v3046
      %v3078 = vadd.f32 %v3011, %v3047
      %v3079 = vadd.f32 %v3012, %v3048
      %v3080 = vadd.f32 %v3013, %v3049
      %v3081 = vadd.f32 %v3014, %v3050
      %v3082 = vadd.f32 %v3015, %v3051
      %v3083 = vadd.f32 %v3016, %v3052
      %v3084 = vadd.f32 %v3017, %v3053
      %v3085 = vadd.f32 %v3018, %v3054
      %v3086 = vadd.f32 %v3019, %v3055
      %v3087 = vadd.f32 %v3020, %v3056
      %v3088 = vadd.f32 %v3021, %v3057
      %v3089 = vadd.f32 %v3022, %v3058
      %v3090 = vadd.f32 %v3023, %v3059
      %v3091 = vadd.f32 %v3024, %v3060
      %v3092 = vadd.f32 %v3025, %v3061
      %v3093 = vadd.f32 %v3026, %v3062
      %v3094 = vadd.f32 %v3027, %v3063
      %v3095 = vadd.f32 %v3028, %v3064
      %v3096 = vadd.f32 %v3029, %v3065
      %v3097 = vadd.f32 %v3030, %v3066
      %v3098 = vadd.f32 %v3031, %v3067
      %v3099 = vadd.f32 %v3032, %v3068
      %v3100 = vadd.f32 %v3033, %v3068
      %v3101 = vlaneseq
      %v3102 = vshrl.u32 %v3101, 7
      %v3103 = vsub.s32 1, %v3102
      %v3104 = vrot.slane %v370, %v3103
      %v3105 = vmul.f32 %v800, %v3104
      %v3106 = vmul.f32 %v876, %v3104
      %v3107 = vmul.f32 %v803, %v3104
      %v3108 = vmul.f32 %v877, %v3104
      %v3109 = vmul.f32 %v806, %v3104
      %v3110 = vmul.f32 %v878, %v3104
      %v3111 = vmul.f32 %v809, %v3104
      %v3112 = vmul.f32 %v879, %v3104
      %v3113 = vmul.f32 %v812, %v3104
      %v3114 = vmul.f32 %v880, %v3104
      %v3115 = vmul.f32 %v815, %v3104
      %v3116 = vmul.f32 %v881, %v3104
      %v3117 = vmul.f32 %v818, %v3104
      %v3118 = vmul.f32 %v882, %v3104
      %v3119 = vmul.f32 %v821, %v3104
      %v3120 = vmul.f32 %v883, %v3104
      %v3121 = vmul.f32 %v824, %v3104
      %v3122 = vmul.f32 %v884, %v3104
      %v3123 = vmul.f32 %v827, %v3104
      %v3124 = vmul.f32 %v885, %v3104
      %v3125 = vmul.f32 %v830, %v3104
      %v3126 = vmul.f32 %v886, %v3104
      %v3127 = vmul.f32 %v833, %v3104
      %v3128 = vmul.f32 %v887, %v3104
      %v3129 = vmul.f32 %v836, %v3104
      %v3130 = vmul.f32 %v888, %v3104
      %v3131 = vmul.f32 %v839, %v3104
      %v3132 = vmul.f32 %v889, %v3104
      %v3133 = vmul.f32 %v842, %v3104
      %v3134 = vmul.f32 %v890, %v3104
      %v3135 = vmul.f32 %v3104, 0.0
      %v3136 = vadd.f32 %v3069, %v3105
      %v3137 = vadd.f32 %v3070, %v3106
      %v3138 = vadd.f32 %v3071, %v3107
      %v3139 = vadd.f32 %v3072, %v3108
      %v3140 = vadd.f32 %v3073, %v3109
      %v3141 = vadd.f32 %v3074, %v3110
      %v3142 = vadd.f32 %v3075, %v3111
      %v3143 = vadd.f32 %v3076, %v3112
      %v3144 = vadd.f32 %v3077, %v3113
      %v3145 = vadd.f32 %v3078, %v3114
      %v3146 = vadd.f32 %v3079, %v3115
      %v3147 = vadd.f32 %v3080, %v3116
      %v3148 = vadd.f32 %v3081, %v3117
      %v3149 = vadd.f32 %v3082, %v3118
      %v3150 = vadd.f32 %v3083, %v3119
      %v3151 = vadd.f32 %v3084, %v3120
      %v3152 = vadd.f32 %v3085, %v3121
      %v3153 = vadd.f32 %v3086, %v3122
      %v3154 = vadd.f32 %v3087, %v3123
      %v3155 = vadd.f32 %v3088, %v3124
      %v3156 = vadd.f32 %v3089, %v3125
      %v3157 = vadd.f32 %v3090, %v3126
      %v3158 = vadd.f32 %v3091, %v3127
      %v3159 = vadd.f32 %v3092, %v3128
      %v3160 = vadd.f32 %v3093, %v3129
      %v3161 = vadd.f32 %v3094, %v3130
      %v3162 = vadd.f32 %v3095, %v3131
      %v3163 = vadd.f32 %v3096, %v3132
      %v3164 = vadd.f32 %v3097, %v3133
      %v3165 = vadd.f32 %v3098, %v3134
      %v3166 = vadd.f32 %v3099, %v3135
      %v3167 = vadd.f32 %v3100, %v3135
      %v3168 = vlaneseq
      %v3169 = vshrl.u32 %v3168, 7
      %v3170 = vsub.s32 2, %v3169
      %v3171 = vrot.slane %v370, %v3170
      %v3172 = vmul.f32 %v897, %v3171
      %v3173 = vmul.f32 %v973, %v3171
      %v3174 = vmul.f32 %v900, %v3171
      %v3175 = vmul.f32 %v974, %v3171
      %v3176 = vmul.f32 %v903, %v3171
      %v3177 = vmul.f32 %v975, %v3171
      %v3178 = vmul.f32 %v906, %v3171
      %v3179 = vmul.f32 %v976, %v3171
      %v3180 = vmul.f32 %v909, %v3171
      %v3181 = vmul.f32 %v977, %v3171
      %v3182 = vmul.f32 %v912, %v3171
      %v3183 = vmul.f32 %v978, %v3171
      %v3184 = vmul.f32 %v915, %v3171
      %v3185 = vmul.f32 %v979, %v3171
      %v3186 = vmul.f32 %v918, %v3171
      %v3187 = vmul.f32 %v980, %v3171
      %v3188 = vmul.f32 %v921, %v3171
      %v3189 = vmul.f32 %v981, %v3171
      %v3190 = vmul.f32 %v924, %v3171
      %v3191 = vmul.f32 %v982, %v3171
      %v3192 = vmul.f32 %v927, %v3171
      %v3193 = vmul.f32 %v983, %v3171
      %v3194 = vmul.f32 %v930, %v3171
      %v3195 = vmul.f32 %v984, %v3171
      %v3196 = vmul.f32 %v933, %v3171
      %v3197 = vmul.f32 %v985, %v3171
      %v3198 = vmul.f32 %v936, %v3171
      %v3199 = vmul.f32 %v986, %v3171
      %v3200 = vmul.f32 %v939, %v3171
      %v3201 = vmul.f32 %v987, %v3171
      %v3202 = vmul.f32 %v3171, 0.0
      %v3203 = vadd.f32 %v3136, %v3172
      %v3204 = vadd.f32 %v3137, %v3173
      %v3205 = vadd.f32 %v3138, %v3174
      %v3206 = vadd.f32 %v3139, %v3175
      %v3207 = vadd.f32 %v3140, %v3176
      %v3208 = vadd.f32 %v3141, %v3177
      %v3209 = vadd.f32 %v3142, %v3178
      %v3210 = vadd.f32 %v3143, %v3179
      %v3211 = vadd.f32 %v3144, %v3180
      %v3212 = vadd.f32 %v3145, %v3181
      %v3213 = vadd.f32 %v3146, %v3182
      %v3214 = vadd.f32 %v3147, %v3183
      %v3215 = vadd.f32 %v3148, %v3184
      %v3216 = vadd.f32 %v3149, %v3185
      %v3217 = vadd.f32 %v3150, %v3186
      %v3218 = vadd.f32 %v3151, %v3187
      %v3219 = vadd.f32 %v3152, %v3188
      %v3220 = vadd.f32 %v3153, %v3189
      %v3221 = vadd.f32 %v3154, %v3190
      %v3222 = vadd.f32 %v3155, %v3191
      %v3223 = vadd.f32 %v3156, %v3192
      %v3224 = vadd.f32 %v3157, %v3193
      %v3225 = vadd.f32 %v3158, %v3194
      %v3226 = vadd.f32 %v3159, %v3195
      %v3227 = vadd.f32 %v3160, %v3196
      %v3228 = vadd.f32 %v3161, %v3197
      %v3229 = vadd.f32 %v3162, %v3198
      %v3230 = vadd.f32 %v3163, %v3199
      %v3231 = vadd.f32 %v3164, %v3200
      %v3232 = vadd.f32 %v3165, %v3201
      %v3233 = vadd.f32 %v3166, %v3202
      %v3234 = vadd.f32 %v3167, %v3202
      %v3235 = vlaneseq
      %v3236 = vshrl.u32 %v3235, 7
      %v3237 = vsub.s32 3, %v3236
      %v3238 = vrot.slane %v370, %v3237
      %v3239 = vmul.f32 %v489, %v3238
      %v3240 = vmul.f32 %v415, %v3238
      %v3241 = vmul.f32 %v490, %v3238
      %v3242 = vmul.f32 %v418, %v3238
      %v3243 = vmul.f32 %v491, %v3238
      %v3244 = vmul.f32 %v421, %v3238
      %v3245 = vmul.f32 %v492, %v3238
      %v3246 = vmul.f32 %v424, %v3238
      %v3247 = vmul.f32 %v493, %v3238
      %v3248 = vmul.f32 %v427, %v3238
      %v3249 = vmul.f32 %v494, %v3238
      %v3250 = vmul.f32 %v430, %v3238
      %v3251 = vmul.f32 %v495, %v3238
      %v3252 = vmul.f32 %v433, %v3238
      %v3253 = vmul.f32 %v496, %v3238
      %v3254 = vmul.f32 %v436, %v3238
      %v3255 = vmul.f32 %v497, %v3238
      %v3256 = vmul.f32 %v439, %v3238
      %v3257 = vmul.f32 %v498, %v3238
      %v3258 = vmul.f32 %v442, %v3238
      %v3259 = vmul.f32 %v499, %v3238
      %v3260 = vmul.f32 %v445, %v3238
      %v3261 = vmul.f32 %v500, %v3238
      %v3262 = vmul.f32 %v448, %v3238
      %v3263 = vmul.f32 %v501, %v3238
      %v3264 = vmul.f32 %v451, %v3238
      %v3265 = vmul.f32 %v502, %v3238
      %v3266 = vmul.f32 %v454, %v3238
      %v3267 = vmul.f32 %v3238, 0.0
      %v3268 = vadd.f32 %v3203, %v3239
      %v3269 = vadd.f32 %v3204, %v3240
      %v3270 = vadd.f32 %v3205, %v3241
      %v3271 = vadd.f32 %v3206, %v3242
      %v3272 = vadd.f32 %v3207, %v3243
      %v3273 = vadd.f32 %v3208, %v3244
      %v3274 = vadd.f32 %v3209, %v3245
      %v3275 = vadd.f32 %v3210, %v3246
      %v3276 = vadd.f32 %v3211, %v3247
      %v3277 = vadd.f32 %v3212, %v3248
      %v3278 = vadd.f32 %v3213, %v3249
      %v3279 = vadd.f32 %v3214, %v3250
      %v3280 = vadd.f32 %v3215, %v3251
      %v3281 = vadd.f32 %v3216, %v3252
      %v3282 = vadd.f32 %v3217, %v3253
      %v3283 = vadd.f32 %v3218, %v3254
      %v3284 = vadd.f32 %v3219, %v3255
      %v3285 = vadd.f32 %v3220, %v3256
      %v3286 = vadd.f32 %v3221, %v3257
      %v3287 = vadd.f32 %v3222, %v3258
      %v3288 = vadd.f32 %v3223, %v3259
      %v3289 = vadd.f32 %v3224, %v3260
      %v3290 = vadd.f32 %v3225, %v3261
      %v3291 = vadd.f32 %v3226, %v3262
      %v3292 = vadd.f32 %v3227, %v3263
      %v3293 = vadd.f32 %v3228, %v3264
      %v3294 = vadd.f32 %v3229, %v3265
      %v3295 = vadd.f32 %v3230, %v3266
      %v3296 = vadd.f32 %v3231, %v3267
      %v3297 = vadd.f32 %v3232, %v3267
      %v3298 = vadd.f32 %v3233, %v3267
      %v3299 = vadd.f32 %v3234, %v3267
      %v3300 = vlaneseq
      %v3301 = vshrl.u32 %v3300, 7
      %v3302 = vsub.s32 4, %v3301
      %v3303 = vrot.slane %v370, %v3302
      %v3304 = vmul.f32 %v586, %v3303
      %v3305 = vmul.f32 %v512, %v3303
      %v3306 = vmul.f32 %v587, %v3303
      %v3307 = vmul.f32 %v515, %v3303
      %v3308 = vmul.f32 %v588, %v3303
      %v3309 = vmul.f32 %v518, %v3303
      %v3310 = vmul.f32 %v589, %v3303
      %v3311 = vmul.f32 %v521, %v3303
      %v3312 = vmul.f32 %v590, %v3303
      %v3313 = vmul.f32 %v524, %v3303
      %v3314 = vmul.f32 %v591, %v3303
      %v3315 = vmul.f32 %v527, %v3303
      %v3316 = vmul.f32 %v592, %v3303
      %v3317 = vmul.f32 %v530, %v3303
      %v3318 = vmul.f32 %v593, %v3303
      %v3319 = vmul.f32 %v533, %v3303
      %v3320 = vmul.f32 %v594, %v3303
      %v3321 = vmul.f32 %v536, %v3303
      %v3322 = vmul.f32 %v595, %v3303
      %v3323 = vmul.f32 %v539, %v3303
      %v3324 = vmul.f32 %v596, %v3303
      %v3325 = vmul.f32 %v542, %v3303
      %v3326 = vmul.f32 %v597, %v3303
      %v3327 = vmul.f32 %v545, %v3303
      %v3328 = vmul.f32 %v598, %v3303
      %v3329 = vmul.f32 %v548, %v3303
      %v3330 = vmul.f32 %v599, %v3303
      %v3331 = vmul.f32 %v551, %v3303
      %v3332 = vmul.f32 %v3303, 0.0
      %v3333 = vadd.f32 %v3268, %v3304
      %v3334 = vadd.f32 %v3269, %v3305
      %v3335 = vadd.f32 %v3270, %v3306
      %v3336 = vadd.f32 %v3271, %v3307
      %v3337 = vadd.f32 %v3272, %v3308
      %v3338 = vadd.f32 %v3273, %v3309
      %v3339 = vadd.f32 %v3274, %v3310
      %v3340 = vadd.f32 %v3275, %v3311
      %v3341 = vadd.f32 %v3276, %v3312
      %v3342 = vadd.f32 %v3277, %v3313
      %v3343 = vadd.f32 %v3278, %v3314
      %v3344 = vadd.f32 %v3279, %v3315
      %v3345 = vadd.f32 %v3280, %v3316
      %v3346 = vadd.f32 %v3281, %v3317
      %v3347 = vadd.f32 %v3282, %v3318
      %v3348 = vadd.f32 %v3283, %v3319
      %v3349 = vadd.f32 %v3284, %v3320
      %v3350 = vadd.f32 %v3285, %v3321
      %v3351 = vadd.f32 %v3286, %v3322
      %v3352 = vadd.f32 %v3287, %v3323
      %v3353 = vadd.f32 %v3288, %v3324
      %v3354 = vadd.f32 %v3289, %v3325
      %v3355 = vadd.f32 %v3290, %v3326
      %v3356 = vadd.f32 %v3291, %v3327
      %v3357 = vadd.f32 %v3292, %v3328
      %v3358 = vadd.f32 %v3293, %v3329
      %v3359 = vadd.f32 %v3294, %v3330
      %v3360 = vadd.f32 %v3295, %v3331
      %v3361 = vadd.f32 %v3296, %v3332
      %v3362 = vadd.f32 %v3297, %v3332
      %v3363 = vadd.f32 %v3298, %v3332
      %v3364 = vadd.f32 %v3299, %v3332
      %v3365 = vlaneseq
      %v3366 = vshrl.u32 %v3365, 7
      %v3367 = vsub.s32 5, %v3366
      %v3368 = vrot.slane %v370, %v3367
      %v3369 = vmul.f32 %v683, %v3368
      %v3370 = vmul.f32 %v609, %v3368
      %v3371 = vmul.f32 %v684, %v3368
      %v3372 = vmul.f32 %v612, %v3368
      %v3373 = vmul.f32 %v685, %v3368
      %v3374 = vmul.f32 %v615, %v3368
      %v3375 = vmul.f32 %v686, %v3368
      %v3376 = vmul.f32 %v618, %v3368
      %v3377 = vmul.f32 %v687, %v3368
      %v3378 = vmul.f32 %v621, %v3368
      %v3379 = vmul.f32 %v688, %v3368
      %v3380 = vmul.f32 %v624, %v3368
      %v3381 = vmul.f32 %v689, %v3368
      %v3382 = vmul.f32 %v627, %v3368
      %v3383 = vmul.f32 %v690, %v3368
      %v3384 = vmul.f32 %v630, %v3368
      %v3385 = vmul.f32 %v691, %v3368
      %v3386 = vmul.f32 %v633, %v3368
      %v3387 = vmul.f32 %v692, %v3368
      %v3388 = vmul.f32 %v636, %v3368
      %v3389 = vmul.f32 %v693, %v3368
      %v3390 = vmul.f32 %v639, %v3368
      %v3391 = vmul.f32 %v694, %v3368
      %v3392 = vmul.f32 %v642, %v3368
      %v3393 = vmul.f32 %v695, %v3368
      %v3394 = vmul.f32 %v645, %v3368
      %v3395 = vmul.f32 %v696, %v3368
      %v3396 = vmul.f32 %v648, %v3368
      %v3397 = vmul.f32 %v3368, 0.0
      %v3398 = vadd.f32 %v3333, %v3369
      %v3399 = vadd.f32 %v3334, %v3370
      %v3400 = vadd.f32 %v3335, %v3371
      %v3401 = vadd.f32 %v3336, %v3372
      %v3402 = vadd.f32 %v3337, %v3373
      %v3403 = vadd.f32 %v3338, %v3374
      %v3404 = vadd.f32 %v3339, %v3375
      %v3405 = vadd.f32 %v3340, %v3376
      %v3406 = vadd.f32 %v3341, %v3377
      %v3407 = vadd.f32 %v3342, %v3378
      %v3408 = vadd.f32 %v3343, %v3379
      %v3409 = vadd.f32 %v3344, %v3380
      %v3410 = vadd.f32 %v3345, %v3381
      %v3411 = vadd.f32 %v3346, %v3382
      %v3412 = vadd.f32 %v3347, %v3383
      %v3413 = vadd.f32 %v3348, %v3384
      %v3414 = vadd.f32 %v3349, %v3385
      %v3415 = vadd.f32 %v3350, %v3386
      %v3416 = vadd.f32 %v3351, %v3387
      %v3417 = vadd.f32 %v3352, %v3388
      %v3418 = vadd.f32 %v3353, %v3389
      %v3419 = vadd.f32 %v3354, %v3390
      %v3420 = vadd.f32 %v3355, %v3391
      %v3421 = vadd.f32 %v3356, %v3392
      %v3422 = vadd.f32 %v3357, %v3393
      %v3423 = vadd.f32 %v3358, %v3394
      %v3424 = vadd.f32 %v3359, %v3395
      %v3425 = vadd.f32 %v3360, %v3396
      %v3426 = vadd.f32 %v3361, %v3397
      %v3427 = vadd.f32 %v3362, %v3397
      %v3428 = vadd.f32 %v3363, %v3397
      %v3429 = vadd.f32 %v3364, %v3397
      %v3430 = vlaneseq
      %v3431 = vshrl.u32 %v3430, 7
      %v3432 = vsub.s32 6, %v3431
      %v3433 = vrot.slane %v370, %v3432
      %v3434 = vmul.f32 %v338, %v3433
      %v3435 = vmul.f32 %v339, %v3433
      %v3436 = vmul.f32 %v340, %v3433
      %v3437 = vmul.f32 %v341, %v3433
      %v3438 = vmul.f32 %v342, %v3433
      %v3439 = vmul.f32 %v343, %v3433
      %v3440 = vmul.f32 %v344, %v3433
      %v3441 = vmul.f32 %v345, %v3433
      %v3442 = vmul.f32 %v346, %v3433
      %v3443 = vmul.f32 %v347, %v3433
      %v3444 = vmul.f32 %v348, %v3433
      %v3445 = vmul.f32 %v349, %v3433
      %v3446 = vmul.f32 %v350, %v3433
      %v3447 = vmul.f32 %v351, %v3433
      %v3448 = vmul.f32 %v352, %v3433
      %v3449 = vmul.f32 %v353, %v3433
      %v3450 = vmul.f32 %v354, %v3433
      %v3451 = vmul.f32 %v355, %v3433
      %v3452 = vmul.f32 %v356, %v3433
      %v3453 = vmul.f32 %v357, %v3433
      %v3454 = vmul.f32 %v358, %v3433
      %v3455 = vmul.f32 %v359, %v3433
      %v3456 = vmul.f32 %v360, %v3433
      %v3457 = vmul.f32 %v361, %v3433
      %v3458 = vmul.f32 %v362, %v3433
      %v3459 = vmul.f32 %v363, %v3433
      %v3460 = vmul.f32 %v364, %v3433
      %v3461 = vmul.f32 %v365, %v3433
      %v3462 = vmul.f32 %v3433, 0.0
      %v3463 = vadd.f32 %v3398, %v3434
      %v3464 = vadd.f32 %v3399, %v3435
      %v3465 = vadd.f32 %v3400, %v3436
      %v3466 = vadd.f32 %v3401, %v3437
      %v3467 = vadd.f32 %v3402, %v3438
      %v3468 = vadd.f32 %v3403, %v3439
      %v3469 = vadd.f32 %v3404, %v3440
      %v3470 = vadd.f32 %v3405, %v3441
      %v3471 = vadd.f32 %v3406, %v3442
      %v3472 = vadd.f32 %v3407, %v3443
      %v3473 = vadd.f32 %v3408, %v3444
      %v3474 = vadd.f32 %v3409, %v3445
      %v3475 = vadd.f32 %v3410, %v3446
      %v3476 = vadd.f32 %v3411, %v3447
      %v3477 = vadd.f32 %v3412, %v3448
      %v3478 = vadd.f32 %v3413, %v3449
      %v3479 = vadd.f32 %v3414, %v3450
      %v3480 = vadd.f32 %v3415, %v3451
      %v3481 = vadd.f32 %v3416, %v3452
      %v3482 = vadd.f32 %v3417, %v3453
      %v3483 = vadd.f32 %v3418, %v3454
      %v3484 = vadd.f32 %v3419, %v3455
      %v3485 = vadd.f32 %v3420, %v3456
      %v3486 = vadd.f32 %v3421, %v3457
      %v3487 = vadd.f32 %v3422, %v3458
      %v3488 = vadd.f32 %v3423, %v3459
      %v3489 = vadd.f32 %v3424, %v3460
      %v3490 = vadd.f32 %v3425, %v3461
      %v3491 = vadd.f32 %v3426, %v3462
      %v3492 = vadd.f32 %v3427, %v3462
      %v3493 = vadd.f32 %v3428, %v3462
      %v3494 = vadd.f32 %v3429, %v3462
      %v3495 = vlaneseq
      %v3496 = vshrl.u32 %v3495, 7
      %v3497 = vsub.s32 7, %v3496
      %v3498 = vrot.slane %v370, %v3497
      %v3499 = vmul.f32 %v706, %v3498
      %v3500 = vmul.f32 %v780, %v3498
      %v3501 = vmul.f32 %v709, %v3498
      %v3502 = vmul.f32 %v781, %v3498
      %v3503 = vmul.f32 %v712, %v3498
      %v3504 = vmul.f32 %v782, %v3498
      %v3505 = vmul.f32 %v715, %v3498
      %v3506 = vmul.f32 %v783, %v3498
      %v3507 = vmul.f32 %v718, %v3498
      %v3508 = vmul.f32 %v784, %v3498
      %v3509 = vmul.f32 %v721, %v3498
      %v3510 = vmul.f32 %v785, %v3498
      %v3511 = vmul.f32 %v724, %v3498
      %v3512 = vmul.f32 %v786, %v3498
      %v3513 = vmul.f32 %v727, %v3498
      %v3514 = vmul.f32 %v787, %v3498
      %v3515 = vmul.f32 %v730, %v3498
      %v3516 = vmul.f32 %v788, %v3498
      %v3517 = vmul.f32 %v733, %v3498
      %v3518 = vmul.f32 %v789, %v3498
      %v3519 = vmul.f32 %v736, %v3498
      %v3520 = vmul.f32 %v790, %v3498
      %v3521 = vmul.f32 %v739, %v3498
      %v3522 = vmul.f32 %v791, %v3498
      %v3523 = vmul.f32 %v742, %v3498
      %v3524 = vmul.f32 %v792, %v3498
      %v3525 = vmul.f32 %v745, %v3498
      %v3526 = vmul.f32 %v793, %v3498
      %v3527 = vmul.f32 %v3498, 0.0
      %v3528 = vadd.f32 %v3463, %v3499
      %v3529 = vadd.f32 %v3464, %v3500
      %v3530 = vadd.f32 %v3465, %v3501
      %v3531 = vadd.f32 %v3466, %v3502
      %v3532 = vadd.f32 %v3467, %v3503
      %v3533 = vadd.f32 %v3468, %v3504
      %v3534 = vadd.f32 %v3469, %v3505
      %v3535 = vadd.f32 %v3470, %v3506
      %v3536 = vadd.f32 %v3471, %v3507
      %v3537 = vadd.f32 %v3472, %v3508
      %v3538 = vadd.f32 %v3473, %v3509
      %v3539 = vadd.f32 %v3474, %v3510
      %v3540 = vadd.f32 %v3475, %v3511
      %v3541 = vadd.f32 %v3476, %v3512
      %v3542 = vadd.f32 %v3477, %v3513
      %v3543 = vadd.f32 %v3478, %v3514
      %v3544 = vadd.f32 %v3479, %v3515
      %v3545 = vadd.f32 %v3480, %v3516
      %v3546 = vadd.f32 %v3481, %v3517
      %v3547 = vadd.f32 %v3482, %v3518
      %v3548 = vadd.f32 %v3483, %v3519
      %v3549 = vadd.f32 %v3484, %v3520
      %v3550 = vadd.f32 %v3485, %v3521
      %v3551 = vadd.f32 %v3486, %v3522
      %v3552 = vadd.f32 %v3487, %v3523
      %v3553 = vadd.f32 %v3488, %v3524
      %v3554 = vadd.f32 %v3489, %v3525
      %v3555 = vadd.f32 %v3490, %v3526
      %v3556 = vadd.f32 %v3491, %v3527
      %v3557 = vadd.f32 %v3492, %v3527
      %v3558 = vadd.f32 %v3493, %v3527
      %v3559 = vadd.f32 %v3494, %v3527
      %v3560 = vlaneseq
      %v3561 = vshrl.u32 %v3560, 7
      %v3562 = vsub.s32 0, %v3561
      %v3563 = vrot.slane %v371, %v3562
      %v3564 = vmul.f32 %v803, %v3563
      %v3565 = vmul.f32 %v877, %v3563
      %v3566 = vmul.f32 %v806, %v3563
      %v3567 = vmul.f32 %v878, %v3563
      %v3568 = vmul.f32 %v809, %v3563
      %v3569 = vmul.f32 %v879, %v3563
      %v3570 = vmul.f32 %v812, %v3563
      %v3571 = vmul.f32 %v880, %v3563
      %v3572 = vmul.f32 %v815, %v3563
      %v3573 = vmul.f32 %v881, %v3563
      %v3574 = vmul.f32 %v818, %v3563
      %v3575 = vmul.f32 %v882, %v3563
      %v3576 = vmul.f32 %v821, %v3563
      %v3577 = vmul.f32 %v883, %v3563
      %v3578 = vmul.f32 %v824, %v3563
      %v3579 = vmul.f32 %v884, %v3563
      %v3580 = vmul.f32 %v827, %v3563
      %v3581 = vmul.f32 %v885, %v3563
      %v3582 = vmul.f32 %v830, %v3563
      %v3583 = vmul.f32 %v886, %v3563
      %v3584 = vmul.f32 %v833, %v3563
      %v3585 = vmul.f32 %v887, %v3563
      %v3586 = vmul.f32 %v836, %v3563
      %v3587 = vmul.f32 %v888, %v3563
      %v3588 = vmul.f32 %v839, %v3563
      %v3589 = vmul.f32 %v889, %v3563
      %v3590 = vmul.f32 %v842, %v3563
      %v3591 = vmul.f32 %v890, %v3563
      %v3592 = vmul.f32 %v3563, 0.0
      %v3593 = vadd.f32 %v3528, %v3564
      %v3594 = vadd.f32 %v3529, %v3565
      %v3595 = vadd.f32 %v3530, %v3566
      %v3596 = vadd.f32 %v3531, %v3567
      %v3597 = vadd.f32 %v3532, %v3568
      %v3598 = vadd.f32 %v3533, %v3569
      %v3599 = vadd.f32 %v3534, %v3570
      %v3600 = vadd.f32 %v3535, %v3571
      %v3601 = vadd.f32 %v3536, %v3572
      %v3602 = vadd.f32 %v3537, %v3573
      %v3603 = vadd.f32 %v3538, %v3574
      %v3604 = vadd.f32 %v3539, %v3575
      %v3605 = vadd.f32 %v3540, %v3576
      %v3606 = vadd.f32 %v3541, %v3577
      %v3607 = vadd.f32 %v3542, %v3578
      %v3608 = vadd.f32 %v3543, %v3579
      %v3609 = vadd.f32 %v3544, %v3580
      %v3610 = vadd.f32 %v3545, %v3581
      %v3611 = vadd.f32 %v3546, %v3582
      %v3612 = vadd.f32 %v3547, %v3583
      %v3613 = vadd.f32 %v3548, %v3584
      %v3614 = vadd.f32 %v3549, %v3585
      %v3615 = vadd.f32 %v3550, %v3586
      %v3616 = vadd.f32 %v3551, %v3587
      %v3617 = vadd.f32 %v3552, %v3588
      %v3618 = vadd.f32 %v3553, %v3589
      %v3619 = vadd.f32 %v3554, %v3590
      %v3620 = vadd.f32 %v3555, %v3591
      %v3621 = vadd.f32 %v3556, %v3592
      %v3622 = vadd.f32 %v3557, %v3592
      %v3623 = vadd.f32 %v3558, %v3592
      %v3624 = vadd.f32 %v3559, %v3592
      %v3625 = vlaneseq
      %v3626 = vshrl.u32 %v3625, 7
      %v3627 = vsub.s32 1, %v3626
      %v3628 = vrot.slane %v371, %v3627
      %v3629 = vmul.f32 %v900, %v3628
      %v3630 = vmul.f32 %v974, %v3628
      %v3631 = vmul.f32 %v903, %v3628
      %v3632 = vmul.f32 %v975, %v3628
      %v3633 = vmul.f32 %v906, %v3628
      %v3634 = vmul.f32 %v976, %v3628
      %v3635 = vmul.f32 %v909, %v3628
      %v3636 = vmul.f32 %v977, %v3628
      %v3637 = vmul.f32 %v912, %v3628
      %v3638 = vmul.f32 %v978, %v3628
      %v3639 = vmul.f32 %v915, %v3628
      %v3640 = vmul.f32 %v979, %v3628
      %v3641 = vmul.f32 %v918, %v3628
      %v3642 = vmul.f32 %v980, %v3628
      %v3643 = vmul.f32 %v921, %v3628
      %v3644 = vmul.f32 %v981, %v3628
      %v3645 = vmul.f32 %v924, %v3628
      %v3646 = vmul.f32 %v982, %v3628
      %v3647 = vmul.f32 %v927, %v3628
      %v3648 = vmul.f32 %v983, %v3628
      %v3649 = vmul.f32 %v930, %v3628
      %v3650 = vmul.f32 %v984, %v3628
      %v3651 = vmul.f32 %v933, %v3628
      %v3652 = vmul.f32 %v985, %v3628
      %v3653 = vmul.f32 %v936, %v3628
      %v3654 = vmul.f32 %v986, %v3628
      %v3655 = vmul.f32 %v939, %v3628
      %v3656 = vmul.f32 %v987, %v3628
      %v3657 = vmul.f32 %v3628, 0.0
      %v3658 = vadd.f32 %v3593, %v3629
      %v3659 = vadd.f32 %v3594, %v3630
      %v3660 = vadd.f32 %v3595, %v3631
      %v3661 = vadd.f32 %v3596, %v3632
      %v3662 = vadd.f32 %v3597, %v3633
      %v3663 = vadd.f32 %v3598, %v3634
      %v3664 = vadd.f32 %v3599, %v3635
      %v3665 = vadd.f32 %v3600, %v3636
      %v3666 = vadd.f32 %v3601, %v3637
      %v3667 = vadd.f32 %v3602, %v3638
      %v3668 = vadd.f32 %v3603, %v3639
      %v3669 = vadd.f32 %v3604, %v3640
      %v3670 = vadd.f32 %v3605, %v3641
      %v3671 = vadd.f32 %v3606, %v3642
      %v3672 = vadd.f32 %v3607, %v3643
      %v3673 = vadd.f32 %v3608, %v3644
      %v3674 = vadd.f32 %v3609, %v3645
      %v3675 = vadd.f32 %v3610, %v3646
      %v3676 = vadd.f32 %v3611, %v3647
      %v3677 = vadd.f32 %v3612, %v3648
      %v3678 = vadd.f32 %v3613, %v3649
      %v3679 = vadd.f32 %v3614, %v3650
      %v3680 = vadd.f32 %v3615, %v3651
      %v3681 = vadd.f32 %v3616, %v3652
      %v3682 = vadd.f32 %v3617, %v3653
      %v3683 = vadd.f32 %v3618, %v3654
      %v3684 = vadd.f32 %v3619, %v3655
      %v3685 = vadd.f32 %v3620, %v3656
      %v3686 = vadd.f32 %v3621, %v3657
      %v3687 = vadd.f32 %v3622, %v3657
      %v3688 = vadd.f32 %v3623, %v3657
      %v3689 = vadd.f32 %v3624, %v3657
      %v3690 = vlaneseq
      %v3691 = vshrl.u32 %v3690, 7
      %v3692 = vsub.s32 2, %v3691
      %v3693 = vrot.slane %v371, %v3692
      %v3694 = vmul.f32 %v490, %v3693
      %v3695 = vmul.f32 %v418, %v3693
      %v3696 = vmul.f32 %v491, %v3693
      %v3697 = vmul.f32 %v421, %v3693
      %v3698 = vmul.f32 %v492, %v3693
      %v3699 = vmul.f32 %v424, %v3693
      %v3700 = vmul.f32 %v493, %v3693
      %v3701 = vmul.f32 %v427, %v3693
      %v3702 = vmul.f32 %v494, %v3693
      %v3703 = vmul.f32 %v430, %v3693
      %v3704 = vmul.f32 %v495, %v3693
      %v3705 = vmul.f32 %v433, %v3693
      %v3706 = vmul.f32 %v496, %v3693
      %v3707 = vmul.f32 %v436, %v3693
      %v3708 = vmul.f32 %v497, %v3693
      %v3709 = vmul.f32 %v439, %v3693
      %v3710 = vmul.f32 %v498, %v3693
      %v3711 = vmul.f32 %v442, %v3693
      %v3712 = vmul.f32 %v499, %v3693
      %v3713 = vmul.f32 %v445, %v3693
      %v3714 = vmul.f32 %v500, %v3693
      %v3715 = vmul.f32 %v448, %v3693
      %v3716 = vmul.f32 %v501, %v3693
      %v3717 = vmul.f32 %v451, %v3693
      %v3718 = vmul.f32 %v502, %v3693
      %v3719 = vmul.f32 %v454, %v3693
      %v3720 = vmul.f32 %v3693, 0.0
      %v3721 = vadd.f32 %v3658, %v3694
      %v3722 = vadd.f32 %v3659, %v3695
      %v3723 = vadd.f32 %v3660, %v3696
      %v3724 = vadd.f32 %v3661, %v3697
      %v3725 = vadd.f32 %v3662, %v3698
      %v3726 = vadd.f32 %v3663, %v3699
      %v3727 = vadd.f32 %v3664, %v3700
      %v3728 = vadd.f32 %v3665, %v3701
      %v3729 = vadd.f32 %v3666, %v3702
      %v3730 = vadd.f32 %v3667, %v3703
      %v3731 = vadd.f32 %v3668, %v3704
      %v3732 = vadd.f32 %v3669, %v3705
      %v3733 = vadd.f32 %v3670, %v3706
      %v3734 = vadd.f32 %v3671, %v3707
      %v3735 = vadd.f32 %v3672, %v3708
      %v3736 = vadd.f32 %v3673, %v3709
      %v3737 = vadd.f32 %v3674, %v3710
      %v3738 = vadd.f32 %v3675, %v3711
      %v3739 = vadd.f32 %v3676, %v3712
      %v3740 = vadd.f32 %v3677, %v3713
      %v3741 = vadd.f32 %v3678, %v3714
      %v3742 = vadd.f32 %v3679, %v3715
      %v3743 = vadd.f32 %v3680, %v3716
      %v3744 = vadd.f32 %v3681, %v3717
      %v3745 = vadd.f32 %v3682, %v3718
      %v3746 = vadd.f32 %v3683, %v3719
      %v3747 = vadd.f32 %v3684, %v3720
      %v3748 = vadd.f32 %v3685, %v3720
      %v3749 = vadd.f32 %v3686, %v3720
      %v3750 = vadd.f32 %v3687, %v3720
      %v3751 = vadd.f32 %v3688, %v3720
      %v3752 = vadd.f32 %v3689, %v3720
      %v3753 = vlaneseq
      %v3754 = vshrl.u32 %v3753, 7
      %v3755 = vsub.s32 3, %v3754
      %v3756 = vrot.slane %v371, %v3755
      %v3757 = vmul.f32 %v587, %v3756
      %v3758 = vmul.f32 %v515, %v3756
      %v3759 = vmul.f32 %v588, %v3756
      %v3760 = vmul.f32 %v518, %v3756
      %v3761 = vmul.f32 %v589, %v3756
      %v3762 = vmul.f32 %v521, %v3756
      %v3763 = vmul.f32 %v590, %v3756
      %v3764 = vmul.f32 %v524, %v3756
      %v3765 = vmul.f32 %v591, %v3756
      %v3766 = vmul.f32 %v527, %v3756
      %v3767 = vmul.f32 %v592, %v3756
      %v3768 = vmul.f32 %v530, %v3756
      %v3769 = vmul.f32 %v593, %v3756
      %v3770 = vmul.f32 %v533, %v3756
      %v3771 = vmul.f32 %v594, %v3756
      %v3772 = vmul.f32 %v536, %v3756
      %v3773 = vmul.f32 %v595, %v3756
      %v3774 = vmul.f32 %v539, %v3756
      %v3775 = vmul.f32 %v596, %v3756
      %v3776 = vmul.f32 %v542, %v3756
      %v3777 = vmul.f32 %v597, %v3756
      %v3778 = vmul.f32 %v545, %v3756
      %v3779 = vmul.f32 %v598, %v3756
      %v3780 = vmul.f32 %v548, %v3756
      %v3781 = vmul.f32 %v599, %v3756
      %v3782 = vmul.f32 %v551, %v3756
      %v3783 = vmul.f32 %v3756, 0.0
      %v3784 = vadd.f32 %v3721, %v3757
      %v3785 = vadd.f32 %v3722, %v3758
      %v3786 = vadd.f32 %v3723, %v3759
      %v3787 = vadd.f32 %v3724, %v3760
      %v3788 = vadd.f32 %v3725, %v3761
      %v3789 = vadd.f32 %v3726, %v3762
      %v3790 = vadd.f32 %v3727, %v3763
      %v3791 = vadd.f32 %v3728, %v3764
      %v3792 = vadd.f32 %v3729, %v3765
      %v3793 = vadd.f32 %v3730, %v3766
      %v3794 = vadd.f32 %v3731, %v3767
      %v3795 = vadd.f32 %v3732, %v3768
      %v3796 = vadd.f32 %v3733, %v3769
      %v3797 = vadd.f32 %v3734, %v3770
      %v3798 = vadd.f32 %v3735, %v3771
      %v3799 = vadd.f32 %v3736, %v3772
      %v3800 = vadd.f32 %v3737, %v3773
      %v3801 = vadd.f32 %v3738, %v3774
      %v3802 = vadd.f32 %v3739, %v3775
      %v3803 = vadd.f32 %v3740, %v3776
      %v3804 = vadd.f32 %v3741, %v3777
      %v3805 = vadd.f32 %v3742, %v3778
      %v3806 = vadd.f32 %v3743, %v3779
      %v3807 = vadd.f32 %v3744, %v3780
      %v3808 = vadd.f32 %v3745, %v3781
      %v3809 = vadd.f32 %v3746, %v3782
      %v3810 = vadd.f32 %v3747, %v3783
      %v3811 = vadd.f32 %v3748, %v3783
      %v3812 = vadd.f32 %v3749, %v3783
      %v3813 = vadd.f32 %v3750, %v3783
      %v3814 = vadd.f32 %v3751, %v3783
      %v3815 = vadd.f32 %v3752, %v3783
      %v3816 = vlaneseq
      %v3817 = vshrl.u32 %v3816, 7
      %v3818 = vsub.s32 4, %v3817
      %v3819 = vrot.slane %v371, %v3818
      %v3820 = vmul.f32 %v684, %v3819
      %v3821 = vmul.f32 %v612, %v3819
      %v3822 = vmul.f32 %v685, %v3819
      %v3823 = vmul.f32 %v615, %v3819
      %v3824 = vmul.f32 %v686, %v3819
      %v3825 = vmul.f32 %v618, %v3819
      %v3826 = vmul.f32 %v687, %v3819
      %v3827 = vmul.f32 %v621, %v3819
      %v3828 = vmul.f32 %v688, %v3819
      %v3829 = vmul.f32 %v624, %v3819
      %v3830 = vmul.f32 %v689, %v3819
      %v3831 = vmul.f32 %v627, %v3819
      %v3832 = vmul.f32 %v690, %v3819
      %v3833 = vmul.f32 %v630, %v3819
      %v3834 = vmul.f32 %v691, %v3819
      %v3835 = vmul.f32 %v633, %v3819
      %v3836 = vmul.f32 %v692, %v3819
      %v3837 = vmul.f32 %v636, %v3819
      %v3838 = vmul.f32 %v693, %v3819
      %v3839 = vmul.f32 %v639, %v3819
      %v3840 = vmul.f32 %v694, %v3819
      %v3841 = vmul.f32 %v642, %v3819
      %v3842 = vmul.f32 %v695, %v3819
      %v3843 = vmul.f32 %v645, %v3819
      %v3844 = vmul.f32 %v696, %v3819
      %v3845 = vmul.f32 %v648, %v3819
      %v3846 = vmul.f32 %v3819, 0.0
      %v3847 = vadd.f32 %v3784, %v3820
      %v3848 = vadd.f32 %v3785, %v3821
      %v3849 = vadd.f32 %v3786, %v3822
      %v3850 = vadd.f32 %v3787, %v3823
      %v3851 = vadd.f32 %v3788, %v3824
      %v3852 = vadd.f32 %v3789, %v3825
      %v3853 = vadd.f32 %v3790, %v3826
      %v3854 = vadd.f32 %v3791, %v3827
      %v3855 = vadd.f32 %v3792, %v3828
      %v3856 = vadd.f32 %v3793, %v3829
      %v3857 = vadd.f32 %v3794, %v3830
      %v3858 = vadd.f32 %v3795, %v3831
      %v3859 = vadd.f32 %v3796, %v3832
      %v3860 = vadd.f32 %v3797, %v3833
      %v3861 = vadd.f32 %v3798, %v3834
      %v3862 = vadd.f32 %v3799, %v3835
      %v3863 = vadd.f32 %v3800, %v3836
      %v3864 = vadd.f32 %v3801, %v3837
      %v3865 = vadd.f32 %v3802, %v3838
      %v3866 = vadd.f32 %v3803, %v3839
      %v3867 = vadd.f32 %v3804, %v3840
      %v3868 = vadd.f32 %v3805, %v3841
      %v3869 = vadd.f32 %v3806, %v3842
      %v3870 = vadd.f32 %v3807, %v3843
      %v3871 = vadd.f32 %v3808, %v3844
      %v3872 = vadd.f32 %v3809, %v3845
      %v3873 = vadd.f32 %v3810, %v3846
      %v3874 = vadd.f32 %v3811, %v3846
      %v3875 = vadd.f32 %v3812, %v3846
      %v3876 = vadd.f32 %v3813, %v3846
      %v3877 = vadd.f32 %v3814, %v3846
      %v3878 = vadd.f32 %v3815, %v3846
      %v3879 = vlaneseq
      %v3880 = vshrl.u32 %v3879, 7
      %v3881 = vsub.s32 5, %v3880
      %v3882 = vrot.slane %v371, %v3881
      %v3883 = vmul.f32 %v340, %v3882
      %v3884 = vmul.f32 %v341, %v3882
      %v3885 = vmul.f32 %v342, %v3882
      %v3886 = vmul.f32 %v343, %v3882
      %v3887 = vmul.f32 %v344, %v3882
      %v3888 = vmul.f32 %v345, %v3882
      %v3889 = vmul.f32 %v346, %v3882
      %v3890 = vmul.f32 %v347, %v3882
      %v3891 = vmul.f32 %v348, %v3882
      %v3892 = vmul.f32 %v349, %v3882
      %v3893 = vmul.f32 %v350, %v3882
      %v3894 = vmul.f32 %v351, %v3882
      %v3895 = vmul.f32 %v352, %v3882
      %v3896 = vmul.f32 %v353, %v3882
      %v3897 = vmul.f32 %v354, %v3882
      %v3898 = vmul.f32 %v355, %v3882
      %v3899 = vmul.f32 %v356, %v3882
      %v3900 = vmul.f32 %v357, %v3882
      %v3901 = vmul.f32 %v358, %v3882
      %v3902 = vmul.f32 %v359, %v3882
      %v3903 = vmul.f32 %v360, %v3882
      %v3904 = vmul.f32 %v361, %v3882
      %v3905 = vmul.f32 %v362, %v3882
      %v3906 = vmul.f32 %v363, %v3882
      %v3907 = vmul.f32 %v364, %v3882
      %v3908 = vmul.f32 %v365, %v3882
      %v3909 = vmul.f32 %v3882, 0.0
      %v3910 = vadd.f32 %v3847, %v3883
      %v3911 = vadd.f32 %v3848, %v3884
      %v3912 = vadd.f32 %v3849, %v3885
      %v3913 = vadd.f32 %v3850, %v3886
      %v3914 = vadd.f32 %v3851, %v3887
      %v3915 = vadd.f32 %v3852, %v3888
      %v3916 = vadd.f32 %v3853, %v3889
      %v3917 = vadd.f32 %v3854, %v3890
      %v3918 = vadd.f32 %v3855, %v3891
      %v3919 = vadd.f32 %v3856, %v3892
      %v3920 = vadd.f32 %v3857, %v3893
      %v3921 = vadd.f32 %v3858, %v3894
      %v3922 = vadd.f32 %v3859, %v3895
      %v3923 = vadd.f32 %v3860, %v3896
      %v3924 = vadd.f32 %v3861, %v3897
      %v3925 = vadd.f32 %v3862, %v3898
      %v3926 = vadd.f32 %v3863, %v3899
      %v3927 = vadd.f32 %v3864, %v3900
      %v3928 = vadd.f32 %v3865, %v3901
      %v3929 = vadd.f32 %v3866, %v3902
      %v3930 = vadd.f32 %v3867, %v3903
      %v3931 = vadd.f32 %v3868, %v3904
      %v3932 = vadd.f32 %v3869, %v3905
      %v3933 = vadd.f32 %v3870, %v3906
      %v3934 = vadd.f32 %v3871, %v3907
      %v3935 = vadd.f32 %v3872, %v3908
      %v3936 = vadd.f32 %v3873, %v3909
      %v3937 = vadd.f32 %v3874, %v3909
      %v3938 = vadd.f32 %v3875, %v3909
      %v3939 = vadd.f32 %v3876, %v3909
      %v3940 = vadd.f32 %v3877, %v3909
      %v3941 = vadd.f32 %v3878, %v3909
      %v3942 = vlaneseq
      %v3943 = vshrl.u32 %v3942, 7
      %v3944 = vsub.s32 6, %v3943
      %v3945 = vrot.slane %v371, %v3944
      %v3946 = vmul.f32 %v709, %v3945
      %v3947 = vmul.f32 %v781, %v3945
      %v3948 = vmul.f32 %v712, %v3945
      %v3949 = vmul.f32 %v782, %v3945
      %v3950 = vmul.f32 %v715, %v3945
      %v3951 = vmul.f32 %v783, %v3945
      %v3952 = vmul.f32 %v718, %v3945
      %v3953 = vmul.f32 %v784, %v3945
      %v3954 = vmul.f32 %v721, %v3945
      %v3955 = vmul.f32 %v785, %v3945
      %v3956 = vmul.f32 %v724, %v3945
      %v3957 = vmul.f32 %v786, %v3945
      %v3958 = vmul.f32 %v727, %v3945
      %v3959 = vmul.f32 %v787, %v3945
      %v3960 = vmul.f32 %v730, %v3945
      %v3961 = vmul.f32 %v788, %v3945
      %v3962 = vmul.f32 %v733, %v3945
      %v3963 = vmul.f32 %v789, %v3945
      %v3964 = vmul.f32 %v736, %v3945
      %v3965 = vmul.f32 %v790, %v3945
      %v3966 = vmul.f32 %v739, %v3945
      %v3967 = vmul.f32 %v791, %v3945
      %v3968 = vmul.f32 %v742, %v3945
      %v3969 = vmul.f32 %v792, %v3945
      %v3970 = vmul.f32 %v745, %v3945
      %v3971 = vmul.f32 %v793, %v3945
      %v3972 = vmul.f32 %v3945, 0.0
      %v3973 = vadd.f32 %v3910, %v3946
      %v3974 = vadd.f32 %v3911, %v3947
      %v3975 = vadd.f32 %v3912, %v3948
      %v3976 = vadd.f32 %v3913, %v3949
      %v3977 = vadd.f32 %v3914, %v3950
      %v3978 = vadd.f32 %v3915, %v3951
      %v3979 = vadd.f32 %v3916, %v3952
      %v3980 = vadd.f32 %v3917, %v3953
      %v3981 = vadd.f32 %v3918, %v3954
      %v3982 = vadd.f32 %v3919, %v3955
      %v3983 = vadd.f32 %v3920, %v3956
      %v3984 = vadd.f32 %v3921, %v3957
      %v3985 = vadd.f32 %v3922, %v3958
      %v3986 = vadd.f32 %v3923, %v3959
      %v3987 = vadd.f32 %v3924, %v3960
      %v3988 = vadd.f32 %v3925, %v3961
      %v3989 = vadd.f32 %v3926, %v3962
      %v3990 = vadd.f32 %v3927, %v3963
      %v3991 = vadd.f32 %v3928, %v3964
      %v3992 = vadd.f32 %v3929, %v3965
      %v3993 = vadd.f32 %v3930, %v3966
      %v3994 = vadd.f32 %v3931, %v3967
      %v3995 = vadd.f32 %v3932, %v3968
      %v3996 = vadd.f32 %v3933, %v3969
      %v3997 = vadd.f32 %v3934, %v3970
      %v3998 = vadd.f32 %v3935, %v3971
      %v3999 = vadd.f32 %v3936, %v3972
      %v4000 = vadd.f32 %v3937, %v3972
      %v4001 = vadd.f32 %v3938, %v3972
      %v4002 = vadd.f32 %v3939, %v3972
      %v4003 = vadd.f32 %v3940, %v3972
      %v4004 = vadd.f32 %v3941, %v3972
      %v4005 = vlaneseq
      %v4006 = vshrl.u32 %v4005, 7
      %v4007 = vsub.s32 7, %v4006
      %v4008 = vrot.slane %v371, %v4007
      %v4009 = vmul.f32 %v806, %v4008
      %v4010 = vmul.f32 %v878, %v4008
      %v4011 = vmul.f32 %v809, %v4008
      %v4012 = vmul.f32 %v879, %v4008
      %v4013 = vmul.f32 %v812, %v4008
      %v4014 = vmul.f32 %v880, %v4008
      %v4015 = vmul.f32 %v815, %v4008
      %v4016 = vmul.f32 %v881, %v4008
      %v4017 = vmul.f32 %v818, %v4008
      %v4018 = vmul.f32 %v882, %v4008
      %v4019 = vmul.f32 %v821, %v4008
      %v4020 = vmul.f32 %v883, %v4008
      %v4021 = vmul.f32 %v824, %v4008
      %v4022 = vmul.f32 %v884, %v4008
      %v4023 = vmul.f32 %v827, %v4008
      %v4024 = vmul.f32 %v885, %v4008
      %v4025 = vmul.f32 %v830, %v4008
      %v4026 = vmul.f32 %v886, %v4008
      %v4027 = vmul.f32 %v833, %v4008
      %v4028 = vmul.f32 %v887, %v4008
      %v4029 = vmul.f32 %v836, %v4008
      %v4030 = vmul.f32 %v888, %v4008
      %v4031 = vmul.f32 %v839, %v4008
      %v4032 = vmul.f32 %v889, %v4008
      %v4033 = vmul.f32 %v842, %v4008
      %v4034 = vmul.f32 %v890, %v4008
      %v4035 = vmul.f32 %v4008, 0.0
      %v4036 = vadd.f32 %v3973, %v4009
      %v4037 = vadd.f32 %v3974, %v4010
      %v4038 = vadd.f32 %v3975, %v4011
      %v4039 = vadd.f32 %v3976, %v4012
      %v4040 = vadd.f32 %v3977, %v4013
      %v4041 = vadd.f32 %v3978, %v4014
      %v4042 = vadd.f32 %v3979, %v4015
      %v4043 = vadd.f32 %v3980, %v4016
      %v4044 = vadd.f32 %v3981, %v4017
      %v4045 = vadd.f32 %v3982, %v4018
      %v4046 = vadd.f32 %v3983, %v4019
      %v4047 = vadd.f32 %v3984, %v4020
      %v4048 = vadd.f32 %v3985, %v4021
      %v4049 = vadd.f32 %v3986, %v4022
      %v4050 = vadd.f32 %v3987, %v4023
      %v4051 = vadd.f32 %v3988, %v4024
      %v4052 = vadd.f32 %v3989, %v4025
      %v4053 = vadd.f32 %v3990, %v4026
      %v4054 = vadd.f32 %v3991, %v4027
      %v4055 = vadd.f32 %v3992, %v4028
      %v4056 = vadd.f32 %v3993, %v4029
      %v4057 = vadd.f32 %v3994, %v4030
      %v4058 = vadd.f32 %v3995, %v4031
      %v4059 = vadd.f32 %v3996, %v4032
      %v4060 = vadd.f32 %v3997, %v4033
      %v4061 = vadd.f32 %v3998, %v4034
      %v4062 = vadd.f32 %v3999, %v4035
      %v4063 = vadd.f32 %v4000, %v4035
      %v4064 = vadd.f32 %v4001, %v4035
      %v4065 = vadd.f32 %v4002, %v4035
      %v4066 = vadd.f32 %v4003, %v4035
      %v4067 = vadd.f32 %v4004, %v4035
      %v4068 = vlaneseq
      %v4069 = vshrl.u32 %v4068, 7
      %v4070 = vsub.s32 0, %v4069
      %v4071 = vrot.slane %v372, %v4070
      %v4072 = vmul.f32 %v903, %v4071
      %v4073 = vmul.f32 %v975, %v4071
      %v4074 = vmul.f32 %v906, %v4071
      %v4075 = vmul.f32 %v976, %v4071
      %v4076 = vmul.f32 %v909, %v4071
      %v4077 = vmul.f32 %v977, %v4071
      %v4078 = vmul.f32 %v912, %v4071
      %v4079 = vmul.f32 %v978, %v4071
      %v4080 = vmul.f32 %v915, %v4071
      %v4081 = vmul.f32 %v979, %v4071
      %v4082 = vmul.f32 %v918, %v4071
      %v4083 = vmul.f32 %v980, %v4071
      %v4084 = vmul.f32 %v921, %v4071
      %v4085 = vmul.f32 %v981, %v4071
      %v4086 = vmul.f32 %v924, %v4071
      %v4087 = vmul.f32 %v982, %v4071
      %v4088 = vmul.f32 %v927, %v4071
      %v4089 = vmul.f32 %v983, %v4071
      %v4090 = vmul.f32 %v930, %v4071
      %v4091 = vmul.f32 %v984, %v4071
      %v4092 = vmul.f32 %v933, %v4071
      %v4093 = vmul.f32 %v985, %v4071
      %v4094 = vmul.f32 %v936, %v4071
      %v4095 = vmul.f32 %v986, %v4071
      %v4096 = vmul.f32 %v939, %v4071
      %v4097 = vmul.f32 %v987, %v4071
      %v4098 = vmul.f32 %v4071, 0.0
      %v4099 = vadd.f32 %v4036, %v4072
      %v4100 = vadd.f32 %v4037, %v4073
      %v4101 = vadd.f32 %v4038, %v4074
      %v4102 = vadd.f32 %v4039, %v4075
      %v4103 = vadd.f32 %v4040, %v4076
      %v4104 = vadd.f32 %v4041, %v4077
      %v4105 = vadd.f32 %v4042, %v4078
      %v4106 = vadd.f32 %v4043, %v4079
      %v4107 = vadd.f32 %v4044, %v4080
      %v4108 = vadd.f32 %v4045, %v4081
      %v4109 = vadd.f32 %v4046, %v4082
      %v4110 = vadd.f32 %v4047, %v4083
      %v4111 = vadd.f32 %v4048, %v4084
      %v4112 = vadd.f32 %v4049, %v4085
      %v4113 = vadd.f32 %v4050, %v4086
      %v4114 = vadd.f32 %v4051, %v4087
      %v4115 = vadd.f32 %v4052, %v4088
      %v4116 = vadd.f32 %v4053, %v4089
      %v4117 = vadd.f32 %v4054, %v4090
      %v4118 = vadd.f32 %v4055, %v4091
      %v4119 = vadd.f32 %v4056, %v4092
      %v4120 = vadd.f32 %v4057, %v4093
      %v4121 = vadd.f32 %v4058, %v4094
      %v4122 = vadd.f32 %v4059, %v4095
      %v4123 = vadd.f32 %v4060, %v4096
      %v4124 = vadd.f32 %v4061, %v4097
      %v4125 = vadd.f32 %v4062, %v4098
      %v4126 = vadd.f32 %v4063, %v4098
      %v4127 = vadd.f32 %v4064, %v4098
      %v4128 = vadd.f32 %v4065, %v4098
      %v4129 = vadd.f32 %v4066, %v4098
      %v4130 = vadd.f32 %v4067, %v4098
      %v4132 = vlaneseq
      %v4133 = vshrl.u32 %v4132, 7
      %v4134 = vsub.s32 0, %v4133
      %v4135 = vrot.slane %v373, %v4134
      %v4137 = vadd.f32 %v4099, %v4135
      %v4138 = vadd.f32 %v4100, %v4135
      %v4139 = vadd.f32 %v4101, %v4135
      %v4140 = vadd.f32 %v4102, %v4135
      %v4141 = vadd.f32 %v4103, %v4135
      %v4142 = vadd.f32 %v4104, %v4135
      %v4143 = vadd.f32 %v4105, %v4135
      %v4144 = vadd.f32 %v4106, %v4135
      %v4145 = vadd.f32 %v4107, %v4135
      %v4146 = vadd.f32 %v4108, %v4135
      %v4147 = vadd.f32 %v4109, %v4135
      %v4148 = vadd.f32 %v4110, %v4135
      %v4149 = vadd.f32 %v4111, %v4135
      %v4150 = vadd.f32 %v4112, %v4135
      %v4151 = vadd.f32 %v4113, %v4135
      %v4152 = vadd.f32 %v4114, %v4135
      %v4153 = vadd.f32 %v4115, %v4135
      %v4154 = vadd.f32 %v4116, %v4135
      %v4155 = vadd.f32 %v4117, %v4135
      %v4156 = vadd.f32 %v4118, %v4135
      %v4157 = vadd.f32 %v4119, %v4135
      %v4158 = vadd.f32 %v4120, %v4135
      %v4159 = vadd.f32 %v4121, %v4135
      %v4160 = vadd.f32 %v4122, %v4135
      %v4161 = vadd.f32 %v4123, %v4135
      %v4162 = vadd.f32 %v4124, %v4135
      %v4163 = vadd.f32 %v4125, %v4135
      %v4164 = vadd.f32 %v4126, %v4135
      %v4165 = vadd.f32 %v4127, %v4135
      %v4166 = vadd.f32 %v4128, %v4135
      %v4167 = vadd.f32 %v4129, %v4135
      %v4168 = vadd.f32 %v4130, %v4135
      %vm4169 = vcmask 31744
      %v4170 = vsel %vm4169, %v4137, 0.0
      %4171 = vadd.xlane.f32.xlu0 %v4170
      %v4172 = vpop.xlane.xlu0 %4171
      %v4173 = vsel %vm4169, %v4138, 0.0
      %4174 = vadd.xlane.f32.xlu0 %v4173
      %v4175 = vpop.xlane.xlu0 %4174
      %v4176 = vsel %vm4169, %v4139, 0.0
      %4177 = vadd.xlane.f32.xlu0 %v4176
      %v4178 = vpop.xlane.xlu0 %4177
      %v4179 = vsel %vm4169, %v4140, 0.0
      %4180 = vadd.xlane.f32.xlu0 %v4179
      %v4181 = vpop.xlane.xlu0 %4180
      %v4182 = vsel %vm4169, %v4141, 0.0
      %4183 = vadd.xlane.f32.xlu0 %v4182
      %v4184 = vpop.xlane.xlu0 %4183
      %v4185 = vsel %vm4169, %v4142, 0.0
      %4186 = vadd.xlane.f32.xlu0 %v4185
      %v4187 = vpop.xlane.xlu0 %4186
      %v4188 = vsel %vm4169, %v4143, 0.0
      %4189 = vadd.xlane.f32.xlu0 %v4188
      %v4190 = vpop.xlane.xlu0 %4189
      %v4191 = vsel %vm4169, %v4144, 0.0
      %4192 = vadd.xlane.f32.xlu0 %v4191
      %v4193 = vpop.xlane.xlu0 %4192
      %v4194 = vsel %vm4169, %v4145, 0.0
      %4195 = vadd.xlane.f32.xlu0 %v4194
      %v4196 = vpop.xlane.xlu0 %4195
      %v4197 = vsel %vm4169, %v4146, 0.0
      %4198 = vadd.xlane.f32.xlu0 %v4197
      %v4199 = vpop.xlane.xlu0 %4198
      %v4200 = vsel %vm4169, %v4147, 0.0
      %4201 = vadd.xlane.f32.xlu0 %v4200
      %v4202 = vpop.xlane.xlu0 %4201
      %v4203 = vsel %vm4169, %v4148, 0.0
      %4204 = vadd.xlane.f32.xlu0 %v4203
      %v4205 = vpop.xlane.xlu0 %4204
      %v4206 = vsel %vm4169, %v4149, 0.0
      %4207 = vadd.xlane.f32.xlu0 %v4206
      %v4208 = vpop.xlane.xlu0 %4207
      %v4209 = vsel %vm4169, %v4150, 0.0
      %4210 = vadd.xlane.f32.xlu0 %v4209
      %v4211 = vpop.xlane.xlu0 %4210
      %v4212 = vsel %vm4169, %v4151, 0.0
      %4213 = vadd.xlane.f32.xlu0 %v4212
      %v4214 = vpop.xlane.xlu0 %4213
      %v4215 = vsel %vm4169, %v4152, 0.0
      %4216 = vadd.xlane.f32.xlu0 %v4215
      %v4217 = vpop.xlane.xlu0 %4216
      %v4218 = vsel %vm4169, %v4153, 0.0
      %4219 = vadd.xlane.f32.xlu0 %v4218
      %v4220 = vpop.xlane.xlu0 %4219
      %v4221 = vsel %vm4169, %v4154, 0.0
      %4222 = vadd.xlane.f32.xlu0 %v4221
      %v4223 = vpop.xlane.xlu0 %4222
      %v4224 = vsel %vm4169, %v4155, 0.0
      %4225 = vadd.xlane.f32.xlu0 %v4224
      %v4226 = vpop.xlane.xlu0 %4225
      %v4227 = vsel %vm4169, %v4156, 0.0
      %4228 = vadd.xlane.f32.xlu0 %v4227
      %v4229 = vpop.xlane.xlu0 %4228
      %v4230 = vsel %vm4169, %v4157, 0.0
      %4231 = vadd.xlane.f32.xlu0 %v4230
      %v4232 = vpop.xlane.xlu0 %4231
      %v4233 = vsel %vm4169, %v4158, 0.0
      %4234 = vadd.xlane.f32.xlu0 %v4233
      %v4235 = vpop.xlane.xlu0 %4234
      %v4236 = vsel %vm4169, %v4159, 0.0
      %4237 = vadd.xlane.f32.xlu0 %v4236
      %v4238 = vpop.xlane.xlu0 %4237
      %v4239 = vsel %vm4169, %v4160, 0.0
      %4240 = vadd.xlane.f32.xlu0 %v4239
      %v4241 = vpop.xlane.xlu0 %4240
      %v4242 = vsel %vm4169, %v4161, 0.0
      %4243 = vadd.xlane.f32.xlu0 %v4242
      %v4244 = vpop.xlane.xlu0 %4243
      %v4245 = vsel %vm4169, %v4162, 0.0
      %4246 = vadd.xlane.f32.xlu0 %v4245
      %v4247 = vpop.xlane.xlu0 %4246
      %v4248 = vsel %vm4169, %v4163, 0.0
      %4249 = vadd.xlane.f32.xlu0 %v4248
      %v4250 = vpop.xlane.xlu0 %4249
      %v4251 = vsel %vm4169, %v4164, 0.0
      %4252 = vadd.xlane.f32.xlu0 %v4251
      %v4253 = vpop.xlane.xlu0 %4252
      %v4254 = vsel %vm4169, %v4165, 0.0
      %4255 = vadd.xlane.f32.xlu0 %v4254
      %v4256 = vpop.xlane.xlu0 %4255
      %v4257 = vsel %vm4169, %v4166, 0.0
      %4258 = vadd.xlane.f32.xlu0 %v4257
      %v4259 = vpop.xlane.xlu0 %4258
      %v4260 = vsel %vm4169, %v4167, 0.0
      %4261 = vadd.xlane.f32.xlu0 %v4260
      %v4262 = vpop.xlane.xlu0 %4261
      %v4263 = vsel %vm4169, %v4168, 0.0
      %4264 = vadd.xlane.f32.xlu0 %v4263
      %v4265 = vpop.xlane.xlu0 %4264
      %v4266 = vrcp.pop 4.0
      %v4267 = vmul.f32 %v4172, %v4266
      %v4268 = vmul.f32 %v4175, %v4266
      %v4269 = vmul.f32 %v4178, %v4266
      %v4270 = vmul.f32 %v4181, %v4266
      %v4271 = vmul.f32 %v4184, %v4266
      %v4272 = vmul.f32 %v4187, %v4266
      %v4273 = vmul.f32 %v4190, %v4266
      %v4274 = vmul.f32 %v4193, %v4266
      %v4275 = vmul.f32 %v4196, %v4266
      %v4276 = vmul.f32 %v4199, %v4266
      %v4277 = vmul.f32 %v4202, %v4266
      %v4278 = vmul.f32 %v4205, %v4266
      %v4279 = vmul.f32 %v4208, %v4266
      %v4280 = vmul.f32 %v4211, %v4266
      %v4281 = vmul.f32 %v4214, %v4266
      %v4282 = vmul.f32 %v4217, %v4266
      %v4283 = vmul.f32 %v4220, %v4266
      %v4284 = vmul.f32 %v4223, %v4266
      %v4285 = vmul.f32 %v4226, %v4266
      %v4286 = vmul.f32 %v4229, %v4266
      %v4287 = vmul.f32 %v4232, %v4266
      %v4288 = vmul.f32 %v4235, %v4266
      %v4289 = vmul.f32 %v4238, %v4266
      %v4290 = vmul.f32 %v4241, %v4266
      %v4291 = vmul.f32 %v4244, %v4266
      %v4292 = vmul.f32 %v4247, %v4266
      %v4293 = vmul.f32 %v4250, %v4266
      %v4294 = vmul.f32 %v4253, %v4266
      %v4295 = vmul.f32 %v4256, %v4266
      %v4296 = vmul.f32 %v4259, %v4266
      %v4297 = vmul.f32 %v4262, %v4266
      %v4298 = vmul.f32 %v4265, %v4266
      %v4299 = vsub.f32 %v4137, %v4267
      %v4300 = vsub.f32 %v4138, %v4268
      %v4301 = vsub.f32 %v4139, %v4269
      %v4302 = vsub.f32 %v4140, %v4270
      %v4303 = vsub.f32 %v4141, %v4271
      %v4304 = vsub.f32 %v4142, %v4272
      %v4305 = vsub.f32 %v4143, %v4273
      %v4306 = vsub.f32 %v4144, %v4274
      %v4307 = vsub.f32 %v4145, %v4275
      %v4308 = vsub.f32 %v4146, %v4276
      %v4309 = vsub.f32 %v4147, %v4277
      %v4310 = vsub.f32 %v4148, %v4278
      %v4311 = vsub.f32 %v4149, %v4279
      %v4312 = vsub.f32 %v4150, %v4280
      %v4313 = vsub.f32 %v4151, %v4281
      %v4314 = vsub.f32 %v4152, %v4282
      %v4315 = vsub.f32 %v4153, %v4283
      %v4316 = vsub.f32 %v4154, %v4284
      %v4317 = vsub.f32 %v4155, %v4285
      %v4318 = vsub.f32 %v4156, %v4286
      %v4319 = vsub.f32 %v4157, %v4287
      %v4320 = vsub.f32 %v4158, %v4288
      %v4321 = vsub.f32 %v4159, %v4289
      %v4322 = vsub.f32 %v4160, %v4290
      %v4323 = vsub.f32 %v4161, %v4291
      %v4324 = vsub.f32 %v4162, %v4292
      %v4325 = vsub.f32 %v4163, %v4293
      %v4326 = vsub.f32 %v4164, %v4294
      %v4327 = vsub.f32 %v4165, %v4295
      %v4328 = vsub.f32 %v4166, %v4296
      %v4329 = vsub.f32 %v4167, %v4297
      %v4330 = vsub.f32 %v4168, %v4298
      %v4331 = vmul.f32 %v4299, %v4299
      %v4332 = vmul.f32 %v4300, %v4300
      %v4333 = vmul.f32 %v4301, %v4301
      %v4334 = vmul.f32 %v4302, %v4302
      %v4335 = vmul.f32 %v4303, %v4303
      %v4336 = vmul.f32 %v4304, %v4304
      %v4337 = vmul.f32 %v4305, %v4305
      %v4338 = vmul.f32 %v4306, %v4306
      %v4339 = vmul.f32 %v4307, %v4307
      %v4340 = vmul.f32 %v4308, %v4308
      %v4341 = vmul.f32 %v4309, %v4309
      %v4342 = vmul.f32 %v4310, %v4310
      %v4343 = vmul.f32 %v4311, %v4311
      %v4344 = vmul.f32 %v4312, %v4312
      %v4345 = vmul.f32 %v4313, %v4313
      %v4346 = vmul.f32 %v4314, %v4314
      %v4347 = vmul.f32 %v4315, %v4315
      %v4348 = vmul.f32 %v4316, %v4316
      %v4349 = vmul.f32 %v4317, %v4317
      %v4350 = vmul.f32 %v4318, %v4318
      %v4351 = vmul.f32 %v4319, %v4319
      %v4352 = vmul.f32 %v4320, %v4320
      %v4353 = vmul.f32 %v4321, %v4321
      %v4354 = vmul.f32 %v4322, %v4322
      %v4355 = vmul.f32 %v4323, %v4323
      %v4356 = vmul.f32 %v4324, %v4324
      %v4357 = vmul.f32 %v4325, %v4325
      %v4358 = vmul.f32 %v4326, %v4326
      %v4359 = vmul.f32 %v4327, %v4327
      %v4360 = vmul.f32 %v4328, %v4328
      %v4361 = vmul.f32 %v4329, %v4329
      %v4362 = vmul.f32 %v4330, %v4330
      %v4363 = vsel %vm4169, %v4331, 0.0
      %4364 = vadd.xlane.f32.xlu0 %v4363
      %v4365 = vpop.xlane.xlu0 %4364
      %v4366 = vsel %vm4169, %v4332, 0.0
      %4367 = vadd.xlane.f32.xlu0 %v4366
      %v4368 = vpop.xlane.xlu0 %4367
      %v4369 = vsel %vm4169, %v4333, 0.0
      %4370 = vadd.xlane.f32.xlu0 %v4369
      %v4371 = vpop.xlane.xlu0 %4370
      %v4372 = vsel %vm4169, %v4334, 0.0
      %4373 = vadd.xlane.f32.xlu0 %v4372
      %v4374 = vpop.xlane.xlu0 %4373
      %v4375 = vsel %vm4169, %v4335, 0.0
      %4376 = vadd.xlane.f32.xlu0 %v4375
      %v4377 = vpop.xlane.xlu0 %4376
      %v4378 = vsel %vm4169, %v4336, 0.0
      %4379 = vadd.xlane.f32.xlu0 %v4378
      %v4380 = vpop.xlane.xlu0 %4379
      %v4381 = vsel %vm4169, %v4337, 0.0
      %4382 = vadd.xlane.f32.xlu0 %v4381
      %v4383 = vpop.xlane.xlu0 %4382
      %v4384 = vsel %vm4169, %v4338, 0.0
      %4385 = vadd.xlane.f32.xlu0 %v4384
      %v4386 = vpop.xlane.xlu0 %4385
      %v4387 = vsel %vm4169, %v4339, 0.0
      %4388 = vadd.xlane.f32.xlu0 %v4387
      %v4389 = vpop.xlane.xlu0 %4388
      %v4390 = vsel %vm4169, %v4340, 0.0
      %4391 = vadd.xlane.f32.xlu0 %v4390
      %v4392 = vpop.xlane.xlu0 %4391
      %v4393 = vsel %vm4169, %v4341, 0.0
      %4394 = vadd.xlane.f32.xlu0 %v4393
      %v4395 = vpop.xlane.xlu0 %4394
      %v4396 = vsel %vm4169, %v4342, 0.0
      %4397 = vadd.xlane.f32.xlu0 %v4396
      %v4398 = vpop.xlane.xlu0 %4397
      %v4399 = vsel %vm4169, %v4343, 0.0
      %4400 = vadd.xlane.f32.xlu0 %v4399
      %v4401 = vpop.xlane.xlu0 %4400
      %v4402 = vsel %vm4169, %v4344, 0.0
      %4403 = vadd.xlane.f32.xlu0 %v4402
      %v4404 = vpop.xlane.xlu0 %4403
      %v4405 = vsel %vm4169, %v4345, 0.0
      %4406 = vadd.xlane.f32.xlu0 %v4405
      %v4407 = vpop.xlane.xlu0 %4406
      %v4408 = vsel %vm4169, %v4346, 0.0
      %4409 = vadd.xlane.f32.xlu0 %v4408
      %v4410 = vpop.xlane.xlu0 %4409
      %v4411 = vsel %vm4169, %v4347, 0.0
      %4412 = vadd.xlane.f32.xlu0 %v4411
      %v4413 = vpop.xlane.xlu0 %4412
      %v4414 = vsel %vm4169, %v4348, 0.0
      %4415 = vadd.xlane.f32.xlu0 %v4414
      %v4416 = vpop.xlane.xlu0 %4415
      %v4417 = vsel %vm4169, %v4349, 0.0
      %4418 = vadd.xlane.f32.xlu0 %v4417
      %v4419 = vpop.xlane.xlu0 %4418
      %v4420 = vsel %vm4169, %v4350, 0.0
      %4421 = vadd.xlane.f32.xlu0 %v4420
      %v4422 = vpop.xlane.xlu0 %4421
      %v4423 = vsel %vm4169, %v4351, 0.0
      %4424 = vadd.xlane.f32.xlu0 %v4423
      %v4425 = vpop.xlane.xlu0 %4424
      %v4426 = vsel %vm4169, %v4352, 0.0
      %4427 = vadd.xlane.f32.xlu0 %v4426
      %v4428 = vpop.xlane.xlu0 %4427
      %v4429 = vsel %vm4169, %v4353, 0.0
      %4430 = vadd.xlane.f32.xlu0 %v4429
      %v4431 = vpop.xlane.xlu0 %4430
      %v4432 = vsel %vm4169, %v4354, 0.0
      %4433 = vadd.xlane.f32.xlu0 %v4432
      %v4434 = vpop.xlane.xlu0 %4433
      %v4435 = vsel %vm4169, %v4355, 0.0
      %4436 = vadd.xlane.f32.xlu0 %v4435
      %v4437 = vpop.xlane.xlu0 %4436
      %v4438 = vsel %vm4169, %v4356, 0.0
      %4439 = vadd.xlane.f32.xlu0 %v4438
      %v4440 = vpop.xlane.xlu0 %4439
      %v4441 = vsel %vm4169, %v4357, 0.0
      %4442 = vadd.xlane.f32.xlu0 %v4441
      %v4443 = vpop.xlane.xlu0 %4442
      %v4444 = vsel %vm4169, %v4358, 0.0
      %4445 = vadd.xlane.f32.xlu0 %v4444
      %v4446 = vpop.xlane.xlu0 %4445
      %v4447 = vsel %vm4169, %v4359, 0.0
      %4448 = vadd.xlane.f32.xlu0 %v4447
      %v4449 = vpop.xlane.xlu0 %4448
      %v4450 = vsel %vm4169, %v4360, 0.0
      %4451 = vadd.xlane.f32.xlu0 %v4450
      %v4452 = vpop.xlane.xlu0 %4451
      %v4453 = vsel %vm4169, %v4361, 0.0
      %4454 = vadd.xlane.f32.xlu0 %v4453
      %v4455 = vpop.xlane.xlu0 %4454
      %v4456 = vsel %vm4169, %v4362, 0.0
      %4457 = vadd.xlane.f32.xlu0 %v4456
      %v4458 = vpop.xlane.xlu0 %4457
      %v4459 = vmul.f32 %v4365, %v4266
      %v4460 = vmul.f32 %v4368, %v4266
      %v4461 = vmul.f32 %v4371, %v4266
      %v4462 = vmul.f32 %v4374, %v4266
      %v4463 = vmul.f32 %v4377, %v4266
      %v4464 = vmul.f32 %v4380, %v4266
      %v4465 = vmul.f32 %v4383, %v4266
      %v4466 = vmul.f32 %v4386, %v4266
      %v4467 = vmul.f32 %v4389, %v4266
      %v4468 = vmul.f32 %v4392, %v4266
      %v4469 = vmul.f32 %v4395, %v4266
      %v4470 = vmul.f32 %v4398, %v4266
      %v4471 = vmul.f32 %v4401, %v4266
      %v4472 = vmul.f32 %v4404, %v4266
      %v4473 = vmul.f32 %v4407, %v4266
      %v4474 = vmul.f32 %v4410, %v4266
      %v4475 = vmul.f32 %v4413, %v4266
      %v4476 = vmul.f32 %v4416, %v4266
      %v4477 = vmul.f32 %v4419, %v4266
      %v4478 = vmul.f32 %v4422, %v4266
      %v4479 = vmul.f32 %v4425, %v4266
      %v4480 = vmul.f32 %v4428, %v4266
      %v4481 = vmul.f32 %v4431, %v4266
      %v4482 = vmul.f32 %v4434, %v4266
      %v4483 = vmul.f32 %v4437, %v4266
      %v4484 = vmul.f32 %v4440, %v4266
      %v4485 = vmul.f32 %v4443, %v4266
      %v4486 = vmul.f32 %v4446, %v4266
      %v4487 = vmul.f32 %v4449, %v4266
      %v4488 = vmul.f32 %v4452, %v4266
      %v4489 = vmul.f32 %v4455, %v4266
      %v4490 = vmul.f32 %v4458, %v4266
      %v4491 = vadd.f32 %v4459, 1e-05
      %v4492 = vadd.f32 %v4460, 1e-05
      %v4493 = vadd.f32 %v4461, 1e-05
      %v4494 = vadd.f32 %v4462, 1e-05
      %v4495 = vadd.f32 %v4463, 1e-05
      %v4496 = vadd.f32 %v4464, 1e-05
      %v4497 = vadd.f32 %v4465, 1e-05
      %v4498 = vadd.f32 %v4466, 1e-05
      %v4499 = vadd.f32 %v4467, 1e-05
      %v4500 = vadd.f32 %v4468, 1e-05
      %v4501 = vadd.f32 %v4469, 1e-05
      %v4502 = vadd.f32 %v4470, 1e-05
      %v4503 = vadd.f32 %v4471, 1e-05
      %v4504 = vadd.f32 %v4472, 1e-05
      %v4505 = vadd.f32 %v4473, 1e-05
      %v4506 = vadd.f32 %v4474, 1e-05
      %v4507 = vadd.f32 %v4475, 1e-05
      %v4508 = vadd.f32 %v4476, 1e-05
      %v4509 = vadd.f32 %v4477, 1e-05
      %v4510 = vadd.f32 %v4478, 1e-05
      %v4511 = vadd.f32 %v4479, 1e-05
      %v4512 = vadd.f32 %v4480, 1e-05
      %v4513 = vadd.f32 %v4481, 1e-05
      %v4514 = vadd.f32 %v4482, 1e-05
      %v4515 = vadd.f32 %v4483, 1e-05
      %v4516 = vadd.f32 %v4484, 1e-05
      %v4517 = vadd.f32 %v4485, 1e-05
      %v4518 = vadd.f32 %v4486, 1e-05
      %v4519 = vadd.f32 %v4487, 1e-05
      %v4520 = vadd.f32 %v4488, 1e-05
      %v4521 = vadd.f32 %v4489, 1e-05
      %v4522 = vadd.f32 %v4490, 1e-05
      %v4523 = vrsqrt.pop %v4491
      %v4524 = vrsqrt.pop %v4492
      %v4525 = vrsqrt.pop %v4493
      %v4526 = vrsqrt.pop %v4494
      %v4527 = vrsqrt.pop %v4495
      %v4528 = vrsqrt.pop %v4496
      %v4529 = vrsqrt.pop %v4497
      %v4530 = vrsqrt.pop %v4498
      %v4531 = vrsqrt.pop %v4499
      %v4532 = vrsqrt.pop %v4500
      %v4533 = vrsqrt.pop %v4501
      %v4534 = vrsqrt.pop %v4502
      %v4535 = vrsqrt.pop %v4503
      %v4536 = vrsqrt.pop %v4504
      %v4537 = vrsqrt.pop %v4505
      %v4538 = vrsqrt.pop %v4506
      %v4539 = vrsqrt.pop %v4507
      %v4540 = vrsqrt.pop %v4508
      %v4541 = vrsqrt.pop %v4509
      %v4542 = vrsqrt.pop %v4510
      %v4543 = vrsqrt.pop %v4511
      %v4544 = vrsqrt.pop %v4512
      %v4545 = vrsqrt.pop %v4513
      %v4546 = vrsqrt.pop %v4514
      %v4547 = vrsqrt.pop %v4515
      %v4548 = vrsqrt.pop %v4516
      %v4549 = vrsqrt.pop %v4517
      %v4550 = vrsqrt.pop %v4518
      %v4551 = vrsqrt.pop %v4519
      %v4552 = vrsqrt.pop %v4520
      %v4553 = vrsqrt.pop %v4521
      %v4554 = vrsqrt.pop %v4522
      %v4555 = vmul.f32 %v4299, %v4523
      %v4556 = vmul.f32 %v4300, %v4524
      %v4557 = vmul.f32 %v4301, %v4525
      %v4558 = vmul.f32 %v4302, %v4526
      %v4559 = vmul.f32 %v4303, %v4527
      %v4560 = vmul.f32 %v4304, %v4528
      %v4561 = vmul.f32 %v4305, %v4529
      %v4562 = vmul.f32 %v4306, %v4530
      %v4563 = vmul.f32 %v4307, %v4531
      %v4564 = vmul.f32 %v4308, %v4532
      %v4565 = vmul.f32 %v4309, %v4533
      %v4566 = vmul.f32 %v4310, %v4534
      %v4567 = vmul.f32 %v4311, %v4535
      %v4568 = vmul.f32 %v4312, %v4536
      %v4569 = vmul.f32 %v4313, %v4537
      %v4570 = vmul.f32 %v4314, %v4538
      %v4571 = vmul.f32 %v4315, %v4539
      %v4572 = vmul.f32 %v4316, %v4540
      %v4573 = vmul.f32 %v4317, %v4541
      %v4574 = vmul.f32 %v4318, %v4542
      %v4575 = vmul.f32 %v4319, %v4543
      %v4576 = vmul.f32 %v4320, %v4544
      %v4577 = vmul.f32 %v4321, %v4545
      %v4578 = vmul.f32 %v4322, %v4546
      %v4579 = vmul.f32 %v4323, %v4547
      %v4580 = vmul.f32 %v4324, %v4548
      %v4581 = vmul.f32 %v4325, %v4549
      %v4582 = vmul.f32 %v4326, %v4550
      %v4583 = vmul.f32 %v4327, %v4551
      %v4584 = vmul.f32 %v4328, %v4552
      %v4585 = vmul.f32 %v4329, %v4553
      %v4586 = vmul.f32 %v4330, %v4554
      %v4587 = vld [vmem:[%s3] sm:$0x1]
      %v4589 = vlaneseq
      %v4590 = vshrl.u32 %v4589, 7
      %v4591 = vsub.s32 0, %v4590
      %v4592 = vrot.slane %v4587, %v4591
      %v4594 = vmul.f32 %v4555, %v4592
      %v4595 = vmul.f32 %v4556, %v4592
      %v4596 = vmul.f32 %v4557, %v4592
      %v4597 = vmul.f32 %v4558, %v4592
      %v4598 = vmul.f32 %v4559, %v4592
      %v4599 = vmul.f32 %v4560, %v4592
      %v4600 = vmul.f32 %v4561, %v4592
      %v4601 = vmul.f32 %v4562, %v4592
      %v4602 = vmul.f32 %v4563, %v4592
      %v4603 = vmul.f32 %v4564, %v4592
      %v4604 = vmul.f32 %v4565, %v4592
      %v4605 = vmul.f32 %v4566, %v4592
      %v4606 = vmul.f32 %v4567, %v4592
      %v4607 = vmul.f32 %v4568, %v4592
      %v4608 = vmul.f32 %v4569, %v4592
      %v4609 = vmul.f32 %v4570, %v4592
      %v4610 = vmul.f32 %v4571, %v4592
      %v4611 = vmul.f32 %v4572, %v4592
      %v4612 = vmul.f32 %v4573, %v4592
      %v4613 = vmul.f32 %v4574, %v4592
      %v4614 = vmul.f32 %v4575, %v4592
      %v4615 = vmul.f32 %v4576, %v4592
      %v4616 = vmul.f32 %v4577, %v4592
      %v4617 = vmul.f32 %v4578, %v4592
      %v4618 = vmul.f32 %v4579, %v4592
      %v4619 = vmul.f32 %v4580, %v4592
      %v4620 = vmul.f32 %v4581, %v4592
      %v4621 = vmul.f32 %v4582, %v4592
      %v4622 = vmul.f32 %v4583, %v4592
      %v4623 = vmul.f32 %v4584, %v4592
      %v4624 = vmul.f32 %v4585, %v4592
      %v4625 = vmul.f32 %v4586, %v4592
      %v4626 = vld [vmem:[%s4] sm:$0x1]
      %v4628 = vlaneseq
      %v4629 = vshrl.u32 %v4628, 7
      %v4630 = vsub.s32 0, %v4629
      %v4631 = vrot.slane %v4626, %v4630
      %v4633 = vadd.f32 %v4594, %v4631
      %v4634 = vadd.f32 %v4595, %v4631
      %v4635 = vadd.f32 %v4596, %v4631
      %v4636 = vadd.f32 %v4597, %v4631
      %v4637 = vadd.f32 %v4598, %v4631
      %v4638 = vadd.f32 %v4599, %v4631
      %v4639 = vadd.f32 %v4600, %v4631
      %v4640 = vadd.f32 %v4601, %v4631
      %v4641 = vadd.f32 %v4602, %v4631
      %v4642 = vadd.f32 %v4603, %v4631
      %v4643 = vadd.f32 %v4604, %v4631
      %v4644 = vadd.f32 %v4605, %v4631
      %v4645 = vadd.f32 %v4606, %v4631
      %v4646 = vadd.f32 %v4607, %v4631
      %v4647 = vadd.f32 %v4608, %v4631
      %v4648 = vadd.f32 %v4609, %v4631
      %v4649 = vadd.f32 %v4610, %v4631
      %v4650 = vadd.f32 %v4611, %v4631
      %v4651 = vadd.f32 %v4612, %v4631
      %v4652 = vadd.f32 %v4613, %v4631
      %v4653 = vadd.f32 %v4614, %v4631
      %v4654 = vadd.f32 %v4615, %v4631
      %v4655 = vadd.f32 %v4616, %v4631
      %v4656 = vadd.f32 %v4617, %v4631
      %v4657 = vadd.f32 %v4618, %v4631
      %v4658 = vadd.f32 %v4619, %v4631
      %v4659 = vadd.f32 %v4620, %v4631
      %v4660 = vadd.f32 %v4621, %v4631
      %v4661 = vadd.f32 %v4622, %v4631
      %v4662 = vadd.f32 %v4623, %v4631
      %v4663 = vadd.f32 %v4624, %v4631
      %v4664 = vadd.f32 %v4625, %v4631
      %v4697 = vrot.slane %v4633, 7
      %v4698 = vrot.slane %v4634, 7
      %v4699 = vsel %vm600, %v4697, %v4698
      %v4700 = vrot.slane %v4635, 7
      %v4701 = vrot.slane %v4636, 7
      %v4702 = vsel %vm600, %v4700, %v4701
      %v4703 = vrot.slane %v4637, 7
      %v4704 = vrot.slane %v4638, 7
      %v4705 = vsel %vm600, %v4703, %v4704
      %v4706 = vrot.slane %v4639, 7
      %v4707 = vrot.slane %v4640, 7
      %v4708 = vsel %vm600, %v4706, %v4707
      %v4709 = vrot.slane %v4641, 7
      %v4710 = vrot.slane %v4642, 7
      %v4711 = vsel %vm600, %v4709, %v4710
      %v4712 = vrot.slane %v4643, 7
      %v4713 = vrot.slane %v4644, 7
      %v4714 = vsel %vm600, %v4712, %v4713
      %v4715 = vrot.slane %v4645, 7
      %v4716 = vrot.slane %v4646, 7
      %v4717 = vsel %vm600, %v4715, %v4716
      %v4718 = vrot.slane %v4647, 7
      %v4719 = vrot.slane %v4648, 7
      %v4720 = vsel %vm600, %v4718, %v4719
      %v4721 = vrot.slane %v4649, 7
      %v4722 = vrot.slane %v4650, 7
      %v4723 = vsel %vm600, %v4721, %v4722
      %v4724 = vrot.slane %v4651, 7
      %v4725 = vrot.slane %v4652, 7
      %v4726 = vsel %vm600, %v4724, %v4725
      %v4727 = vrot.slane %v4653, 7
      %v4728 = vrot.slane %v4654, 7
      %v4729 = vsel %vm600, %v4727, %v4728
      %v4730 = vrot.slane %v4655, 7
      %v4731 = vrot.slane %v4656, 7
      %v4732 = vsel %vm600, %v4730, %v4731
      %v4733 = vrot.slane %v4657, 7
      %v4734 = vrot.slane %v4658, 7
      %v4735 = vsel %vm600, %v4733, %v4734
      %v4736 = vrot.slane %v4659, 7
      %v4737 = vrot.slane %v4660, 7
      %v4738 = vsel %vm600, %v4736, %v4737
      %v4739 = vrot.slane %v4661, 7
      %v4740 = vrot.slane %v4662, 7
      %v4741 = vsel %vm600, %v4739, %v4740
      %v4742 = vrot.slane %v4663, 7
      %v4743 = vrot.slane %v4664, 7
      %v4744 = vsel %vm600, %v4742, %v4743
      %v4776 = vsel %vm600, 0.0, %v4697
      %v4777 = vsel %vm600, 0.0, %v4700
      %v4778 = vsel %vm600, 0.0, %v4703
      %v4779 = vsel %vm600, 0.0, %v4706
      %v4780 = vsel %vm600, 0.0, %v4709
      %v4781 = vsel %vm600, 0.0, %v4712
      %v4782 = vsel %vm600, 0.0, %v4715
      %v4783 = vsel %vm600, 0.0, %v4718
      %v4784 = vsel %vm600, 0.0, %v4721
      %v4785 = vsel %vm600, 0.0, %v4724
      %v4786 = vsel %vm600, 0.0, %v4727
      %v4787 = vsel %vm600, 0.0, %v4730
      %v4788 = vsel %vm600, 0.0, %v4733
      %v4789 = vsel %vm600, 0.0, %v4736
      %v4790 = vsel %vm600, 0.0, %v4739
      %v4791 = vsel %vm600, 0.0, %v4742
      %v4792 = vrot.slane %v4633, 1
      %v4793 = vrot.slane %v4634, 1
      %v4794 = vsel %vm697, %v4792, %v4793
      %v4795 = vrot.slane %v4635, 1
      %v4796 = vrot.slane %v4636, 1
      %v4797 = vsel %vm697, %v4795, %v4796
      %v4798 = vrot.slane %v4637, 1
      %v4799 = vrot.slane %v4638, 1
      %v4800 = vsel %vm697, %v4798, %v4799
      %v4801 = vrot.slane %v4639, 1
      %v4802 = vrot.slane %v4640, 1
      %v4803 = vsel %vm697, %v4801, %v4802
      %v4804 = vrot.slane %v4641, 1
      %v4805 = vrot.slane %v4642, 1
      %v4806 = vsel %vm697, %v4804, %v4805
      %v4807 = vrot.slane %v4643, 1
      %v4808 = vrot.slane %v4644, 1
      %v4809 = vsel %vm697, %v4807, %v4808
      %v4810 = vrot.slane %v4645, 1
      %v4811 = vrot.slane %v4646, 1
      %v4812 = vsel %vm697, %v4810, %v4811
      %v4813 = vrot.slane %v4647, 1
      %v4814 = vrot.slane %v4648, 1
      %v4815 = vsel %vm697, %v4813, %v4814
      %v4816 = vrot.slane %v4649, 1
      %v4817 = vrot.slane %v4650, 1
      %v4818 = vsel %vm697, %v4816, %v4817
      %v4819 = vrot.slane %v4651, 1
      %v4820 = vrot.slane %v4652, 1
      %v4821 = vsel %vm697, %v4819, %v4820
      %v4822 = vrot.slane %v4653, 1
      %v4823 = vrot.slane %v4654, 1
      %v4824 = vsel %vm697, %v4822, %v4823
      %v4825 = vrot.slane %v4655, 1
      %v4826 = vrot.slane %v4656, 1
      %v4827 = vsel %vm697, %v4825, %v4826
      %v4828 = vrot.slane %v4657, 1
      %v4829 = vrot.slane %v4658, 1
      %v4830 = vsel %vm697, %v4828, %v4829
      %v4831 = vrot.slane %v4659, 1
      %v4832 = vrot.slane %v4660, 1
      %v4833 = vsel %vm697, %v4831, %v4832
      %v4834 = vrot.slane %v4661, 1
      %v4835 = vrot.slane %v4662, 1
      %v4836 = vsel %vm697, %v4834, %v4835
      %v4837 = vrot.slane %v4663, 1
      %v4838 = vrot.slane %v4664, 1
      %v4839 = vsel %vm697, %v4837, %v4838
      %v4856 = vsel %vm697, %v4793, 0.0
      %v4857 = vsel %vm697, %v4796, 0.0
      %v4858 = vsel %vm697, %v4799, 0.0
      %v4859 = vsel %vm697, %v4802, 0.0
      %v4860 = vsel %vm697, %v4805, 0.0
      %v4861 = vsel %vm697, %v4808, 0.0
      %v4862 = vsel %vm697, %v4811, 0.0
      %v4863 = vsel %vm697, %v4814, 0.0
      %v4864 = vsel %vm697, %v4817, 0.0
      %v4865 = vsel %vm697, %v4820, 0.0
      %v4866 = vsel %vm697, %v4823, 0.0
      %v4867 = vsel %vm697, %v4826, 0.0
      %v4868 = vsel %vm697, %v4829, 0.0
      %v4869 = vsel %vm697, %v4832, 0.0
      %v4870 = vsel %vm697, %v4835, 0.0
      %v4871 = vsel %vm697, %v4838, 0.0
      %4873 = vrot.lane.b32.xlu0 0.0, 4
      %v4874 = vpop.permute.xlu0 %4873
      %4875 = vrot.lane.b32.xlu0 %v4633, 4
      %v4876 = vpop.permute.xlu0 %4875
      %4877 = vrot.lane.b32.xlu0 %v4634, 4
      %v4878 = vpop.permute.xlu0 %4877
      %4879 = vrot.lane.b32.xlu0 %v4635, 4
      %v4880 = vpop.permute.xlu0 %4879
      %4881 = vrot.lane.b32.xlu0 %v4636, 4
      %v4882 = vpop.permute.xlu0 %4881
      %4883 = vrot.lane.b32.xlu0 %v4637, 4
      %v4884 = vpop.permute.xlu0 %4883
      %4885 = vrot.lane.b32.xlu0 %v4638, 4
      %v4886 = vpop.permute.xlu0 %4885
      %4887 = vrot.lane.b32.xlu0 %v4639, 4
      %v4888 = vpop.permute.xlu0 %4887
      %4889 = vrot.lane.b32.xlu0 %v4640, 4
      %v4890 = vpop.permute.xlu0 %4889
      %4891 = vrot.lane.b32.xlu0 %v4641, 4
      %v4892 = vpop.permute.xlu0 %4891
      %4893 = vrot.lane.b32.xlu0 %v4642, 4
      %v4894 = vpop.permute.xlu0 %4893
      %4895 = vrot.lane.b32.xlu0 %v4643, 4
      %v4896 = vpop.permute.xlu0 %4895
      %4897 = vrot.lane.b32.xlu0 %v4644, 4
      %v4898 = vpop.permute.xlu0 %4897
      %4899 = vrot.lane.b32.xlu0 %v4645, 4
      %v4900 = vpop.permute.xlu0 %4899
      %4901 = vrot.lane.b32.xlu0 %v4646, 4
      %v4902 = vpop.permute.xlu0 %4901
      %4903 = vrot.lane.b32.xlu0 %v4647, 4
      %v4904 = vpop.permute.xlu0 %4903
      %4905 = vrot.lane.b32.xlu0 %v4648, 4
      %v4906 = vpop.permute.xlu0 %4905
      %4907 = vrot.lane.b32.xlu0 %v4649, 4
      %v4908 = vpop.permute.xlu0 %4907
      %4909 = vrot.lane.b32.xlu0 %v4650, 4
      %v4910 = vpop.permute.xlu0 %4909
      %4911 = vrot.lane.b32.xlu0 %v4651, 4
      %v4912 = vpop.permute.xlu0 %4911
      %4913 = vrot.lane.b32.xlu0 %v4652, 4
      %v4914 = vpop.permute.xlu0 %4913
      %4915 = vrot.lane.b32.xlu0 %v4653, 4
      %v4916 = vpop.permute.xlu0 %4915
      %4917 = vrot.lane.b32.xlu0 %v4654, 4
      %v4918 = vpop.permute.xlu0 %4917
      %4919 = vrot.lane.b32.xlu0 %v4655, 4
      %v4920 = vpop.permute.xlu0 %4919
      %4921 = vrot.lane.b32.xlu0 %v4656, 4
      %v4922 = vpop.permute.xlu0 %4921
      %4923 = vrot.lane.b32.xlu0 %v4657, 4
      %v4924 = vpop.permute.xlu0 %4923
      %4925 = vrot.lane.b32.xlu0 %v4658, 4
      %v4926 = vpop.permute.xlu0 %4925
      %4927 = vrot.lane.b32.xlu0 %v4659, 4
      %v4928 = vpop.permute.xlu0 %4927
      %4929 = vrot.lane.b32.xlu0 %v4660, 4
      %v4930 = vpop.permute.xlu0 %4929
      %4931 = vrot.lane.b32.xlu0 %v4661, 4
      %v4932 = vpop.permute.xlu0 %4931
      %4933 = vrot.lane.b32.xlu0 %v4662, 4
      %v4934 = vpop.permute.xlu0 %4933
      %4981 = vrot.lane.b32.xlu0 0.0, 8
      %v4982 = vpop.permute.xlu0 %4981
      %4983 = vrot.lane.b32.xlu0 %v4794, 8
      %v4984 = vpop.permute.xlu0 %4983
      %4985 = vrot.lane.b32.xlu0 %v4856, 8
      %v4986 = vpop.permute.xlu0 %4985
      %4987 = vrot.lane.b32.xlu0 %v4797, 8
      %v4988 = vpop.permute.xlu0 %4987
      %4989 = vrot.lane.b32.xlu0 %v4857, 8
      %v4990 = vpop.permute.xlu0 %4989
      %4991 = vrot.lane.b32.xlu0 %v4800, 8
      %v4992 = vpop.permute.xlu0 %4991
      %4993 = vrot.lane.b32.xlu0 %v4858, 8
      %v4994 = vpop.permute.xlu0 %4993
      %4995 = vrot.lane.b32.xlu0 %v4803, 8
      %v4996 = vpop.permute.xlu0 %4995
      %4997 = vrot.lane.b32.xlu0 %v4859, 8
      %v4998 = vpop.permute.xlu0 %4997
      %4999 = vrot.lane.b32.xlu0 %v4806, 8
      %v5000 = vpop.permute.xlu0 %4999
      %5001 = vrot.lane.b32.xlu0 %v4860, 8
      %v5002 = vpop.permute.xlu0 %5001
      %5003 = vrot.lane.b32.xlu0 %v4809, 8
      %v5004 = vpop.permute.xlu0 %5003
      %5005 = vrot.lane.b32.xlu0 %v4861, 8
      %v5006 = vpop.permute.xlu0 %5005
      %5007 = vrot.lane.b32.xlu0 %v4812, 8
      %v5008 = vpop.permute.xlu0 %5007
      %5009 = vrot.lane.b32.xlu0 %v4862, 8
      %v5010 = vpop.permute.xlu0 %5009
      %5011 = vrot.lane.b32.xlu0 %v4815, 8
      %v5012 = vpop.permute.xlu0 %5011
      %5013 = vrot.lane.b32.xlu0 %v4863, 8
      %v5014 = vpop.permute.xlu0 %5013
      %5015 = vrot.lane.b32.xlu0 %v4818, 8
      %v5016 = vpop.permute.xlu0 %5015
      %5017 = vrot.lane.b32.xlu0 %v4864, 8
      %v5018 = vpop.permute.xlu0 %5017
      %5019 = vrot.lane.b32.xlu0 %v4821, 8
      %v5020 = vpop.permute.xlu0 %5019
      %5021 = vrot.lane.b32.xlu0 %v4865, 8
      %v5022 = vpop.permute.xlu0 %5021
      %5023 = vrot.lane.b32.xlu0 %v4824, 8
      %v5024 = vpop.permute.xlu0 %5023
      %5025 = vrot.lane.b32.xlu0 %v4866, 8
      %v5026 = vpop.permute.xlu0 %5025
      %5027 = vrot.lane.b32.xlu0 %v4827, 8
      %v5028 = vpop.permute.xlu0 %5027
      %5029 = vrot.lane.b32.xlu0 %v4867, 8
      %v5030 = vpop.permute.xlu0 %5029
      %5031 = vrot.lane.b32.xlu0 %v4830, 8
      %v5032 = vpop.permute.xlu0 %5031
      %5033 = vrot.lane.b32.xlu0 %v4868, 8
      %v5034 = vpop.permute.xlu0 %5033
      %5035 = vrot.lane.b32.xlu0 %v4833, 8
      %v5036 = vpop.permute.xlu0 %5035
      %5037 = vrot.lane.b32.xlu0 %v4869, 8
      %v5038 = vpop.permute.xlu0 %5037
      %5039 = vrot.lane.b32.xlu0 %v4836, 8
      %v5040 = vpop.permute.xlu0 %5039
      %5041 = vrot.lane.b32.xlu0 %v4870, 8
      %v5042 = vpop.permute.xlu0 %5041
      %5090 = vrot.lane.b32.xlu0 %v4776, 12
      %v5091 = vpop.permute.xlu0 %5090
      %5092 = vrot.lane.b32.xlu0 %v4699, 12
      %v5093 = vpop.permute.xlu0 %5092
      %5094 = vrot.lane.b32.xlu0 %v4777, 12
      %v5095 = vpop.permute.xlu0 %5094
      %5096 = vrot.lane.b32.xlu0 %v4702, 12
      %v5097 = vpop.permute.xlu0 %5096
      %5098 = vrot.lane.b32.xlu0 %v4778, 12
      %v5099 = vpop.permute.xlu0 %5098
      %5100 = vrot.lane.b32.xlu0 %v4705, 12
      %v5101 = vpop.permute.xlu0 %5100
      %5102 = vrot.lane.b32.xlu0 %v4779, 12
      %v5103 = vpop.permute.xlu0 %5102
      %5104 = vrot.lane.b32.xlu0 %v4708, 12
      %v5105 = vpop.permute.xlu0 %5104
      %5106 = vrot.lane.b32.xlu0 %v4780, 12
      %v5107 = vpop.permute.xlu0 %5106
      %5108 = vrot.lane.b32.xlu0 %v4711, 12
      %v5109 = vpop.permute.xlu0 %5108
      %5110 = vrot.lane.b32.xlu0 %v4781, 12
      %v5111 = vpop.permute.xlu0 %5110
      %5112 = vrot.lane.b32.xlu0 %v4714, 12
      %v5113 = vpop.permute.xlu0 %5112
      %5114 = vrot.lane.b32.xlu0 %v4782, 12
      %v5115 = vpop.permute.xlu0 %5114
      %5116 = vrot.lane.b32.xlu0 %v4717, 12
      %v5117 = vpop.permute.xlu0 %5116
      %5118 = vrot.lane.b32.xlu0 %v4783, 12
      %v5119 = vpop.permute.xlu0 %5118
      %5120 = vrot.lane.b32.xlu0 %v4720, 12
      %v5121 = vpop.permute.xlu0 %5120
      %5122 = vrot.lane.b32.xlu0 %v4784, 12
      %v5123 = vpop.permute.xlu0 %5122
      %5124 = vrot.lane.b32.xlu0 %v4723, 12
      %v5125 = vpop.permute.xlu0 %5124
      %5126 = vrot.lane.b32.xlu0 %v4785, 12
      %v5127 = vpop.permute.xlu0 %5126
      %5128 = vrot.lane.b32.xlu0 %v4726, 12
      %v5129 = vpop.permute.xlu0 %5128
      %5130 = vrot.lane.b32.xlu0 %v4786, 12
      %v5131 = vpop.permute.xlu0 %5130
      %5132 = vrot.lane.b32.xlu0 %v4729, 12
      %v5133 = vpop.permute.xlu0 %5132
      %5134 = vrot.lane.b32.xlu0 %v4787, 12
      %v5135 = vpop.permute.xlu0 %5134
      %5136 = vrot.lane.b32.xlu0 %v4732, 12
      %v5137 = vpop.permute.xlu0 %5136
      %5138 = vrot.lane.b32.xlu0 %v4788, 12
      %v5139 = vpop.permute.xlu0 %5138
      %5140 = vrot.lane.b32.xlu0 %v4735, 12
      %v5141 = vpop.permute.xlu0 %5140
      %5142 = vrot.lane.b32.xlu0 %v4789, 12
      %v5143 = vpop.permute.xlu0 %5142
      %5144 = vrot.lane.b32.xlu0 %v4738, 12
      %v5145 = vpop.permute.xlu0 %5144
      %5146 = vrot.lane.b32.xlu0 %v4790, 12
      %v5147 = vpop.permute.xlu0 %5146
      %5148 = vrot.lane.b32.xlu0 %v4741, 12
      %v5149 = vpop.permute.xlu0 %5148
      %5150 = vrot.lane.b32.xlu0 %v4791, 12
      %v5151 = vpop.permute.xlu0 %5150
      %5152 = vrot.lane.b32.xlu0 %v4744, 12
      %v5153 = vpop.permute.xlu0 %5152
      %5186 = vrot.lane.b32.xlu0 %v4633, 16
      %v5187 = vpop.permute.xlu0 %5186
      %5188 = vrot.lane.b32.xlu0 %v4634, 16
      %v5189 = vpop.permute.xlu0 %5188
      %5190 = vrot.lane.b32.xlu0 %v4635, 16
      %v5191 = vpop.permute.xlu0 %5190
      %5192 = vrot.lane.b32.xlu0 %v4636, 16
      %v5193 = vpop.permute.xlu0 %5192
      %5194 = vrot.lane.b32.xlu0 %v4637, 16
      %v5195 = vpop.permute.xlu0 %5194
      %5196 = vrot.lane.b32.xlu0 %v4638, 16
      %v5197 = vpop.permute.xlu0 %5196
      %5198 = vrot.lane.b32.xlu0 %v4639, 16
      %v5199 = vpop.permute.xlu0 %5198
      %5200 = vrot.lane.b32.xlu0 %v4640, 16
      %v5201 = vpop.permute.xlu0 %5200
      %5202 = vrot.lane.b32.xlu0 %v4641, 16
      %v5203 = vpop.permute.xlu0 %5202
      %5204 = vrot.lane.b32.xlu0 %v4642, 16
      %v5205 = vpop.permute.xlu0 %5204
      %5206 = vrot.lane.b32.xlu0 %v4643, 16
      %v5207 = vpop.permute.xlu0 %5206
      %5208 = vrot.lane.b32.xlu0 %v4644, 16
      %v5209 = vpop.permute.xlu0 %5208
      %5210 = vrot.lane.b32.xlu0 %v4645, 16
      %v5211 = vpop.permute.xlu0 %5210
      %5212 = vrot.lane.b32.xlu0 %v4646, 16
      %v5213 = vpop.permute.xlu0 %5212
      %5214 = vrot.lane.b32.xlu0 %v4647, 16
      %v5215 = vpop.permute.xlu0 %5214
      %5216 = vrot.lane.b32.xlu0 %v4648, 16
      %v5217 = vpop.permute.xlu0 %5216
      %5218 = vrot.lane.b32.xlu0 %v4649, 16
      %v5219 = vpop.permute.xlu0 %5218
      %5220 = vrot.lane.b32.xlu0 %v4650, 16
      %v5221 = vpop.permute.xlu0 %5220
      %5222 = vrot.lane.b32.xlu0 %v4651, 16
      %v5223 = vpop.permute.xlu0 %5222
      %5224 = vrot.lane.b32.xlu0 %v4652, 16
      %v5225 = vpop.permute.xlu0 %5224
      %5226 = vrot.lane.b32.xlu0 %v4653, 16
      %v5227 = vpop.permute.xlu0 %5226
      %5228 = vrot.lane.b32.xlu0 %v4654, 16
      %v5229 = vpop.permute.xlu0 %5228
      %5230 = vrot.lane.b32.xlu0 %v4655, 16
      %v5231 = vpop.permute.xlu0 %5230
      %5232 = vrot.lane.b32.xlu0 %v4656, 16
      %v5233 = vpop.permute.xlu0 %5232
      %5234 = vrot.lane.b32.xlu0 %v4657, 16
      %v5235 = vpop.permute.xlu0 %5234
      %5236 = vrot.lane.b32.xlu0 %v4658, 16
      %v5237 = vpop.permute.xlu0 %5236
      %5238 = vrot.lane.b32.xlu0 %v4659, 16
      %v5239 = vpop.permute.xlu0 %5238
      %5240 = vrot.lane.b32.xlu0 %v4660, 16
      %v5241 = vpop.permute.xlu0 %5240
      %5242 = vrot.lane.b32.xlu0 %v4661, 16
      %v5243 = vpop.permute.xlu0 %5242
      %5244 = vrot.lane.b32.xlu0 %v4662, 16
      %v5245 = vpop.permute.xlu0 %5244
      %5246 = vrot.lane.b32.xlu0 %v4663, 16
      %v5247 = vpop.permute.xlu0 %5246
      %5248 = vrot.lane.b32.xlu0 %v4664, 16
      %v5249 = vpop.permute.xlu0 %5248
      %5283 = vrot.lane.b32.xlu0 %v4794, 20
      %v5284 = vpop.permute.xlu0 %5283
      %5285 = vrot.lane.b32.xlu0 %v4856, 20
      %v5286 = vpop.permute.xlu0 %5285
      %5287 = vrot.lane.b32.xlu0 %v4797, 20
      %v5288 = vpop.permute.xlu0 %5287
      %5289 = vrot.lane.b32.xlu0 %v4857, 20
      %v5290 = vpop.permute.xlu0 %5289
      %5291 = vrot.lane.b32.xlu0 %v4800, 20
      %v5292 = vpop.permute.xlu0 %5291
      %5293 = vrot.lane.b32.xlu0 %v4858, 20
      %v5294 = vpop.permute.xlu0 %5293
      %5295 = vrot.lane.b32.xlu0 %v4803, 20
      %v5296 = vpop.permute.xlu0 %5295
      %5297 = vrot.lane.b32.xlu0 %v4859, 20
      %v5298 = vpop.permute.xlu0 %5297
      %5299 = vrot.lane.b32.xlu0 %v4806, 20
      %v5300 = vpop.permute.xlu0 %5299
      %5301 = vrot.lane.b32.xlu0 %v4860, 20
      %v5302 = vpop.permute.xlu0 %5301
      %5303 = vrot.lane.b32.xlu0 %v4809, 20
      %v5304 = vpop.permute.xlu0 %5303
      %5305 = vrot.lane.b32.xlu0 %v4861, 20
      %v5306 = vpop.permute.xlu0 %5305
      %5307 = vrot.lane.b32.xlu0 %v4812, 20
      %v5308 = vpop.permute.xlu0 %5307
      %5309 = vrot.lane.b32.xlu0 %v4862, 20
      %v5310 = vpop.permute.xlu0 %5309
      %5311 = vrot.lane.b32.xlu0 %v4815, 20
      %v5312 = vpop.permute.xlu0 %5311
      %5313 = vrot.lane.b32.xlu0 %v4863, 20
      %v5314 = vpop.permute.xlu0 %5313
      %5315 = vrot.lane.b32.xlu0 %v4818, 20
      %v5316 = vpop.permute.xlu0 %5315
      %5317 = vrot.lane.b32.xlu0 %v4864, 20
      %v5318 = vpop.permute.xlu0 %5317
      %5319 = vrot.lane.b32.xlu0 %v4821, 20
      %v5320 = vpop.permute.xlu0 %5319
      %5321 = vrot.lane.b32.xlu0 %v4865, 20
      %v5322 = vpop.permute.xlu0 %5321
      %5323 = vrot.lane.b32.xlu0 %v4824, 20
      %v5324 = vpop.permute.xlu0 %5323
      %5325 = vrot.lane.b32.xlu0 %v4866, 20
      %v5326 = vpop.permute.xlu0 %5325
      %5327 = vrot.lane.b32.xlu0 %v4827, 20
      %v5328 = vpop.permute.xlu0 %5327
      %5329 = vrot.lane.b32.xlu0 %v4867, 20
      %v5330 = vpop.permute.xlu0 %5329
      %5331 = vrot.lane.b32.xlu0 %v4830, 20
      %v5332 = vpop.permute.xlu0 %5331
      %5333 = vrot.lane.b32.xlu0 %v4868, 20
      %v5334 = vpop.permute.xlu0 %5333
      %5335 = vrot.lane.b32.xlu0 %v4833, 20
      %v5336 = vpop.permute.xlu0 %5335
      %5337 = vrot.lane.b32.xlu0 %v4869, 20
      %v5338 = vpop.permute.xlu0 %5337
      %5339 = vrot.lane.b32.xlu0 %v4836, 20
      %v5340 = vpop.permute.xlu0 %5339
      %5341 = vrot.lane.b32.xlu0 %v4870, 20
      %v5342 = vpop.permute.xlu0 %5341
      %5343 = vrot.lane.b32.xlu0 %v4839, 20
      %v5344 = vpop.permute.xlu0 %5343
      %5345 = vrot.lane.b32.xlu0 %v4871, 20
      %v5346 = vpop.permute.xlu0 %5345
      %5379 = vrot.lane.b32.xlu0 %v4777, 24
      %v5380 = vpop.permute.xlu0 %5379
      %5381 = vrot.lane.b32.xlu0 %v4702, 24
      %v5382 = vpop.permute.xlu0 %5381
      %5383 = vrot.lane.b32.xlu0 %v4778, 24
      %v5384 = vpop.permute.xlu0 %5383
      %5385 = vrot.lane.b32.xlu0 %v4705, 24
      %v5386 = vpop.permute.xlu0 %5385
      %5387 = vrot.lane.b32.xlu0 %v4779, 24
      %v5388 = vpop.permute.xlu0 %5387
      %5389 = vrot.lane.b32.xlu0 %v4708, 24
      %v5390 = vpop.permute.xlu0 %5389
      %5391 = vrot.lane.b32.xlu0 %v4780, 24
      %v5392 = vpop.permute.xlu0 %5391
      %5393 = vrot.lane.b32.xlu0 %v4711, 24
      %v5394 = vpop.permute.xlu0 %5393
      %5395 = vrot.lane.b32.xlu0 %v4781, 24
      %v5396 = vpop.permute.xlu0 %5395
      %5397 = vrot.lane.b32.xlu0 %v4714, 24
      %v5398 = vpop.permute.xlu0 %5397
      %5399 = vrot.lane.b32.xlu0 %v4782, 24
      %v5400 = vpop.permute.xlu0 %5399
      %5401 = vrot.lane.b32.xlu0 %v4717, 24
      %v5402 = vpop.permute.xlu0 %5401
      %5403 = vrot.lane.b32.xlu0 %v4783, 24
      %v5404 = vpop.permute.xlu0 %5403
      %5405 = vrot.lane.b32.xlu0 %v4720, 24
      %v5406 = vpop.permute.xlu0 %5405
      %5407 = vrot.lane.b32.xlu0 %v4784, 24
      %v5408 = vpop.permute.xlu0 %5407
      %5409 = vrot.lane.b32.xlu0 %v4723, 24
      %v5410 = vpop.permute.xlu0 %5409
      %5411 = vrot.lane.b32.xlu0 %v4785, 24
      %v5412 = vpop.permute.xlu0 %5411
      %5413 = vrot.lane.b32.xlu0 %v4726, 24
      %v5414 = vpop.permute.xlu0 %5413
      %5415 = vrot.lane.b32.xlu0 %v4786, 24
      %v5416 = vpop.permute.xlu0 %5415
      %5417 = vrot.lane.b32.xlu0 %v4729, 24
      %v5418 = vpop.permute.xlu0 %5417
      %5419 = vrot.lane.b32.xlu0 %v4787, 24
      %v5420 = vpop.permute.xlu0 %5419
      %5421 = vrot.lane.b32.xlu0 %v4732, 24
      %v5422 = vpop.permute.xlu0 %5421
      %5423 = vrot.lane.b32.xlu0 %v4788, 24
      %v5424 = vpop.permute.xlu0 %5423
      %5425 = vrot.lane.b32.xlu0 %v4735, 24
      %v5426 = vpop.permute.xlu0 %5425
      %5427 = vrot.lane.b32.xlu0 %v4789, 24
      %v5428 = vpop.permute.xlu0 %5427
      %5429 = vrot.lane.b32.xlu0 %v4738, 24
      %v5430 = vpop.permute.xlu0 %5429
      %5431 = vrot.lane.b32.xlu0 %v4790, 24
      %v5432 = vpop.permute.xlu0 %5431
      %5433 = vrot.lane.b32.xlu0 %v4741, 24
      %v5434 = vpop.permute.xlu0 %5433
      %5435 = vrot.lane.b32.xlu0 %v4791, 24
      %v5436 = vpop.permute.xlu0 %5435
      %5437 = vrot.lane.b32.xlu0 %v4744, 24
      %v5438 = vpop.permute.xlu0 %5437
      %5439 = vrot.lane.b32.xlu0 0.0, 24
      %v5440 = vpop.permute.xlu0 %5439
      %5472 = vrot.lane.b32.xlu0 %v4635, 28
      %v5473 = vpop.permute.xlu0 %5472
      %5474 = vrot.lane.b32.xlu0 %v4636, 28
      %v5475 = vpop.permute.xlu0 %5474
      %5476 = vrot.lane.b32.xlu0 %v4637, 28
      %v5477 = vpop.permute.xlu0 %5476
      %5478 = vrot.lane.b32.xlu0 %v4638, 28
      %v5479 = vpop.permute.xlu0 %5478
      %5480 = vrot.lane.b32.xlu0 %v4639, 28
      %v5481 = vpop.permute.xlu0 %5480
      %5482 = vrot.lane.b32.xlu0 %v4640, 28
      %v5483 = vpop.permute.xlu0 %5482
      %5484 = vrot.lane.b32.xlu0 %v4641, 28
      %v5485 = vpop.permute.xlu0 %5484
      %5486 = vrot.lane.b32.xlu0 %v4642, 28
      %v5487 = vpop.permute.xlu0 %5486
      %5488 = vrot.lane.b32.xlu0 %v4643, 28
      %v5489 = vpop.permute.xlu0 %5488
      %5490 = vrot.lane.b32.xlu0 %v4644, 28
      %v5491 = vpop.permute.xlu0 %5490
      %5492 = vrot.lane.b32.xlu0 %v4645, 28
      %v5493 = vpop.permute.xlu0 %5492
      %5494 = vrot.lane.b32.xlu0 %v4646, 28
      %v5495 = vpop.permute.xlu0 %5494
      %5496 = vrot.lane.b32.xlu0 %v4647, 28
      %v5497 = vpop.permute.xlu0 %5496
      %5498 = vrot.lane.b32.xlu0 %v4648, 28
      %v5499 = vpop.permute.xlu0 %5498
      %5500 = vrot.lane.b32.xlu0 %v4649, 28
      %v5501 = vpop.permute.xlu0 %5500
      %5502 = vrot.lane.b32.xlu0 %v4650, 28
      %v5503 = vpop.permute.xlu0 %5502
      %5504 = vrot.lane.b32.xlu0 %v4651, 28
      %v5505 = vpop.permute.xlu0 %5504
      %5506 = vrot.lane.b32.xlu0 %v4652, 28
      %v5507 = vpop.permute.xlu0 %5506
      %5508 = vrot.lane.b32.xlu0 %v4653, 28
      %v5509 = vpop.permute.xlu0 %5508
      %5510 = vrot.lane.b32.xlu0 %v4654, 28
      %v5511 = vpop.permute.xlu0 %5510
      %5512 = vrot.lane.b32.xlu0 %v4655, 28
      %v5513 = vpop.permute.xlu0 %5512
      %5514 = vrot.lane.b32.xlu0 %v4656, 28
      %v5515 = vpop.permute.xlu0 %5514
      %5516 = vrot.lane.b32.xlu0 %v4657, 28
      %v5517 = vpop.permute.xlu0 %5516
      %5518 = vrot.lane.b32.xlu0 %v4658, 28
      %v5519 = vpop.permute.xlu0 %5518
      %5520 = vrot.lane.b32.xlu0 %v4659, 28
      %v5521 = vpop.permute.xlu0 %5520
      %5522 = vrot.lane.b32.xlu0 %v4660, 28
      %v5523 = vpop.permute.xlu0 %5522
      %5524 = vrot.lane.b32.xlu0 %v4661, 28
      %v5525 = vpop.permute.xlu0 %5524
      %5526 = vrot.lane.b32.xlu0 %v4662, 28
      %v5527 = vpop.permute.xlu0 %5526
      %5528 = vrot.lane.b32.xlu0 %v4663, 28
      %v5529 = vpop.permute.xlu0 %5528
      %5530 = vrot.lane.b32.xlu0 %v4664, 28
      %v5531 = vpop.permute.xlu0 %5530
      %5532 = vrot.lane.b32.xlu0 0.0, 28
      %v5533 = vpop.permute.xlu0 %5532
      %5565 = vrot.lane.b32.xlu0 %v4797, 32
      %v5566 = vpop.permute.xlu0 %5565
      %5567 = vrot.lane.b32.xlu0 %v4857, 32
      %v5568 = vpop.permute.xlu0 %5567
      %5569 = vrot.lane.b32.xlu0 %v4800, 32
      %v5570 = vpop.permute.xlu0 %5569
      %5571 = vrot.lane.b32.xlu0 %v4858, 32
      %v5572 = vpop.permute.xlu0 %5571
      %5573 = vrot.lane.b32.xlu0 %v4803, 32
      %v5574 = vpop.permute.xlu0 %5573
      %5575 = vrot.lane.b32.xlu0 %v4859, 32
      %v5576 = vpop.permute.xlu0 %5575
      %5577 = vrot.lane.b32.xlu0 %v4806, 32
      %v5578 = vpop.permute.xlu0 %5577
      %5579 = vrot.lane.b32.xlu0 %v4860, 32
      %v5580 = vpop.permute.xlu0 %5579
      %5581 = vrot.lane.b32.xlu0 %v4809, 32
      %v5582 = vpop.permute.xlu0 %5581
      %5583 = vrot.lane.b32.xlu0 %v4861, 32
      %v5584 = vpop.permute.xlu0 %5583
      %5585 = vrot.lane.b32.xlu0 %v4812, 32
      %v5586 = vpop.permute.xlu0 %5585
      %5587 = vrot.lane.b32.xlu0 %v4862, 32
      %v5588 = vpop.permute.xlu0 %5587
      %5589 = vrot.lane.b32.xlu0 %v4815, 32
      %v5590 = vpop.permute.xlu0 %5589
      %5591 = vrot.lane.b32.xlu0 %v4863, 32
      %v5592 = vpop.permute.xlu0 %5591
      %5593 = vrot.lane.b32.xlu0 %v4818, 32
      %v5594 = vpop.permute.xlu0 %5593
      %5595 = vrot.lane.b32.xlu0 %v4864, 32
      %v5596 = vpop.permute.xlu0 %5595
      %5597 = vrot.lane.b32.xlu0 %v4821, 32
      %v5598 = vpop.permute.xlu0 %5597
      %5599 = vrot.lane.b32.xlu0 %v4865, 32
      %v5600 = vpop.permute.xlu0 %5599
      %5601 = vrot.lane.b32.xlu0 %v4824, 32
      %v5602 = vpop.permute.xlu0 %5601
      %5603 = vrot.lane.b32.xlu0 %v4866, 32
      %v5604 = vpop.permute.xlu0 %5603
      %5605 = vrot.lane.b32.xlu0 %v4827, 32
      %v5606 = vpop.permute.xlu0 %5605
      %5607 = vrot.lane.b32.xlu0 %v4867, 32
      %v5608 = vpop.permute.xlu0 %5607
      %5609 = vrot.lane.b32.xlu0 %v4830, 32
      %v5610 = vpop.permute.xlu0 %5609
      %5611 = vrot.lane.b32.xlu0 %v4868, 32
      %v5612 = vpop.permute.xlu0 %5611
      %5613 = vrot.lane.b32.xlu0 %v4833, 32
      %v5614 = vpop.permute.xlu0 %5613
      %5615 = vrot.lane.b32.xlu0 %v4869, 32
      %v5616 = vpop.permute.xlu0 %5615
      %5617 = vrot.lane.b32.xlu0 %v4836, 32
      %v5618 = vpop.permute.xlu0 %5617
      %5619 = vrot.lane.b32.xlu0 %v4870, 32
      %v5620 = vpop.permute.xlu0 %5619
      %5621 = vrot.lane.b32.xlu0 %v4839, 32
      %v5622 = vpop.permute.xlu0 %5621
      %5623 = vrot.lane.b32.xlu0 %v4871, 32
      %v5624 = vpop.permute.xlu0 %5623
      %5625 = vrot.lane.b32.xlu0 0.0, 32
      %v5626 = vpop.permute.xlu0 %5625
      %v5658 = vsel %vm4169, 0.0, %v4874
      %v5659 = vsel %vm4169, %v4776, %v4876
      %v5660 = vsel %vm4169, %v4699, %v4878
      %v5661 = vsel %vm4169, %v4777, %v4880
      %v5662 = vsel %vm4169, %v4702, %v4882
      %v5663 = vsel %vm4169, %v4778, %v4884
      %v5664 = vsel %vm4169, %v4705, %v4886
      %v5665 = vsel %vm4169, %v4779, %v4888
      %v5666 = vsel %vm4169, %v4708, %v4890
      %v5667 = vsel %vm4169, %v4780, %v4892
      %v5668 = vsel %vm4169, %v4711, %v4894
      %v5669 = vsel %vm4169, %v4781, %v4896
      %v5670 = vsel %vm4169, %v4714, %v4898
      %v5671 = vsel %vm4169, %v4782, %v4900
      %v5672 = vsel %vm4169, %v4717, %v4902
      %v5673 = vsel %vm4169, %v4783, %v4904
      %v5674 = vsel %vm4169, %v4720, %v4906
      %v5675 = vsel %vm4169, %v4784, %v4908
      %v5676 = vsel %vm4169, %v4723, %v4910
      %v5677 = vsel %vm4169, %v4785, %v4912
      %v5678 = vsel %vm4169, %v4726, %v4914
      %v5679 = vsel %vm4169, %v4786, %v4916
      %v5680 = vsel %vm4169, %v4729, %v4918
      %v5681 = vsel %vm4169, %v4787, %v4920
      %v5682 = vsel %vm4169, %v4732, %v4922
      %v5683 = vsel %vm4169, %v4788, %v4924
      %v5684 = vsel %vm4169, %v4735, %v4926
      %v5685 = vsel %vm4169, %v4789, %v4928
      %v5686 = vsel %vm4169, %v4738, %v4930
      %v5687 = vsel %vm4169, %v4790, %v4932
      %v5688 = vsel %vm4169, %v4741, %v4934
      %vm5689 = vcmask 64512
      %v5690 = vsel %vm5689, %v5658, %v4982
      %v5691 = vsel %vm5689, %v5659, %v4984
      %v5692 = vsel %vm5689, %v5660, %v4986
      %v5693 = vsel %vm5689, %v5661, %v4988
      %v5694 = vsel %vm5689, %v5662, %v4990
      %v5695 = vsel %vm5689, %v5663, %v4992
      %v5696 = vsel %vm5689, %v5664, %v4994
      %v5697 = vsel %vm5689, %v5665, %v4996
      %v5698 = vsel %vm5689, %v5666, %v4998
      %v5699 = vsel %vm5689, %v5667, %v5000
      %v5700 = vsel %vm5689, %v5668, %v5002
      %v5701 = vsel %vm5689, %v5669, %v5004
      %v5702 = vsel %vm5689, %v5670, %v5006
      %v5703 = vsel %vm5689, %v5671, %v5008
      %v5704 = vsel %vm5689, %v5672, %v5010
      %v5705 = vsel %vm5689, %v5673, %v5012
      %v5706 = vsel %vm5689, %v5674, %v5014
      %v5707 = vsel %vm5689, %v5675, %v5016
      %v5708 = vsel %vm5689, %v5676, %v5018
      %v5709 = vsel %vm5689, %v5677, %v5020
      %v5710 = vsel %vm5689, %v5678, %v5022
      %v5711 = vsel %vm5689, %v5679, %v5024
      %v5712 = vsel %vm5689, %v5680, %v5026
      %v5713 = vsel %vm5689, %v5681, %v5028
      %v5714 = vsel %vm5689, %v5682, %v5030
      %v5715 = vsel %vm5689, %v5683, %v5032
      %v5716 = vsel %vm5689, %v5684, %v5034
      %v5717 = vsel %vm5689, %v5685, %v5036
      %v5718 = vsel %vm5689, %v5686, %v5038
      %v5719 = vsel %vm5689, %v5687, %v5040
      %v5720 = vsel %vm5689, %v5688, %v5042
      %vm5721 = vcmask 97280
      %v5722 = vsel %vm5721, %v5690, %v5091
      %v5723 = vsel %vm5721, %v5690, %v5093
      %v5724 = vsel %vm5721, %v5691, %v5095
      %v5725 = vsel %vm5721, %v5692, %v5097
      %v5726 = vsel %vm5721, %v5693, %v5099
      %v5727 = vsel %vm5721, %v5694, %v5101
      %v5728 = vsel %vm5721, %v5695, %v5103
      %v5729 = vsel %vm5721, %v5696, %v5105
      %v5730 = vsel %vm5721, %v5697, %v5107
      %v5731 = vsel %vm5721, %v5698, %v5109
      %v5732 = vsel %vm5721, %v5699, %v5111
      %v5733 = vsel %vm5721, %v5700, %v5113
      %v5734 = vsel %vm5721, %v5701, %v5115
      %v5735 = vsel %vm5721, %v5702, %v5117
      %v5736 = vsel %vm5721, %v5703, %v5119
      %v5737 = vsel %vm5721, %v5704, %v5121
      %v5738 = vsel %vm5721, %v5705, %v5123
      %v5739 = vsel %vm5721, %v5706, %v5125
      %v5740 = vsel %vm5721, %v5707, %v5127
      %v5741 = vsel %vm5721, %v5708, %v5129
      %v5742 = vsel %vm5721, %v5709, %v5131
      %v5743 = vsel %vm5721, %v5710, %v5133
      %v5744 = vsel %vm5721, %v5711, %v5135
      %v5745 = vsel %vm5721, %v5712, %v5137
      %v5746 = vsel %vm5721, %v5713, %v5139
      %v5747 = vsel %vm5721, %v5714, %v5141
      %v5748 = vsel %vm5721, %v5715, %v5143
      %v5749 = vsel %vm5721, %v5716, %v5145
      %v5750 = vsel %vm5721, %v5717, %v5147
      %v5751 = vsel %vm5721, %v5718, %v5149
      %v5752 = vsel %vm5721, %v5719, %v5151
      %v5753 = vsel %vm5721, %v5720, %v5153
      %vm5754 = vcmask 130048
      %v5755 = vsel %vm5754, %v5722, %v5187
      %v5756 = vsel %vm5754, %v5723, %v5189
      %v5757 = vsel %vm5754, %v5724, %v5191
      %v5758 = vsel %vm5754, %v5725, %v5193
      %v5759 = vsel %vm5754, %v5726, %v5195
      %v5760 = vsel %vm5754, %v5727, %v5197
      %v5761 = vsel %vm5754, %v5728, %v5199
      %v5762 = vsel %vm5754, %v5729, %v5201
      %v5763 = vsel %vm5754, %v5730, %v5203
      %v5764 = vsel %vm5754, %v5731, %v5205
      %v5765 = vsel %vm5754, %v5732, %v5207
      %v5766 = vsel %vm5754, %v5733, %v5209
      %v5767 = vsel %vm5754, %v5734, %v5211
      %v5768 = vsel %vm5754, %v5735, %v5213
      %v5769 = vsel %vm5754, %v5736, %v5215
      %v5770 = vsel %vm5754, %v5737, %v5217
      %v5771 = vsel %vm5754, %v5738, %v5219
      %v5772 = vsel %vm5754, %v5739, %v5221
      %v5773 = vsel %vm5754, %v5740, %v5223
      %v5774 = vsel %vm5754, %v5741, %v5225
      %v5775 = vsel %vm5754, %v5742, %v5227
      %v5776 = vsel %vm5754, %v5743, %v5229
      %v5777 = vsel %vm5754, %v5744, %v5231
      %v5778 = vsel %vm5754, %v5745, %v5233
      %v5779 = vsel %vm5754, %v5746, %v5235
      %v5780 = vsel %vm5754, %v5747, %v5237
      %v5781 = vsel %vm5754, %v5748, %v5239
      %v5782 = vsel %vm5754, %v5749, %v5241
      %v5783 = vsel %vm5754, %v5750, %v5243
      %v5784 = vsel %vm5754, %v5751, %v5245
      %v5785 = vsel %vm5754, %v5752, %v5247
      %v5786 = vsel %vm5754, %v5753, %v5249
      %vm5787 = vcmask 162816
      %v5788 = vsel %vm5787, %v5755, %v5284
      %v5789 = vsel %vm5787, %v5756, %v5286
      %v5790 = vsel %vm5787, %v5757, %v5288
      %v5791 = vsel %vm5787, %v5758, %v5290
      %v5792 = vsel %vm5787, %v5759, %v5292
      %v5793 = vsel %vm5787, %v5760, %v5294
      %v5794 = vsel %vm5787, %v5761, %v5296
      %v5795 = vsel %vm5787, %v5762, %v5298
      %v5796 = vsel %vm5787, %v5763, %v5300
      %v5797 = vsel %vm5787, %v5764, %v5302
      %v5798 = vsel %vm5787, %v5765, %v5304
      %v5799 = vsel %vm5787, %v5766, %v5306
      %v5800 = vsel %vm5787, %v5767, %v5308
      %v5801 = vsel %vm5787, %v5768, %v5310
      %v5802 = vsel %vm5787, %v5769, %v5312
      %v5803 = vsel %vm5787, %v5770, %v5314
      %v5804 = vsel %vm5787, %v5771, %v5316
      %v5805 = vsel %vm5787, %v5772, %v5318
      %v5806 = vsel %vm5787, %v5773, %v5320
      %v5807 = vsel %vm5787, %v5774, %v5322
      %v5808 = vsel %vm5787, %v5775, %v5324
      %v5809 = vsel %vm5787, %v5776, %v5326
      %v5810 = vsel %vm5787, %v5777, %v5328
      %v5811 = vsel %vm5787, %v5778, %v5330
      %v5812 = vsel %vm5787, %v5779, %v5332
      %v5813 = vsel %vm5787, %v5780, %v5334
      %v5814 = vsel %vm5787, %v5781, %v5336
      %v5815 = vsel %vm5787, %v5782, %v5338
      %v5816 = vsel %vm5787, %v5783, %v5340
      %v5817 = vsel %vm5787, %v5784, %v5342
      %v5818 = vsel %vm5787, %v5785, %v5344
      %v5819 = vsel %vm5787, %v5786, %v5346
      %vm5820 = vcmask 195584
      %v5821 = vsel %vm5820, %v5788, %v5380
      %v5822 = vsel %vm5820, %v5789, %v5382
      %v5823 = vsel %vm5820, %v5790, %v5384
      %v5824 = vsel %vm5820, %v5791, %v5386
      %v5825 = vsel %vm5820, %v5792, %v5388
      %v5826 = vsel %vm5820, %v5793, %v5390
      %v5827 = vsel %vm5820, %v5794, %v5392
      %v5828 = vsel %vm5820, %v5795, %v5394
      %v5829 = vsel %vm5820, %v5796, %v5396
      %v5830 = vsel %vm5820, %v5797, %v5398
      %v5831 = vsel %vm5820, %v5798, %v5400
      %v5832 = vsel %vm5820, %v5799, %v5402
      %v5833 = vsel %vm5820, %v5800, %v5404
      %v5834 = vsel %vm5820, %v5801, %v5406
      %v5835 = vsel %vm5820, %v5802, %v5408
      %v5836 = vsel %vm5820, %v5803, %v5410
      %v5837 = vsel %vm5820, %v5804, %v5412
      %v5838 = vsel %vm5820, %v5805, %v5414
      %v5839 = vsel %vm5820, %v5806, %v5416
      %v5840 = vsel %vm5820, %v5807, %v5418
      %v5841 = vsel %vm5820, %v5808, %v5420
      %v5842 = vsel %vm5820, %v5809, %v5422
      %v5843 = vsel %vm5820, %v5810, %v5424
      %v5844 = vsel %vm5820, %v5811, %v5426
      %v5845 = vsel %vm5820, %v5812, %v5428
      %v5846 = vsel %vm5820, %v5813, %v5430
      %v5847 = vsel %vm5820, %v5814, %v5432
      %v5848 = vsel %vm5820, %v5815, %v5434
      %v5849 = vsel %vm5820, %v5816, %v5436
      %v5850 = vsel %vm5820, %v5817, %v5438
      %v5851 = vsel %vm5820, %v5818, %v5440
      %v5852 = vsel %vm5820, %v5819, %v5440
      %vm5853 = vcmask 228352
      %v5854 = vsel %vm5853, %v5821, %v5473
      %v5855 = vsel %vm5853, %v5822, %v5475
      %v5856 = vsel %vm5853, %v5823, %v5477
      %v5857 = vsel %vm5853, %v5824, %v5479
      %v5858 = vsel %vm5853, %v5825, %v5481
      %v5859 = vsel %vm5853, %v5826, %v5483
      %v5860 = vsel %vm5853, %v5827, %v5485
      %v5861 = vsel %vm5853, %v5828, %v5487
      %v5862 = vsel %vm5853, %v5829, %v5489
      %v5863 = vsel %vm5853, %v5830, %v5491
      %v5864 = vsel %vm5853, %v5831, %v5493
      %v5865 = vsel %vm5853, %v5832, %v5495
      %v5866 = vsel %vm5853, %v5833, %v5497
      %v5867 = vsel %vm5853, %v5834, %v5499
      %v5868 = vsel %vm5853, %v5835, %v5501
      %v5869 = vsel %vm5853, %v5836, %v5503
      %v5870 = vsel %vm5853, %v5837, %v5505
      %v5871 = vsel %vm5853, %v5838, %v5507
      %v5872 = vsel %vm5853, %v5839, %v5509
      %v5873 = vsel %vm5853, %v5840, %v5511
      %v5874 = vsel %vm5853, %v5841, %v5513
      %v5875 = vsel %vm5853, %v5842, %v5515
      %v5876 = vsel %vm5853, %v5843, %v5517
      %v5877 = vsel %vm5853, %v5844, %v5519
      %v5878 = vsel %vm5853, %v5845, %v5521
      %v5879 = vsel %vm5853, %v5846, %v5523
      %v5880 = vsel %vm5853, %v5847, %v5525
      %v5881 = vsel %vm5853, %v5848, %v5527
      %v5882 = vsel %vm5853, %v5849, %v5529
      %v5883 = vsel %vm5853, %v5850, %v5531
      %v5884 = vsel %vm5853, %v5851, %v5533
      %v5885 = vsel %vm5853, %v5852, %v5533
      %vm5886 = vcmask 261120
      %v5887 = vsel %vm5886, %v5854, %v5566
      %v5888 = vsel %vm5886, %v5855, %v5568
      %v5889 = vsel %vm5886, %v5856, %v5570
      %v5890 = vsel %vm5886, %v5857, %v5572
      %v5891 = vsel %vm5886, %v5858, %v5574
      %v5892 = vsel %vm5886, %v5859, %v5576
      %v5893 = vsel %vm5886, %v5860, %v5578
      %v5894 = vsel %vm5886, %v5861, %v5580
      %v5895 = vsel %vm5886, %v5862, %v5582
      %v5896 = vsel %vm5886, %v5863, %v5584
      %v5897 = vsel %vm5886, %v5864, %v5586
      %v5898 = vsel %vm5886, %v5865, %v5588
      %v5899 = vsel %vm5886, %v5866, %v5590
      %v5900 = vsel %vm5886, %v5867, %v5592
      %v5901 = vsel %vm5886, %v5868, %v5594
      %v5902 = vsel %vm5886, %v5869, %v5596
      %v5903 = vsel %vm5886, %v5870, %v5598
      %v5904 = vsel %vm5886, %v5871, %v5600
      %v5905 = vsel %vm5886, %v5872, %v5602
      %v5906 = vsel %vm5886, %v5873, %v5604
      %v5907 = vsel %vm5886, %v5874, %v5606
      %v5908 = vsel %vm5886, %v5875, %v5608
      %v5909 = vsel %vm5886, %v5876, %v5610
      %v5910 = vsel %vm5886, %v5877, %v5612
      %v5911 = vsel %vm5886, %v5878, %v5614
      %v5912 = vsel %vm5886, %v5879, %v5616
      %v5913 = vsel %vm5886, %v5880, %v5618
      %v5914 = vsel %vm5886, %v5881, %v5620
      %v5915 = vsel %vm5886, %v5882, %v5622
      %v5916 = vsel %vm5886, %v5883, %v5624
      %v5917 = vsel %vm5886, %v5884, %v5626
      %v5918 = vsel %vm5886, %v5885, %v5626
      %v5919 = vpack.c.bf16 %v5888, %v5887
      %v5920 = vpack.c.bf16 %v5890, %v5889
      %v5921 = vpack.c.bf16 %v5892, %v5891
      %v5922 = vpack.c.bf16 %v5894, %v5893
      %v5923 = vpack.c.bf16 %v5896, %v5895
      %v5924 = vpack.c.bf16 %v5898, %v5897
      %v5925 = vpack.c.bf16 %v5900, %v5899
      %v5926 = vpack.c.bf16 %v5902, %v5901
      %v5927 = vpack.c.bf16 %v5904, %v5903
      %v5928 = vpack.c.bf16 %v5906, %v5905
      %v5929 = vpack.c.bf16 %v5908, %v5907
      %v5930 = vpack.c.bf16 %v5910, %v5909
      %v5931 = vpack.c.bf16 %v5912, %v5911
      %v5932 = vpack.c.bf16 %v5914, %v5913
      %v5933 = vpack.c.bf16 %v5916, %v5915
      %v5934 = vpack.c.bf16 %v5918, %v5917
      %v5935 = vld [vmem:[%s5] sm:$0xf]
      %v5936 = vld [vmem:[%s5 + $0x4] sm:$0xf]
      %v5937 = vld [vmem:[%s5 + $0x8] sm:$0xf]
      %v5938 = vld [vmem:[%s5 + $0xc] sm:$0xf]
      %v5939 = vld [vmem:[%s5 + $0x10] sm:$0x3]
      %v5940 = vld [vmem:[%s6] sm:$0x1]
      %v5942 = vlaneseq
      %v5943 = vshrl.u32 %v5942, 7
      %v5944 = vsub.s32 0, %v5943
      %v5945 = vrot.slane %v5940, %v5944
      %v5952 = vunpack.c.l.b16 %v5935
      %v5953 = vunpack.c.l.b16 %v5936
      %v5954 = vunpack.c.l.b16 %v5937
      %v5955 = vunpack.c.l.b16 %v5938
      %v5956 = vunpack.c.l.b16 %v5939
      %v5957 = vpack.c.b16 %v5953, %v5952
      %v5958 = vpack.c.b16 %v5955, %v5954
      %v5959 = vpack.c.b16 %v5956, %v5956
      %vm5962 = vcmask 293888
      %v5964 = vsel %vm5962, %v5919, 0
      %v5967 = vsel %vm5962, %v5920, 0
      %v5970 = vsel %vm5962, %v5921, 0
      %v5973 = vsel %vm5962, %v5922, 0
      %v5976 = vsel %vm5962, %v5923, 0
      %v5979 = vsel %vm5962, %v5924, 0
      %v5982 = vsel %vm5962, %v5925, 0
      %v5985 = vsel %vm5962, %v5926, 0
      %v5988 = vsel %vm5962, %v5927, 0
      %v5991 = vsel %vm5962, %v5928, 0
      %v5994 = vsel %vm5962, %v5929, 0
      %v5997 = vsel %vm5962, %v5930, 0
      %v6000 = vsel %vm5962, %v5931, 0
      %v6003 = vsel %vm5962, %v5932, 0
      %v6006 = vsel %vm5962, %v5933, 0
      %v6009 = vsel %vm5962, %v5934, 0
      %v6012 = vsel %vm503, %v5959, 0
      %6014 = vmatprep.subr.bf16.mxu0 0
      %6015 = vmatpush1.bf16.msra.mxu0 %v5957
      %6016 = vmatprep.subr.bf16.mxu0 0
      %6017 = vmatpush1.bf16.msra.mxu0 %v5958
      %6018 = vmatprep.subr.bf16.mxu0 0
      %6019 = vmatpush1.bf16.msra.mxu0 %v6012
      %6020 = vmatprep.subr.bf16.mxu0 0
      %6021 = vmatpush1.bf16.msra.mxu0 0
      %6022 = vmatprep.subr.bf16.mxu0 0
      %6023 = vmatpush1.bf16.msra.mxu0 0
      %6024 = vmatprep.subr.bf16.mxu0 0
      %6025 = vmatpush1.bf16.msra.mxu0 0
      %6026 = vmatprep.subr.bf16.mxu0 0
      %6027 = vmatpush1.bf16.msra.mxu0 0
      %6028 = vmatprep.subr.bf16.mxu0 0
      %6029 = vmatpush1.bf16.msra.mxu0 0
      %6030 = vmatprep.subr.bf16.mxu0 0
      %6031 = vmatpush1.bf16.msra.mxu0 0
      %6032 = vmatprep.subr.bf16.mxu0 0
      %6033 = vmatpush1.bf16.msra.mxu0 0
      %6034 = vmatprep.subr.bf16.mxu0 0
      %6035 = vmatpush1.bf16.msra.mxu0 0
      %6036 = vmatprep.subr.bf16.mxu0 0
      %6037 = vmatpush1.bf16.msra.mxu0 0
      %6038 = vmatprep.subr.bf16.mxu0 0
      %6039 = vmatpush1.bf16.msra.mxu0 0
      %6040 = vmatprep.subr.bf16.mxu0 0
      %6041 = vmatpush1.bf16.msra.mxu0 0
      %6042 = vmatprep.subr.bf16.mxu0 0
      %6043 = vmatpush1.bf16.msra.mxu0 0
      %6044 = vmatprep.subr.bf16.mxu0 0
      %6045 = vmatpush1.bf16.msra.mxu0 0
      %6046 = vmatprep.mubr.bf16.mxu0 0
      %6047 = vmatmul.mubr.bf16.gmra.mrb[0].mxu0 %v5964
      %v6048 = vpop.f32.mrb[0].mxu0
      %v6049 = vadd.f32 %v5945, %v6048
      %v6050 = vpop.f32.mrb[0].mxu0
      %v6051 = vpop.f32.mrb[0].mxu0
      %v6052 = vadd.f32 %v5945, %v6051
      %v6053 = vpop.f32.mrb[0].mxu0
      %6054 = vmatprep.mubr.bf16.mxu0 0
      %6055 = vmatmul.mubr.bf16.gmra.mrb[0].mxu0 %v5967
      %v6056 = vpop.f32.mrb[0].mxu0
      %v6057 = vadd.f32 %v5945, %v6056
      %v6058 = vpop.f32.mrb[0].mxu0
      %v6059 = vpop.f32.mrb[0].mxu0
      %v6060 = vadd.f32 %v5945, %v6059
      %v6061 = vpop.f32.mrb[0].mxu0
      %6062 = vmatprep.mubr.bf16.mxu0 0
      %6063 = vmatmul.mubr.bf16.gmra.mrb[0].mxu0 %v5970
      %v6064 = vpop.f32.mrb[0].mxu0
      %v6065 = vadd.f32 %v5945, %v6064
      %v6066 = vpop.f32.mrb[0].mxu0
      %v6067 = vpop.f32.mrb[0].mxu0
      %v6068 = vadd.f32 %v5945, %v6067
      %v6069 = vpop.f32.mrb[0].mxu0
      %6070 = vmatprep.mubr.bf16.mxu0 0
      %6071 = vmatmul.mubr.bf16.gmra.mrb[0].mxu0 %v5973
      %v6072 = vpop.f32.mrb[0].mxu0
      %v6073 = vadd.f32 %v5945, %v6072
      %v6074 = vpop.f32.mrb[0].mxu0
      %v6075 = vpop.f32.mrb[0].mxu0
      %v6076 = vadd.f32 %v5945, %v6075
      %v6077 = vpop.f32.mrb[0].mxu0
      %6078 = vmatprep.mubr.bf16.mxu0 0
      %6079 = vmatmul.mubr.bf16.gmra.mrb[0].mxu0 %v5976
      %v6080 = vpop.f32.mrb[0].mxu0
      %v6081 = vadd.f32 %v5945, %v6080
      %v6082 = vpop.f32.mrb[0].mxu0
      %v6083 = vpop.f32.mrb[0].mxu0
      %v6084 = vadd.f32 %v5945, %v6083
      %v6085 = vpop.f32.mrb[0].mxu0
      %6086 = vmatprep.mubr.bf16.mxu0 0
      %6087 = vmatmul.mubr.bf16.gmra.mrb[0].mxu0 %v5979
      %v6088 = vpop.f32.mrb[0].mxu0
      %v6089 = vadd.f32 %v5945, %v6088
      %v6090 = vpop.f32.mrb[0].mxu0
      %v6091 = vpop.f32.mrb[0].mxu0
      %v6092 = vadd.f32 %v5945, %v6091
      %v6093 = vpop.f32.mrb[0].mxu0
      %6094 = vmatprep.mubr.bf16.mxu0 0
      %6095 = vmatmul.mubr.bf16.gmra.mrb[0].mxu0 %v5982
      %v6096 = vpop.f32.mrb[0].mxu0
      %v6097 = vadd.f32 %v5945, %v6096
      %v6098 = vpop.f32.mrb[0].mxu0
      %v6099 = vpop.f32.mrb[0].mxu0
      %v6100 = vadd.f32 %v5945, %v6099
      %v6101 = vpop.f32.mrb[0].mxu0
      %6102 = vmatprep.mubr.bf16.mxu0 0
      %6103 = vmatmul.mubr.bf16.gmra.mrb[0].mxu0 %v5985
      %v6104 = vpop.f32.mrb[0].mxu0
      %v6105 = vadd.f32 %v5945, %v6104
      %v6106 = vpop.f32.mrb[0].mxu0
      %v6107 = vpop.f32.mrb[0].mxu0
      %v6108 = vadd.f32 %v5945, %v6107
      %v6109 = vpop.f32.mrb[0].mxu0
      %6110 = vmatprep.mubr.bf16.mxu0 0
      %6111 = vmatmul.mubr.bf16.gmra.mrb[0].mxu0 %v5988
      %v6112 = vpop.f32.mrb[0].mxu0
      %v6113 = vadd.f32 %v5945, %v6112
      %v6114 = vpop.f32.mrb[0].mxu0
      %v6115 = vpop.f32.mrb[0].mxu0
      %v6116 = vadd.f32 %v5945, %v6115
      %v6117 = vpop.f32.mrb[0].mxu0
      %6118 = vmatprep.mubr.bf16.mxu0 0
      %6119 = vmatmul.mubr.bf16.gmra.mrb[0].mxu0 %v5991
      %v6120 = vpop.f32.mrb[0].mxu0
      %v6121 = vadd.f32 %v5945, %v6120
      %v6122 = vpop.f32.mrb[0].mxu0
      %v6123 = vpop.f32.mrb[0].mxu0
      %v6124 = vadd.f32 %v5945, %v6123
      %v6125 = vpop.f32.mrb[0].mxu0
      %6126 = vmatprep.mubr.bf16.mxu0 0
      %6127 = vmatmul.mubr.bf16.gmra.mrb[0].mxu0 %v5994
      %v6128 = vpop.f32.mrb[0].mxu0
      %v6129 = vadd.f32 %v5945, %v6128
      %v6130 = vpop.f32.mrb[0].mxu0
      %v6131 = vpop.f32.mrb[0].mxu0
      %v6132 = vadd.f32 %v5945, %v6131
      %v6133 = vpop.f32.mrb[0].mxu0
      %6134 = vmatprep.mubr.bf16.mxu0 0
      %6135 = vmatmul.mubr.bf16.gmra.mrb[0].mxu0 %v5997
      %v6136 = vpop.f32.mrb[0].mxu0
      %v6137 = vadd.f32 %v5945, %v6136
      %v6138 = vpop.f32.mrb[0].mxu0
      %v6139 = vpop.f32.mrb[0].mxu0
      %v6140 = vadd.f32 %v5945, %v6139
      %v6141 = vpop.f32.mrb[0].mxu0
      %6142 = vmatprep.mubr.bf16.mxu0 0
      %6143 = vmatmul.mubr.bf16.gmra.mrb[0].mxu0 %v6000
      %v6144 = vpop.f32.mrb[0].mxu0
      %v6145 = vadd.f32 %v5945, %v6144
      %v6146 = vpop.f32.mrb[0].mxu0
      %v6147 = vpop.f32.mrb[0].mxu0
      %v6148 = vadd.f32 %v5945, %v6147
      %v6149 = vpop.f32.mrb[0].mxu0
      %6150 = vmatprep.mubr.bf16.mxu0 0
      %6151 = vmatmul.mubr.bf16.gmra.mrb[0].mxu0 %v6003
      %v6152 = vpop.f32.mrb[0].mxu0
      %v6153 = vadd.f32 %v5945, %v6152
      %v6154 = vpop.f32.mrb[0].mxu0
      %v6155 = vpop.f32.mrb[0].mxu0
      %v6156 = vadd.f32 %v5945, %v6155
      %v6157 = vpop.f32.mrb[0].mxu0
      %6158 = vmatprep.mubr.bf16.mxu0 0
      %6159 = vmatmul.mubr.bf16.gmra.mrb[0].mxu0 %v6006
      %v6160 = vpop.f32.mrb[0].mxu0
      %v6161 = vadd.f32 %v5945, %v6160
      %v6162 = vpop.f32.mrb[0].mxu0
      %v6163 = vpop.f32.mrb[0].mxu0
      %v6164 = vadd.f32 %v5945, %v6163
      %v6165 = vpop.f32.mrb[0].mxu0
      %6166 = vmatprep.mubr.bf16.mxu0 0
      %6167 = vmatmul.mubr.bf16.gmra.mrb[0].mxu0 %v6009
      %v6168 = vpop.f32.mrb[0].mxu0
      %v6169 = vadd.f32 %v5945, %v6168
      %v6170 = vpop.f32.mrb[0].mxu0
      %v6171 = vpop.f32.mrb[0].mxu0
      %v6172 = vadd.f32 %v5945, %v6171
      %v6173 = vpop.f32.mrb[0].mxu0
      %6174 = vdwg.mxu0
      %v6175 = vmul.f32 %v6049, 0.5
      %v6176 = vmul.f32 %v6052, 0.5
      %v6177 = vmul.f32 %v6057, 0.5
      %v6178 = vmul.f32 %v6060, 0.5
      %v6179 = vmul.f32 %v6065, 0.5
      %v6180 = vmul.f32 %v6068, 0.5
      %v6181 = vmul.f32 %v6073, 0.5
      %v6182 = vmul.f32 %v6076, 0.5
      %v6183 = vmul.f32 %v6081, 0.5
      %v6184 = vmul.f32 %v6084, 0.5
      %v6185 = vmul.f32 %v6089, 0.5
      %v6186 = vmul.f32 %v6092, 0.5
      %v6187 = vmul.f32 %v6097, 0.5
      %v6188 = vmul.f32 %v6100, 0.5
      %v6189 = vmul.f32 %v6105, 0.5
      %v6190 = vmul.f32 %v6108, 0.5
      %v6191 = vmul.f32 %v6113, 0.5
      %v6192 = vmul.f32 %v6116, 0.5
      %v6193 = vmul.f32 %v6121, 0.5
      %v6194 = vmul.f32 %v6124, 0.5
      %v6195 = vmul.f32 %v6129, 0.5
      %v6196 = vmul.f32 %v6132, 0.5
      %v6197 = vmul.f32 %v6137, 0.5
      %v6198 = vmul.f32 %v6140, 0.5
      %v6199 = vmul.f32 %v6145, 0.5
      %v6200 = vmul.f32 %v6148, 0.5
      %v6201 = vmul.f32 %v6153, 0.5
      %v6202 = vmul.f32 %v6156, 0.5
      %v6203 = vmul.f32 %v6161, 0.5
      %v6204 = vmul.f32 %v6164, 0.5
      %v6205 = vmul.f32 %v6169, 0.5
      %v6206 = vmul.f32 %v6172, 0.5
      %v6207 = vmul.f32 %v6049, 0.044715
      %v6208 = vmul.f32 %v6052, 0.044715
      %v6209 = vmul.f32 %v6057, 0.044715
      %v6210 = vmul.f32 %v6060, 0.044715
      %v6211 = vmul.f32 %v6065, 0.044715
      %v6212 = vmul.f32 %v6068, 0.044715
      %v6213 = vmul.f32 %v6073, 0.044715
      %v6214 = vmul.f32 %v6076, 0.044715
      %v6215 = vmul.f32 %v6081, 0.044715
      %v6216 = vmul.f32 %v6084, 0.044715
      %v6217 = vmul.f32 %v6089, 0.044715
      %v6218 = vmul.f32 %v6092, 0.044715
      %v6219 = vmul.f32 %v6097, 0.044715
      %v6220 = vmul.f32 %v6100, 0.044715
      %v6221 = vmul.f32 %v6105, 0.044715
      %v6222 = vmul.f32 %v6108, 0.044715
      %v6223 = vmul.f32 %v6113, 0.044715
      %v6224 = vmul.f32 %v6116, 0.044715
      %v6225 = vmul.f32 %v6121, 0.044715
      %v6226 = vmul.f32 %v6124, 0.044715
      %v6227 = vmul.f32 %v6129, 0.044715
      %v6228 = vmul.f32 %v6132, 0.044715
      %v6229 = vmul.f32 %v6137, 0.044715
      %v6230 = vmul.f32 %v6140, 0.044715
      %v6231 = vmul.f32 %v6145, 0.044715
      %v6232 = vmul.f32 %v6148, 0.044715
      %v6233 = vmul.f32 %v6153, 0.044715
      %v6234 = vmul.f32 %v6156, 0.044715
      %v6235 = vmul.f32 %v6161, 0.044715
      %v6236 = vmul.f32 %v6164, 0.044715
      %v6237 = vmul.f32 %v6169, 0.044715
      %v6238 = vmul.f32 %v6172, 0.044715
      %v6239 = vmul.f32 %v6207, %v6049
      %v6240 = vmul.f32 %v6208, %v6052
      %v6241 = vmul.f32 %v6209, %v6057
      %v6242 = vmul.f32 %v6210, %v6060
      %v6243 = vmul.f32 %v6211, %v6065
      %v6244 = vmul.f32 %v6212, %v6068
      %v6245 = vmul.f32 %v6213, %v6073
      %v6246 = vmul.f32 %v6214, %v6076
      %v6247 = vmul.f32 %v6215, %v6081
      %v6248 = vmul.f32 %v6216, %v6084
      %v6249 = vmul.f32 %v6217, %v6089
      %v6250 = vmul.f32 %v6218, %v6092
      %v6251 = vmul.f32 %v6219, %v6097
      %v6252 = vmul.f32 %v6220, %v6100
      %v6253 = vmul.f32 %v6221, %v6105
      %v6254 = vmul.f32 %v6222, %v6108
      %v6255 = vmul.f32 %v6223, %v6113
      %v6256 = vmul.f32 %v6224, %v6116
      %v6257 = vmul.f32 %v6225, %v6121
      %v6258 = vmul.f32 %v6226, %v6124
      %v6259 = vmul.f32 %v6227, %v6129
      %v6260 = vmul.f32 %v6228, %v6132
      %v6261 = vmul.f32 %v6229, %v6137
      %v6262 = vmul.f32 %v6230, %v6140
      %v6263 = vmul.f32 %v6231, %v6145
      %v6264 = vmul.f32 %v6232, %v6148
      %v6265 = vmul.f32 %v6233, %v6153
      %v6266 = vmul.f32 %v6234, %v6156
      %v6267 = vmul.f32 %v6235, %v6161
      %v6268 = vmul.f32 %v6236, %v6164
      %v6269 = vmul.f32 %v6237, %v6169
      %v6270 = vmul.f32 %v6238, %v6172
      %v6271 = vmul.f32 %v6239, %v6049
      %v6272 = vmul.f32 %v6240, %v6052
      %v6273 = vmul.f32 %v6241, %v6057
      %v6274 = vmul.f32 %v6242, %v6060
      %v6275 = vmul.f32 %v6243, %v6065
      %v6276 = vmul.f32 %v6244, %v6068
      %v6277 = vmul.f32 %v6245, %v6073
      %v6278 = vmul.f32 %v6246, %v6076
      %v6279 = vmul.f32 %v6247, %v6081
      %v6280 = vmul.f32 %v6248, %v6084
      %v6281 = vmul.f32 %v6249, %v6089
      %v6282 = vmul.f32 %v6250, %v6092
      %v6283 = vmul.f32 %v6251, %v6097
      %v6284 = vmul.f32 %v6252, %v6100
      %v6285 = vmul.f32 %v6253, %v6105
      %v6286 = vmul.f32 %v6254, %v6108
      %v6287 = vmul.f32 %v6255, %v6113
      %v6288 = vmul.f32 %v6256, %v6116
      %v6289 = vmul.f32 %v6257, %v6121
      %v6290 = vmul.f32 %v6258, %v6124
      %v6291 = vmul.f32 %v6259, %v6129
      %v6292 = vmul.f32 %v6260, %v6132
      %v6293 = vmul.f32 %v6261, %v6137
      %v6294 = vmul.f32 %v6262, %v6140
      %v6295 = vmul.f32 %v6263, %v6145
      %v6296 = vmul.f32 %v6264, %v6148
      %v6297 = vmul.f32 %v6265, %v6153
      %v6298 = vmul.f32 %v6266, %v6156
      %v6299 = vmul.f32 %v6267, %v6161
      %v6300 = vmul.f32 %v6268, %v6164
      %v6301 = vmul.f32 %v6269, %v6169
      %v6302 = vmul.f32 %v6270, %v6172
      %v6303 = vadd.f32 %v6049, %v6271
      %v6304 = vadd.f32 %v6052, %v6272
      %v6305 = vadd.f32 %v6057, %v6273
      %v6306 = vadd.f32 %v6060, %v6274
      %v6307 = vadd.f32 %v6065, %v6275
      %v6308 = vadd.f32 %v6068, %v6276
      %v6309 = vadd.f32 %v6073, %v6277
      %v6310 = vadd.f32 %v6076, %v6278
      %v6311 = vadd.f32 %v6081, %v6279
      %v6312 = vadd.f32 %v6084, %v6280
      %v6313 = vadd.f32 %v6089, %v6281
      %v6314 = vadd.f32 %v6092, %v6282
      %v6315 = vadd.f32 %v6097, %v6283
      %v6316 = vadd.f32 %v6100, %v6284
      %v6317 = vadd.f32 %v6105, %v6285
      %v6318 = vadd.f32 %v6108, %v6286
      %v6319 = vadd.f32 %v6113, %v6287
      %v6320 = vadd.f32 %v6116, %v6288
      %v6321 = vadd.f32 %v6121, %v6289
      %v6322 = vadd.f32 %v6124, %v6290
      %v6323 = vadd.f32 %v6129, %v6291
      %v6324 = vadd.f32 %v6132, %v6292
      %v6325 = vadd.f32 %v6137, %v6293
      %v6326 = vadd.f32 %v6140, %v6294
      %v6327 = vadd.f32 %v6145, %v6295
      %v6328 = vadd.f32 %v6148, %v6296
      %v6329 = vadd.f32 %v6153, %v6297
      %v6330 = vadd.f32 %v6156, %v6298
      %v6331 = vadd.f32 %v6161, %v6299
      %v6332 = vadd.f32 %v6164, %v6300
      %v6333 = vadd.f32 %v6169, %v6301
      %v6334 = vadd.f32 %v6172, %v6302
      %v6335 = vmul.f32 %v6303, 0.7978846
      %v6336 = vmul.f32 %v6304, 0.7978846
      %v6337 = vmul.f32 %v6305, 0.7978846
      %v6338 = vmul.f32 %v6306, 0.7978846
      %v6339 = vmul.f32 %v6307, 0.7978846
      %v6340 = vmul.f32 %v6308, 0.7978846
      %v6341 = vmul.f32 %v6309, 0.7978846
      %v6342 = vmul.f32 %v6310, 0.7978846
      %v6343 = vmul.f32 %v6311, 0.7978846
      %v6344 = vmul.f32 %v6312, 0.7978846
      %v6345 = vmul.f32 %v6313, 0.7978846
      %v6346 = vmul.f32 %v6314, 0.7978846
      %v6347 = vmul.f32 %v6315, 0.7978846
      %v6348 = vmul.f32 %v6316, 0.7978846
      %v6349 = vmul.f32 %v6317, 0.7978846
      %v6350 = vmul.f32 %v6318, 0.7978846
      %v6351 = vmul.f32 %v6319, 0.7978846
      %v6352 = vmul.f32 %v6320, 0.7978846
      %v6353 = vmul.f32 %v6321, 0.7978846
      %v6354 = vmul.f32 %v6322, 0.7978846
      %v6355 = vmul.f32 %v6323, 0.7978846
      %v6356 = vmul.f32 %v6324, 0.7978846
      %v6357 = vmul.f32 %v6325, 0.7978846
      %v6358 = vmul.f32 %v6326, 0.7978846
      %v6359 = vmul.f32 %v6327, 0.7978846
      %v6360 = vmul.f32 %v6328, 0.7978846
      %v6361 = vmul.f32 %v6329, 0.7978846
      %v6362 = vmul.f32 %v6330, 0.7978846
      %v6363 = vmul.f32 %v6331, 0.7978846
      %v6364 = vmul.f32 %v6332, 0.7978846
      %v6365 = vmul.f32 %v6333, 0.7978846
      %v6366 = vmul.f32 %v6334, 0.7978846
      %v6367 = vtanh.pop %v6335
      %v6368 = vtanh.pop %v6336
      %v6369 = vtanh.pop %v6337
      %v6370 = vtanh.pop %v6338
      %v6371 = vtanh.pop %v6339
      %v6372 = vtanh.pop %v6340
      %v6373 = vtanh.pop %v6341
      %v6374 = vtanh.pop %v6342
      %v6375 = vtanh.pop %v6343
      %v6376 = vtanh.pop %v6344
      %v6377 = vtanh.pop %v6345
      %v6378 = vtanh.pop %v6346
      %v6379 = vtanh.pop %v6347
      %v6380 = vtanh.pop %v6348
      %v6381 = vtanh.pop %v6349
      %v6382 = vtanh.pop %v6350
      %v6383 = vtanh.pop %v6351
      %v6384 = vtanh.pop %v6352
      %v6385 = vtanh.pop %v6353
      %v6386 = vtanh.pop %v6354
      %v6387 = vtanh.pop %v6355
      %v6388 = vtanh.pop %v6356
      %v6389 = vtanh.pop %v6357
      %v6390 = vtanh.pop %v6358
      %v6391 = vtanh.pop %v6359
      %v6392 = vtanh.pop %v6360
      %v6393 = vtanh.pop %v6361
      %v6394 = vtanh.pop %v6362
      %v6395 = vtanh.pop %v6363
      %v6396 = vtanh.pop %v6364
      %v6397 = vtanh.pop %v6365
      %v6398 = vtanh.pop %v6366
      %v6399 = vadd.f32 %v6367, 1.0
      %v6400 = vadd.f32 %v6368, 1.0
      %v6401 = vadd.f32 %v6369, 1.0
      %v6402 = vadd.f32 %v6370, 1.0
      %v6403 = vadd.f32 %v6371, 1.0
      %v6404 = vadd.f32 %v6372, 1.0
      %v6405 = vadd.f32 %v6373, 1.0
      %v6406 = vadd.f32 %v6374, 1.0
      %v6407 = vadd.f32 %v6375, 1.0
      %v6408 = vadd.f32 %v6376, 1.0
      %v6409 = vadd.f32 %v6377, 1.0
      %v6410 = vadd.f32 %v6378, 1.0
      %v6411 = vadd.f32 %v6379, 1.0
      %v6412 = vadd.f32 %v6380, 1.0
      %v6413 = vadd.f32 %v6381, 1.0
      %v6414 = vadd.f32 %v6382, 1.0
      %v6415 = vadd.f32 %v6383, 1.0
      %v6416 = vadd.f32 %v6384, 1.0
      %v6417 = vadd.f32 %v6385, 1.0
      %v6418 = vadd.f32 %v6386, 1.0
      %v6419 = vadd.f32 %v6387, 1.0
      %v6420 = vadd.f32 %v6388, 1.0
      %v6421 = vadd.f32 %v6389, 1.0
      %v6422 = vadd.f32 %v6390, 1.0
      %v6423 = vadd.f32 %v6391, 1.0
      %v6424 = vadd.f32 %v6392, 1.0
      %v6425 = vadd.f32 %v6393, 1.0
      %v6426 = vadd.f32 %v6394, 1.0
      %v6427 = vadd.f32 %v6395, 1.0
      %v6428 = vadd.f32 %v6396, 1.0
      %v6429 = vadd.f32 %v6397, 1.0
      %v6430 = vadd.f32 %v6398, 1.0
      %v6431 = vmul.f32 %v6175, %v6399
      %v6432 = vmul.f32 %v6176, %v6400
      %v6433 = vmul.f32 %v6177, %v6401
      %v6434 = vmul.f32 %v6178, %v6402
      %v6435 = vmul.f32 %v6179, %v6403
      %v6436 = vmul.f32 %v6180, %v6404
      %v6437 = vmul.f32 %v6181, %v6405
      %v6438 = vmul.f32 %v6182, %v6406
      %v6439 = vmul.f32 %v6183, %v6407
      %v6440 = vmul.f32 %v6184, %v6408
      %v6441 = vmul.f32 %v6185, %v6409
      %v6442 = vmul.f32 %v6186, %v6410
      %v6443 = vmul.f32 %v6187, %v6411
      %v6444 = vmul.f32 %v6188, %v6412
      %v6445 = vmul.f32 %v6189, %v6413
      %v6446 = vmul.f32 %v6190, %v6414
      %v6447 = vmul.f32 %v6191, %v6415
      %v6448 = vmul.f32 %v6192, %v6416
      %v6449 = vmul.f32 %v6193, %v6417
      %v6450 = vmul.f32 %v6194, %v6418
      %v6451 = vmul.f32 %v6195, %v6419
      %v6452 = vmul.f32 %v6196, %v6420
      %v6453 = vmul.f32 %v6197, %v6421
      %v6454 = vmul.f32 %v6198, %v6422
      %v6455 = vmul.f32 %v6199, %v6423
      %v6456 = vmul.f32 %v6200, %v6424
      %v6457 = vmul.f32 %v6201, %v6425
      %v6458 = vmul.f32 %v6202, %v6426
      %v6459 = vmul.f32 %v6203, %v6427
      %v6460 = vmul.f32 %v6204, %v6428
      %v6461 = vmul.f32 %v6205, %v6429
      %v6462 = vmul.f32 %v6206, %v6430
      %v6495 = vrot.slane %v6431, 7
      %v6496 = vrot.slane %v6432, 7
      %v6497 = vsel %vm600, %v6495, %v6496
      %v6498 = vrot.slane %v6433, 7
      %v6499 = vrot.slane %v6434, 7
      %v6500 = vsel %vm600, %v6498, %v6499
      %v6501 = vrot.slane %v6435, 7
      %v6502 = vrot.slane %v6436, 7
      %v6503 = vsel %vm600, %v6501, %v6502
      %v6504 = vrot.slane %v6437, 7
      %v6505 = vrot.slane %v6438, 7
      %v6506 = vsel %vm600, %v6504, %v6505
      %v6507 = vrot.slane %v6439, 7
      %v6508 = vrot.slane %v6440, 7
      %v6509 = vsel %vm600, %v6507, %v6508
      %v6510 = vrot.slane %v6441, 7
      %v6511 = vrot.slane %v6442, 7
      %v6512 = vsel %vm600, %v6510, %v6511
      %v6513 = vrot.slane %v6443, 7
      %v6514 = vrot.slane %v6444, 7
      %v6515 = vsel %vm600, %v6513, %v6514
      %v6516 = vrot.slane %v6445, 7
      %v6517 = vrot.slane %v6446, 7
      %v6518 = vsel %vm600, %v6516, %v6517
      %v6519 = vrot.slane %v6447, 7
      %v6520 = vrot.slane %v6448, 7
      %v6521 = vsel %vm600, %v6519, %v6520
      %v6522 = vrot.slane %v6449, 7
      %v6523 = vrot.slane %v6450, 7
      %v6524 = vsel %vm600, %v6522, %v6523
      %v6525 = vrot.slane %v6451, 7
      %v6526 = vrot.slane %v6452, 7
      %v6527 = vsel %vm600, %v6525, %v6526
      %v6528 = vrot.slane %v6453, 7
      %v6529 = vrot.slane %v6454, 7
      %v6530 = vsel %vm600, %v6528, %v6529
      %v6531 = vrot.slane %v6455, 7
      %v6532 = vrot.slane %v6456, 7
      %v6533 = vsel %vm600, %v6531, %v6532
      %v6534 = vrot.slane %v6457, 7
      %v6535 = vrot.slane %v6458, 7
      %v6536 = vsel %vm600, %v6534, %v6535
      %v6537 = vrot.slane %v6459, 7
      %v6538 = vrot.slane %v6460, 7
      %v6539 = vsel %vm600, %v6537, %v6538
      %v6540 = vrot.slane %v6461, 7
      %v6541 = vrot.slane %v6462, 7
      %v6542 = vsel %vm600, %v6540, %v6541
      %v6574 = vsel %vm600, 0.0, %v6495
      %v6575 = vsel %vm600, 0.0, %v6498
      %v6576 = vsel %vm600, 0.0, %v6501
      %v6577 = vsel %vm600, 0.0, %v6504
      %v6578 = vsel %vm600, 0.0, %v6507
      %v6579 = vsel %vm600, 0.0, %v6510
      %v6580 = vsel %vm600, 0.0, %v6513
      %v6581 = vsel %vm600, 0.0, %v6516
      %v6582 = vsel %vm600, 0.0, %v6519
      %v6583 = vsel %vm600, 0.0, %v6522
      %v6584 = vsel %vm600, 0.0, %v6525
      %v6585 = vsel %vm600, 0.0, %v6528
      %v6586 = vsel %vm600, 0.0, %v6531
      %v6587 = vsel %vm600, 0.0, %v6534
      %v6588 = vsel %vm600, 0.0, %v6537
      %v6589 = vsel %vm600, 0.0, %v6540
      %v6590 = vrot.slane %v6431, 1
      %v6591 = vrot.slane %v6432, 1
      %v6592 = vsel %vm697, %v6590, %v6591
      %v6593 = vrot.slane %v6433, 1
      %v6594 = vrot.slane %v6434, 1
      %v6595 = vsel %vm697, %v6593, %v6594
      %v6596 = vrot.slane %v6435, 1
      %v6597 = vrot.slane %v6436, 1
      %v6598 = vsel %vm697, %v6596, %v6597
      %v6599 = vrot.slane %v6437, 1
      %v6600 = vrot.slane %v6438, 1
      %v6601 = vsel %vm697, %v6599, %v6600
      %v6602 = vrot.slane %v6439, 1
      %v6603 = vrot.slane %v6440, 1
      %v6604 = vsel %vm697, %v6602, %v6603
      %v6605 = vrot.slane %v6441, 1
      %v6606 = vrot.slane %v6442, 1
      %v6607 = vsel %vm697, %v6605, %v6606
      %v6608 = vrot.slane %v6443, 1
      %v6609 = vrot.slane %v6444, 1
      %v6610 = vsel %vm697, %v6608, %v6609
      %v6611 = vrot.slane %v6445, 1
      %v6612 = vrot.slane %v6446, 1
      %v6613 = vsel %vm697, %v6611, %v6612
      %v6614 = vrot.slane %v6447, 1
      %v6615 = vrot.slane %v6448, 1
      %v6616 = vsel %vm697, %v6614, %v6615
      %v6617 = vrot.slane %v6449, 1
      %v6618 = vrot.slane %v6450, 1
      %v6619 = vsel %vm697, %v6617, %v6618
      %v6620 = vrot.slane %v6451, 1
      %v6621 = vrot.slane %v6452, 1
      %v6622 = vsel %vm697, %v6620, %v6621
      %v6623 = vrot.slane %v6453, 1
      %v6624 = vrot.slane %v6454, 1
      %v6625 = vsel %vm697, %v6623, %v6624
      %v6626 = vrot.slane %v6455, 1
      %v6627 = vrot.slane %v6456, 1
      %v6628 = vsel %vm697, %v6626, %v6627
      %v6629 = vrot.slane %v6457, 1
      %v6630 = vrot.slane %v6458, 1
      %v6631 = vsel %vm697, %v6629, %v6630
      %v6632 = vrot.slane %v6459, 1
      %v6633 = vrot.slane %v6460, 1
      %v6634 = vsel %vm697, %v6632, %v6633
      %v6635 = vrot.slane %v6461, 1
      %v6636 = vrot.slane %v6462, 1
      %v6637 = vsel %vm697, %v6635, %v6636
      %v6654 = vsel %vm697, %v6591, 0.0
      %v6655 = vsel %vm697, %v6594, 0.0
      %v6656 = vsel %vm697, %v6597, 0.0
      %v6657 = vsel %vm697, %v6600, 0.0
      %v6658 = vsel %vm697, %v6603, 0.0
      %v6659 = vsel %vm697, %v6606, 0.0
      %v6660 = vsel %vm697, %v6609, 0.0
      %v6661 = vsel %vm697, %v6612, 0.0
      %v6662 = vsel %vm697, %v6615, 0.0
      %v6663 = vsel %vm697, %v6618, 0.0
      %v6664 = vsel %vm697, %v6621, 0.0
      %v6665 = vsel %vm697, %v6624, 0.0
      %v6666 = vsel %vm697, %v6627, 0.0
      %v6667 = vsel %vm697, %v6630, 0.0
      %v6668 = vsel %vm697, %v6633, 0.0
      %v6669 = vsel %vm697, %v6636, 0.0
      %6670 = vrot.lane.b32.xlu0 %v6431, 24
      %v6671 = vpop.permute.xlu0 %6670
      %6672 = vrot.lane.b32.xlu0 %v6432, 24
      %v6673 = vpop.permute.xlu0 %6672
      %6674 = vrot.lane.b32.xlu0 %v6433, 24
      %v6675 = vpop.permute.xlu0 %6674
      %6676 = vrot.lane.b32.xlu0 %v6434, 24
      %v6677 = vpop.permute.xlu0 %6676
      %6678 = vrot.lane.b32.xlu0 %v6435, 24
      %v6679 = vpop.permute.xlu0 %6678
      %6680 = vrot.lane.b32.xlu0 %v6436, 24
      %v6681 = vpop.permute.xlu0 %6680
      %6682 = vrot.lane.b32.xlu0 %v6437, 24
      %v6683 = vpop.permute.xlu0 %6682
      %6684 = vrot.lane.b32.xlu0 %v6438, 24
      %v6685 = vpop.permute.xlu0 %6684
      %6686 = vrot.lane.b32.xlu0 %v6439, 24
      %v6687 = vpop.permute.xlu0 %6686
      %6688 = vrot.lane.b32.xlu0 %v6440, 24
      %v6689 = vpop.permute.xlu0 %6688
      %6690 = vrot.lane.b32.xlu0 %v6441, 24
      %v6691 = vpop.permute.xlu0 %6690
      %6692 = vrot.lane.b32.xlu0 %v6442, 24
      %v6693 = vpop.permute.xlu0 %6692
      %6694 = vrot.lane.b32.xlu0 %v6443, 24
      %v6695 = vpop.permute.xlu0 %6694
      %6696 = vrot.lane.b32.xlu0 %v6444, 24
      %v6697 = vpop.permute.xlu0 %6696
      %6698 = vrot.lane.b32.xlu0 %v6445, 24
      %v6699 = vpop.permute.xlu0 %6698
      %6700 = vrot.lane.b32.xlu0 %v6446, 24
      %v6701 = vpop.permute.xlu0 %6700
      %6702 = vrot.lane.b32.xlu0 %v6447, 24
      %v6703 = vpop.permute.xlu0 %6702
      %6704 = vrot.lane.b32.xlu0 %v6448, 24
      %v6705 = vpop.permute.xlu0 %6704
      %6706 = vrot.lane.b32.xlu0 %v6449, 24
      %v6707 = vpop.permute.xlu0 %6706
      %6708 = vrot.lane.b32.xlu0 %v6450, 24
      %v6709 = vpop.permute.xlu0 %6708
      %6710 = vrot.lane.b32.xlu0 %v6451, 24
      %v6711 = vpop.permute.xlu0 %6710
      %6712 = vrot.lane.b32.xlu0 %v6452, 24
      %v6713 = vpop.permute.xlu0 %6712
      %6714 = vrot.lane.b32.xlu0 %v6453, 24
      %v6715 = vpop.permute.xlu0 %6714
      %6716 = vrot.lane.b32.xlu0 %v6454, 24
      %v6717 = vpop.permute.xlu0 %6716
      %6718 = vrot.lane.b32.xlu0 %v6455, 24
      %v6719 = vpop.permute.xlu0 %6718
      %6720 = vrot.lane.b32.xlu0 %v6456, 24
      %v6721 = vpop.permute.xlu0 %6720
      %6722 = vrot.lane.b32.xlu0 %v6457, 24
      %v6723 = vpop.permute.xlu0 %6722
      %6724 = vrot.lane.b32.xlu0 %v6458, 24
      %v6725 = vpop.permute.xlu0 %6724
      %6726 = vrot.lane.b32.xlu0 %v6459, 24
      %v6727 = vpop.permute.xlu0 %6726
      %6728 = vrot.lane.b32.xlu0 %v6460, 24
      %v6729 = vpop.permute.xlu0 %6728
      %6775 = vrot.lane.b32.xlu0 0.0, 48
      %v6776 = vpop.permute.xlu0 %6775
      %6777 = vrot.lane.b32.xlu0 %v6592, 48
      %v6778 = vpop.permute.xlu0 %6777
      %6779 = vrot.lane.b32.xlu0 %v6654, 48
      %v6780 = vpop.permute.xlu0 %6779
      %6781 = vrot.lane.b32.xlu0 %v6595, 48
      %v6782 = vpop.permute.xlu0 %6781
      %6783 = vrot.lane.b32.xlu0 %v6655, 48
      %v6784 = vpop.permute.xlu0 %6783
      %6785 = vrot.lane.b32.xlu0 %v6598, 48
      %v6786 = vpop.permute.xlu0 %6785
      %6787 = vrot.lane.b32.xlu0 %v6656, 48
      %v6788 = vpop.permute.xlu0 %6787
      %6789 = vrot.lane.b32.xlu0 %v6601, 48
      %v6790 = vpop.permute.xlu0 %6789
      %6791 = vrot.lane.b32.xlu0 %v6657, 48
      %v6792 = vpop.permute.xlu0 %6791
      %6793 = vrot.lane.b32.xlu0 %v6604, 48
      %v6794 = vpop.permute.xlu0 %6793
      %6795 = vrot.lane.b32.xlu0 %v6658, 48
      %v6796 = vpop.permute.xlu0 %6795
      %6797 = vrot.lane.b32.xlu0 %v6607, 48
      %v6798 = vpop.permute.xlu0 %6797
      %6799 = vrot.lane.b32.xlu0 %v6659, 48
      %v6800 = vpop.permute.xlu0 %6799
      %6801 = vrot.lane.b32.xlu0 %v6610, 48
      %v6802 = vpop.permute.xlu0 %6801
      %6803 = vrot.lane.b32.xlu0 %v6660, 48
      %v6804 = vpop.permute.xlu0 %6803
      %6805 = vrot.lane.b32.xlu0 %v6613, 48
      %v6806 = vpop.permute.xlu0 %6805
      %6807 = vrot.lane.b32.xlu0 %v6661, 48
      %v6808 = vpop.permute.xlu0 %6807
      %6809 = vrot.lane.b32.xlu0 %v6616, 48
      %v6810 = vpop.permute.xlu0 %6809
      %6811 = vrot.lane.b32.xlu0 %v6662, 48
      %v6812 = vpop.permute.xlu0 %6811
      %6813 = vrot.lane.b32.xlu0 %v6619, 48
      %v6814 = vpop.permute.xlu0 %6813
      %6815 = vrot.lane.b32.xlu0 %v6663, 48
      %v6816 = vpop.permute.xlu0 %6815
      %6817 = vrot.lane.b32.xlu0 %v6622, 48
      %v6818 = vpop.permute.xlu0 %6817
      %6819 = vrot.lane.b32.xlu0 %v6664, 48
      %v6820 = vpop.permute.xlu0 %6819
      %6821 = vrot.lane.b32.xlu0 %v6625, 48
      %v6822 = vpop.permute.xlu0 %6821
      %6823 = vrot.lane.b32.xlu0 %v6665, 48
      %v6824 = vpop.permute.xlu0 %6823
      %6825 = vrot.lane.b32.xlu0 %v6628, 48
      %v6826 = vpop.permute.xlu0 %6825
      %6827 = vrot.lane.b32.xlu0 %v6666, 48
      %v6828 = vpop.permute.xlu0 %6827
      %6829 = vrot.lane.b32.xlu0 %v6631, 48
      %v6830 = vpop.permute.xlu0 %6829
      %6831 = vrot.lane.b32.xlu0 %v6667, 48
      %v6832 = vpop.permute.xlu0 %6831
      %6833 = vrot.lane.b32.xlu0 %v6634, 48
      %v6834 = vpop.permute.xlu0 %6833
      %6835 = vrot.lane.b32.xlu0 %v6668, 48
      %v6836 = vpop.permute.xlu0 %6835
      %6884 = vrot.lane.b32.xlu0 %v6574, 72
      %v6885 = vpop.permute.xlu0 %6884
      %6886 = vrot.lane.b32.xlu0 %v6497, 72
      %v6887 = vpop.permute.xlu0 %6886
      %6888 = vrot.lane.b32.xlu0 %v6575, 72
      %v6889 = vpop.permute.xlu0 %6888
      %6890 = vrot.lane.b32.xlu0 %v6500, 72
      %v6891 = vpop.permute.xlu0 %6890
      %6892 = vrot.lane.b32.xlu0 %v6576, 72
      %v6893 = vpop.permute.xlu0 %6892
      %6894 = vrot.lane.b32.xlu0 %v6503, 72
      %v6895 = vpop.permute.xlu0 %6894
      %6896 = vrot.lane.b32.xlu0 %v6577, 72
      %v6897 = vpop.permute.xlu0 %6896
      %6898 = vrot.lane.b32.xlu0 %v6506, 72
      %v6899 = vpop.permute.xlu0 %6898
      %6900 = vrot.lane.b32.xlu0 %v6578, 72
      %v6901 = vpop.permute.xlu0 %6900
      %6902 = vrot.lane.b32.xlu0 %v6509, 72
      %v6903 = vpop.permute.xlu0 %6902
      %6904 = vrot.lane.b32.xlu0 %v6579, 72
      %v6905 = vpop.permute.xlu0 %6904
      %6906 = vrot.lane.b32.xlu0 %v6512, 72
      %v6907 = vpop.permute.xlu0 %6906
      %6908 = vrot.lane.b32.xlu0 %v6580, 72
      %v6909 = vpop.permute.xlu0 %6908
      %6910 = vrot.lane.b32.xlu0 %v6515, 72
      %v6911 = vpop.permute.xlu0 %6910
      %6912 = vrot.lane.b32.xlu0 %v6581, 72
      %v6913 = vpop.permute.xlu0 %6912
      %6914 = vrot.lane.b32.xlu0 %v6518, 72
      %v6915 = vpop.permute.xlu0 %6914
      %6916 = vrot.lane.b32.xlu0 %v6582, 72
      %v6917 = vpop.permute.xlu0 %6916
      %6918 = vrot.lane.b32.xlu0 %v6521, 72
      %v6919 = vpop.permute.xlu0 %6918
      %6920 = vrot.lane.b32.xlu0 %v6583, 72
      %v6921 = vpop.permute.xlu0 %6920
      %6922 = vrot.lane.b32.xlu0 %v6524, 72
      %v6923 = vpop.permute.xlu0 %6922
      %6924 = vrot.lane.b32.xlu0 %v6584, 72
      %v6925 = vpop.permute.xlu0 %6924
      %6926 = vrot.lane.b32.xlu0 %v6527, 72
      %v6927 = vpop.permute.xlu0 %6926
      %6928 = vrot.lane.b32.xlu0 %v6585, 72
      %v6929 = vpop.permute.xlu0 %6928
      %6930 = vrot.lane.b32.xlu0 %v6530, 72
      %v6931 = vpop.permute.xlu0 %6930
      %6932 = vrot.lane.b32.xlu0 %v6586, 72
      %v6933 = vpop.permute.xlu0 %6932
      %6934 = vrot.lane.b32.xlu0 %v6533, 72
      %v6935 = vpop.permute.xlu0 %6934
      %6936 = vrot.lane.b32.xlu0 %v6587, 72
      %v6937 = vpop.permute.xlu0 %6936
      %6938 = vrot.lane.b32.xlu0 %v6536, 72
      %v6939 = vpop.permute.xlu0 %6938
      %6940 = vrot.lane.b32.xlu0 %v6588, 72
      %v6941 = vpop.permute.xlu0 %6940
      %6942 = vrot.lane.b32.xlu0 %v6539, 72
      %v6943 = vpop.permute.xlu0 %6942
      %6944 = vrot.lane.b32.xlu0 %v6589, 72
      %v6945 = vpop.permute.xlu0 %6944
      %6946 = vrot.lane.b32.xlu0 %v6542, 72
      %v6947 = vpop.permute.xlu0 %6946
      %6980 = vrot.lane.b32.xlu0 %v6431, 96
      %v6981 = vpop.permute.xlu0 %6980
      %6982 = vrot.lane.b32.xlu0 %v6432, 96
      %v6983 = vpop.permute.xlu0 %6982
      %6984 = vrot.lane.b32.xlu0 %v6433, 96
      %v6985 = vpop.permute.xlu0 %6984
      %6986 = vrot.lane.b32.xlu0 %v6434, 96
      %v6987 = vpop.permute.xlu0 %6986
      %6988 = vrot.lane.b32.xlu0 %v6435, 96
      %v6989 = vpop.permute.xlu0 %6988
      %6990 = vrot.lane.b32.xlu0 %v6436, 96
      %v6991 = vpop.permute.xlu0 %6990
      %6992 = vrot.lane.b32.xlu0 %v6437, 96
      %v6993 = vpop.permute.xlu0 %6992
      %6994 = vrot.lane.b32.xlu0 %v6438, 96
      %v6995 = vpop.permute.xlu0 %6994
      %6996 = vrot.lane.b32.xlu0 %v6439, 96
      %v6997 = vpop.permute.xlu0 %6996
      %6998 = vrot.lane.b32.xlu0 %v6440, 96
      %v6999 = vpop.permute.xlu0 %6998
      %7000 = vrot.lane.b32.xlu0 %v6441, 96
      %v7001 = vpop.permute.xlu0 %7000
      %7002 = vrot.lane.b32.xlu0 %v6442, 96
      %v7003 = vpop.permute.xlu0 %7002
      %7004 = vrot.lane.b32.xlu0 %v6443, 96
      %v7005 = vpop.permute.xlu0 %7004
      %7006 = vrot.lane.b32.xlu0 %v6444, 96
      %v7007 = vpop.permute.xlu0 %7006
      %7008 = vrot.lane.b32.xlu0 %v6445, 96
      %v7009 = vpop.permute.xlu0 %7008
      %7010 = vrot.lane.b32.xlu0 %v6446, 96
      %v7011 = vpop.permute.xlu0 %7010
      %7012 = vrot.lane.b32.xlu0 %v6447, 96
      %v7013 = vpop.permute.xlu0 %7012
      %7014 = vrot.lane.b32.xlu0 %v6448, 96
      %v7015 = vpop.permute.xlu0 %7014
      %7016 = vrot.lane.b32.xlu0 %v6449, 96
      %v7017 = vpop.permute.xlu0 %7016
      %7018 = vrot.lane.b32.xlu0 %v6450, 96
      %v7019 = vpop.permute.xlu0 %7018
      %7020 = vrot.lane.b32.xlu0 %v6451, 96
      %v7021 = vpop.permute.xlu0 %7020
      %7022 = vrot.lane.b32.xlu0 %v6452, 96
      %v7023 = vpop.permute.xlu0 %7022
      %7024 = vrot.lane.b32.xlu0 %v6453, 96
      %v7025 = vpop.permute.xlu0 %7024
      %7026 = vrot.lane.b32.xlu0 %v6454, 96
      %v7027 = vpop.permute.xlu0 %7026
      %7028 = vrot.lane.b32.xlu0 %v6455, 96
      %v7029 = vpop.permute.xlu0 %7028
      %7030 = vrot.lane.b32.xlu0 %v6456, 96
      %v7031 = vpop.permute.xlu0 %7030
      %7032 = vrot.lane.b32.xlu0 %v6457, 96
      %v7033 = vpop.permute.xlu0 %7032
      %7034 = vrot.lane.b32.xlu0 %v6458, 96
      %v7035 = vpop.permute.xlu0 %7034
      %7036 = vrot.lane.b32.xlu0 %v6459, 96
      %v7037 = vpop.permute.xlu0 %7036
      %7038 = vrot.lane.b32.xlu0 %v6460, 96
      %v7039 = vpop.permute.xlu0 %7038
      %7040 = vrot.lane.b32.xlu0 %v6461, 96
      %v7041 = vpop.permute.xlu0 %7040
      %7042 = vrot.lane.b32.xlu0 %v6462, 96
      %v7043 = vpop.permute.xlu0 %7042
      %7077 = vrot.lane.b32.xlu0 %v6592, 120
      %v7078 = vpop.permute.xlu0 %7077
      %7079 = vrot.lane.b32.xlu0 %v6654, 120
      %v7080 = vpop.permute.xlu0 %7079
      %7081 = vrot.lane.b32.xlu0 %v6595, 120
      %v7082 = vpop.permute.xlu0 %7081
      %7083 = vrot.lane.b32.xlu0 %v6655, 120
      %v7084 = vpop.permute.xlu0 %7083
      %7085 = vrot.lane.b32.xlu0 %v6598, 120
      %v7086 = vpop.permute.xlu0 %7085
      %7087 = vrot.lane.b32.xlu0 %v6656, 120
      %v7088 = vpop.permute.xlu0 %7087
      %7089 = vrot.lane.b32.xlu0 %v6601, 120
      %v7090 = vpop.permute.xlu0 %7089
      %7091 = vrot.lane.b32.xlu0 %v6657, 120
      %v7092 = vpop.permute.xlu0 %7091
      %7093 = vrot.lane.b32.xlu0 %v6604, 120
      %v7094 = vpop.permute.xlu0 %7093
      %7095 = vrot.lane.b32.xlu0 %v6658, 120
      %v7096 = vpop.permute.xlu0 %7095
      %7097 = vrot.lane.b32.xlu0 %v6607, 120
      %v7098 = vpop.permute.xlu0 %7097
      %7099 = vrot.lane.b32.xlu0 %v6659, 120
      %v7100 = vpop.permute.xlu0 %7099
      %7101 = vrot.lane.b32.xlu0 %v6610, 120
      %v7102 = vpop.permute.xlu0 %7101
      %7103 = vrot.lane.b32.xlu0 %v6660, 120
      %v7104 = vpop.permute.xlu0 %7103
      %7105 = vrot.lane.b32.xlu0 %v6613, 120
      %v7106 = vpop.permute.xlu0 %7105
      %7107 = vrot.lane.b32.xlu0 %v6661, 120
      %v7108 = vpop.permute.xlu0 %7107
      %7109 = vrot.lane.b32.xlu0 %v6616, 120
      %v7110 = vpop.permute.xlu0 %7109
      %7111 = vrot.lane.b32.xlu0 %v6662, 120
      %v7112 = vpop.permute.xlu0 %7111
      %7113 = vrot.lane.b32.xlu0 %v6619, 120
      %v7114 = vpop.permute.xlu0 %7113
      %7115 = vrot.lane.b32.xlu0 %v6663, 120
      %v7116 = vpop.permute.xlu0 %7115
      %7117 = vrot.lane.b32.xlu0 %v6622, 120
      %v7118 = vpop.permute.xlu0 %7117
      %7119 = vrot.lane.b32.xlu0 %v6664, 120
      %v7120 = vpop.permute.xlu0 %7119
      %7121 = vrot.lane.b32.xlu0 %v6625, 120
      %v7122 = vpop.permute.xlu0 %7121
      %7123 = vrot.lane.b32.xlu0 %v6665, 120
      %v7124 = vpop.permute.xlu0 %7123
      %7125 = vrot.lane.b32.xlu0 %v6628, 120
      %v7126 = vpop.permute.xlu0 %7125
      %7127 = vrot.lane.b32.xlu0 %v6666, 120
      %v7128 = vpop.permute.xlu0 %7127
      %7129 = vrot.lane.b32.xlu0 %v6631, 120
      %v7130 = vpop.permute.xlu0 %7129
      %7131 = vrot.lane.b32.xlu0 %v6667, 120
      %v7132 = vpop.permute.xlu0 %7131
      %7133 = vrot.lane.b32.xlu0 %v6634, 120
      %v7134 = vpop.permute.xlu0 %7133
      %7135 = vrot.lane.b32.xlu0 %v6668, 120
      %v7136 = vpop.permute.xlu0 %7135
      %7137 = vrot.lane.b32.xlu0 %v6637, 120
      %v7138 = vpop.permute.xlu0 %7137
      %7139 = vrot.lane.b32.xlu0 %v6669, 120
      %v7140 = vpop.permute.xlu0 %7139
      %7173 = vrot.lane.b32.xlu0 %v6575, 16
      %v7174 = vpop.permute.xlu0 %7173
      %7175 = vrot.lane.b32.xlu0 %v6500, 16
      %v7176 = vpop.permute.xlu0 %7175
      %7177 = vrot.lane.b32.xlu0 %v6576, 16
      %v7178 = vpop.permute.xlu0 %7177
      %7179 = vrot.lane.b32.xlu0 %v6503, 16
      %v7180 = vpop.permute.xlu0 %7179
      %7181 = vrot.lane.b32.xlu0 %v6577, 16
      %v7182 = vpop.permute.xlu0 %7181
      %7183 = vrot.lane.b32.xlu0 %v6506, 16
      %v7184 = vpop.permute.xlu0 %7183
      %7185 = vrot.lane.b32.xlu0 %v6578, 16
      %v7186 = vpop.permute.xlu0 %7185
      %7187 = vrot.lane.b32.xlu0 %v6509, 16
      %v7188 = vpop.permute.xlu0 %7187
      %7189 = vrot.lane.b32.xlu0 %v6579, 16
      %v7190 = vpop.permute.xlu0 %7189
      %7191 = vrot.lane.b32.xlu0 %v6512, 16
      %v7192 = vpop.permute.xlu0 %7191
      %7193 = vrot.lane.b32.xlu0 %v6580, 16
      %v7194 = vpop.permute.xlu0 %7193
      %7195 = vrot.lane.b32.xlu0 %v6515, 16
      %v7196 = vpop.permute.xlu0 %7195
      %7197 = vrot.lane.b32.xlu0 %v6581, 16
      %v7198 = vpop.permute.xlu0 %7197
      %7199 = vrot.lane.b32.xlu0 %v6518, 16
      %v7200 = vpop.permute.xlu0 %7199
      %7201 = vrot.lane.b32.xlu0 %v6582, 16
      %v7202 = vpop.permute.xlu0 %7201
      %7203 = vrot.lane.b32.xlu0 %v6521, 16
      %v7204 = vpop.permute.xlu0 %7203
      %7205 = vrot.lane.b32.xlu0 %v6583, 16
      %v7206 = vpop.permute.xlu0 %7205
      %7207 = vrot.lane.b32.xlu0 %v6524, 16
      %v7208 = vpop.permute.xlu0 %7207
      %7209 = vrot.lane.b32.xlu0 %v6584, 16
      %v7210 = vpop.permute.xlu0 %7209
      %7211 = vrot.lane.b32.xlu0 %v6527, 16
      %v7212 = vpop.permute.xlu0 %7211
      %7213 = vrot.lane.b32.xlu0 %v6585, 16
      %v7214 = vpop.permute.xlu0 %7213
      %7215 = vrot.lane.b32.xlu0 %v6530, 16
      %v7216 = vpop.permute.xlu0 %7215
      %7217 = vrot.lane.b32.xlu0 %v6586, 16
      %v7218 = vpop.permute.xlu0 %7217
      %7219 = vrot.lane.b32.xlu0 %v6533, 16
      %v7220 = vpop.permute.xlu0 %7219
      %7221 = vrot.lane.b32.xlu0 %v6587, 16
      %v7222 = vpop.permute.xlu0 %7221
      %7223 = vrot.lane.b32.xlu0 %v6536, 16
      %v7224 = vpop.permute.xlu0 %7223
      %7225 = vrot.lane.b32.xlu0 %v6588, 16
      %v7226 = vpop.permute.xlu0 %7225
      %7227 = vrot.lane.b32.xlu0 %v6539, 16
      %v7228 = vpop.permute.xlu0 %7227
      %7229 = vrot.lane.b32.xlu0 %v6589, 16
      %v7230 = vpop.permute.xlu0 %7229
      %7231 = vrot.lane.b32.xlu0 %v6542, 16
      %v7232 = vpop.permute.xlu0 %7231
      %7233 = vrot.lane.b32.xlu0 0.0, 16
      %v7234 = vpop.permute.xlu0 %7233
      %7266 = vrot.lane.b32.xlu0 %v6433, 40
      %v7267 = vpop.permute.xlu0 %7266
      %7268 = vrot.lane.b32.xlu0 %v6434, 40
      %v7269 = vpop.permute.xlu0 %7268
      %7270 = vrot.lane.b32.xlu0 %v6435, 40
      %v7271 = vpop.permute.xlu0 %7270
      %7272 = vrot.lane.b32.xlu0 %v6436, 40
      %v7273 = vpop.permute.xlu0 %7272
      %7274 = vrot.lane.b32.xlu0 %v6437, 40
      %v7275 = vpop.permute.xlu0 %7274
      %7276 = vrot.lane.b32.xlu0 %v6438, 40
      %v7277 = vpop.permute.xlu0 %7276
      %7278 = vrot.lane.b32.xlu0 %v6439, 40
      %v7279 = vpop.permute.xlu0 %7278
      %7280 = vrot.lane.b32.xlu0 %v6440, 40
      %v7281 = vpop.permute.xlu0 %7280
      %7282 = vrot.lane.b32.xlu0 %v6441, 40
      %v7283 = vpop.permute.xlu0 %7282
      %7284 = vrot.lane.b32.xlu0 %v6442, 40
      %v7285 = vpop.permute.xlu0 %7284
      %7286 = vrot.lane.b32.xlu0 %v6443, 40
      %v7287 = vpop.permute.xlu0 %7286
      %7288 = vrot.lane.b32.xlu0 %v6444, 40
      %v7289 = vpop.permute.xlu0 %7288
      %7290 = vrot.lane.b32.xlu0 %v6445, 40
      %v7291 = vpop.permute.xlu0 %7290
      %7292 = vrot.lane.b32.xlu0 %v6446, 40
      %v7293 = vpop.permute.xlu0 %7292
      %7294 = vrot.lane.b32.xlu0 %v6447, 40
      %v7295 = vpop.permute.xlu0 %7294
      %7296 = vrot.lane.b32.xlu0 %v6448, 40
      %v7297 = vpop.permute.xlu0 %7296
      %7298 = vrot.lane.b32.xlu0 %v6449, 40
      %v7299 = vpop.permute.xlu0 %7298
      %7300 = vrot.lane.b32.xlu0 %v6450, 40
      %v7301 = vpop.permute.xlu0 %7300
      %7302 = vrot.lane.b32.xlu0 %v6451, 40
      %v7303 = vpop.permute.xlu0 %7302
      %7304 = vrot.lane.b32.xlu0 %v6452, 40
      %v7305 = vpop.permute.xlu0 %7304
      %7306 = vrot.lane.b32.xlu0 %v6453, 40
      %v7307 = vpop.permute.xlu0 %7306
      %7308 = vrot.lane.b32.xlu0 %v6454, 40
      %v7309 = vpop.permute.xlu0 %7308
      %7310 = vrot.lane.b32.xlu0 %v6455, 40
      %v7311 = vpop.permute.xlu0 %7310
      %7312 = vrot.lane.b32.xlu0 %v6456, 40
      %v7313 = vpop.permute.xlu0 %7312
      %7314 = vrot.lane.b32.xlu0 %v6457, 40
      %v7315 = vpop.permute.xlu0 %7314
      %7316 = vrot.lane.b32.xlu0 %v6458, 40
      %v7317 = vpop.permute.xlu0 %7316
      %7318 = vrot.lane.b32.xlu0 %v6459, 40
      %v7319 = vpop.permute.xlu0 %7318
      %7320 = vrot.lane.b32.xlu0 %v6460, 40
      %v7321 = vpop.permute.xlu0 %7320
      %7322 = vrot.lane.b32.xlu0 %v6461, 40
      %v7323 = vpop.permute.xlu0 %7322
      %7324 = vrot.lane.b32.xlu0 %v6462, 40
      %v7325 = vpop.permute.xlu0 %7324
      %7326 = vrot.lane.b32.xlu0 0.0, 40
      %v7327 = vpop.permute.xlu0 %7326
      %7359 = vrot.lane.b32.xlu0 %v6595, 64
      %v7360 = vpop.permute.xlu0 %7359
      %7361 = vrot.lane.b32.xlu0 %v6655, 64
      %v7362 = vpop.permute.xlu0 %7361
      %7363 = vrot.lane.b32.xlu0 %v6598, 64
      %v7364 = vpop.permute.xlu0 %7363
      %7365 = vrot.lane.b32.xlu0 %v6656, 64
      %v7366 = vpop.permute.xlu0 %7365
      %7367 = vrot.lane.b32.xlu0 %v6601, 64
      %v7368 = vpop.permute.xlu0 %7367
      %7369 = vrot.lane.b32.xlu0 %v6657, 64
      %v7370 = vpop.permute.xlu0 %7369
      %7371 = vrot.lane.b32.xlu0 %v6604, 64
      %v7372 = vpop.permute.xlu0 %7371
      %7373 = vrot.lane.b32.xlu0 %v6658, 64
      %v7374 = vpop.permute.xlu0 %7373
      %7375 = vrot.lane.b32.xlu0 %v6607, 64
      %v7376 = vpop.permute.xlu0 %7375
      %7377 = vrot.lane.b32.xlu0 %v6659, 64
      %v7378 = vpop.permute.xlu0 %7377
      %7379 = vrot.lane.b32.xlu0 %v6610, 64
      %v7380 = vpop.permute.xlu0 %7379
      %7381 = vrot.lane.b32.xlu0 %v6660, 64
      %v7382 = vpop.permute.xlu0 %7381
      %7383 = vrot.lane.b32.xlu0 %v6613, 64
      %v7384 = vpop.permute.xlu0 %7383
      %7385 = vrot.lane.b32.xlu0 %v6661, 64
      %v7386 = vpop.permute.xlu0 %7385
      %7387 = vrot.lane.b32.xlu0 %v6616, 64
      %v7388 = vpop.permute.xlu0 %7387
      %7389 = vrot.lane.b32.xlu0 %v6662, 64
      %v7390 = vpop.permute.xlu0 %7389
      %7391 = vrot.lane.b32.xlu0 %v6619, 64
      %v7392 = vpop.permute.xlu0 %7391
      %7393 = vrot.lane.b32.xlu0 %v6663, 64
      %v7394 = vpop.permute.xlu0 %7393
      %7395 = vrot.lane.b32.xlu0 %v6622, 64
      %v7396 = vpop.permute.xlu0 %7395
      %7397 = vrot.lane.b32.xlu0 %v6664, 64
      %v7398 = vpop.permute.xlu0 %7397
      %7399 = vrot.lane.b32.xlu0 %v6625, 64
      %v7400 = vpop.permute.xlu0 %7399
      %7401 = vrot.lane.b32.xlu0 %v6665, 64
      %v7402 = vpop.permute.xlu0 %7401
      %7403 = vrot.lane.b32.xlu0 %v6628, 64
      %v7404 = vpop.permute.xlu0 %7403
      %7405 = vrot.lane.b32.xlu0 %v6666, 64
      %v7406 = vpop.permute.xlu0 %7405
      %7407 = vrot.lane.b32.xlu0 %v6631, 64
      %v7408 = vpop.permute.xlu0 %7407
      %7409 = vrot.lane.b32.xlu0 %v6667, 64
      %v7410 = vpop.permute.xlu0 %7409
      %7411 = vrot.lane.b32.xlu0 %v6634, 64
      %v7412 = vpop.permute.xlu0 %7411
      %7413 = vrot.lane.b32.xlu0 %v6668, 64
      %v7414 = vpop.permute.xlu0 %7413
      %7415 = vrot.lane.b32.xlu0 %v6637, 64
      %v7416 = vpop.permute.xlu0 %7415
      %7417 = vrot.lane.b32.xlu0 %v6669, 64
      %v7418 = vpop.permute.xlu0 %7417
      %7419 = vrot.lane.b32.xlu0 0.0, 64
      %v7420 = vpop.permute.xlu0 %7419
      %7452 = vrot.lane.b32.xlu0 %v334, 88
      %v7453 = vpop.permute.xlu0 %7452
      %7454 = vrot.lane.b32.xlu0 %v335, 88
      %v7455 = vpop.permute.xlu0 %7454
      %7456 = vrot.lane.b32.xlu0 %v336, 88
      %v7457 = vpop.permute.xlu0 %7456
      %7458 = vrot.lane.b32.xlu0 %v337, 88
      %v7459 = vpop.permute.xlu0 %7458
      %7460 = vrot.lane.b32.xlu0 %v338, 88
      %v7461 = vpop.permute.xlu0 %7460
      %7462 = vrot.lane.b32.xlu0 %v339, 88
      %v7463 = vpop.permute.xlu0 %7462
      %7464 = vrot.lane.b32.xlu0 %v340, 88
      %v7465 = vpop.permute.xlu0 %7464
      %7466 = vrot.lane.b32.xlu0 %v341, 88
      %v7467 = vpop.permute.xlu0 %7466
      %7468 = vrot.lane.b32.xlu0 %v342, 88
      %v7469 = vpop.permute.xlu0 %7468
      %7470 = vrot.lane.b32.xlu0 %v343, 88
      %v7471 = vpop.permute.xlu0 %7470
      %7472 = vrot.lane.b32.xlu0 %v344, 88
      %v7473 = vpop.permute.xlu0 %7472
      %7474 = vrot.lane.b32.xlu0 %v345, 88
      %v7475 = vpop.permute.xlu0 %7474
      %7476 = vrot.lane.b32.xlu0 %v346, 88
      %v7477 = vpop.permute.xlu0 %7476
      %7478 = vrot.lane.b32.xlu0 %v347, 88
      %v7479 = vpop.permute.xlu0 %7478
      %7480 = vrot.lane.b32.xlu0 %v348, 88
      %v7481 = vpop.permute.xlu0 %7480
      %7482 = vrot.lane.b32.xlu0 %v349, 88
      %v7483 = vpop.permute.xlu0 %7482
      %7484 = vrot.lane.b32.xlu0 %v350, 88
      %v7485 = vpop.permute.xlu0 %7484
      %7486 = vrot.lane.b32.xlu0 %v351, 88
      %v7487 = vpop.permute.xlu0 %7486
      %7488 = vrot.lane.b32.xlu0 %v352, 88
      %v7489 = vpop.permute.xlu0 %7488
      %7490 = vrot.lane.b32.xlu0 %v353, 88
      %v7491 = vpop.permute.xlu0 %7490
      %7492 = vrot.lane.b32.xlu0 %v354, 88
      %v7493 = vpop.permute.xlu0 %7492
      %7494 = vrot.lane.b32.xlu0 %v355, 88
      %v7495 = vpop.permute.xlu0 %7494
      %7496 = vrot.lane.b32.xlu0 %v356, 88
      %v7497 = vpop.permute.xlu0 %7496
      %7498 = vrot.lane.b32.xlu0 %v357, 88
      %v7499 = vpop.permute.xlu0 %7498
      %7500 = vrot.lane.b32.xlu0 %v358, 88
      %v7501 = vpop.permute.xlu0 %7500
      %7502 = vrot.lane.b32.xlu0 %v359, 88
      %v7503 = vpop.permute.xlu0 %7502
      %7504 = vrot.lane.b32.xlu0 %v360, 88
      %v7505 = vpop.permute.xlu0 %7504
      %7506 = vrot.lane.b32.xlu0 %v361, 88
      %v7507 = vpop.permute.xlu0 %7506
      %7508 = vrot.lane.b32.xlu0 %v362, 88
      %v7509 = vpop.permute.xlu0 %7508
      %7510 = vrot.lane.b32.xlu0 %v363, 88
      %v7511 = vpop.permute.xlu0 %7510
      %7512 = vrot.lane.b32.xlu0 %v364, 88
      %v7513 = vpop.permute.xlu0 %7512
      %7514 = vrot.lane.b32.xlu0 %v365, 88
      %v7515 = vpop.permute.xlu0 %7514
      %v7548 = vsel %vm5820, 0.0, %v5440
      %v7549 = vsel %vm5820, %v6574, %v6671
      %v7550 = vsel %vm5820, %v6497, %v6673
      %v7551 = vsel %vm5820, %v6575, %v6675
      %v7552 = vsel %vm5820, %v6500, %v6677
      %v7553 = vsel %vm5820, %v6576, %v6679
      %v7554 = vsel %vm5820, %v6503, %v6681
      %v7555 = vsel %vm5820, %v6577, %v6683
      %v7556 = vsel %vm5820, %v6506, %v6685
      %v7557 = vsel %vm5820, %v6578, %v6687
      %v7558 = vsel %vm5820, %v6509, %v6689
      %v7559 = vsel %vm5820, %v6579, %v6691
      %v7560 = vsel %vm5820, %v6512, %v6693
      %v7561 = vsel %vm5820, %v6580, %v6695
      %v7562 = vsel %vm5820, %v6515, %v6697
      %v7563 = vsel %vm5820, %v6581, %v6699
      %v7564 = vsel %vm5820, %v6518, %v6701
      %v7565 = vsel %vm5820, %v6582, %v6703
      %v7566 = vsel %vm5820, %v6521, %v6705
      %v7567 = vsel %vm5820, %v6583, %v6707
      %v7568 = vsel %vm5820, %v6524, %v6709
      %v7569 = vsel %vm5820, %v6584, %v6711
      %v7570 = vsel %vm5820, %v6527, %v6713
      %v7571 = vsel %vm5820, %v6585, %v6715
      %v7572 = vsel %vm5820, %v6530, %v6717
      %v7573 = vsel %vm5820, %v6586, %v6719
      %v7574 = vsel %vm5820, %v6533, %v6721
      %v7575 = vsel %vm5820, %v6587, %v6723
      %v7576 = vsel %vm5820, %v6536, %v6725
      %v7577 = vsel %vm5820, %v6588, %v6727
      %v7578 = vsel %vm5820, %v6539, %v6729
      %vm7579 = vcmask 392192
      %v7580 = vsel %vm7579, %v7548, %v6776
      %v7581 = vsel %vm7579, %v7549, %v6778
      %v7582 = vsel %vm7579, %v7550, %v6780
      %v7583 = vsel %vm7579, %v7551, %v6782
      %v7584 = vsel %vm7579, %v7552, %v6784
      %v7585 = vsel %vm7579, %v7553, %v6786
      %v7586 = vsel %vm7579, %v7554, %v6788
      %v7587 = vsel %vm7579, %v7555, %v6790
      %v7588 = vsel %vm7579, %v7556, %v6792
      %v7589 = vsel %vm7579, %v7557, %v6794
      %v7590 = vsel %vm7579, %v7558, %v6796
      %v7591 = vsel %vm7579, %v7559, %v6798
      %v7592 = vsel %vm7579, %v7560, %v6800
      %v7593 = vsel %vm7579, %v7561, %v6802
      %v7594 = vsel %vm7579, %v7562, %v6804
      %v7595 = vsel %vm7579, %v7563, %v6806
      %v7596 = vsel %vm7579, %v7564, %v6808
      %v7597 = vsel %vm7579, %v7565, %v6810
      %v7598 = vsel %vm7579, %v7566, %v6812
      %v7599 = vsel %vm7579, %v7567, %v6814
      %v7600 = vsel %vm7579, %v7568, %v6816
      %v7601 = vsel %vm7579, %v7569, %v6818
      %v7602 = vsel %vm7579, %v7570, %v6820
      %v7603 = vsel %vm7579, %v7571, %v6822
      %v7604 = vsel %vm7579, %v7572, %v6824
      %v7605 = vsel %vm7579, %v7573, %v6826
      %v7606 = vsel %vm7579, %v7574, %v6828
      %v7607 = vsel %vm7579, %v7575, %v6830
      %v7608 = vsel %vm7579, %v7576, %v6832
      %v7609 = vsel %vm7579, %v7577, %v6834
      %v7610 = vsel %vm7579, %v7578, %v6836
      %vm7611 = vcmask 588800
      %v7612 = vsel %vm7611, %v7580, %v6885
      %v7613 = vsel %vm7611, %v7580, %v6887
      %v7614 = vsel %vm7611, %v7581, %v6889
      %v7615 = vsel %vm7611, %v7582, %v6891
      %v7616 = vsel %vm7611, %v7583, %v6893
      %v7617 = vsel %vm7611, %v7584, %v6895
      %v7618 = vsel %vm7611, %v7585, %v6897
      %v7619 = vsel %vm7611, %v7586, %v6899
      %v7620 = vsel %vm7611, %v7587, %v6901
      %v7621 = vsel %vm7611, %v7588, %v6903
      %v7622 = vsel %vm7611, %v7589, %v6905
      %v7623 = vsel %vm7611, %v7590, %v6907
      %v7624 = vsel %vm7611, %v7591, %v6909
      %v7625 = vsel %vm7611, %v7592, %v6911
      %v7626 = vsel %vm7611, %v7593, %v6913
      %v7627 = vsel %vm7611, %v7594, %v6915
      %v7628 = vsel %vm7611, %v7595, %v6917
      %v7629 = vsel %vm7611, %v7596, %v6919
      %v7630 = vsel %vm7611, %v7597, %v6921
      %v7631 = vsel %vm7611, %v7598, %v6923
      %v7632 = vsel %vm7611, %v7599, %v6925
      %v7633 = vsel %vm7611, %v7600, %v6927
      %v7634 = vsel %vm7611, %v7601, %v6929
      %v7635 = vsel %vm7611, %v7602, %v6931
      %v7636 = vsel %vm7611, %v7603, %v6933
      %v7637 = vsel %vm7611, %v7604, %v6935
      %v7638 = vsel %vm7611, %v7605, %v6937
      %v7639 = vsel %vm7611, %v7606, %v6939
      %v7640 = vsel %vm7611, %v7607, %v6941
      %v7641 = vsel %vm7611, %v7608, %v6943
      %v7642 = vsel %vm7611, %v7609, %v6945
      %v7643 = vsel %vm7611, %v7610, %v6947
      %vm7644 = vcmask 785408
      %v7645 = vsel %vm7644, %v7612, %v6981
      %v7646 = vsel %vm7644, %v7613, %v6983
      %v7647 = vsel %vm7644, %v7614, %v6985
      %v7648 = vsel %vm7644, %v7615, %v6987
      %v7649 = vsel %vm7644, %v7616, %v6989
      %v7650 = vsel %vm7644, %v7617, %v6991
      %v7651 = vsel %vm7644, %v7618, %v6993
      %v7652 = vsel %vm7644, %v7619, %v6995
      %v7653 = vsel %vm7644, %v7620, %v6997
      %v7654 = vsel %vm7644, %v7621, %v6999
      %v7655 = vsel %vm7644, %v7622, %v7001
      %v7656 = vsel %vm7644, %v7623, %v7003
      %v7657 = vsel %vm7644, %v7624, %v7005
      %v7658 = vsel %vm7644, %v7625, %v7007
      %v7659 = vsel %vm7644, %v7626, %v7009
      %v7660 = vsel %vm7644, %v7627, %v7011
      %v7661 = vsel %vm7644, %v7628, %v7013
      %v7662 = vsel %vm7644, %v7629, %v7015
      %v7663 = vsel %vm7644, %v7630, %v7017
      %v7664 = vsel %vm7644, %v7631, %v7019
      %v7665 = vsel %vm7644, %v7632, %v7021
      %v7666 = vsel %vm7644, %v7633, %v7023
      %v7667 = vsel %vm7644, %v7634, %v7025
      %v7668 = vsel %vm7644, %v7635, %v7027
      %v7669 = vsel %vm7644, %v7636, %v7029
      %v7670 = vsel %vm7644, %v7637, %v7031
      %v7671 = vsel %vm7644, %v7638, %v7033
      %v7672 = vsel %vm7644, %v7639, %v7035
      %v7673 = vsel %vm7644, %v7640, %v7037
      %v7674 = vsel %vm7644, %v7641, %v7039
      %v7675 = vsel %vm7644, %v7642, %v7041
      %v7676 = vsel %vm7644, %v7643, %v7043
      %vm7677 = vcmask 982016
      %v7678 = vsel %vm7677, %v7645, %v7078
      %v7679 = vsel %vm7677, %v7646, %v7080
      %v7680 = vsel %vm7677, %v7647, %v7082
      %v7681 = vsel %vm7677, %v7648, %v7084
      %v7682 = vsel %vm7677, %v7649, %v7086
      %v7683 = vsel %vm7677, %v7650, %v7088
      %v7684 = vsel %vm7677, %v7651, %v7090
      %v7685 = vsel %vm7677, %v7652, %v7092
      %v7686 = vsel %vm7677, %v7653, %v7094
      %v7687 = vsel %vm7677, %v7654, %v7096
      %v7688 = vsel %vm7677, %v7655, %v7098
      %v7689 = vsel %vm7677, %v7656, %v7100
      %v7690 = vsel %vm7677, %v7657, %v7102
      %v7691 = vsel %vm7677, %v7658, %v7104
      %v7692 = vsel %vm7677, %v7659, %v7106
      %v7693 = vsel %vm7677, %v7660, %v7108
      %v7694 = vsel %vm7677, %v7661, %v7110
      %v7695 = vsel %vm7677, %v7662, %v7112
      %v7696 = vsel %vm7677, %v7663, %v7114
      %v7697 = vsel %vm7677, %v7664, %v7116
      %v7698 = vsel %vm7677, %v7665, %v7118
      %v7699 = vsel %vm7677, %v7666, %v7120
      %v7700 = vsel %vm7677, %v7667, %v7122
      %v7701 = vsel %vm7677, %v7668, %v7124
      %v7702 = vsel %vm7677, %v7669, %v7126
      %v7703 = vsel %vm7677, %v7670, %v7128
      %v7704 = vsel %vm7677, %v7671, %v7130
      %v7705 = vsel %vm7677, %v7672, %v7132
      %v7706 = vsel %vm7677, %v7673, %v7134
      %v7707 = vsel %vm7677, %v7674, %v7136
      %v7708 = vsel %vm7677, %v7675, %v7138
      %v7709 = vsel %vm7677, %v7676, %v7140
      %v7710 = vsel %vm5754, %v7078, %v7174
      %v7711 = vsel %vm5754, %v7080, %v7176
      %v7712 = vsel %vm5754, %v7082, %v7178
      %v7713 = vsel %vm5754, %v7084, %v7180
      %v7714 = vsel %vm5754, %v7086, %v7182
      %v7715 = vsel %vm5754, %v7088, %v7184
      %v7716 = vsel %vm5754, %v7090, %v7186
      %v7717 = vsel %vm5754, %v7092, %v7188
      %v7718 = vsel %vm5754, %v7094, %v7190
      %v7719 = vsel %vm5754, %v7096, %v7192
      %v7720 = vsel %vm5754, %v7098, %v7194
      %v7721 = vsel %vm5754, %v7100, %v7196
      %v7722 = vsel %vm5754, %v7102, %v7198
      %v7723 = vsel %vm5754, %v7104, %v7200
      %v7724 = vsel %vm5754, %v7106, %v7202
      %v7725 = vsel %vm5754, %v7108, %v7204
      %v7726 = vsel %vm5754, %v7110, %v7206
      %v7727 = vsel %vm5754, %v7112, %v7208
      %v7728 = vsel %vm5754, %v7114, %v7210
      %v7729 = vsel %vm5754, %v7116, %v7212
      %v7730 = vsel %vm5754, %v7118, %v7214
      %v7731 = vsel %vm5754, %v7120, %v7216
      %v7732 = vsel %vm5754, %v7122, %v7218
      %v7733 = vsel %vm5754, %v7124, %v7220
      %v7734 = vsel %vm5754, %v7126, %v7222
      %v7735 = vsel %vm5754, %v7128, %v7224
      %v7736 = vsel %vm5754, %v7130, %v7226
      %v7737 = vsel %vm5754, %v7132, %v7228
      %v7738 = vsel %vm5754, %v7134, %v7230
      %v7739 = vsel %vm5754, %v7136, %v7232
      %v7740 = vsel %vm5754, %v7138, %v7234
      %v7741 = vsel %vm5754, %v7140, %v7234
      %vm7742 = vcmask 326656
      %v7743 = vsel %vm7742, %v7710, %v7267
      %v7744 = vsel %vm7742, %v7711, %v7269
      %v7745 = vsel %vm7742, %v7712, %v7271
      %v7746 = vsel %vm7742, %v7713, %v7273
      %v7747 = vsel %vm7742, %v7714, %v7275
      %v7748 = vsel %vm7742, %v7715, %v7277
      %v7749 = vsel %vm7742, %v7716, %v7279
      %v7750 = vsel %vm7742, %v7717, %v7281
      %v7751 = vsel %vm7742, %v7718, %v7283
      %v7752 = vsel %vm7742, %v7719, %v7285
      %v7753 = vsel %vm7742, %v7720, %v7287
      %v7754 = vsel %vm7742, %v7721, %v7289
      %v7755 = vsel %vm7742, %v7722, %v7291
      %v7756 = vsel %vm7742, %v7723, %v7293
      %v7757 = vsel %vm7742, %v7724, %v7295
      %v7758 = vsel %vm7742, %v7725, %v7297
      %v7759 = vsel %vm7742, %v7726, %v7299
      %v7760 = vsel %vm7742, %v7727, %v7301
      %v7761 = vsel %vm7742, %v7728, %v7303
      %v7762 = vsel %vm7742, %v7729, %v7305
      %v7763 = vsel %vm7742, %v7730, %v7307
      %v7764 = vsel %vm7742, %v7731, %v7309
      %v7765 = vsel %vm7742, %v7732, %v7311
      %v7766 = vsel %vm7742, %v7733, %v7313
      %v7767 = vsel %vm7742, %v7734, %v7315
      %v7768 = vsel %vm7742, %v7735, %v7317
      %v7769 = vsel %vm7742, %v7736, %v7319
      %v7770 = vsel %vm7742, %v7737, %v7321
      %v7771 = vsel %vm7742, %v7738, %v7323
      %v7772 = vsel %vm7742, %v7739, %v7325
      %v7773 = vsel %vm7742, %v7740, %v7327
      %v7774 = vsel %vm7742, %v7741, %v7327
      %vm7775 = vcmask 523264
      %v7776 = vsel %vm7775, %v7743, %v7360
      %v7777 = vsel %vm7775, %v7744, %v7362
      %v7778 = vsel %vm7775, %v7745, %v7364
      %v7779 = vsel %vm7775, %v7746, %v7366
      %v7780 = vsel %vm7775, %v7747, %v7368
      %v7781 = vsel %vm7775, %v7748, %v7370
      %v7782 = vsel %vm7775, %v7749, %v7372
      %v7783 = vsel %vm7775, %v7750, %v7374
      %v7784 = vsel %vm7775, %v7751, %v7376
      %v7785 = vsel %vm7775, %v7752, %v7378
      %v7786 = vsel %vm7775, %v7753, %v7380
      %v7787 = vsel %vm7775, %v7754, %v7382
      %v7788 = vsel %vm7775, %v7755, %v7384
      %v7789 = vsel %vm7775, %v7756, %v7386
      %v7790 = vsel %vm7775, %v7757, %v7388
      %v7791 = vsel %vm7775, %v7758, %v7390
      %v7792 = vsel %vm7775, %v7759, %v7392
      %v7793 = vsel %vm7775, %v7760, %v7394
      %v7794 = vsel %vm7775, %v7761, %v7396
      %v7795 = vsel %vm7775, %v7762, %v7398
      %v7796 = vsel %vm7775, %v7763, %v7400
      %v7797 = vsel %vm7775, %v7764, %v7402
      %v7798 = vsel %vm7775, %v7765, %v7404
      %v7799 = vsel %vm7775, %v7766, %v7406
      %v7800 = vsel %vm7775, %v7767, %v7408
      %v7801 = vsel %vm7775, %v7768, %v7410
      %v7802 = vsel %vm7775, %v7769, %v7412
      %v7803 = vsel %vm7775, %v7770, %v7414
      %v7804 = vsel %vm7775, %v7771, %v7416
      %v7805 = vsel %vm7775, %v7772, %v7418
      %v7806 = vsel %vm7775, %v7773, %v7420
      %v7807 = vsel %vm7775, %v7774, %v7420
      %vm7808 = vcmask 719872
      %v7809 = vsel %vm7808, %v7776, %v7453
      %v7810 = vsel %vm7808, %v7777, %v7455
      %v7811 = vsel %vm7808, %v7778, %v7457
      %v7812 = vsel %vm7808, %v7779, %v7459
      %v7813 = vsel %vm7808, %v7780, %v7461
      %v7814 = vsel %vm7808, %v7781, %v7463
      %v7815 = vsel %vm7808, %v7782, %v7465
      %v7816 = vsel %vm7808, %v7783, %v7467
      %v7817 = vsel %vm7808, %v7784, %v7469
      %v7818 = vsel %vm7808, %v7785, %v7471
      %v7819 = vsel %vm7808, %v7786, %v7473
      %v7820 = vsel %vm7808, %v7787, %v7475
      %v7821 = vsel %vm7808, %v7788, %v7477
      %v7822 = vsel %vm7808, %v7789, %v7479
      %v7823 = vsel %vm7808, %v7790, %v7481
      %v7824 = vsel %vm7808, %v7791, %v7483
      %v7825 = vsel %vm7808, %v7792, %v7485
      %v7826 = vsel %vm7808, %v7793, %v7487
      %v7827 = vsel %vm7808, %v7794, %v7489
      %v7828 = vsel %vm7808, %v7795, %v7491
      %v7829 = vsel %vm7808, %v7796, %v7493
      %v7830 = vsel %vm7808, %v7797, %v7495
      %v7831 = vsel %vm7808, %v7798, %v7497
      %v7832 = vsel %vm7808, %v7799, %v7499
      %v7833 = vsel %vm7808, %v7800, %v7501
      %v7834 = vsel %vm7808, %v7801, %v7503
      %v7835 = vsel %vm7808, %v7802, %v7505
      %v7836 = vsel %vm7808, %v7803, %v7507
      %v7837 = vsel %vm7808, %v7804, %v7509
      %v7838 = vsel %vm7808, %v7805, %v7511
      %v7839 = vsel %vm7808, %v7806, %v7513
      %v7840 = vsel %vm7808, %v7807, %v7515
      %v7841 = vpack.c.bf16 %v7679, %v7678
      %v7842 = vpack.c.bf16 %v7810, %v7809
      %v7843 = vpack.c.bf16 %v7681, %v7680
      %v7844 = vpack.c.bf16 %v7812, %v7811
      %v7845 = vpack.c.bf16 %v7683, %v7682
      %v7846 = vpack.c.bf16 %v7814, %v7813
      %v7847 = vpack.c.bf16 %v7685, %v7684
      %v7848 = vpack.c.bf16 %v7816, %v7815
      %v7849 = vpack.c.bf16 %v7687, %v7686
      %v7850 = vpack.c.bf16 %v7818, %v7817
      %v7851 = vpack.c.bf16 %v7689, %v7688
      %v7852 = vpack.c.bf16 %v7820, %v7819
      %v7853 = vpack.c.bf16 %v7691, %v7690
      %v7854 = vpack.c.bf16 %v7822, %v7821
      %v7855 = vpack.c.bf16 %v7693, %v7692
      %v7856 = vpack.c.bf16 %v7824, %v7823
      %v7857 = vpack.c.bf16 %v7695, %v7694
      %v7858 = vpack.c.bf16 %v7826, %v7825
      %v7859 = vpack.c.bf16 %v7697, %v7696
      %v7860 = vpack.c.bf16 %v7828, %v7827
      %v7861 = vpack.c.bf16 %v7699, %v7698
      %v7862 = vpack.c.bf16 %v7830, %v7829
      %v7863 = vpack.c.bf16 %v7701, %v7700
      %v7864 = vpack.c.bf16 %v7832, %v7831
      %v7865 = vpack.c.bf16 %v7703, %v7702
      %v7866 = vpack.c.bf16 %v7834, %v7833
      %v7867 = vpack.c.bf16 %v7705, %v7704
      %v7868 = vpack.c.bf16 %v7836, %v7835
      %v7869 = vpack.c.bf16 %v7707, %v7706
      %v7870 = vpack.c.bf16 %v7838, %v7837
      %v7871 = vpack.c.bf16 %v7709, %v7708
      %v7872 = vpack.c.bf16 %v7840, %v7839
      %v7873 = vld [vmem:[%s7] sm:$0xf]
      %v7874 = vld [vmem:[%s7 + $0x4] sm:$0xf]
      %v7875 = vld [vmem:[%s7 + $0x8] sm:$0xf]
      %v7876 = vld [vmem:[%s7 + $0xc] sm:$0xf]
      %v7877 = vld [vmem:[%s7 + $0x10] sm:$0xf]
      %v7878 = vld [vmem:[%s7 + $0x14] sm:$0xf]
      %v7879 = vld [vmem:[%s7 + $0x18] sm:$0xf]
      %v7880 = vld [vmem:[%s7 + $0x1c] sm:$0xf]
      %v7881 = vld [vmem:[%s7 + $0x20] sm:$0xf]
      %v7882 = vld [vmem:[%s7 + $0x24] sm:$0xf]
      %v7883 = vld [vmem:[%s7 + $0x28] sm:$0xf]
      %v7884 = vld [vmem:[%s7 + $0x2c] sm:$0xf]
      %v7885 = vld [vmem:[%s7 + $0x30] sm:$0xf]
      %v7886 = vld [vmem:[%s7 + $0x34] sm:$0xf]
      %v7887 = vld [vmem:[%s7 + $0x38] sm:$0xf]
      %v7888 = vld [vmem:[%s7 + $0x3c] sm:$0xf]
      %v7889 = vld [vmem:[%s7 + $0x40] sm:$0xf]
      %v7890 = vld [vmem:[%s7 + $0x44] sm:$0xf]
      %v7891 = vld [vmem:[%s7 + $0x48] sm:$0xf]
      %v7892 = vld [vmem:[%s7 + $0x4c] sm:$0xf]
      %v7893 = vld [vmem:[%s7 + $0x50] sm:$0xf]
      %v7894 = vld [vmem:[%s7 + $0x54] sm:$0xf]
      %v7895 = vld [vmem:[%s7 + $0x58] sm:$0xf]
      %v7896 = vld [vmem:[%s7 + $0x5c] sm:$0xf]
      %v7897 = vld [vmem:[%s7 + $0x60] sm:$0xf]
      %v7898 = vld [vmem:[%s7 + $0x64] sm:$0xf]
      %v7899 = vld [vmem:[%s7 + $0x68] sm:$0xf]
      %v7900 = vld [vmem:[%s7 + $0x6c] sm:$0x3]
      %v7901 = vld [vmem:[%s8] sm:$0x1]
      %v7903 = vlaneseq
      %v7904 = vshrl.u32 %v7903, 7
      %v7905 = vsub.s32 0, %v7904
      %v7906 = vrot.slane %v7901, %v7905
      %v7936 = vunpack.c.l.b16 %v7873
      %v7937 = vunpack.c.l.b16 %v7874
      %v7938 = vunpack.c.l.b16 %v7875
      %v7939 = vunpack.c.l.b16 %v7876
      %v7940 = vunpack.c.l.b16 %v7877
      %v7941 = vunpack.c.l.b16 %v7878
      %v7942 = vunpack.c.l.b16 %v7879
      %v7943 = vunpack.c.l.b16 %v7880
      %v7944 = vunpack.c.l.b16 %v7881
      %v7945 = vunpack.c.l.b16 %v7882
      %v7946 = vunpack.c.l.b16 %v7883
      %v7947 = vunpack.c.l.b16 %v7884
      %v7948 = vunpack.c.l.b16 %v7885
      %v7949 = vunpack.c.l.b16 %v7886
      %v7950 = vunpack.c.l.b16 %v7887
      %v7951 = vunpack.c.l.b16 %v7888
      %v7952 = vunpack.c.l.b16 %v7889
      %v7953 = vunpack.c.l.b16 %v7890
      %v7954 = vunpack.c.l.b16 %v7891
      %v7955 = vunpack.c.l.b16 %v7892
      %v7956 = vunpack.c.l.b16 %v7893
      %v7957 = vunpack.c.l.b16 %v7894
      %v7958 = vunpack.c.l.b16 %v7895
      %v7959 = vunpack.c.l.b16 %v7896
      %v7960 = vunpack.c.l.b16 %v7897
      %v7961 = vunpack.c.l.b16 %v7898
      %v7962 = vunpack.c.l.b16 %v7899
      %v7963 = vunpack.c.l.b16 %v7900
      %v7964 = vpack.c.b16 %v7937, %v7936
      %v7965 = vpack.c.b16 %v7939, %v7938
      %v7966 = vpack.c.b16 %v7941, %v7940
      %v7967 = vpack.c.b16 %v7943, %v7942
      %v7968 = vpack.c.b16 %v7945, %v7944
      %v7969 = vpack.c.b16 %v7947, %v7946
      %v7970 = vpack.c.b16 %v7949, %v7948
      %v7971 = vpack.c.b16 %v7951, %v7950
      %v7972 = vpack.c.b16 %v7953, %v7952
      %v7973 = vpack.c.b16 %v7955, %v7954
      %v7974 = vpack.c.b16 %v7957, %v7956
      %v7975 = vpack.c.b16 %v7959, %v7958
      %v7976 = vpack.c.b16 %v7961, %v7960
      %v7977 = vpack.c.b16 %v7963, %v7962
      %vm7991 = vcmask 752640
      %v7993 = vsel %vm7991, %v7842, 0
      %v7996 = vsel %vm7991, %v7844, 0
      %v7999 = vsel %vm7991, %v7846, 0
      %v8002 = vsel %vm7991, %v7848, 0
      %v8005 = vsel %vm7991, %v7850, 0
      %v8008 = vsel %vm7991, %v7852, 0
      %v8011 = vsel %vm7991, %v7854, 0
      %v8014 = vsel %vm7991, %v7856, 0
      %v8017 = vsel %vm7991, %v7858, 0
      %v8020 = vsel %vm7991, %v7860, 0
      %v8023 = vsel %vm7991, %v7862, 0
      %v8026 = vsel %vm7991, %v7864, 0
      %v8029 = vsel %vm7991, %v7866, 0
      %v8032 = vsel %vm7991, %v7868, 0
      %v8035 = vsel %vm7991, %v7870, 0
      %v8038 = vsel %vm7991, %v7872, 0
      %v8041 = vsel %vm794, %v7977, 0
      %8043 = vmatprep.subr.bf16.mxu0 0
      %8044 = vmatpush1.bf16.msra.mxu0 %v7964
      %8045 = vmatprep.subr.bf16.mxu0 0
      %8046 = vmatpush1.bf16.msra.mxu0 %v7965
      %8047 = vmatprep.subr.bf16.mxu0 0
      %8048 = vmatpush1.bf16.msra.mxu0 %v7966
      %8049 = vmatprep.subr.bf16.mxu0 0
      %8050 = vmatpush1.bf16.msra.mxu0 %v7967
      %8051 = vmatprep.subr.bf16.mxu0 0
      %8052 = vmatpush1.bf16.msra.mxu0 %v7968
      %8053 = vmatprep.subr.bf16.mxu0 0
      %8054 = vmatpush1.bf16.msra.mxu0 %v7969
      %8055 = vmatprep.subr.bf16.mxu0 0
      %8056 = vmatpush1.bf16.msra.mxu0 %v7970
      %8057 = vmatprep.subr.bf16.mxu0 0
      %8058 = vmatpush1.bf16.msra.mxu0 %v7971
      %8059 = vmatprep.subr.bf16.mxu0 0
      %8060 = vmatpush1.bf16.msra.mxu0 %v7972
      %8061 = vmatprep.subr.bf16.mxu0 0
      %8062 = vmatpush1.bf16.msra.mxu0 %v7973
      %8063 = vmatprep.subr.bf16.mxu0 0
      %8064 = vmatpush1.bf16.msra.mxu0 %v7974
      %8065 = vmatprep.subr.bf16.mxu0 0
      %8066 = vmatpush1.bf16.msra.mxu0 %v7975
      %8067 = vmatprep.subr.bf16.mxu0 0
      %8068 = vmatpush1.bf16.msra.mxu0 %v7976
      %8069 = vmatprep.subr.bf16.mxu0 0
      %8070 = vmatpush1.bf16.msra.mxu0 %v8041
      %8071 = vmatprep.subr.bf16.mxu0 0
      %8072 = vmatpush1.bf16.msra.mxu0 0
      %8073 = vmatprep.subr.bf16.mxu0 0
      %8074 = vmatpush1.bf16.msra.mxu0 0
      %8075 = vmatprep.mubr.bf16.mxu0 %v7993
      %8076 = vmatmul.mubr.bf16.gmra.mrb[0].mxu0 %v7841
      %v8077 = vpop.f32.mrb[0].mxu0
      %v8078 = vadd.f32 %v7906, %v8077
      %v8079 = vpop.f32.mrb[0].mxu0
      %v8080 = vpop.f32.mrb[0].mxu0
      %v8081 = vadd.f32 %v7906, %v8080
      %v8082 = vpop.f32.mrb[0].mxu0
      %8083 = vmatprep.mubr.bf16.mxu0 %v7996
      %8084 = vmatmul.mubr.bf16.gmra.mrb[0].mxu0 %v7843
      %v8085 = vpop.f32.mrb[0].mxu0
      %v8086 = vadd.f32 %v7906, %v8085
      %v8087 = vpop.f32.mrb[0].mxu0
      %v8088 = vpop.f32.mrb[0].mxu0
      %v8089 = vadd.f32 %v7906, %v8088
      %v8090 = vpop.f32.mrb[0].mxu0
      %8091 = vmatprep.mubr.bf16.mxu0 %v7999
      %8092 = vmatmul.mubr.bf16.gmra.mrb[0].mxu0 %v7845
      %v8093 = vpop.f32.mrb[0].mxu0
      %v8094 = vadd.f32 %v7906, %v8093
      %v8095 = vpop.f32.mrb[0].mxu0
      %v8096 = vpop.f32.mrb[0].mxu0
      %v8097 = vadd.f32 %v7906, %v8096
      %v8098 = vpop.f32.mrb[0].mxu0
      %8099 = vmatprep.mubr.bf16.mxu0 %v8002
      %8100 = vmatmul.mubr.bf16.gmra.mrb[0].mxu0 %v7847
      %v8101 = vpop.f32.mrb[0].mxu0
      %v8102 = vadd.f32 %v7906, %v8101
      %v8103 = vpop.f32.mrb[0].mxu0
      %v8104 = vpop.f32.mrb[0].mxu0
      %v8105 = vadd.f32 %v7906, %v8104
      %v8106 = vpop.f32.mrb[0].mxu0
      %8107 = vmatprep.mubr.bf16.mxu0 %v8005
      %8108 = vmatmul.mubr.bf16.gmra.mrb[0].mxu0 %v7849
      %v8109 = vpop.f32.mrb[0].mxu0
      %v8110 = vadd.f32 %v7906, %v8109
      %v8111 = vpop.f32.mrb[0].mxu0
      %v8112 = vpop.f32.mrb[0].mxu0
      %v8113 = vadd.f32 %v7906, %v8112
      %v8114 = vpop.f32.mrb[0].mxu0
      %8115 = vmatprep.mubr.bf16.mxu0 %v8008
      %8116 = vmatmul.mubr.bf16.gmra.mrb[0].mxu0 %v7851
      %v8117 = vpop.f32.mrb[0].mxu0
      %v8118 = vadd.f32 %v7906, %v8117
      %v8119 = vpop.f32.mrb[0].mxu0
      %v8120 = vpop.f32.mrb[0].mxu0
      %v8121 = vadd.f32 %v7906, %v8120
      %v8122 = vpop.f32.mrb[0].mxu0
      %8123 = vmatprep.mubr.bf16.mxu0 %v8011
      %8124 = vmatmul.mubr.bf16.gmra.mrb[0].mxu0 %v7853
      %v8125 = vpop.f32.mrb[0].mxu0
      %v8126 = vadd.f32 %v7906, %v8125
      %v8127 = vpop.f32.mrb[0].mxu0
      %v8128 = vpop.f32.mrb[0].mxu0
      %v8129 = vadd.f32 %v7906, %v8128
      %v8130 = vpop.f32.mrb[0].mxu0
      %8131 = vmatprep.mubr.bf16.mxu0 %v8014
      %8132 = vmatmul.mubr.bf16.gmra.mrb[0].mxu0 %v7855
      %v8133 = vpop.f32.mrb[0].mxu0
      %v8134 = vadd.f32 %v7906, %v8133
      %v8135 = vpop.f32.mrb[0].mxu0
      %v8136 = vpop.f32.mrb[0].mxu0
      %v8137 = vadd.f32 %v7906, %v8136
      %v8138 = vpop.f32.mrb[0].mxu0
      %8139 = vmatprep.mubr.bf16.mxu0 %v8017
      %8140 = vmatmul.mubr.bf16.gmra.mrb[0].mxu0 %v7857
      %v8141 = vpop.f32.mrb[0].mxu0
      %v8142 = vadd.f32 %v7906, %v8141
      %v8143 = vpop.f32.mrb[0].mxu0
      %v8144 = vpop.f32.mrb[0].mxu0
      %v8145 = vadd.f32 %v7906, %v8144
      %v8146 = vpop.f32.mrb[0].mxu0
      %8147 = vmatprep.mubr.bf16.mxu0 %v8020
      %8148 = vmatmul.mubr.bf16.gmra.mrb[0].mxu0 %v7859
      %v8149 = vpop.f32.mrb[0].mxu0
      %v8150 = vadd.f32 %v7906, %v8149
      %v8151 = vpop.f32.mrb[0].mxu0
      %v8152 = vpop.f32.mrb[0].mxu0
      %v8153 = vadd.f32 %v7906, %v8152
      %v8154 = vpop.f32.mrb[0].mxu0
      %8155 = vmatprep.mubr.bf16.mxu0 %v8023
      %8156 = vmatmul.mubr.bf16.gmra.mrb[0].mxu0 %v7861
      %v8157 = vpop.f32.mrb[0].mxu0
      %v8158 = vadd.f32 %v7906, %v8157
      %v8159 = vpop.f32.mrb[0].mxu0
      %v8160 = vpop.f32.mrb[0].mxu0
      %v8161 = vadd.f32 %v7906, %v8160
      %v8162 = vpop.f32.mrb[0].mxu0
      %8163 = vmatprep.mubr.bf16.mxu0 %v8026
      %8164 = vmatmul.mubr.bf16.gmra.mrb[0].mxu0 %v7863
      %v8165 = vpop.f32.mrb[0].mxu0
      %v8166 = vadd.f32 %v7906, %v8165
      %v8167 = vpop.f32.mrb[0].mxu0
      %v8168 = vpop.f32.mrb[0].mxu0
      %v8169 = vadd.f32 %v7906, %v8168
      %v8170 = vpop.f32.mrb[0].mxu0
      %8171 = vmatprep.mubr.bf16.mxu0 %v8029
      %8172 = vmatmul.mubr.bf16.gmra.mrb[0].mxu0 %v7865
      %v8173 = vpop.f32.mrb[0].mxu0
      %v8174 = vadd.f32 %v7906, %v8173
      %v8175 = vpop.f32.mrb[0].mxu0
      %v8176 = vpop.f32.mrb[0].mxu0
      %v8177 = vadd.f32 %v7906, %v8176
      %v8178 = vpop.f32.mrb[0].mxu0
      %8179 = vmatprep.mubr.bf16.mxu0 %v8032
      %8180 = vmatmul.mubr.bf16.gmra.mrb[0].mxu0 %v7867
      %v8181 = vpop.f32.mrb[0].mxu0
      %v8182 = vadd.f32 %v7906, %v8181
      %v8183 = vpop.f32.mrb[0].mxu0
      %v8184 = vpop.f32.mrb[0].mxu0
      %v8185 = vadd.f32 %v7906, %v8184
      %v8186 = vpop.f32.mrb[0].mxu0
      %8187 = vmatprep.mubr.bf16.mxu0 %v8035
      %8188 = vmatmul.mubr.bf16.gmra.mrb[0].mxu0 %v7869
      %v8189 = vpop.f32.mrb[0].mxu0
      %v8190 = vadd.f32 %v7906, %v8189
      %v8191 = vpop.f32.mrb[0].mxu0
      %v8192 = vpop.f32.mrb[0].mxu0
      %v8193 = vadd.f32 %v7906, %v8192
      %v8194 = vpop.f32.mrb[0].mxu0
      %8195 = vmatprep.mubr.bf16.mxu0 %v8038
      %8196 = vmatmul.mubr.bf16.gmra.mrb[0].mxu0 %v7871
      %v8197 = vpop.f32.mrb[0].mxu0
      %v8198 = vadd.f32 %v7906, %v8197
      %v8199 = vpop.f32.mrb[0].mxu0
      %v8200 = vpop.f32.mrb[0].mxu0
      %v8201 = vadd.f32 %v7906, %v8200
      %v8202 = vpop.f32.mrb[0].mxu0
      %8203 = vdwg.mxu0
      %8204 = vst.msk [vmem:[%s332] sm:$0xff] %vm5689, %v8078
      %8205 = vst.msk [vmem:[%s332 + $0x8] sm:$0xff] %vm5689, %v8081
      %8206 = vst.msk [vmem:[%s332 + $0x10] sm:$0xff] %vm5689, %v8086
      %8207 = vst.msk [vmem:[%s332 + $0x18] sm:$0xff] %vm5689, %v8089
      %8208 = vst.msk [vmem:[%s332 + $0x20] sm:$0xff] %vm5689, %v8094
      %8209 = vst.msk [vmem:[%s332 + $0x28] sm:$0xff] %vm5689, %v8097
      %8210 = vst.msk [vmem:[%s332 + $0x30] sm:$0xff] %vm5689, %v8102
      %8211 = vst.msk [vmem:[%s332 + $0x38] sm:$0xff] %vm5689, %v8105
      %8212 = vst.msk [vmem:[%s332 + $0x40] sm:$0xff] %vm5689, %v8110
      %8213 = vst.msk [vmem:[%s332 + $0x48] sm:$0xff] %vm5689, %v8113
      %8214 = vst.msk [vmem:[%s332 + $0x50] sm:$0xff] %vm5689, %v8118
      %8215 = vst.msk [vmem:[%s332 + $0x58] sm:$0xff] %vm5689, %v8121
      %8216 = vst.msk [vmem:[%s332 + $0x60] sm:$0xff] %vm5689, %v8126
      %8217 = vst.msk [vmem:[%s332 + $0x68] sm:$0xff] %vm5689, %v8129
      %8218 = vst.msk [vmem:[%s332 + $0x70] sm:$0xff] %vm5689, %v8134
      %8219 = vst.msk [vmem:[%s332 + $0x78] sm:$0xff] %vm5689, %v8137
      %8220 = vst.msk [vmem:[%s332 + $0x80] sm:$0xff] %vm5689, %v8142
      %8221 = vst.msk [vmem:[%s332 + $0x88] sm:$0xff] %vm5689, %v8145
      %8222 = vst.msk [vmem:[%s332 + $0x90] sm:$0xff] %vm5689, %v8150
      %8223 = vst.msk [vmem:[%s332 + $0x98] sm:$0xff] %vm5689, %v8153
      %8224 = vst.msk [vmem:[%s332 + $0xa0] sm:$0xff] %vm5689, %v8158
      %8225 = vst.msk [vmem:[%s332 + $0xa8] sm:$0xff] %vm5689, %v8161
      %8226 = vst.msk [vmem:[%s332 + $0xb0] sm:$0xff] %vm5689, %v8166
      %8227 = vst.msk [vmem:[%s332 + $0xb8] sm:$0xff] %vm5689, %v8169
      %8228 = vst.msk [vmem:[%s332 + $0xc0] sm:$0xff] %vm5689, %v8174
      %8229 = vst.msk [vmem:[%s332 + $0xc8] sm:$0xff] %vm5689, %v8177
      %8230 = vst.msk [vmem:[%s332 + $0xd0] sm:$0xff] %vm5689, %v8182
      %8231 = vst.msk [vmem:[%s332 + $0xd8] sm:$0xff] %vm5689, %v8185
      %8232 = vst.msk [vmem:[%s332 + $0xe0] sm:$0xff] %vm5689, %v8190
      %8233 = vst.msk [vmem:[%s332 + $0xe8] sm:$0xff] %vm5689, %v8193
      %8234 = vst.msk [vmem:[%s332 + $0xf0] sm:$0xff] %vm5689, %v8198
      %8235 = vst.msk [vmem:[%s332 + $0xf8] sm:$0xff] %vm5689, %v8201
      %p8236 = scmp.lt.s32.totalorder %s20, 1
      %s8237 = scalar_select %p8236, %s20, 1
      %s8238 = smul.addr %s8237, 32
      %s8239 = smul.addr %s8238, 8
      %s8240 = scalar_lea.vmem %s9, %s8239
      // Predicated region
      $region57: #{tpu_custom_call.1} parent=55 // pred_check
        %p8241 = pneg %p232
      $region58: #{tpu_custom_call.1} parent=55 // pred_check_branch
        %8243 = sbr.rel (%p8241) target = $region60
      $region59: #{tpu_custom_call.1} parent=55 // pred_region
        _
      $region60: #{tpu_custom_call.1} parent=55 // pred_fallthru
        _
    $region56: #{tpu_custom_call.1} parent=5 // pred_fallthru
      _
    %p8244 = scmp.le.s32.totalorder 2, %s15
    // Predicated region
    $region61: #{tpu_custom_call.1} parent=5 // pred_check
      %p8245 = pneg %p8244
    $region62: #{tpu_custom_call.1} parent=5 // pred_check_branch
      %8247 = sbr.rel (%p8245) target = $region64
    $region63: #{tpu_custom_call.1} parent=5 // pred_region
      %s8248 = ssub.s32 %s15, 2
      // Predicated region
      $region65: #{tpu_custom_call.1} parent=63 // pred_check
        %p8249 = pneg %p238
      $region66: #{tpu_custom_call.1} parent=63 // pred_check_branch
        %8251 = sbr.rel (%p8249) target = $region68
      $region67: #{tpu_custom_call.1} parent=63 // pred_region
        %p8252 = scmp.lt.s32.totalorder %s21, 1
        %s8253 = scalar_select %p8252, %s21, 1
        %s8254 = smul.addr %s8253, 32
        %s8255 = smul.addr %s8254, 8
        %s8256 = scalar_lea.vmem %s9, %s8255
      $region68: #{tpu_custom_call.1} parent=63 // pred_fallthru
        _
    $region64: #{tpu_custom_call.1} parent=5 // pred_fallthru
      _
  $region6: #{tpu_custom_call.1} parent=0 // loop_footer
    %s19 = sadd.s32 1, %s15
  $region7: #{tpu_custom_call.1} parent=0 // loop_footer_branch
    %14 = sbr.rel target = $region3
  $region8: #{tpu_custom_call.1} parent=0 // loop_exit
    _

</llo_original>
